<compile_context>
chip_gen: v5e
topology: v5e:2x2
jax: 0.10.0
libtpu: 0.0.40
codegen_flags: <defaults>
</compile_context>

<pallas_src>
import functools
import math

import jax
import jax.numpy as jnp
from jax.experimental import pallas as pl
from jax.experimental.pallas import tpu as pltpu


def _round_up(x, m):
    return (x + m - 1) // m * m


# ----------------------------------------------------------------------------
# Fused Pallas GEMM kernels:  out = [relu](X @ W + b) [+ add]
# Single full-K block per call; X/W are bf16, accumulation/output f32.
# ----------------------------------------------------------------------------
def _gemm_kernel(x_ref, w_ref, b_ref, o_ref, *, relu):
    y = jnp.dot(x_ref[...], w_ref[...], preferred_element_type=jnp.float32)
    y = y + b_ref[...]                       # bias broadcast over rows
    if relu:
        y = jnp.maximum(y, 0.0)
    o_ref[...] = y.astype(o_ref.dtype)


def _gemm_add_kernel(x_ref, w_ref, b_ref, add_ref, o_ref, *, relu):
    y = jnp.dot(x_ref[...], w_ref[...], preferred_element_type=jnp.float32)
    y = y + b_ref[...]
    if relu:
        y = jnp.maximum(y, 0.0)
    y = y + add_ref[...]                     # post-ReLU per-(batch,chan) add
    o_ref[...] = y.astype(o_ref.dtype)


def batched_gemm_bias_act(x, w, b, add=None, relu=False, tm_max=512):
    """x:(G, M, K)  w:(K, N)  b:(N,)  add:(G, N) or None.

    Returns (G, M, N) float32 = [relu](x @ w + b) [+ add[:, None, :]].
    """
    G, M, K = x.shape
    K2, N = w.shape
    assert K == K2

    Np = _round_up(N, 128)
    tm = min(tm_max, _round_up(M, 8))        # M tile (multiple of 8)
    Mp = _round_up(M, tm)

    xp = jnp.pad(x, ((0, 0), (0, Mp - M), (0, 0))).astype(jnp.bfloat16)
    wp = jnp.pad(w, ((0, 0), (0, Np - N))).astype(jnp.bfloat16)
    bp = jnp.pad(b.astype(jnp.float32), (0, Np - N)).reshape(1, Np)

    x_spec = pl.BlockSpec((None, tm, K), lambda g, i: (g, i, 0))
    w_spec = pl.BlockSpec((K, Np), lambda g, i: (0, 0))
    b_spec = pl.BlockSpec((1, Np), lambda g, i: (0, 0))
    o_spec = pl.BlockSpec((None, tm, Np), lambda g, i: (g, i, 0))

    if add is None:
        kernel = functools.partial(_gemm_kernel, relu=relu)
        in_specs = [x_spec, w_spec, b_spec]
        operands = (xp, wp, bp)
    else:
        addp = jnp.pad(add.astype(jnp.float32),
                       ((0, 0), (0, Np - N))).reshape(G, 1, Np)
        kernel = functools.partial(_gemm_add_kernel, relu=relu)
        add_spec = pl.BlockSpec((None, 1, Np), lambda g, i: (g, 0, 0))
        in_specs = [x_spec, w_spec, b_spec, add_spec]
        operands = (xp, wp, bp, addp)

    out = pl.pallas_call(
        kernel,
        out_shape=jax.ShapeDtypeStruct((G, Mp, Np), jnp.float32),
        grid_spec=pltpu.PrefetchScalarGridSpec(
            num_scalar_prefetch=0,
            grid=(G, Mp // tm),
            in_specs=in_specs,
            out_specs=o_spec,
        ),
        compiler_params=pltpu.CompilerParams(
            dimension_semantics=("parallel", "parallel"),
            vmem_limit_bytes=32 * 1024 * 1024,   # sized against v7x's VMEM
        ),
    )(*operands)
    return out[:, :M, :N]


# ----------------------------------------------------------------------------
# Conv2d (valid padding, stride) as NHWC im2col + fused Pallas GEMM
# ----------------------------------------------------------------------------
def _im2col_nhwc(x, KH, KW, stride):
    """x: (B, H, W, C) -> (B, OH*OW, KH*KW*C), OH, OW."""
    B, H, W, C = x.shape
    OH = (H - KH) // stride + 1
    OW = (W - KW) // stride + 1
    cols = []
    for kh in range(KH):
        for kw in range(KW):
            cols.append(
                x[:, kh:kh + stride * OH:stride, kw:kw + stride * OW:stride, :])
    patches = jnp.stack(cols, axis=3)                 # (B, OH, OW, KH*KW, C)
    return patches.reshape(B, OH * OW, KH * KW * C), OH, OW


def conv2d_relu_add(x_nhwc, w, b, stride, relu=True, add_per_bc=None,
                    tm_max=512):
    """x NHWC (bf16 cast internally), w (Cout,Cin,KH,KW) PyTorch layout.

    Returns NHWC float32:  relu(conv(x) + b) [+ add_per_bc[b, c]].
    """
    B = x_nhwc.shape[0]
    Cout, Cin, KH, KW = w.shape
    # cast before im2col so the duplicated patch matrix is half-width in HBM
    X, OH, OW = _im2col_nhwc(x_nhwc.astype(jnp.bfloat16), KH, KW, stride)
    W2d = jnp.transpose(w, (2, 3, 1, 0)).reshape(KH * KW * Cin, Cout)
    Y = batched_gemm_bias_act(X, W2d, b, add=add_per_bc, relu=relu,
                              tm_max=tm_max)
    return Y.reshape(B, OH, OW, Cout)                 # stays NHWC


# ----------------------------------------------------------------------------
# Timestep embedding (tiny; plain JAX glue)
# ----------------------------------------------------------------------------
def get_timestep_embedding(timesteps, embedding_dim):
    half_dim = embedding_dim // 2
    scale = math.log(10000) / (half_dim - 1)
    emb = jnp.exp(jnp.arange(half_dim, dtype=jnp.float32) * -scale)
    emb = timesteps.astype(jnp.float32)[:, None] * emb[None, :]
    emb = jnp.concatenate([jnp.sin(emb), jnp.cos(emb)], axis=1)
    if embedding_dim % 2 == 1:
        emb = jnp.pad(emb, ((0, 0), (0, 1)))
    return emb


def _dense(x, w, b):
    # tiny (M = batch) matmuls: left to XLA on purpose (pallas launch overhead
    # would dominate an 8x128x128 GEMM)
    return jnp.dot(x, w, preferred_element_type=jnp.float32) + b


# ----------------------------------------------------------------------------
# Parameters (shapes exactly as NatureCNND.__init__ no-downsample branch)
# ----------------------------------------------------------------------------
def init_params(key, input_channels, feature_size):
    def dense(k, fin, fout):           # weight stored as (in, out)
        kw, _ = jax.random.split(k)
        return (jax.random.normal(kw, (fin, fout), jnp.float32) / jnp.sqrt(fin),
                jnp.zeros((fout,), jnp.float32))

    def conv(k, cout, cin, kh, kwd):
        kk, _ = jax.random.split(k)
        fan_in = cin * kh * kwd
        return (jax.random.normal(kk, (cout, cin, kh, kwd), jnp.float32)
                / jnp.sqrt(fan_in),
                jnp.zeros((cout,), jnp.float32))

    ks = jax.random.split(key, 10)
    p = {}
    p['temb_d0_w'], p['temb_d0_b'] = dense(ks[0], 32, 128)
    p['temb_d1_w'], p['temb_d1_b'] = dense(ks[1], 128, 128)
    p['proj1_w'], p['proj1_b'] = dense(ks[2], 128, 64)
    p['proj2_w'], p['proj2_b'] = dense(ks[3], 128, 128)
    p['proj3_w'], p['proj3_b'] = dense(ks[4], 128, 64)
    p['conv1_w'], p['conv1_b'] = conv(ks[5], 32, input_channels, 8, 8)
    p['conv2_w'], p['conv2_b'] = conv(ks[6], 64, 32, 4, 4)
    p['conv3_w'], p['conv3_b'] = conv(ks[7], 128, 64, 4, 4)
    p['conv4_w'], p['conv4_b'] = conv(ks[8], 64, 128, 3, 3)
    final_conv_size = 64 * 9 * 6
    p['fc_w'], p['fc_b'] = dense(ks[9], final_conv_size, feature_size)
    return p


# ----------------------------------------------------------------------------
# NatureCNND.forward (ddim / no-downsample branch), end_with_relu=False
# ----------------------------------------------------------------------------
def nature_cnn_d_forward(params, inputs, t=None, end_with_relu=False):
    B = inputs.shape[0]
    if t is None:
        t = jnp.arange(0, 1000, 1000 / B).astype(jnp.int32)

    # --- timestep embedding MLP + projections (plain XLA, tiny) ---
    temb = get_timestep_embedding(t, 32)                              # (B, 32)
    temb = jnp.maximum(
        _dense(temb, params['temb_d0_w'], params['temb_d0_b']), 0.0)  # (B,128)
    temb = _dense(temb, params['temb_d1_w'], params['temb_d1_b'])     # (B,128)
    temb_r = jnp.maximum(temb, 0.0)                                   # F.relu

    proj1 = _dense(temb_r, params['proj1_w'], params['proj1_b'])      # (B, 64)
    proj2 = _dense(temb_r, params['proj2_w'], params['proj2_b'])      # (B,128)
    proj3 = _dense(temb_r, params['proj3_w'], params['proj3_b'])      # (B, 64)

    # --- conv trunk: NHWC internally, fused Pallas GEMMs ---
    x = jnp.transpose(inputs, (0, 2, 3, 1))                 # NCHW -> NHWC once
    h0 = conv2d_relu_add(x, params['conv1_w'], params['conv1_b'],
                         stride=4)                          # (B, 51, 39, 32)
    h1 = conv2d_relu_add(h0, params['conv2_w'], params['conv2_b'],
                         stride=2, add_per_bc=proj1)        # (B, 24, 18, 64)
    h2 = conv2d_relu_add(h1, params['conv3_w'], params['conv3_b'],
                         stride=2, add_per_bc=proj2)        # (B, 11, 8, 128)
    h3 = conv2d_relu_add(h2, params['conv4_w'], params['conv4_b'],
                         stride=1, add_per_bc=proj3)        # (B, 9, 6, 64)

    # flatten in PyTorch NCHW order: (B, C, H, W).view(B, -1)
    flat = jnp.transpose(h3, (0, 3, 1, 2)).reshape(B, -1)   # (B, 3456)
    out = batched_gemm_bias_act(flat[None], params['fc_w'], params['fc_b'],
                                relu=end_with_relu)[0]      # (B, feature_size)
    return out


if __name__ == "__main__":
    key = jax.random.PRNGKey(0)
    k_param, k_in = jax.random.split(key)

    # spatial size is implied by the module's hard-coded final_conv_shape
    # (64, 9, 6): 210x160 input -> 51x39 -> 24x18 -> 11x8 -> 9x6
    B, C, H, W = 2, 1, 210, 160
    feature_size = 64

    params = init_params(k_param, input_channels=C, feature_size=feature_size)
    x = jax.random.normal(k_in, (B, C, H, W), jnp.float32)

    fwd = jax.jit(functools.partial(nature_cnn_d_forward, end_with_relu=False))
    out = fwd(params, x)
    jax.block_until_ready(out)
    assert out.shape == (B, feature_size) and out.dtype == jnp.float32
    print("KERNEL_OK")
</pallas_src>

<mosaic_0001>
module attributes {stable_mosaic.version = 11 : i64} {
  func.func @_gemm_kernel(%arg0: i32, %arg1: i32, %arg2: memref<1x512x64xbf16, #tpu.memory_space<vmem>>, %arg3: memref<64x128xbf16, #tpu.memory_space<vmem>>, %arg4: memref<1x128xf32, #tpu.memory_space<vmem>>, %arg5: memref<1x512x128xf32, #tpu.memory_space<vmem>>) attributes {dimension_semantics = [#tpu.dimension_semantics<parallel>, #tpu.dimension_semantics<parallel>], iteration_bounds = array<i64: 2, 4>, scalar_prefetch = 0 : i64, scratch_operands = 0 : i64, tpu.core_type = #tpu.core_type<tc>, window_params = [{transform_indices = @transform_0, window_bounds = array<i64: 1, 512, 64>}, {pipeline_mode = #tpu.pipeline_mode<synchronous>, transform_indices = @transform_1, window_bounds = array<i64: 64, 128>}, {pipeline_mode = #tpu.pipeline_mode<synchronous>, transform_indices = @transform_2, window_bounds = array<i64: 1, 128>}, {transform_indices = @transform_3, window_bounds = array<i64: 1, 512, 128>}]} {
    %c0 = arith.constant 0 : index
    %c0_0 = arith.constant 0 : index
    %c0_1 = arith.constant 0 : index
    %0 = vector.load %arg2[%c0, %c0_0, %c0_1] : memref<1x512x64xbf16, #tpu.memory_space<vmem>>, vector<1x512x64xbf16>
    %1 = vector.shape_cast %0 : vector<1x512x64xbf16> to vector<512x64xbf16>
    %c0_2 = arith.constant 0 : index
    %c0_3 = arith.constant 0 : index
    %2 = vector.load %arg3[%c0_2, %c0_3] : memref<64x128xbf16, #tpu.memory_space<vmem>>, vector<64x128xbf16>
    %cst = arith.constant dense<0.000000e+00> : vector<512x128xf32>
    %3 = tpu.matmul %1, %2, %cst {dimension_numbers = #tpu.dot_dimension_numbers<[1], [0], [0], [1], [0, 0, 1, 1], [], []>} : vector<512x64xbf16>, vector<64x128xbf16>, vector<512x128xf32> -> vector<512x128xf32>
    %c0_4 = arith.constant 0 : index
    %c0_5 = arith.constant 0 : index
    %4 = vector.load %arg4[%c0_4, %c0_5] : memref<1x128xf32, #tpu.memory_space<vmem>>, vector<1x128xf32>
    %5 = vector.broadcast %4 : vector<1x128xf32> to vector<512x128xf32>
    %6 = arith.addf %3, %5 : vector<512x128xf32>
    %cst_6 = arith.constant 0.000000e+00 : f32
    %7 = vector.broadcast %cst_6 : f32 to vector<512x128xf32>
    %8 = arith.maximumf %6, %7 : vector<512x128xf32>
    %c0_7 = arith.constant 0 : index
    %c0_8 = arith.constant 0 : index
    %c0_9 = arith.constant 0 : index
    %9 = vector.load %arg5[%c0_7, %c0_8, %c0_9] : memref<1x512x128xf32, #tpu.memory_space<vmem>>, vector<1x512x128xf32>
    %10 = vector.shape_cast %9 : vector<1x512x128xf32> to vector<512x128xf32>
    %11 = vector.shape_cast %8 : vector<512x128xf32> to vector<1x512x128xf32>
    tpu.vector_store %arg5[%c0_7, %c0_8, %c0_9], %11 {strides = array<i32>} : memref<1x512x128xf32, #tpu.memory_space<vmem>>, vector<1x512x128xf32>,
    return
  }
  func.func @transform_0(%arg0: i32, %arg1: i32) -> (i32, i32, i32) {
    %c0_i32 = arith.constant 0 : i32
    %c0_i32_0 = arith.constant 0 : i32
    return %arg0, %arg1, %c0_i32 : i32, i32, i32
  }
  func.func @transform_1(%arg0: i32, %arg1: i32) -> (i32, i32) {
    %c0_i32 = arith.constant 0 : i32
    %c0_i32_0 = arith.constant 0 : i32
    %c0_i32_1 = arith.constant 0 : i32
    return %c0_i32, %c0_i32_0 : i32, i32
  }
  func.func @transform_2(%arg0: i32, %arg1: i32) -> (i32, i32) {
    %c0_i32 = arith.constant 0 : i32
    %c0_i32_0 = arith.constant 0 : i32
    %c0_i32_1 = arith.constant 0 : i32
    return %c0_i32, %c0_i32_0 : i32, i32
  }
  func.func @transform_3(%arg0: i32, %arg1: i32) -> (i32, i32, i32) {
    %c0_i32 = arith.constant 0 : i32
    %c0_i32_0 = arith.constant 0 : i32
    return %arg0, %arg1, %c0_i32 : i32, i32, i32
  }
}

module attributes {stable_mosaic.version = 11 : i64} {
  func.func @_gemm_add_kernel(%arg0: i32, %arg1: i32, %arg2: memref<1x432x512xbf16, #tpu.memory_space<vmem>>, %arg3: memref<512x128xbf16, #tpu.memory_space<vmem>>, %arg4: memref<1x128xf32, #tpu.memory_space<vmem>>, %arg5: memref<1x1x128xf32, #tpu.memory_space<vmem>>, %arg6: memref<1x432x128xf32, #tpu.memory_space<vmem>>) attributes {dimension_semantics = [#tpu.dimension_semantics<parallel>, #tpu.dimension_semantics<parallel>], iteration_bounds = array<i64: 2, 1>, scalar_prefetch = 0 : i64, scratch_operands = 0 : i64, tpu.core_type = #tpu.core_type<tc>, window_params = [{transform_indices = @transform_0, window_bounds = array<i64: 1, 432, 512>}, {pipeline_mode = #tpu.pipeline_mode<synchronous>, transform_indices = @transform_1, window_bounds = array<i64: 512, 128>}, {pipeline_mode = #tpu.pipeline_mode<synchronous>, transform_indices = @transform_2, window_bounds = array<i64: 1, 128>}, {transform_indices = @transform_3, window_bounds = array<i64: 1, 1, 128>}, {transform_indices = @transform_4, window_bounds = array<i64: 1, 432, 128>}]} {
    %c0 = arith.constant 0 : index
    %c0_0 = arith.constant 0 : index
    %c0_1 = arith.constant 0 : index
    %0 = vector.load %arg2[%c0, %c0_0, %c0_1] : memref<1x432x512xbf16, #tpu.memory_space<vmem>>, vector<1x432x512xbf16>
    %1 = vector.shape_cast %0 : vector<1x432x512xbf16> to vector<432x512xbf16>
    %c0_2 = arith.constant 0 : index
    %c0_3 = arith.constant 0 : index
    %2 = vector.load %arg3[%c0_2, %c0_3] : memref<512x128xbf16, #tpu.memory_space<vmem>>, vector<512x128xbf16>
    %cst = arith.constant dense<0.000000e+00> : vector<432x128xf32>
    %3 = tpu.matmul %1, %2, %cst {dimension_numbers = #tpu.dot_dimension_numbers<[1], [0], [0], [1], [0, 0, 1, 1], [], []>} : vector<432x512xbf16>, vector<512x128xbf16>, vector<432x128xf32> -> vector<432x128xf32>
    %c0_4 = arith.constant 0 : index
    %c0_5 = arith.constant 0 : index
    %4 = vector.load %arg4[%c0_4, %c0_5] : memref<1x128xf32, #tpu.memory_space<vmem>>, vector<1x128xf32>
    %5 = vector.broadcast %4 : vector<1x128xf32> to vector<432x128xf32>
    %6 = arith.addf %3, %5 : vector<432x128xf32>
    %cst_6 = arith.constant 0.000000e+00 : f32
    %7 = vector.broadcast %cst_6 : f32 to vector<432x128xf32>
    %8 = arith.maximumf %6, %7 : vector<432x128xf32>
    %c0_7 = arith.constant 0 : index
    %c0_8 = arith.constant 0 : index
    %c0_9 = arith.constant 0 : index
    %9 = vector.load %arg5[%c0_7, %c0_8, %c0_9] : memref<1x1x128xf32, #tpu.memory_space<vmem>>, vector<1x1x128xf32>
    %10 = vector.shape_cast %9 : vector<1x1x128xf32> to vector<1x128xf32>
    %11 = vector.broadcast %10 : vector<1x128xf32> to vector<432x128xf32>
    %12 = arith.addf %8, %11 : vector<432x128xf32>
    %c0_10 = arith.constant 0 : index
    %c0_11 = arith.constant 0 : index
    %c0_12 = arith.constant 0 : index
    %13 = vector.load %arg6[%c0_10, %c0_11, %c0_12] : memref<1x432x128xf32, #tpu.memory_space<vmem>>, vector<1x432x128xf32>
    %14 = vector.shape_cast %13 : vector<1x432x128xf32> to vector<432x128xf32>
    %15 = vector.shape_cast %12 : vector<432x128xf32> to vector<1x432x128xf32>
    tpu.vector_store %arg6[%c0_10, %c0_11, %c0_12], %15 {strides = array<i32>} : memref<1x432x128xf32, #tpu.memory_space<vmem>>, vector<1x432x128xf32>,
    return
  }
  func.func @transform_0(%arg0: i32, %arg1: i32) -> (i32, i32, i32) {
    %c0_i32 = arith.constant 0 : i32
    %c0_i32_0 = arith.constant 0 : i32
    return %arg0, %arg1, %c0_i32 : i32, i32, i32
  }
  func.func @transform_1(%arg0: i32, %arg1: i32) -> (i32, i32) {
    %c0_i32 = arith.constant 0 : i32
    %c0_i32_0 = arith.constant 0 : i32
    %c0_i32_1 = arith.constant 0 : i32
    return %c0_i32, %c0_i32_0 : i32, i32
  }
  func.func @transform_2(%arg0: i32, %arg1: i32) -> (i32, i32) {
    %c0_i32 = arith.constant 0 : i32
    %c0_i32_0 = arith.constant 0 : i32
    %c0_i32_1 = arith.constant 0 : i32
    return %c0_i32, %c0_i32_0 : i32, i32
  }
  func.func @transform_3(%arg0: i32, %arg1: i32) -> (i32, i32, i32) {
    %c0_i32 = arith.constant 0 : i32
    %c0_i32_0 = arith.constant 0 : i32
    %c0_i32_1 = arith.constant 0 : i32
    return %arg0, %c0_i32, %c0_i32_0 : i32, i32, i32
  }
  func.func @transform_4(%arg0: i32, %arg1: i32) -> (i32, i32, i32) {
    %c0_i32 = arith.constant 0 : i32
    %c0_i32_0 = arith.constant 0 : i32
    return %arg0, %arg1, %c0_i32 : i32, i32, i32
  }
}

module attributes {stable_mosaic.version = 11 : i64} {
  func.func @_gemm_add_kernel(%arg0: i32, %arg1: i32, %arg2: memref<1x88x1024xbf16, #tpu.memory_space<vmem>>, %arg3: memref<1024x128xbf16, #tpu.memory_space<vmem>>, %arg4: memref<1x128xf32, #tpu.memory_space<vmem>>, %arg5: memref<1x1x128xf32, #tpu.memory_space<vmem>>, %arg6: memref<1x88x128xf32, #tpu.memory_space<vmem>>) attributes {dimension_semantics = [#tpu.dimension_semantics<parallel>, #tpu.dimension_semantics<parallel>], iteration_bounds = array<i64: 2, 1>, scalar_prefetch = 0 : i64, scratch_operands = 0 : i64, tpu.core_type = #tpu.core_type<tc>, window_params = [{transform_indices = @transform_0, window_bounds = array<i64: 1, 88, 1024>}, {pipeline_mode = #tpu.pipeline_mode<synchronous>, transform_indices = @transform_1, window_bounds = array<i64: 1024, 128>}, {pipeline_mode = #tpu.pipeline_mode<synchronous>, transform_indices = @transform_2, window_bounds = array<i64: 1, 128>}, {transform_indices = @transform_3, window_bounds = array<i64: 1, 1, 128>}, {transform_indices = @transform_4, window_bounds = array<i64: 1, 88, 128>}]} {
    %c0 = arith.constant 0 : index
    %c0_0 = arith.constant 0 : index
    %c0_1 = arith.constant 0 : index
    %0 = vector.load %arg2[%c0, %c0_0, %c0_1] : memref<1x88x1024xbf16, #tpu.memory_space<vmem>>, vector<1x88x1024xbf16>
    %1 = vector.shape_cast %0 : vector<1x88x1024xbf16> to vector<88x1024xbf16>
    %c0_2 = arith.constant 0 : index
    %c0_3 = arith.constant 0 : index
    %2 = vector.load %arg3[%c0_2, %c0_3] : memref<1024x128xbf16, #tpu.memory_space<vmem>>, vector<1024x128xbf16>
    %cst = arith.constant dense<0.000000e+00> : vector<88x128xf32>
    %3 = tpu.matmul %1, %2, %cst {dimension_numbers = #tpu.dot_dimension_numbers<[1], [0], [0], [1], [0, 0, 1, 1], [], []>} : vector<88x1024xbf16>, vector<1024x128xbf16>, vector<88x128xf32> -> vector<88x128xf32>
    %c0_4 = arith.constant 0 : index
    %c0_5 = arith.constant 0 : index
    %4 = vector.load %arg4[%c0_4, %c0_5] : memref<1x128xf32, #tpu.memory_space<vmem>>, vector<1x128xf32>
    %5 = vector.broadcast %4 : vector<1x128xf32> to vector<88x128xf32>
    %6 = arith.addf %3, %5 : vector<88x128xf32>
    %cst_6 = arith.constant 0.000000e+00 : f32
    %7 = vector.broadcast %cst_6 : f32 to vector<88x128xf32>
    %8 = arith.maximumf %6, %7 : vector<88x128xf32>
    %c0_7 = arith.constant 0 : index
    %c0_8 = arith.constant 0 : index
    %c0_9 = arith.constant 0 : index
    %9 = vector.load %arg5[%c0_7, %c0_8, %c0_9] : memref<1x1x128xf32, #tpu.memory_space<vmem>>, vector<1x1x128xf32>
    %10 = vector.shape_cast %9 : vector<1x1x128xf32> to vector<1x128xf32>
    %11 = vector.broadcast %10 : vector<1x128xf32> to vector<88x128xf32>
    %12 = arith.addf %8, %11 : vector<88x128xf32>
    %c0_10 = arith.constant 0 : index
    %c0_11 = arith.constant 0 : index
    %c0_12 = arith.constant 0 : index
    %13 = vector.load %arg6[%c0_10, %c0_11, %c0_12] : memref<1x88x128xf32, #tpu.memory_space<vmem>>, vector<1x88x128xf32>
    %14 = vector.shape_cast %13 : vector<1x88x128xf32> to vector<88x128xf32>
    %15 = vector.shape_cast %12 : vector<88x128xf32> to vector<1x88x128xf32>
    tpu.vector_store %arg6[%c0_10, %c0_11, %c0_12], %15 {strides = array<i32>} : memref<1x88x128xf32, #tpu.memory_space<vmem>>, vector<1x88x128xf32>,
    return
  }
  func.func @transform_0(%arg0: i32, %arg1: i32) -> (i32, i32, i32) {
    %c0_i32 = arith.constant 0 : i32
    %c0_i32_0 = arith.constant 0 : i32
    return %arg0, %arg1, %c0_i32 : i32, i32, i32
  }
  func.func @transform_1(%arg0: i32, %arg1: i32) -> (i32, i32) {
    %c0_i32 = arith.constant 0 : i32
    %c0_i32_0 = arith.constant 0 : i32
    %c0_i32_1 = arith.constant 0 : i32
    return %c0_i32, %c0_i32_0 : i32, i32
  }
  func.func @transform_2(%arg0: i32, %arg1: i32) -> (i32, i32) {
    %c0_i32 = arith.constant 0 : i32
    %c0_i32_0 = arith.constant 0 : i32
    %c0_i32_1 = arith.constant 0 : i32
    return %c0_i32, %c0_i32_0 : i32, i32
  }
  func.func @transform_3(%arg0: i32, %arg1: i32) -> (i32, i32, i32) {
    %c0_i32 = arith.constant 0 : i32
    %c0_i32_0 = arith.constant 0 : i32
    %c0_i32_1 = arith.constant 0 : i32
    return %arg0, %c0_i32, %c0_i32_0 : i32, i32, i32
  }
  func.func @transform_4(%arg0: i32, %arg1: i32) -> (i32, i32, i32) {
    %c0_i32 = arith.constant 0 : i32
    %c0_i32_0 = arith.constant 0 : i32
    return %arg0, %arg1, %c0_i32 : i32, i32, i32
  }
}

module attributes {stable_mosaic.version = 11 : i64} {
  func.func @_gemm_add_kernel(%arg0: i32, %arg1: i32, %arg2: memref<1x56x1152xbf16, #tpu.memory_space<vmem>>, %arg3: memref<1152x128xbf16, #tpu.memory_space<vmem>>, %arg4: memref<1x128xf32, #tpu.memory_space<vmem>>, %arg5: memref<1x1x128xf32, #tpu.memory_space<vmem>>, %arg6: memref<1x56x128xf32, #tpu.memory_space<vmem>>) attributes {dimension_semantics = [#tpu.dimension_semantics<parallel>, #tpu.dimension_semantics<parallel>], iteration_bounds = array<i64: 2, 1>, scalar_prefetch = 0 : i64, scratch_operands = 0 : i64, tpu.core_type = #tpu.core_type<tc>, window_params = [{transform_indices = @transform_0, window_bounds = array<i64: 1, 56, 1152>}, {pipeline_mode = #tpu.pipeline_mode<synchronous>, transform_indices = @transform_1, window_bounds = array<i64: 1152, 128>}, {pipeline_mode = #tpu.pipeline_mode<synchronous>, transform_indices = @transform_2, window_bounds = array<i64: 1, 128>}, {transform_indices = @transform_3, window_bounds = array<i64: 1, 1, 128>}, {transform_indices = @transform_4, window_bounds = array<i64: 1, 56, 128>}]} {
    %c0 = arith.constant 0 : index
    %c0_0 = arith.constant 0 : index
    %c0_1 = arith.constant 0 : index
    %0 = vector.load %arg2[%c0, %c0_0, %c0_1] : memref<1x56x1152xbf16, #tpu.memory_space<vmem>>, vector<1x56x1152xbf16>
    %1 = vector.shape_cast %0 : vector<1x56x1152xbf16> to vector<56x1152xbf16>
    %c0_2 = arith.constant 0 : index
    %c0_3 = arith.constant 0 : index
    %2 = vector.load %arg3[%c0_2, %c0_3] : memref<1152x128xbf16, #tpu.memory_space<vmem>>, vector<1152x128xbf16>
    %cst = arith.constant dense<0.000000e+00> : vector<56x128xf32>
    %3 = tpu.matmul %1, %2, %cst {dimension_numbers = #tpu.dot_dimension_numbers<[1], [0], [0], [1], [0, 0, 1, 1], [], []>} : vector<56x1152xbf16>, vector<1152x128xbf16>, vector<56x128xf32> -> vector<56x128xf32>
    %c0_4 = arith.constant 0 : index
    %c0_5 = arith.constant 0 : index
    %4 = vector.load %arg4[%c0_4, %c0_5] : memref<1x128xf32, #tpu.memory_space<vmem>>, vector<1x128xf32>
    %5 = vector.broadcast %4 : vector<1x128xf32> to vector<56x128xf32>
    %6 = arith.addf %3, %5 : vector<56x128xf32>
    %cst_6 = arith.constant 0.000000e+00 : f32
    %7 = vector.broadcast %cst_6 : f32 to vector<56x128xf32>
    %8 = arith.maximumf %6, %7 : vector<56x128xf32>
    %c0_7 = arith.constant 0 : index
    %c0_8 = arith.constant 0 : index
    %c0_9 = arith.constant 0 : index
    %9 = vector.load %arg5[%c0_7, %c0_8, %c0_9] : memref<1x1x128xf32, #tpu.memory_space<vmem>>, vector<1x1x128xf32>
    %10 = vector.shape_cast %9 : vector<1x1x128xf32> to vector<1x128xf32>
    %11 = vector.broadcast %10 : vector<1x128xf32> to vector<56x128xf32>
    %12 = arith.addf %8, %11 : vector<56x128xf32>
    %c0_10 = arith.constant 0 : index
    %c0_11 = arith.constant 0 : index
    %c0_12 = arith.constant 0 : index
    %13 = vector.load %arg6[%c0_10, %c0_11, %c0_12] : memref<1x56x128xf32, #tpu.memory_space<vmem>>, vector<1x56x128xf32>
    %14 = vector.shape_cast %13 : vector<1x56x128xf32> to vector<56x128xf32>
    %15 = vector.shape_cast %12 : vector<56x128xf32> to vector<1x56x128xf32>
    tpu.vector_store %arg6[%c0_10, %c0_11, %c0_12], %15 {strides = array<i32>} : memref<1x56x128xf32, #tpu.memory_space<vmem>>, vector<1x56x128xf32>,
    return
  }
  func.func @transform_0(%arg0: i32, %arg1: i32) -> (i32, i32, i32) {
    %c0_i32 = arith.constant 0 : i32
    %c0_i32_0 = arith.constant 0 : i32
    return %arg0, %arg1, %c0_i32 : i32, i32, i32
  }
  func.func @transform_1(%arg0: i32, %arg1: i32) -> (i32, i32) {
    %c0_i32 = arith.constant 0 : i32
    %c0_i32_0 = arith.constant 0 : i32
    %c0_i32_1 = arith.constant 0 : i32
    return %c0_i32, %c0_i32_0 : i32, i32
  }
  func.func @transform_2(%arg0: i32, %arg1: i32) -> (i32, i32) {
    %c0_i32 = arith.constant 0 : i32
    %c0_i32_0 = arith.constant 0 : i32
    %c0_i32_1 = arith.constant 0 : i32
    return %c0_i32, %c0_i32_0 : i32, i32
  }
  func.func @transform_3(%arg0: i32, %arg1: i32) -> (i32, i32, i32) {
    %c0_i32 = arith.constant 0 : i32
    %c0_i32_0 = arith.constant 0 : i32
    %c0_i32_1 = arith.constant 0 : i32
    return %arg0, %c0_i32, %c0_i32_0 : i32, i32, i32
  }
  func.func @transform_4(%arg0: i32, %arg1: i32) -> (i32, i32, i32) {
    %c0_i32 = arith.constant 0 : i32
    %c0_i32_0 = arith.constant 0 : i32
    return %arg0, %arg1, %c0_i32 : i32, i32, i32
  }
}

module attributes {stable_mosaic.version = 11 : i64} {
  func.func @_gemm_kernel(%arg0: i32, %arg1: i32, %arg2: memref<1x8x3456xbf16, #tpu.memory_space<vmem>>, %arg3: memref<3456x128xbf16, #tpu.memory_space<vmem>>, %arg4: memref<1x128xf32, #tpu.memory_space<vmem>>, %arg5: memref<1x8x128xf32, #tpu.memory_space<vmem>>) attributes {dimension_semantics = [#tpu.dimension_semantics<parallel>, #tpu.dimension_semantics<parallel>], iteration_bounds = array<i64: 1, 1>, scalar_prefetch = 0 : i64, scratch_operands = 0 : i64, tpu.core_type = #tpu.core_type<tc>, window_params = [{transform_indices = @transform_0, window_bounds = array<i64: 1, 8, 3456>}, {pipeline_mode = #tpu.pipeline_mode<synchronous>, transform_indices = @transform_1, window_bounds = array<i64: 3456, 128>}, {pipeline_mode = #tpu.pipeline_mode<synchronous>, transform_indices = @transform_2, window_bounds = array<i64: 1, 128>}, {transform_indices = @transform_3, window_bounds = array<i64: 1, 8, 128>}]} {
    %c0 = arith.constant 0 : index
    %c0_0 = arith.constant 0 : index
    %c0_1 = arith.constant 0 : index
    %0 = vector.load %arg2[%c0, %c0_0, %c0_1] : memref<1x8x3456xbf16, #tpu.memory_space<vmem>>, vector<1x8x3456xbf16>
    %1 = vector.shape_cast %0 : vector<1x8x3456xbf16> to vector<8x3456xbf16>
    %c0_2 = arith.constant 0 : index
    %c0_3 = arith.constant 0 : index
    %2 = vector.load %arg3[%c0_2, %c0_3] : memref<3456x128xbf16, #tpu.memory_space<vmem>>, vector<3456x128xbf16>
    %cst = arith.constant dense<0.000000e+00> : vector<8x128xf32>
    %3 = tpu.matmul %1, %2, %cst {dimension_numbers = #tpu.dot_dimension_numbers<[1], [0], [0], [1], [0, 0, 1, 1], [], []>} : vector<8x3456xbf16>, vector<3456x128xbf16>, vector<8x128xf32> -> vector<8x128xf32>
    %c0_4 = arith.constant 0 : index
    %c0_5 = arith.constant 0 : index
    %4 = vector.load %arg4[%c0_4, %c0_5] : memref<1x128xf32, #tpu.memory_space<vmem>>, vector<1x128xf32>
    %5 = vector.broadcast %4 : vector<1x128xf32> to vector<8x128xf32>
    %6 = arith.addf %3, %5 : vector<8x128xf32>
    %c0_6 = arith.constant 0 : index
    %c0_7 = arith.constant 0 : index
    %c0_8 = arith.constant 0 : index
    %7 = vector.load %arg5[%c0_6, %c0_7, %c0_8] : memref<1x8x128xf32, #tpu.memory_space<vmem>>, vector<1x8x128xf32>
    %8 = vector.shape_cast %7 : vector<1x8x128xf32> to vector<8x128xf32>
    %9 = vector.shape_cast %6 : vector<8x128xf32> to vector<1x8x128xf32>
    tpu.vector_store %arg5[%c0_6, %c0_7, %c0_8], %9 {strides = array<i32>} : memref<1x8x128xf32, #tpu.memory_space<vmem>>, vector<1x8x128xf32>,
    return
  }
  func.func @transform_0(%arg0: i32, %arg1: i32) -> (i32, i32, i32) {
    %c0_i32 = arith.constant 0 : i32
    %c0_i32_0 = arith.constant 0 : i32
    return %arg0, %arg1, %c0_i32 : i32, i32, i32
  }
  func.func @transform_1(%arg0: i32, %arg1: i32) -> (i32, i32) {
    %c0_i32 = arith.constant 0 : i32
    %c0_i32_0 = arith.constant 0 : i32
    %c0_i32_1 = arith.constant 0 : i32
    return %c0_i32, %c0_i32_0 : i32, i32
  }
  func.func @transform_2(%arg0: i32, %arg1: i32) -> (i32, i32) {
    %c0_i32 = arith.constant 0 : i32
    %c0_i32_0 = arith.constant 0 : i32
    %c0_i32_1 = arith.constant 0 : i32
    return %c0_i32, %c0_i32_0 : i32, i32
  }
  func.func @transform_3(%arg0: i32, %arg1: i32) -> (i32, i32, i32) {
    %c0_i32 = arith.constant 0 : i32
    %c0_i32_0 = arith.constant 0 : i32
    return %arg0, %arg1, %c0_i32 : i32, i32, i32
  }
}

</mosaic_0001>

<llo_original>
// kernel: nature_cnn_d_forward.5
$region0: #{nature_cnn_d_forward.5}
  #allocation0 [shape = 'u32[]', space=smem, size = 0x4, offset = 0x4, fixed_abs, tag = 'smem constant byte address 0x4 - core index']
  #allocation1 [shape = 'u32[72,128]{1,0:T(1,128)}', space=vmem, size = 0x9000, scoped, tag = 'internal scratch']
  %s0 = inlined_call_operand.vmem [shape: bf16[2,2048,64], index: 0, kind: input, shape index: {}]
  %s1 = inlined_call_operand.vmem [shape: bf16[64,128], index: 1, kind: input, shape index: {}]
  %s2 = inlined_call_operand.vmem [shape: f32[1,128], index: 2, kind: input, shape index: {}]
  %s3 = inlined_call_operand.vmem [shape: f32[2,2048,128], index: 3, kind: output, shape index: {}]
  %s4 = sld [smem:[#allocation0]]
  $region45: #{nature_cnn_d_forward.5} parent=0
    _
  %s6 = ssub.s32 1, %s4
  %s7 = scalar_select 0, %s6, %s4
  loop: start=0, step=1, limit=10
  $region2: #{nature_cnn_d_forward.5} parent=0 // loop_pre_header
    _
  $region3: #{nature_cnn_d_forward.5} parent=0 // loop_header
    %s9 = sphi 0, %s13
    %p10 = scmp.ge.s32.totalorder %s9, 10
    %s16 = sphi 0, %s28
    %s17 = sphi 0, %s24
    %s18 = sphi 0, %s16
    %s19 = sphi 0, %s17
    %s20 = sphi 0, %s18
    %s21 = sphi 0, %s19
    %s33 = sphi 0, %s35
    %s36 = sphi 0, %s33
    %s37 = sphi 0, %s36
    %s53 = sphi 0, %s37
    %s57 = sphi 0, %s57
    %s59 = sphi 0, %s57
    %s60 = sphi 0, %s59
    %s74 = sphi 0, %s60
    %s78 = sphi 0, %s78
    %s80 = sphi 0, %s78
    %s81 = sphi 0, %s80
    %s95 = sphi 0, %s81
    %s103 = sphi 0, %s105
    %s106 = sphi 0, %s103
    %s107 = sphi 0, %s106
    %s123 = sphi 0, %s107
  $region4: #{nature_cnn_d_forward.5} parent=0 // loop_header_branch
    %12 = sbr.rel (%p10) target = $region8
  $region5: #{nature_cnn_d_forward.5} parent=0 // loop_body
    %s14 = ssub.s32 %s9, 1
    %s15 = ssub.s32 %s9, 2
    %s22 = sadd.s32 1, %s17
    %p23 = scmp.ge.s32.totalorder %s22, 4
    %s24 = scalar_select %p23, 0, %s22
    %s25 = sadd.s32 1, %s16
    %s26 = scalar_select %p23, %s25, %s16
    %p27 = scmp.ge.s32.totalorder %s26, 2
    %s28 = scalar_select %p27, 0, %s26
    %s29 = ssub.s32 %s16, %s28
    %s30 = ssub.s32 %s17, %s24
    %s31 = sor.u32 %s29, %s30
    %p32 = scmp.eq.s32.totalorder %s31, 0
    %s34 = sadd.s32 %s33, 1
    %s35 = scalar_select %p32, %s33, %s34
    %p38 = pneg %p32
    %p39 = scmp.eq.s32.totalorder %s9, 7
    %p40 = por %p38, %p39
    %p41 = scmp.ne.s32.totalorder %s33, %s36
    %p42 = scmp.eq.s32.totalorder %s9, 0
    %p43 = por %p41, %p42
    %p44 = scmp.ne.s32.totalorder %s33, %s36
    %p45 = scmp.eq.s32.totalorder %s14, 7
    %p46 = por %p44, %p45
    %p47 = scmp.ne.s32.totalorder %s36, %s37
    %p48 = scmp.eq.s32.totalorder %s14, 0
    %p49 = por %p47, %p48
    %p50 = scmp.ne.s32.totalorder %s36, %s37
    %p51 = scmp.eq.s32.totalorder %s15, 7
    %p52 = por %p50, %p51
    %p54 = scmp.ne.s32.totalorder %s37, %s53
    %p55 = scmp.eq.s32.totalorder %s15, 0
    %p56 = por %p54, %p55
    %s58 = sadd.s32 %s57, 1
    %p61 = scmp.eq.s32.totalorder %s9, 7
    %p62 = scmp.ne.s32.totalorder %s57, %s59
    %p63 = scmp.eq.s32.totalorder %s9, 0
    %p64 = por %p62, %p63
    %p65 = scmp.ne.s32.totalorder %s57, %s59
    %p66 = scmp.eq.s32.totalorder %s14, 7
    %p67 = por %p65, %p66
    %p68 = scmp.ne.s32.totalorder %s59, %s60
    %p69 = scmp.eq.s32.totalorder %s14, 0
    %p70 = por %p68, %p69
    %p71 = scmp.ne.s32.totalorder %s59, %s60
    %p72 = scmp.eq.s32.totalorder %s15, 7
    %p73 = por %p71, %p72
    %p75 = scmp.ne.s32.totalorder %s60, %s74
    %p76 = scmp.eq.s32.totalorder %s15, 0
    %p77 = por %p75, %p76
    %s79 = sadd.s32 %s78, 1
    %p82 = scmp.eq.s32.totalorder %s9, 7
    %p83 = scmp.ne.s32.totalorder %s78, %s80
    %p84 = scmp.eq.s32.totalorder %s9, 0
    %p85 = por %p83, %p84
    %p86 = scmp.ne.s32.totalorder %s78, %s80
    %p87 = scmp.eq.s32.totalorder %s14, 7
    %p88 = por %p86, %p87
    %p89 = scmp.ne.s32.totalorder %s80, %s81
    %p90 = scmp.eq.s32.totalorder %s14, 0
    %p91 = por %p89, %p90
    %p92 = scmp.ne.s32.totalorder %s80, %s81
    %p93 = scmp.eq.s32.totalorder %s15, 7
    %p94 = por %p92, %p93
    %p96 = scmp.ne.s32.totalorder %s81, %s95
    %p97 = scmp.eq.s32.totalorder %s15, 0
    %p98 = por %p96, %p97
    %s99 = ssub.s32 %s16, %s28
    %s100 = ssub.s32 %s17, %s24
    %s101 = sor.u32 %s99, %s100
    %p102 = scmp.eq.s32.totalorder %s101, 0
    %s104 = sadd.s32 %s103, 1
    %s105 = scalar_select %p102, %s103, %s104
    %p108 = pneg %p102
    %p109 = scmp.eq.s32.totalorder %s9, 7
    %p110 = por %p108, %p109
    %p111 = scmp.ne.s32.totalorder %s103, %s106
    %p112 = scmp.eq.s32.totalorder %s9, 0
    %p113 = por %p111, %p112
    %p114 = scmp.ne.s32.totalorder %s103, %s106
    %p115 = scmp.eq.s32.totalorder %s14, 7
    %p116 = por %p114, %p115
    %p117 = scmp.ne.s32.totalorder %s106, %s107
    %p118 = scmp.eq.s32.totalorder %s14, 0
    %p119 = por %p117, %p118
    %p120 = scmp.ne.s32.totalorder %s106, %s107
    %p121 = scmp.eq.s32.totalorder %s15, 7
    %p122 = por %p120, %p121
    %p124 = scmp.ne.s32.totalorder %s107, %s123
    %p125 = scmp.eq.s32.totalorder %s15, 0
    %p126 = por %p124, %p125
    %p127 = scmp.le.s32.totalorder 1, %s9
    %p128 = scmp.lt.s32.totalorder %s9, 9
    %p129 = pnand %p127, %p128
    %p130 = pneg %p129
    // Predicated region
    $region9: #{nature_cnn_d_forward.5} parent=5 // pred_check
      _
    $region10: #{nature_cnn_d_forward.5} parent=5 // pred_check_branch
      %132 = sbr.rel (%p129) target = $region12
    $region11: #{nature_cnn_d_forward.5} parent=5 // pred_region
      %s133 = ssub.s32 %s9, 1
      // Predicated region
      $region13: #{nature_cnn_d_forward.5} parent=11 // pred_check
        %p134 = pneg %p70
      $region14: #{nature_cnn_d_forward.5} parent=11 // pred_check_branch
        %136 = sbr.rel (%p134) target = $region16
      $region15: #{nature_cnn_d_forward.5} parent=11 // pred_region
        _
      $region16: #{nature_cnn_d_forward.5} parent=11 // pred_fallthru
        _
      // Predicated region
      $region17: #{nature_cnn_d_forward.5} parent=11 // pred_check
        %p137 = pneg %p91
      $region18: #{nature_cnn_d_forward.5} parent=11 // pred_check_branch
        %139 = sbr.rel (%p137) target = $region20
      $region19: #{nature_cnn_d_forward.5} parent=11 // pred_region
        _
      $region20: #{nature_cnn_d_forward.5} parent=11 // pred_fallthru
        _
    $region12: #{nature_cnn_d_forward.5} parent=5 // pred_fallthru
      _
    %p140 = scmp.lt.s32.totalorder %s9, 8
    // Predicated region
    $region21: #{nature_cnn_d_forward.5} parent=5 // pred_check
      %p141 = pneg %p140
    $region22: #{nature_cnn_d_forward.5} parent=5 // pred_check_branch
      %143 = sbr.rel (%p141) target = $region24
    $region23: #{nature_cnn_d_forward.5} parent=5 // pred_region
      // Predicated region
      $region25: #{nature_cnn_d_forward.5} parent=23 // pred_check
        %p144 = pneg %p43
      $region26: #{nature_cnn_d_forward.5} parent=23 // pred_check_branch
        %146 = sbr.rel (%p144) target = $region28
      $region27: #{nature_cnn_d_forward.5} parent=23 // pred_region
        %s147 = smul.u32 64, %s17
        %p148 = scmp.lt.s32.totalorder %s16, 1
        %s149 = scalar_select %p148, %s16, 1
        %p150 = scmp.lt.s32.totalorder %s147, 255
        %s151 = scalar_select %p150, %s147, 255
        %s152 = smul.addr %s149, 256
        %s153 = sadd.s32 %s151, %s152
        %s154 = smul.addr %s153, 4
        %s155 = scalar_lea.vmem %s0, %s154
        %s156 = smul.u32 64, %s17
      $region28: #{nature_cnn_d_forward.5} parent=23 // pred_fallthru
        _
    $region24: #{nature_cnn_d_forward.5} parent=5 // pred_fallthru
      _
    %p157 = scmp.le.s32.totalorder 1, %s9
    %p158 = scmp.lt.s32.totalorder %s9, 9
    %p159 = pnand %p157, %p158
    %p160 = pneg %p159
    // Predicated region
    $region29: #{nature_cnn_d_forward.5} parent=5 // pred_check
      _
    $region30: #{nature_cnn_d_forward.5} parent=5 // pred_check_branch
      %162 = sbr.rel (%p159) target = $region32
    $region31: #{nature_cnn_d_forward.5} parent=5 // pred_region
      %s163 = ssub.s32 %s9, 1
      %s164 = smul.u32 64, %s19
      %p165 = scmp.lt.s32.totalorder %s18, 1
      %s166 = scalar_select %p165, %s18, 1
      %p167 = scmp.lt.s32.totalorder %s164, 255
      %s168 = scalar_select %p167, %s164, 255
      %s169 = smul.addr %s166, 256
      %s170 = sadd.s32 %s168, %s169
      %s171 = smul.addr %s170, 4
      %s172 = scalar_lea.vmem %s0, %s171
      %p173 = pneg %p49
      %p174 = pneg %p46
      %p175 = pneg %p70
      %p176 = pneg %p67
      %p177 = pneg %p91
      %p178 = pneg %p88
      %p179 = pneg %p119
      %p180 = pneg %p116
      %s181 = smul.u32 64, %s19
      %p182 = scmp.lt.s32.totalorder %s18, 1
      %s183 = scalar_select %p182, %s18, 1
      %p184 = scmp.lt.s32.totalorder %s181, 255
      %s185 = scalar_select %p184, %s181, 255
      %s186 = smul.addr %s183, 256
      %s187 = sadd.s32 %s185, %s186
      %s188 = smul.addr %s187, 8
      %s189 = scalar_lea.vmem %s3, %s188
      %s190 = smul.u32 64, %s19
      %p191 = scmp.lt.s32.totalorder %s18, 1
      %s192 = scalar_select %p191, %s18, 1
      %p193 = scmp.lt.s32.totalorder %s190, 255
      %s194 = scalar_select %p193, %s190, 255
      %s195 = smul.addr %s192, 256
      %s196 = sadd.s32 %s194, %s195
      %s197 = smul.addr %s196, 4
      %s198 = scalar_lea.vmem %s0, %s197
      %s199 = smul.u32 64, %s19
      %s200 = smul.u32 64, %s19
      %p201 = scmp.lt.s32.totalorder %s18, 1
      %s202 = scalar_select %p201, %s18, 1
      %p203 = scmp.lt.s32.totalorder %s200, 255
      %s204 = scalar_select %p203, %s200, 255
      %s205 = smul.addr %s202, 256
      %s206 = sadd.s32 %s204, %s205
      %s207 = smul.addr %s206, 8
      %s208 = scalar_lea.vmem %s3, %s207
      %s209 = smul.u32 64, %s19
      %v211 = vld [vmem:[%s198] sm:$0xf]
      %v212 = vld [vmem:[%s198 + $0x4] sm:$0xf]
      %v213 = vld [vmem:[%s198 + $0x8] sm:$0xf]
      %v214 = vld [vmem:[%s198 + $0xc] sm:$0xf]
      %v215 = vld [vmem:[%s198 + $0x10] sm:$0xf]
      %v216 = vld [vmem:[%s198 + $0x14] sm:$0xf]
      %v217 = vld [vmem:[%s198 + $0x18] sm:$0xf]
      %v218 = vld [vmem:[%s198 + $0x1c] sm:$0xf]
      %v219 = vld [vmem:[%s198 + $0x20] sm:$0xf]
      %v220 = vld [vmem:[%s198 + $0x24] sm:$0xf]
      %v221 = vld [vmem:[%s198 + $0x28] sm:$0xf]
      %v222 = vld [vmem:[%s198 + $0x2c] sm:$0xf]
      %v223 = vld [vmem:[%s198 + $0x30] sm:$0xf]
      %v224 = vld [vmem:[%s198 + $0x34] sm:$0xf]
      %v225 = vld [vmem:[%s198 + $0x38] sm:$0xf]
      %v226 = vld [vmem:[%s198 + $0x3c] sm:$0xf]
      %v227 = vld [vmem:[%s198 + $0x40] sm:$0xf]
      %v228 = vld [vmem:[%s198 + $0x44] sm:$0xf]
      %v229 = vld [vmem:[%s198 + $0x48] sm:$0xf]
      %v230 = vld [vmem:[%s198 + $0x4c] sm:$0xf]
      %v231 = vld [vmem:[%s198 + $0x50] sm:$0xf]
      %v232 = vld [vmem:[%s198 + $0x54] sm:$0xf]
      %v233 = vld [vmem:[%s198 + $0x58] sm:$0xf]
      %v234 = vld [vmem:[%s198 + $0x5c] sm:$0xf]
      %v235 = vld [vmem:[%s198 + $0x60] sm:$0xf]
      %v236 = vld [vmem:[%s198 + $0x64] sm:$0xf]
      %v237 = vld [vmem:[%s198 + $0x68] sm:$0xf]
      %v238 = vld [vmem:[%s198 + $0x6c] sm:$0xf]
      %v239 = vld [vmem:[%s198 + $0x70] sm:$0xf]
      %v240 = vld [vmem:[%s198 + $0x74] sm:$0xf]
      %v241 = vld [vmem:[%s198 + $0x78] sm:$0xf]
      %v242 = vld [vmem:[%s198 + $0x7c] sm:$0xf]
      %v243 = vld [vmem:[%s198 + $0x80] sm:$0xf]
      %v244 = vld [vmem:[%s198 + $0x84] sm:$0xf]
      %v245 = vld [vmem:[%s198 + $0x88] sm:$0xf]
      %v246 = vld [vmem:[%s198 + $0x8c] sm:$0xf]
      %v247 = vld [vmem:[%s198 + $0x90] sm:$0xf]
      %v248 = vld [vmem:[%s198 + $0x94] sm:$0xf]
      %v249 = vld [vmem:[%s198 + $0x98] sm:$0xf]
      %v250 = vld [vmem:[%s198 + $0x9c] sm:$0xf]
      %v251 = vld [vmem:[%s198 + $0xa0] sm:$0xf]
      %v252 = vld [vmem:[%s198 + $0xa4] sm:$0xf]
      %v253 = vld [vmem:[%s198 + $0xa8] sm:$0xf]
      %v254 = vld [vmem:[%s198 + $0xac] sm:$0xf]
      %v255 = vld [vmem:[%s198 + $0xb0] sm:$0xf]
      %v256 = vld [vmem:[%s198 + $0xb4] sm:$0xf]
      %v257 = vld [vmem:[%s198 + $0xb8] sm:$0xf]
      %v258 = vld [vmem:[%s198 + $0xbc] sm:$0xf]
      %v259 = vld [vmem:[%s198 + $0xc0] sm:$0xf]
      %v260 = vld [vmem:[%s198 + $0xc4] sm:$0xf]
      %v261 = vld [vmem:[%s198 + $0xc8] sm:$0xf]
      %v262 = vld [vmem:[%s198 + $0xcc] sm:$0xf]
      %v263 = vld [vmem:[%s198 + $0xd0] sm:$0xf]
      %v264 = vld [vmem:[%s198 + $0xd4] sm:$0xf]
      %v265 = vld [vmem:[%s198 + $0xd8] sm:$0xf]
      %v266 = vld [vmem:[%s198 + $0xdc] sm:$0xf]
      %v267 = vld [vmem:[%s198 + $0xe0] sm:$0xf]
      %v268 = vld [vmem:[%s198 + $0xe4] sm:$0xf]
      %v269 = vld [vmem:[%s198 + $0xe8] sm:$0xf]
      %v270 = vld [vmem:[%s198 + $0xec] sm:$0xf]
      %v271 = vld [vmem:[%s198 + $0xf0] sm:$0xf]
      %v272 = vld [vmem:[%s198 + $0xf4] sm:$0xf]
      %v273 = vld [vmem:[%s198 + $0xf8] sm:$0xf]
      %v274 = vld [vmem:[%s198 + $0xfc] sm:$0xf]
      %v275 = vld [vmem:[%s1] sm:$0xf]
      %v276 = vld [vmem:[%s1 + $0x4] sm:$0xf]
      %v277 = vld [vmem:[%s1 + $0x8] sm:$0xf]
      %v278 = vld [vmem:[%s1 + $0xc] sm:$0xf]
      %v279 = vld [vmem:[%s1 + $0x10] sm:$0xf]
      %v280 = vld [vmem:[%s1 + $0x14] sm:$0xf]
      %v281 = vld [vmem:[%s1 + $0x18] sm:$0xf]
      %v282 = vld [vmem:[%s1 + $0x1c] sm:$0xf]
      %v283 = vld [vmem:[%s2] sm:$0x1]
      %v285 = vperm.slane %v283, 0
      %v351 = vunpack.c.l.b16 %v211
      %v352 = vunpack.c.l.b16 %v212
      %v353 = vunpack.c.l.b16 %v213
      %v354 = vunpack.c.l.b16 %v214
      %v355 = vunpack.c.l.b16 %v215
      %v356 = vunpack.c.l.b16 %v216
      %v357 = vunpack.c.l.b16 %v217
      %v358 = vunpack.c.l.b16 %v218
      %v359 = vunpack.c.l.b16 %v219
      %v360 = vunpack.c.l.b16 %v220
      %v361 = vunpack.c.l.b16 %v221
      %v362 = vunpack.c.l.b16 %v222
      %v363 = vunpack.c.l.b16 %v223
      %v364 = vunpack.c.l.b16 %v224
      %v365 = vunpack.c.l.b16 %v225
      %v366 = vunpack.c.l.b16 %v226
      %v367 = vunpack.c.l.b16 %v227
      %v368 = vunpack.c.l.b16 %v228
      %v369 = vunpack.c.l.b16 %v229
      %v370 = vunpack.c.l.b16 %v230
      %v371 = vunpack.c.l.b16 %v231
      %v372 = vunpack.c.l.b16 %v232
      %v373 = vunpack.c.l.b16 %v233
      %v374 = vunpack.c.l.b16 %v234
      %v375 = vunpack.c.l.b16 %v235
      %v376 = vunpack.c.l.b16 %v236
      %v377 = vunpack.c.l.b16 %v237
      %v378 = vunpack.c.l.b16 %v238
      %v379 = vunpack.c.l.b16 %v239
      %v380 = vunpack.c.l.b16 %v240
      %v381 = vunpack.c.l.b16 %v241
      %v382 = vunpack.c.l.b16 %v242
      %v383 = vunpack.c.l.b16 %v243
      %v384 = vunpack.c.l.b16 %v244
      %v385 = vunpack.c.l.b16 %v245
      %v386 = vunpack.c.l.b16 %v246
      %v387 = vunpack.c.l.b16 %v247
      %v388 = vunpack.c.l.b16 %v248
      %v389 = vunpack.c.l.b16 %v249
      %v390 = vunpack.c.l.b16 %v250
      %v391 = vunpack.c.l.b16 %v251
      %v392 = vunpack.c.l.b16 %v252
      %v393 = vunpack.c.l.b16 %v253
      %v394 = vunpack.c.l.b16 %v254
      %v395 = vunpack.c.l.b16 %v255
      %v396 = vunpack.c.l.b16 %v256
      %v397 = vunpack.c.l.b16 %v257
      %v398 = vunpack.c.l.b16 %v258
      %v399 = vunpack.c.l.b16 %v259
      %v400 = vunpack.c.l.b16 %v260
      %v401 = vunpack.c.l.b16 %v261
      %v402 = vunpack.c.l.b16 %v262
      %v403 = vunpack.c.l.b16 %v263
      %v404 = vunpack.c.l.b16 %v264
      %v405 = vunpack.c.l.b16 %v265
      %v406 = vunpack.c.l.b16 %v266
      %v407 = vunpack.c.l.b16 %v267
      %v408 = vunpack.c.l.b16 %v268
      %v409 = vunpack.c.l.b16 %v269
      %v410 = vunpack.c.l.b16 %v270
      %v411 = vunpack.c.l.b16 %v271
      %v412 = vunpack.c.l.b16 %v272
      %v413 = vunpack.c.l.b16 %v273
      %v414 = vunpack.c.l.b16 %v274
      %v415 = vpack.c.b16 %v352, %v351
      %v416 = vpack.c.b16 %v354, %v353
      %v417 = vpack.c.b16 %v356, %v355
      %v418 = vpack.c.b16 %v358, %v357
      %v419 = vpack.c.b16 %v360, %v359
      %v420 = vpack.c.b16 %v362, %v361
      %v421 = vpack.c.b16 %v364, %v363
      %v422 = vpack.c.b16 %v366, %v365
      %v423 = vpack.c.b16 %v368, %v367
      %v424 = vpack.c.b16 %v370, %v369
      %v425 = vpack.c.b16 %v372, %v371
      %v426 = vpack.c.b16 %v374, %v373
      %v427 = vpack.c.b16 %v376, %v375
      %v428 = vpack.c.b16 %v378, %v377
      %v429 = vpack.c.b16 %v380, %v379
      %v430 = vpack.c.b16 %v382, %v381
      %v431 = vpack.c.b16 %v384, %v383
      %v432 = vpack.c.b16 %v386, %v385
      %v433 = vpack.c.b16 %v388, %v387
      %v434 = vpack.c.b16 %v390, %v389
      %v435 = vpack.c.b16 %v392, %v391
      %v436 = vpack.c.b16 %v394, %v393
      %v437 = vpack.c.b16 %v396, %v395
      %v438 = vpack.c.b16 %v398, %v397
      %v439 = vpack.c.b16 %v400, %v399
      %v440 = vpack.c.b16 %v402, %v401
      %v441 = vpack.c.b16 %v404, %v403
      %v442 = vpack.c.b16 %v406, %v405
      %v443 = vpack.c.b16 %v408, %v407
      %v444 = vpack.c.b16 %v410, %v409
      %v445 = vpack.c.b16 %v412, %v411
      %v446 = vpack.c.b16 %v414, %v413
      %v455 = vunpack.c.l.b16 %v275
      %v456 = vunpack.c.l.b16 %v276
      %v457 = vunpack.c.l.b16 %v277
      %v458 = vunpack.c.l.b16 %v278
      %v459 = vunpack.c.l.b16 %v279
      %v460 = vunpack.c.l.b16 %v280
      %v461 = vunpack.c.l.b16 %v281
      %v462 = vunpack.c.l.b16 %v282
      %v463 = vpack.c.b16 %v456, %v455
      %v464 = vpack.c.b16 %v458, %v457
      %v465 = vpack.c.b16 %v460, %v459
      %v466 = vpack.c.b16 %v462, %v461
      %vm471 = vcmask 523264
      %v473 = vsel %vm471, %v415, 0
      %v476 = vsel %vm471, %v416, 0
      %v479 = vsel %vm471, %v417, 0
      %v482 = vsel %vm471, %v418, 0
      %v485 = vsel %vm471, %v419, 0
      %v488 = vsel %vm471, %v420, 0
      %v491 = vsel %vm471, %v421, 0
      %v494 = vsel %vm471, %v422, 0
      %v497 = vsel %vm471, %v423, 0
      %v500 = vsel %vm471, %v424, 0
      %v503 = vsel %vm471, %v425, 0
      %v506 = vsel %vm471, %v426, 0
      %v509 = vsel %vm471, %v427, 0
      %v512 = vsel %vm471, %v428, 0
      %v515 = vsel %vm471, %v429, 0
      %v518 = vsel %vm471, %v430, 0
      %v521 = vsel %vm471, %v431, 0
      %v524 = vsel %vm471, %v432, 0
      %v527 = vsel %vm471, %v433, 0
      %v530 = vsel %vm471, %v434, 0
      %v533 = vsel %vm471, %v435, 0
      %v536 = vsel %vm471, %v436, 0
      %v539 = vsel %vm471, %v437, 0
      %v542 = vsel %vm471, %v438, 0
      %v545 = vsel %vm471, %v439, 0
      %v548 = vsel %vm471, %v440, 0
      %v551 = vsel %vm471, %v441, 0
      %v554 = vsel %vm471, %v442, 0
      %v557 = vsel %vm471, %v443, 0
      %v560 = vsel %vm471, %v444, 0
      %v563 = vsel %vm471, %v445, 0
      %v566 = vsel %vm471, %v446, 0
      %568 = vmatpush.bf16.msra.mxu0 0
      %569 = vmatpush.bf16.msra.mxu0 0
      %570 = vmatpush.bf16.msra.mxu0 0
      %571 = vmatpush.bf16.msra.mxu0 0
      %572 = vmatpush.bf16.msra.mxu0 %v466
      %573 = vmatpush.bf16.msra.mxu0 %v465
      %574 = vmatpush.bf16.msra.mxu0 %v464
      %575 = vmatpush.bf16.msra.mxu0 %v463
      %576 = vmatmul.bf16.gmra.mxu0 %v473
      %v577 = vpop.f32.mrf.mxu0
      %v578 = vadd.f32 %v285, %v577
      %v579 = vpop.f32.mrf.mxu0
      %v580 = vadd.f32 %v285, %v579
      %581 = vmatmul.bf16.gmra.mxu0 %v476
      %v582 = vpop.f32.mrf.mxu0
      %v583 = vadd.f32 %v285, %v582
      %v584 = vpop.f32.mrf.mxu0
      %v585 = vadd.f32 %v285, %v584
      %586 = vmatmul.bf16.gmra.mxu0 %v479
      %v587 = vpop.f32.mrf.mxu0
      %v588 = vadd.f32 %v285, %v587
      %v589 = vpop.f32.mrf.mxu0
      %v590 = vadd.f32 %v285, %v589
      %591 = vmatmul.bf16.gmra.mxu0 %v482
      %v592 = vpop.f32.mrf.mxu0
      %v593 = vadd.f32 %v285, %v592
      %v594 = vpop.f32.mrf.mxu0
      %v595 = vadd.f32 %v285, %v594
      %596 = vmatmul.bf16.gmra.mxu0 %v485
      %v597 = vpop.f32.mrf.mxu0
      %v598 = vadd.f32 %v285, %v597
      %v599 = vpop.f32.mrf.mxu0
      %v600 = vadd.f32 %v285, %v599
      %601 = vmatmul.bf16.gmra.mxu0 %v488
      %v602 = vpop.f32.mrf.mxu0
      %v603 = vadd.f32 %v285, %v602
      %v604 = vpop.f32.mrf.mxu0
      %v605 = vadd.f32 %v285, %v604
      %606 = vmatmul.bf16.gmra.mxu0 %v491
      %v607 = vpop.f32.mrf.mxu0
      %v608 = vadd.f32 %v285, %v607
      %v609 = vpop.f32.mrf.mxu0
      %v610 = vadd.f32 %v285, %v609
      %611 = vmatmul.bf16.gmra.mxu0 %v494
      %v612 = vpop.f32.mrf.mxu0
      %v613 = vadd.f32 %v285, %v612
      %v614 = vpop.f32.mrf.mxu0
      %v615 = vadd.f32 %v285, %v614
      %616 = vmatmul.bf16.gmra.mxu0 %v497
      %v617 = vpop.f32.mrf.mxu0
      %v618 = vadd.f32 %v285, %v617
      %v619 = vpop.f32.mrf.mxu0
      %v620 = vadd.f32 %v285, %v619
      %621 = vmatmul.bf16.gmra.mxu0 %v500
      %v622 = vpop.f32.mrf.mxu0
      %v623 = vadd.f32 %v285, %v622
      %v624 = vpop.f32.mrf.mxu0
      %v625 = vadd.f32 %v285, %v624
      %626 = vmatmul.bf16.gmra.mxu0 %v503
      %v627 = vpop.f32.mrf.mxu0
      %v628 = vadd.f32 %v285, %v627
      %v629 = vpop.f32.mrf.mxu0
      %v630 = vadd.f32 %v285, %v629
      %631 = vmatmul.bf16.gmra.mxu0 %v506
      %v632 = vpop.f32.mrf.mxu0
      %v633 = vadd.f32 %v285, %v632
      %v634 = vpop.f32.mrf.mxu0
      %v635 = vadd.f32 %v285, %v634
      %636 = vmatmul.bf16.gmra.mxu0 %v509
      %v637 = vpop.f32.mrf.mxu0
      %v638 = vadd.f32 %v285, %v637
      %v639 = vpop.f32.mrf.mxu0
      %v640 = vadd.f32 %v285, %v639
      %641 = vmatmul.bf16.gmra.mxu0 %v512
      %v642 = vpop.f32.mrf.mxu0
      %v643 = vadd.f32 %v285, %v642
      %v644 = vpop.f32.mrf.mxu0
      %v645 = vadd.f32 %v285, %v644
      %646 = vmatmul.bf16.gmra.mxu0 %v515
      %v647 = vpop.f32.mrf.mxu0
      %v648 = vadd.f32 %v285, %v647
      %v649 = vpop.f32.mrf.mxu0
      %v650 = vadd.f32 %v285, %v649
      %651 = vmatmul.bf16.gmra.mxu0 %v518
      %v652 = vpop.f32.mrf.mxu0
      %v653 = vadd.f32 %v285, %v652
      %v654 = vpop.f32.mrf.mxu0
      %v655 = vadd.f32 %v285, %v654
      %656 = vmatmul.bf16.gmra.mxu0 %v521
      %v657 = vpop.f32.mrf.mxu0
      %v658 = vadd.f32 %v285, %v657
      %v659 = vpop.f32.mrf.mxu0
      %v660 = vadd.f32 %v285, %v659
      %661 = vmatmul.bf16.gmra.mxu0 %v524
      %v662 = vpop.f32.mrf.mxu0
      %v663 = vadd.f32 %v285, %v662
      %v664 = vpop.f32.mrf.mxu0
      %v665 = vadd.f32 %v285, %v664
      %666 = vmatmul.bf16.gmra.mxu0 %v527
      %v667 = vpop.f32.mrf.mxu0
      %v668 = vadd.f32 %v285, %v667
      %v669 = vpop.f32.mrf.mxu0
      %v670 = vadd.f32 %v285, %v669
      %671 = vmatmul.bf16.gmra.mxu0 %v530
      %v672 = vpop.f32.mrf.mxu0
      %v673 = vadd.f32 %v285, %v672
      %v674 = vpop.f32.mrf.mxu0
      %v675 = vadd.f32 %v285, %v674
      %676 = vmatmul.bf16.gmra.mxu0 %v533
      %v677 = vpop.f32.mrf.mxu0
      %v678 = vadd.f32 %v285, %v677
      %v679 = vpop.f32.mrf.mxu0
      %v680 = vadd.f32 %v285, %v679
      %681 = vmatmul.bf16.gmra.mxu0 %v536
      %v682 = vpop.f32.mrf.mxu0
      %v683 = vadd.f32 %v285, %v682
      %v684 = vpop.f32.mrf.mxu0
      %v685 = vadd.f32 %v285, %v684
      %686 = vmatmul.bf16.gmra.mxu0 %v539
      %v687 = vpop.f32.mrf.mxu0
      %v688 = vadd.f32 %v285, %v687
      %v689 = vpop.f32.mrf.mxu0
      %v690 = vadd.f32 %v285, %v689
      %691 = vmatmul.bf16.gmra.mxu0 %v542
      %v692 = vpop.f32.mrf.mxu0
      %v693 = vadd.f32 %v285, %v692
      %v694 = vpop.f32.mrf.mxu0
      %v695 = vadd.f32 %v285, %v694
      %696 = vmatmul.bf16.gmra.mxu0 %v545
      %v697 = vpop.f32.mrf.mxu0
      %v698 = vadd.f32 %v285, %v697
      %v699 = vpop.f32.mrf.mxu0
      %v700 = vadd.f32 %v285, %v699
      %701 = vmatmul.bf16.gmra.mxu0 %v548
      %v702 = vpop.f32.mrf.mxu0
      %v703 = vadd.f32 %v285, %v702
      %v704 = vpop.f32.mrf.mxu0
      %v705 = vadd.f32 %v285, %v704
      %706 = vmatmul.bf16.gmra.mxu0 %v551
      %v707 = vpop.f32.mrf.mxu0
      %v708 = vadd.f32 %v285, %v707
      %v709 = vpop.f32.mrf.mxu0
      %v710 = vadd.f32 %v285, %v709
      %711 = vmatmul.bf16.gmra.mxu0 %v554
      %v712 = vpop.f32.mrf.mxu0
      %v713 = vadd.f32 %v285, %v712
      %v714 = vpop.f32.mrf.mxu0
      %v715 = vadd.f32 %v285, %v714
      %716 = vmatmul.bf16.gmra.mxu0 %v557
      %v717 = vpop.f32.mrf.mxu0
      %v718 = vadd.f32 %v285, %v717
      %v719 = vpop.f32.mrf.mxu0
      %v720 = vadd.f32 %v285, %v719
      %721 = vmatmul.bf16.gmra.mxu0 %v560
      %v722 = vpop.f32.mrf.mxu0
      %v723 = vadd.f32 %v285, %v722
      %v724 = vpop.f32.mrf.mxu0
      %v725 = vadd.f32 %v285, %v724
      %726 = vmatmul.bf16.gmra.mxu0 %v563
      %v727 = vpop.f32.mrf.mxu0
      %v728 = vadd.f32 %v285, %v727
      %v729 = vpop.f32.mrf.mxu0
      %v730 = vadd.f32 %v285, %v729
      %731 = vmatmul.bf16.gmra.mxu0 %v566
      %v732 = vpop.f32.mrf.mxu0
      %v733 = vadd.f32 %v285, %v732
      %v734 = vpop.f32.mrf.mxu0
      %v735 = vadd.f32 %v285, %v734
      %736 = vdwg.mxu0
      %v737 = vmax.f32 %v578, 0.0
      %v738 = vmax.f32 %v580, 0.0
      %v739 = vmax.f32 %v583, 0.0
      %v740 = vmax.f32 %v585, 0.0
      %v741 = vmax.f32 %v588, 0.0
      %v742 = vmax.f32 %v590, 0.0
      %v743 = vmax.f32 %v593, 0.0
      %v744 = vmax.f32 %v595, 0.0
      %v745 = vmax.f32 %v598, 0.0
      %v746 = vmax.f32 %v600, 0.0
      %v747 = vmax.f32 %v603, 0.0
      %v748 = vmax.f32 %v605, 0.0
      %v749 = vmax.f32 %v608, 0.0
      %v750 = vmax.f32 %v610, 0.0
      %v751 = vmax.f32 %v613, 0.0
      %v752 = vmax.f32 %v615, 0.0
      %v753 = vmax.f32 %v618, 0.0
      %v754 = vmax.f32 %v620, 0.0
      %v755 = vmax.f32 %v623, 0.0
      %v756 = vmax.f32 %v625, 0.0
      %v757 = vmax.f32 %v628, 0.0
      %v758 = vmax.f32 %v630, 0.0
      %v759 = vmax.f32 %v633, 0.0
      %v760 = vmax.f32 %v635, 0.0
      %v761 = vmax.f32 %v638, 0.0
      %v762 = vmax.f32 %v640, 0.0
      %v763 = vmax.f32 %v643, 0.0
      %v764 = vmax.f32 %v645, 0.0
      %v765 = vmax.f32 %v648, 0.0
      %v766 = vmax.f32 %v650, 0.0
      %v767 = vmax.f32 %v653, 0.0
      %v768 = vmax.f32 %v655, 0.0
      %v769 = vmax.f32 %v658, 0.0
      %v770 = vmax.f32 %v660, 0.0
      %v771 = vmax.f32 %v663, 0.0
      %v772 = vmax.f32 %v665, 0.0
      %v773 = vmax.f32 %v668, 0.0
      %v774 = vmax.f32 %v670, 0.0
      %v775 = vmax.f32 %v673, 0.0
      %v776 = vmax.f32 %v675, 0.0
      %v777 = vmax.f32 %v678, 0.0
      %v778 = vmax.f32 %v680, 0.0
      %v779 = vmax.f32 %v683, 0.0
      %v780 = vmax.f32 %v685, 0.0
      %v781 = vmax.f32 %v688, 0.0
      %v782 = vmax.f32 %v690, 0.0
      %v783 = vmax.f32 %v693, 0.0
      %v784 = vmax.f32 %v695, 0.0
      %v785 = vmax.f32 %v698, 0.0
      %v786 = vmax.f32 %v700, 0.0
      %v787 = vmax.f32 %v703, 0.0
      %v788 = vmax.f32 %v705, 0.0
      %v789 = vmax.f32 %v708, 0.0
      %v790 = vmax.f32 %v710, 0.0
      %v791 = vmax.f32 %v713, 0.0
      %v792 = vmax.f32 %v715, 0.0
      %v793 = vmax.f32 %v718, 0.0
      %v794 = vmax.f32 %v720, 0.0
      %v795 = vmax.f32 %v723, 0.0
      %v796 = vmax.f32 %v725, 0.0
      %v797 = vmax.f32 %v728, 0.0
      %v798 = vmax.f32 %v730, 0.0
      %v799 = vmax.f32 %v733, 0.0
      %v800 = vmax.f32 %v735, 0.0
      %801 = vst [vmem:[%s208] sm:$0xff] %v737
      %802 = vst [vmem:[%s208 + $0x8] sm:$0xff] %v738
      %803 = vst [vmem:[%s208 + $0x10] sm:$0xff] %v739
      %804 = vst [vmem:[%s208 + $0x18] sm:$0xff] %v740
      %805 = vst [vmem:[%s208 + $0x20] sm:$0xff] %v741
      %806 = vst [vmem:[%s208 + $0x28] sm:$0xff] %v742
      %807 = vst [vmem:[%s208 + $0x30] sm:$0xff] %v743
      %808 = vst [vmem:[%s208 + $0x38] sm:$0xff] %v744
      %809 = vst [vmem:[%s208 + $0x40] sm:$0xff] %v745
      %810 = vst [vmem:[%s208 + $0x48] sm:$0xff] %v746
      %811 = vst [vmem:[%s208 + $0x50] sm:$0xff] %v747
      %812 = vst [vmem:[%s208 + $0x58] sm:$0xff] %v748
      %813 = vst [vmem:[%s208 + $0x60] sm:$0xff] %v749
      %814 = vst [vmem:[%s208 + $0x68] sm:$0xff] %v750
      %815 = vst [vmem:[%s208 + $0x70] sm:$0xff] %v751
      %816 = vst [vmem:[%s208 + $0x78] sm:$0xff] %v752
      %817 = vst [vmem:[%s208 + $0x80] sm:$0xff] %v753
      %818 = vst [vmem:[%s208 + $0x88] sm:$0xff] %v754
      %819 = vst [vmem:[%s208 + $0x90] sm:$0xff] %v755
      %820 = vst [vmem:[%s208 + $0x98] sm:$0xff] %v756
      %821 = vst [vmem:[%s208 + $0xa0] sm:$0xff] %v757
      %822 = vst [vmem:[%s208 + $0xa8] sm:$0xff] %v758
      %823 = vst [vmem:[%s208 + $0xb0] sm:$0xff] %v759
      %824 = vst [vmem:[%s208 + $0xb8] sm:$0xff] %v760
      %825 = vst [vmem:[%s208 + $0xc0] sm:$0xff] %v761
      %826 = vst [vmem:[%s208 + $0xc8] sm:$0xff] %v762
      %827 = vst [vmem:[%s208 + $0xd0] sm:$0xff] %v763
      %828 = vst [vmem:[%s208 + $0xd8] sm:$0xff] %v764
      %829 = vst [vmem:[%s208 + $0xe0] sm:$0xff] %v765
      %830 = vst [vmem:[%s208 + $0xe8] sm:$0xff] %v766
      %831 = vst [vmem:[%s208 + $0xf0] sm:$0xff] %v767
      %832 = vst [vmem:[%s208 + $0xf8] sm:$0xff] %v768
      %833 = vst [vmem:[%s208 + $0x100] sm:$0xff] %v769
      %834 = vst [vmem:[%s208 + $0x108] sm:$0xff] %v770
      %835 = vst [vmem:[%s208 + $0x110] sm:$0xff] %v771
      %836 = vst [vmem:[%s208 + $0x118] sm:$0xff] %v772
      %837 = vst [vmem:[%s208 + $0x120] sm:$0xff] %v773
      %838 = vst [vmem:[%s208 + $0x128] sm:$0xff] %v774
      %839 = vst [vmem:[%s208 + $0x130] sm:$0xff] %v775
      %840 = vst [vmem:[%s208 + $0x138] sm:$0xff] %v776
      %841 = vst [vmem:[%s208 + $0x140] sm:$0xff] %v777
      %842 = vst [vmem:[%s208 + $0x148] sm:$0xff] %v778
      %843 = vst [vmem:[%s208 + $0x150] sm:$0xff] %v779
      %844 = vst [vmem:[%s208 + $0x158] sm:$0xff] %v780
      %845 = vst [vmem:[%s208 + $0x160] sm:$0xff] %v781
      %846 = vst [vmem:[%s208 + $0x168] sm:$0xff] %v782
      %847 = vst [vmem:[%s208 + $0x170] sm:$0xff] %v783
      %848 = vst [vmem:[%s208 + $0x178] sm:$0xff] %v784
      %849 = vst [vmem:[%s208 + $0x180] sm:$0xff] %v785
      %850 = vst [vmem:[%s208 + $0x188] sm:$0xff] %v786
      %851 = vst [vmem:[%s208 + $0x190] sm:$0xff] %v787
      %852 = vst [vmem:[%s208 + $0x198] sm:$0xff] %v788
      %853 = vst [vmem:[%s208 + $0x1a0] sm:$0xff] %v789
      %854 = vst [vmem:[%s208 + $0x1a8] sm:$0xff] %v790
      %855 = vst [vmem:[%s208 + $0x1b0] sm:$0xff] %v791
      %856 = vst [vmem:[%s208 + $0x1b8] sm:$0xff] %v792
      %857 = vst [vmem:[%s208 + $0x1c0] sm:$0xff] %v793
      %858 = vst [vmem:[%s208 + $0x1c8] sm:$0xff] %v794
      %859 = vst [vmem:[%s208 + $0x1d0] sm:$0xff] %v795
      %860 = vst [vmem:[%s208 + $0x1d8] sm:$0xff] %v796
      %861 = vst [vmem:[%s208 + $0x1e0] sm:$0xff] %v797
      %862 = vst [vmem:[%s208 + $0x1e8] sm:$0xff] %v798
      %863 = vst [vmem:[%s208 + $0x1f0] sm:$0xff] %v799
      %864 = vst [vmem:[%s208 + $0x1f8] sm:$0xff] %v800
      %s865 = smul.u32 64, %s19
      %p866 = scmp.lt.s32.totalorder %s18, 1
      %s867 = scalar_select %p866, %s18, 1
      %p868 = scmp.lt.s32.totalorder %s865, 255
      %s869 = scalar_select %p868, %s865, 255
      %s870 = smul.addr %s867, 256
      %s871 = sadd.s32 %s869, %s870
      %s872 = smul.addr %s871, 8
      %s873 = scalar_lea.vmem %s3, %s872
      // Predicated region
      $region33: #{nature_cnn_d_forward.5} parent=31 // pred_check
        %p874 = pneg %p116
      $region34: #{nature_cnn_d_forward.5} parent=31 // pred_check_branch
        %876 = sbr.rel (%p874) target = $region36
      $region35: #{nature_cnn_d_forward.5} parent=31 // pred_region
        %s877 = smul.u32 64, %s19
      $region36: #{nature_cnn_d_forward.5} parent=31 // pred_fallthru
        _
    $region32: #{nature_cnn_d_forward.5} parent=5 // pred_fallthru
      _
    %p878 = scmp.le.s32.totalorder 2, %s9
    // Predicated region
    $region37: #{nature_cnn_d_forward.5} parent=5 // pred_check
      %p879 = pneg %p878
    $region38: #{nature_cnn_d_forward.5} parent=5 // pred_check_branch
      %881 = sbr.rel (%p879) target = $region40
    $region39: #{nature_cnn_d_forward.5} parent=5 // pred_region
      %s882 = ssub.s32 %s9, 2
      // Predicated region
      $region41: #{nature_cnn_d_forward.5} parent=39 // pred_check
        %p883 = pneg %p122
      $region42: #{nature_cnn_d_forward.5} parent=39 // pred_check_branch
        %885 = sbr.rel (%p883) target = $region44
      $region43: #{nature_cnn_d_forward.5} parent=39 // pred_region
        %s886 = smul.u32 64, %s21
        %p887 = scmp.lt.s32.totalorder %s20, 1
        %s888 = scalar_select %p887, %s20, 1
        %p889 = scmp.lt.s32.totalorder %s886, 255
        %s890 = scalar_select %p889, %s886, 255
        %s891 = smul.addr %s888, 256
        %s892 = sadd.s32 %s890, %s891
        %s893 = smul.addr %s892, 8
        %s894 = scalar_lea.vmem %s3, %s893
      $region44: #{nature_cnn_d_forward.5} parent=39 // pred_fallthru
        _
    $region40: #{nature_cnn_d_forward.5} parent=5 // pred_fallthru
      _
  $region6: #{nature_cnn_d_forward.5} parent=0 // loop_footer
    %s13 = sadd.s32 1, %s9
  $region7: #{nature_cnn_d_forward.5} parent=0 // loop_footer_branch
    %8 = sbr.rel target = $region3
  $region8: #{nature_cnn_d_forward.5} parent=0 // loop_exit
    _

// kernel: nature_cnn_d_forward.6
$region0: #{nature_cnn_d_forward.6}
  #allocation0 [shape = 'u32[]', space=smem, size = 0x4, offset = 0x4, fixed_abs, tag = 'smem constant byte address 0x4 - core index']
  #allocation1 [shape = 'u32[72,128]{1,0:T(1,128)}', space=vmem, size = 0x9000, scoped, tag = 'internal scratch']
  %s0 = inlined_call_operand.vmem [shape: bf16[2,432,512], index: 0, kind: input, shape index: {}]
  %s1 = inlined_call_operand.vmem [shape: bf16[512,128], index: 1, kind: input, shape index: {}]
  %s2 = inlined_call_operand.vmem [shape: f32[1,128], index: 2, kind: input, shape index: {}]
  %s3 = inlined_call_operand.vmem [shape: f32[2,1,128], index: 3, kind: input, shape index: {}]
  %s4 = inlined_call_operand.vmem [shape: f32[2,432,128], index: 4, kind: output, shape index: {}]
  %s5 = sld [smem:[#allocation0]]
  $region49: #{nature_cnn_d_forward.6} parent=0
    _
  %s7 = ssub.s32 1, %s5
  %s8 = scalar_select 0, %s7, %s5
  loop: start=0, step=1, limit=4
  $region2: #{nature_cnn_d_forward.6} parent=0 // loop_pre_header
    _
  $region3: #{nature_cnn_d_forward.6} parent=0 // loop_header
    %s10 = sphi 0, %s14
    %p11 = scmp.ge.s32.totalorder %s10, 4
    %s17 = sphi 0, %s29
    %s18 = sphi 0, %s25
    %s19 = sphi 0, %s17
    %s20 = sphi 0, %s18
    %s21 = sphi 0, %s19
    %s22 = sphi 0, %s20
    %s34 = sphi 0, %s36
    %s37 = sphi 0, %s34
    %s38 = sphi 0, %s37
    %s54 = sphi 0, %s38
    %s58 = sphi 0, %s58
    %s60 = sphi 0, %s58
    %s61 = sphi 0, %s60
    %s75 = sphi 0, %s61
    %s79 = sphi 0, %s79
    %s81 = sphi 0, %s79
    %s82 = sphi 0, %s81
    %s96 = sphi 0, %s82
    %s102 = sphi 0, %s104
    %s105 = sphi 0, %s102
    %s106 = sphi 0, %s105
    %s122 = sphi 0, %s106
    %s130 = sphi 0, %s132
    %s133 = sphi 0, %s130
    %s134 = sphi 0, %s133
    %s150 = sphi 0, %s134
  $region4: #{nature_cnn_d_forward.6} parent=0 // loop_header_branch
    %13 = sbr.rel (%p11) target = $region8
  $region5: #{nature_cnn_d_forward.6} parent=0 // loop_body
    %s15 = ssub.s32 %s10, 1
    %s16 = ssub.s32 %s10, 2
    %s23 = sadd.s32 1, %s18
    %p24 = scmp.ge.s32.totalorder %s23, 1
    %s25 = scalar_select %p24, 0, %s23
    %s26 = sadd.s32 1, %s17
    %s27 = scalar_select %p24, %s26, %s17
    %p28 = scmp.ge.s32.totalorder %s27, 2
    %s29 = scalar_select %p28, 0, %s27
    %s30 = ssub.s32 %s17, %s29
    %s31 = ssub.s32 %s18, %s25
    %s32 = sor.u32 %s30, %s31
    %p33 = scmp.eq.s32.totalorder %s32, 0
    %s35 = sadd.s32 %s34, 1
    %s36 = scalar_select %p33, %s34, %s35
    %p39 = pneg %p33
    %p40 = scmp.eq.s32.totalorder %s10, 1
    %p41 = por %p39, %p40
    %p42 = scmp.ne.s32.totalorder %s34, %s37
    %p43 = scmp.eq.s32.totalorder %s10, 0
    %p44 = por %p42, %p43
    %p45 = scmp.ne.s32.totalorder %s34, %s37
    %p46 = scmp.eq.s32.totalorder %s15, 1
    %p47 = por %p45, %p46
    %p48 = scmp.ne.s32.totalorder %s37, %s38
    %p49 = scmp.eq.s32.totalorder %s15, 0
    %p50 = por %p48, %p49
    %p51 = scmp.ne.s32.totalorder %s37, %s38
    %p52 = scmp.eq.s32.totalorder %s16, 1
    %p53 = por %p51, %p52
    %p55 = scmp.ne.s32.totalorder %s38, %s54
    %p56 = scmp.eq.s32.totalorder %s16, 0
    %p57 = por %p55, %p56
    %s59 = sadd.s32 %s58, 1
    %p62 = scmp.eq.s32.totalorder %s10, 1
    %p63 = scmp.ne.s32.totalorder %s58, %s60
    %p64 = scmp.eq.s32.totalorder %s10, 0
    %p65 = por %p63, %p64
    %p66 = scmp.ne.s32.totalorder %s58, %s60
    %p67 = scmp.eq.s32.totalorder %s15, 1
    %p68 = por %p66, %p67
    %p69 = scmp.ne.s32.totalorder %s60, %s61
    %p70 = scmp.eq.s32.totalorder %s15, 0
    %p71 = por %p69, %p70
    %p72 = scmp.ne.s32.totalorder %s60, %s61
    %p73 = scmp.eq.s32.totalorder %s16, 1
    %p74 = por %p72, %p73
    %p76 = scmp.ne.s32.totalorder %s61, %s75
    %p77 = scmp.eq.s32.totalorder %s16, 0
    %p78 = por %p76, %p77
    %s80 = sadd.s32 %s79, 1
    %p83 = scmp.eq.s32.totalorder %s10, 1
    %p84 = scmp.ne.s32.totalorder %s79, %s81
    %p85 = scmp.eq.s32.totalorder %s10, 0
    %p86 = por %p84, %p85
    %p87 = scmp.ne.s32.totalorder %s79, %s81
    %p88 = scmp.eq.s32.totalorder %s15, 1
    %p89 = por %p87, %p88
    %p90 = scmp.ne.s32.totalorder %s81, %s82
    %p91 = scmp.eq.s32.totalorder %s15, 0
    %p92 = por %p90, %p91
    %p93 = scmp.ne.s32.totalorder %s81, %s82
    %p94 = scmp.eq.s32.totalorder %s16, 1
    %p95 = por %p93, %p94
    %p97 = scmp.ne.s32.totalorder %s82, %s96
    %p98 = scmp.eq.s32.totalorder %s16, 0
    %p99 = por %p97, %p98
    %s100 = ssub.s32 %s17, %s29
    %p101 = scmp.eq.s32.totalorder %s100, 0
    %s103 = sadd.s32 %s102, 1
    %s104 = scalar_select %p101, %s102, %s103
    %p107 = pneg %p101
    %p108 = scmp.eq.s32.totalorder %s10, 1
    %p109 = por %p107, %p108
    %p110 = scmp.ne.s32.totalorder %s102, %s105
    %p111 = scmp.eq.s32.totalorder %s10, 0
    %p112 = por %p110, %p111
    %p113 = scmp.ne.s32.totalorder %s102, %s105
    %p114 = scmp.eq.s32.totalorder %s15, 1
    %p115 = por %p113, %p114
    %p116 = scmp.ne.s32.totalorder %s105, %s106
    %p117 = scmp.eq.s32.totalorder %s15, 0
    %p118 = por %p116, %p117
    %p119 = scmp.ne.s32.totalorder %s105, %s106
    %p120 = scmp.eq.s32.totalorder %s16, 1
    %p121 = por %p119, %p120
    %p123 = scmp.ne.s32.totalorder %s106, %s122
    %p124 = scmp.eq.s32.totalorder %s16, 0
    %p125 = por %p123, %p124
    %s126 = ssub.s32 %s17, %s29
    %s127 = ssub.s32 %s18, %s25
    %s128 = sor.u32 %s126, %s127
    %p129 = scmp.eq.s32.totalorder %s128, 0
    %s131 = sadd.s32 %s130, 1
    %s132 = scalar_select %p129, %s130, %s131
    %p135 = pneg %p129
    %p136 = scmp.eq.s32.totalorder %s10, 1
    %p137 = por %p135, %p136
    %p138 = scmp.ne.s32.totalorder %s130, %s133
    %p139 = scmp.eq.s32.totalorder %s10, 0
    %p140 = por %p138, %p139
    %p141 = scmp.ne.s32.totalorder %s130, %s133
    %p142 = scmp.eq.s32.totalorder %s15, 1
    %p143 = por %p141, %p142
    %p144 = scmp.ne.s32.totalorder %s133, %s134
    %p145 = scmp.eq.s32.totalorder %s15, 0
    %p146 = por %p144, %p145
    %p147 = scmp.ne.s32.totalorder %s133, %s134
    %p148 = scmp.eq.s32.totalorder %s16, 1
    %p149 = por %p147, %p148
    %p151 = scmp.ne.s32.totalorder %s134, %s150
    %p152 = scmp.eq.s32.totalorder %s16, 0
    %p153 = por %p151, %p152
    %p154 = scmp.le.s32.totalorder 1, %s10
    %p155 = scmp.lt.s32.totalorder %s10, 3
    %p156 = pnand %p154, %p155
    %p157 = pneg %p156
    // Predicated region
    $region9: #{nature_cnn_d_forward.6} parent=5 // pred_check
      _
    $region10: #{nature_cnn_d_forward.6} parent=5 // pred_check_branch
      %159 = sbr.rel (%p156) target = $region12
    $region11: #{nature_cnn_d_forward.6} parent=5 // pred_region
      %s160 = ssub.s32 %s10, 1
      // Predicated region
      $region13: #{nature_cnn_d_forward.6} parent=11 // pred_check
        %p161 = pneg %p71
      $region14: #{nature_cnn_d_forward.6} parent=11 // pred_check_branch
        %163 = sbr.rel (%p161) target = $region16
      $region15: #{nature_cnn_d_forward.6} parent=11 // pred_region
        _
      $region16: #{nature_cnn_d_forward.6} parent=11 // pred_fallthru
        _
      // Predicated region
      $region17: #{nature_cnn_d_forward.6} parent=11 // pred_check
        %p164 = pneg %p92
      $region18: #{nature_cnn_d_forward.6} parent=11 // pred_check_branch
        %166 = sbr.rel (%p164) target = $region20
      $region19: #{nature_cnn_d_forward.6} parent=11 // pred_region
        _
      $region20: #{nature_cnn_d_forward.6} parent=11 // pred_fallthru
        _
    $region12: #{nature_cnn_d_forward.6} parent=5 // pred_fallthru
      _
    %p167 = scmp.lt.s32.totalorder %s10, 2
    // Predicated region
    $region21: #{nature_cnn_d_forward.6} parent=5 // pred_check
      %p168 = pneg %p167
    $region22: #{nature_cnn_d_forward.6} parent=5 // pred_check_branch
      %170 = sbr.rel (%p168) target = $region24
    $region23: #{nature_cnn_d_forward.6} parent=5 // pred_region
      // Predicated region
      $region25: #{nature_cnn_d_forward.6} parent=23 // pred_check
        %p171 = pneg %p44
      $region26: #{nature_cnn_d_forward.6} parent=23 // pred_check_branch
        %173 = sbr.rel (%p171) target = $region28
      $region27: #{nature_cnn_d_forward.6} parent=23 // pred_region
        %s174 = smul.u32 54, %s18
        %p175 = scmp.lt.s32.totalorder %s17, 1
        %s176 = scalar_select %p175, %s17, 1
        %p177 = scmp.lt.s32.totalorder %s174, 53
        %s178 = scalar_select %p177, %s174, 53
        %s179 = smul.addr %s178, 4
        %s180 = smul.addr %s176, 216
        %s181 = sadd.s32 %s179, %s180
        %s182 = smul.addr %s181, 4
        %s183 = scalar_lea.vmem %s0, %s182
        %s184 = smul.u32 54, %s18
      $region28: #{nature_cnn_d_forward.6} parent=23 // pred_fallthru
        _
      // Predicated region
      $region29: #{nature_cnn_d_forward.6} parent=23 // pred_check
        %p185 = pneg %p112
      $region30: #{nature_cnn_d_forward.6} parent=23 // pred_check_branch
        %187 = sbr.rel (%p185) target = $region32
      $region31: #{nature_cnn_d_forward.6} parent=23 // pred_region
        %p188 = scmp.lt.s32.totalorder %s17, 1
        %s189 = scalar_select %p188, %s17, 1
        %s190 = scalar_lea.vmem %s3, %s189
      $region32: #{nature_cnn_d_forward.6} parent=23 // pred_fallthru
        _
    $region24: #{nature_cnn_d_forward.6} parent=5 // pred_fallthru
      _
    %p191 = scmp.le.s32.totalorder 1, %s10
    %p192 = scmp.lt.s32.totalorder %s10, 3
    %p193 = pnand %p191, %p192
    %p194 = pneg %p193
    // Predicated region
    $region33: #{nature_cnn_d_forward.6} parent=5 // pred_check
      _
    $region34: #{nature_cnn_d_forward.6} parent=5 // pred_check_branch
      %196 = sbr.rel (%p193) target = $region36
    $region35: #{nature_cnn_d_forward.6} parent=5 // pred_region
      %s197 = ssub.s32 %s10, 1
      %s198 = smul.u32 54, %s20
      %p199 = scmp.lt.s32.totalorder %s19, 1
      %s200 = scalar_select %p199, %s19, 1
      %p201 = scmp.lt.s32.totalorder %s198, 53
      %s202 = scalar_select %p201, %s198, 53
      %s203 = smul.addr %s202, 4
      %s204 = smul.addr %s200, 216
      %s205 = sadd.s32 %s203, %s204
      %s206 = smul.addr %s205, 4
      %s207 = scalar_lea.vmem %s0, %s206
      %p208 = pneg %p50
      %p209 = pneg %p47
      %p210 = pneg %p71
      %p211 = pneg %p68
      %p212 = pneg %p92
      %p213 = pneg %p89
      %p214 = scmp.lt.s32.totalorder %s19, 1
      %s215 = scalar_select %p214, %s19, 1
      %s216 = scalar_lea.vmem %s3, %s215
      %p217 = pneg %p118
      %p218 = pneg %p115
      %p219 = pneg %p146
      %p220 = pneg %p143
      %s221 = smul.u32 54, %s20
      %p222 = scmp.lt.s32.totalorder %s19, 1
      %s223 = scalar_select %p222, %s19, 1
      %p224 = scmp.lt.s32.totalorder %s221, 53
      %s225 = scalar_select %p224, %s221, 53
      %s226 = smul.addr %s223, 54
      %s227 = sadd.s32 %s225, %s226
      %s228 = smul.addr %s227, 8
      %s229 = scalar_lea.vmem %s4, %s228
      %s230 = smul.u32 54, %s20
      %p231 = scmp.lt.s32.totalorder %s19, 1
      %s232 = scalar_select %p231, %s19, 1
      %p233 = scmp.lt.s32.totalorder %s230, 53
      %s234 = scalar_select %p233, %s230, 53
      %s235 = smul.addr %s234, 4
      %s236 = smul.addr %s232, 216
      %s237 = sadd.s32 %s235, %s236
      %s238 = smul.addr %s237, 4
      %s239 = scalar_lea.vmem %s0, %s238
      %s240 = smul.u32 54, %s20
      %p241 = scmp.lt.s32.totalorder %s19, 1
      %s242 = scalar_select %p241, %s19, 1
      %s243 = scalar_lea.vmem %s3, %s242
      %s244 = smul.u32 54, %s20
      %p245 = scmp.lt.s32.totalorder %s19, 1
      %s246 = scalar_select %p245, %s19, 1
      %p247 = scmp.lt.s32.totalorder %s244, 53
      %s248 = scalar_select %p247, %s244, 53
      %s249 = smul.addr %s246, 54
      %s250 = sadd.s32 %s248, %s249
      %s251 = smul.addr %s250, 8
      %s252 = scalar_lea.vmem %s4, %s251
      %s253 = smul.u32 54, %s20
      %v254 = vld [vmem:[%s239] sm:$0xff]
      %v255 = vld [vmem:[%s239 + $0x8] sm:$0xff]
      %v256 = vld [vmem:[%s239 + $0x10] sm:$0xff]
      %v257 = vld [vmem:[%s239 + $0x18] sm:$0xff]
      %v258 = vld [vmem:[%s239 + $0x20] sm:$0xff]
      %v259 = vld [vmem:[%s239 + $0x28] sm:$0xff]
      %v260 = vld [vmem:[%s239 + $0x30] sm:$0xff]
      %v261 = vld [vmem:[%s239 + $0x38] sm:$0xff]
      %v262 = vld [vmem:[%s239 + $0x40] sm:$0xff]
      %v263 = vld [vmem:[%s239 + $0x48] sm:$0xff]
      %v264 = vld [vmem:[%s239 + $0x50] sm:$0xff]
      %v265 = vld [vmem:[%s239 + $0x58] sm:$0xff]
      %v266 = vld [vmem:[%s239 + $0x60] sm:$0xff]
      %v267 = vld [vmem:[%s239 + $0x68] sm:$0xff]
      %v268 = vld [vmem:[%s239 + $0x70] sm:$0xff]
      %v269 = vld [vmem:[%s239 + $0x78] sm:$0xff]
      %v270 = vld [vmem:[%s239 + $0x80] sm:$0xff]
      %v271 = vld [vmem:[%s239 + $0x88] sm:$0xff]
      %v272 = vld [vmem:[%s239 + $0x90] sm:$0xff]
      %v273 = vld [vmem:[%s239 + $0x98] sm:$0xff]
      %v274 = vld [vmem:[%s239 + $0xa0] sm:$0xff]
      %v275 = vld [vmem:[%s239 + $0xa8] sm:$0xff]
      %v276 = vld [vmem:[%s239 + $0xb0] sm:$0xff]
      %v277 = vld [vmem:[%s239 + $0xb8] sm:$0xff]
      %v278 = vld [vmem:[%s239 + $0xc0] sm:$0xff]
      %v279 = vld [vmem:[%s239 + $0xc8] sm:$0xff]
      %v280 = vld [vmem:[%s239 + $0xd0] sm:$0xff]
      %v281 = vld [vmem:[%s239 + $0xd8] sm:$0xff]
      %v282 = vld [vmem:[%s239 + $0xe0] sm:$0xff]
      %v283 = vld [vmem:[%s239 + $0xe8] sm:$0xff]
      %v284 = vld [vmem:[%s239 + $0xf0] sm:$0xff]
      %v285 = vld [vmem:[%s239 + $0xf8] sm:$0xff]
      %v286 = vld [vmem:[%s239 + $0x100] sm:$0xff]
      %v287 = vld [vmem:[%s239 + $0x108] sm:$0xff]
      %v288 = vld [vmem:[%s239 + $0x110] sm:$0xff]
      %v289 = vld [vmem:[%s239 + $0x118] sm:$0xff]
      %v290 = vld [vmem:[%s239 + $0x120] sm:$0xff]
      %v291 = vld [vmem:[%s239 + $0x128] sm:$0xff]
      %v292 = vld [vmem:[%s239 + $0x130] sm:$0xff]
      %v293 = vld [vmem:[%s239 + $0x138] sm:$0xff]
      %v294 = vld [vmem:[%s239 + $0x140] sm:$0xff]
      %v295 = vld [vmem:[%s239 + $0x148] sm:$0xff]
      %v296 = vld [vmem:[%s239 + $0x150] sm:$0xff]
      %v297 = vld [vmem:[%s239 + $0x158] sm:$0xff]
      %v298 = vld [vmem:[%s239 + $0x160] sm:$0xff]
      %v299 = vld [vmem:[%s239 + $0x168] sm:$0xff]
      %v300 = vld [vmem:[%s239 + $0x170] sm:$0xff]
      %v301 = vld [vmem:[%s239 + $0x178] sm:$0xff]
      %v302 = vld [vmem:[%s239 + $0x180] sm:$0xff]
      %v303 = vld [vmem:[%s239 + $0x188] sm:$0xff]
      %v304 = vld [vmem:[%s239 + $0x190] sm:$0xff]
      %v305 = vld [vmem:[%s239 + $0x198] sm:$0xff]
      %v306 = vld [vmem:[%s239 + $0x1a0] sm:$0xff]
      %v307 = vld [vmem:[%s239 + $0x1a8] sm:$0xff]
      %v308 = vld [vmem:[%s239 + $0x1b0] sm:$0xff]
      %v309 = vld [vmem:[%s239 + $0x1b8] sm:$0xff]
      %v310 = vld [vmem:[%s239 + $0x1c0] sm:$0xff]
      %v311 = vld [vmem:[%s239 + $0x1c8] sm:$0xff]
      %v312 = vld [vmem:[%s239 + $0x1d0] sm:$0xff]
      %v313 = vld [vmem:[%s239 + $0x1d8] sm:$0xff]
      %v314 = vld [vmem:[%s239 + $0x1e0] sm:$0xff]
      %v315 = vld [vmem:[%s239 + $0x1e8] sm:$0xff]
      %v316 = vld [vmem:[%s239 + $0x1f0] sm:$0xff]
      %v317 = vld [vmem:[%s239 + $0x1f8] sm:$0xff]
      %v318 = vld [vmem:[%s239 + $0x200] sm:$0xff]
      %v319 = vld [vmem:[%s239 + $0x208] sm:$0xff]
      %v320 = vld [vmem:[%s239 + $0x210] sm:$0xff]
      %v321 = vld [vmem:[%s239 + $0x218] sm:$0xff]
      %v322 = vld [vmem:[%s239 + $0x220] sm:$0xff]
      %v323 = vld [vmem:[%s239 + $0x228] sm:$0xff]
      %v324 = vld [vmem:[%s239 + $0x230] sm:$0xff]
      %v325 = vld [vmem:[%s239 + $0x238] sm:$0xff]
      %v326 = vld [vmem:[%s239 + $0x240] sm:$0xff]
      %v327 = vld [vmem:[%s239 + $0x248] sm:$0xff]
      %v328 = vld [vmem:[%s239 + $0x250] sm:$0xff]
      %v329 = vld [vmem:[%s239 + $0x258] sm:$0xff]
      %v330 = vld [vmem:[%s239 + $0x260] sm:$0xff]
      %v331 = vld [vmem:[%s239 + $0x268] sm:$0xff]
      %v332 = vld [vmem:[%s239 + $0x270] sm:$0xff]
      %v333 = vld [vmem:[%s239 + $0x278] sm:$0xff]
      %v334 = vld [vmem:[%s239 + $0x280] sm:$0xff]
      %v335 = vld [vmem:[%s239 + $0x288] sm:$0xff]
      %v336 = vld [vmem:[%s239 + $0x290] sm:$0xff]
      %v337 = vld [vmem:[%s239 + $0x298] sm:$0xff]
      %v338 = vld [vmem:[%s239 + $0x2a0] sm:$0xff]
      %v339 = vld [vmem:[%s239 + $0x2a8] sm:$0xff]
      %v340 = vld [vmem:[%s239 + $0x2b0] sm:$0xff]
      %v341 = vld [vmem:[%s239 + $0x2b8] sm:$0xff]
      %v342 = vld [vmem:[%s239 + $0x2c0] sm:$0xff]
      %v343 = vld [vmem:[%s239 + $0x2c8] sm:$0xff]
      %v344 = vld [vmem:[%s239 + $0x2d0] sm:$0xff]
      %v345 = vld [vmem:[%s239 + $0x2d8] sm:$0xff]
      %v346 = vld [vmem:[%s239 + $0x2e0] sm:$0xff]
      %v347 = vld [vmem:[%s239 + $0x2e8] sm:$0xff]
      %v348 = vld [vmem:[%s239 + $0x2f0] sm:$0xff]
      %v349 = vld [vmem:[%s239 + $0x2f8] sm:$0xff]
      %v350 = vld [vmem:[%s239 + $0x300] sm:$0xff]
      %v351 = vld [vmem:[%s239 + $0x308] sm:$0xff]
      %v352 = vld [vmem:[%s239 + $0x310] sm:$0xff]
      %v353 = vld [vmem:[%s239 + $0x318] sm:$0xff]
      %v354 = vld [vmem:[%s239 + $0x320] sm:$0xff]
      %v355 = vld [vmem:[%s239 + $0x328] sm:$0xff]
      %v356 = vld [vmem:[%s239 + $0x330] sm:$0xff]
      %v357 = vld [vmem:[%s239 + $0x338] sm:$0xff]
      %v358 = vld [vmem:[%s239 + $0x340] sm:$0xff]
      %v359 = vld [vmem:[%s239 + $0x348] sm:$0xff]
      %v360 = vld [vmem:[%s239 + $0x350] sm:$0xff]
      %v361 = vld [vmem:[%s239 + $0x358] sm:$0xff]
      %v362 = vld [vmem:[%s1] sm:$0xf]
      %v363 = vld [vmem:[%s1 + $0x4] sm:$0xf]
      %v364 = vld [vmem:[%s1 + $0x8] sm:$0xf]
      %v365 = vld [vmem:[%s1 + $0xc] sm:$0xf]
      %v366 = vld [vmem:[%s1 + $0x10] sm:$0xf]
      %v367 = vld [vmem:[%s1 + $0x14] sm:$0xf]
      %v368 = vld [vmem:[%s1 + $0x18] sm:$0xf]
      %v369 = vld [vmem:[%s1 + $0x1c] sm:$0xf]
      %v370 = vld [vmem:[%s1 + $0x20] sm:$0xf]
      %v371 = vld [vmem:[%s1 + $0x24] sm:$0xf]
      %v372 = vld [vmem:[%s1 + $0x28] sm:$0xf]
      %v373 = vld [vmem:[%s1 + $0x2c] sm:$0xf]
      %v374 = vld [vmem:[%s1 + $0x30] sm:$0xf]
      %v375 = vld [vmem:[%s1 + $0x34] sm:$0xf]
      %v376 = vld [vmem:[%s1 + $0x38] sm:$0xf]
      %v377 = vld [vmem:[%s1 + $0x3c] sm:$0xf]
      %v378 = vld [vmem:[%s1 + $0x40] sm:$0xf]
      %v379 = vld [vmem:[%s1 + $0x44] sm:$0xf]
      %v380 = vld [vmem:[%s1 + $0x48] sm:$0xf]
      %v381 = vld [vmem:[%s1 + $0x4c] sm:$0xf]
      %v382 = vld [vmem:[%s1 + $0x50] sm:$0xf]
      %v383 = vld [vmem:[%s1 + $0x54] sm:$0xf]
      %v384 = vld [vmem:[%s1 + $0x58] sm:$0xf]
      %v385 = vld [vmem:[%s1 + $0x5c] sm:$0xf]
      %v386 = vld [vmem:[%s1 + $0x60] sm:$0xf]
      %v387 = vld [vmem:[%s1 + $0x64] sm:$0xf]
      %v388 = vld [vmem:[%s1 + $0x68] sm:$0xf]
      %v389 = vld [vmem:[%s1 + $0x6c] sm:$0xf]
      %v390 = vld [vmem:[%s1 + $0x70] sm:$0xf]
      %v391 = vld [vmem:[%s1 + $0x74] sm:$0xf]
      %v392 = vld [vmem:[%s1 + $0x78] sm:$0xf]
      %v393 = vld [vmem:[%s1 + $0x7c] sm:$0xf]
      %v394 = vld [vmem:[%s1 + $0x80] sm:$0xf]
      %v395 = vld [vmem:[%s1 + $0x84] sm:$0xf]
      %v396 = vld [vmem:[%s1 + $0x88] sm:$0xf]
      %v397 = vld [vmem:[%s1 + $0x8c] sm:$0xf]
      %v398 = vld [vmem:[%s1 + $0x90] sm:$0xf]
      %v399 = vld [vmem:[%s1 + $0x94] sm:$0xf]
      %v400 = vld [vmem:[%s1 + $0x98] sm:$0xf]
      %v401 = vld [vmem:[%s1 + $0x9c] sm:$0xf]
      %v402 = vld [vmem:[%s1 + $0xa0] sm:$0xf]
      %v403 = vld [vmem:[%s1 + $0xa4] sm:$0xf]
      %v404 = vld [vmem:[%s1 + $0xa8] sm:$0xf]
      %v405 = vld [vmem:[%s1 + $0xac] sm:$0xf]
      %v406 = vld [vmem:[%s1 + $0xb0] sm:$0xf]
      %v407 = vld [vmem:[%s1 + $0xb4] sm:$0xf]
      %v408 = vld [vmem:[%s1 + $0xb8] sm:$0xf]
      %v409 = vld [vmem:[%s1 + $0xbc] sm:$0xf]
      %v410 = vld [vmem:[%s1 + $0xc0] sm:$0xf]
      %v411 = vld [vmem:[%s1 + $0xc4] sm:$0xf]
      %v412 = vld [vmem:[%s1 + $0xc8] sm:$0xf]
      %v413 = vld [vmem:[%s1 + $0xcc] sm:$0xf]
      %v414 = vld [vmem:[%s1 + $0xd0] sm:$0xf]
      %v415 = vld [vmem:[%s1 + $0xd4] sm:$0xf]
      %v416 = vld [vmem:[%s1 + $0xd8] sm:$0xf]
      %v417 = vld [vmem:[%s1 + $0xdc] sm:$0xf]
      %v418 = vld [vmem:[%s1 + $0xe0] sm:$0xf]
      %v419 = vld [vmem:[%s1 + $0xe4] sm:$0xf]
      %v420 = vld [vmem:[%s1 + $0xe8] sm:$0xf]
      %v421 = vld [vmem:[%s1 + $0xec] sm:$0xf]
      %v422 = vld [vmem:[%s1 + $0xf0] sm:$0xf]
      %v423 = vld [vmem:[%s1 + $0xf4] sm:$0xf]
      %v424 = vld [vmem:[%s1 + $0xf8] sm:$0xf]
      %v425 = vld [vmem:[%s1 + $0xfc] sm:$0xf]
      %v426 = vld [vmem:[%s2] sm:$0x1]
      %v428 = vperm.slane %v426, 0
      %v538 = vunpack.c.l.b16 %v254
      %v539 = vunpack.c.h.b16 %v254
      %v540 = vunpack.c.l.b16 %v255
      %v541 = vunpack.c.h.b16 %v255
      %v542 = vunpack.c.l.b16 %v256
      %v543 = vunpack.c.h.b16 %v256
      %v544 = vunpack.c.l.b16 %v257
      %v545 = vunpack.c.h.b16 %v257
      %v546 = vunpack.c.l.b16 %v258
      %v547 = vunpack.c.h.b16 %v258
      %v548 = vunpack.c.l.b16 %v259
      %v549 = vunpack.c.h.b16 %v259
      %v550 = vunpack.c.l.b16 %v260
      %v551 = vunpack.c.h.b16 %v260
      %v552 = vunpack.c.l.b16 %v261
      %v553 = vunpack.c.h.b16 %v261
      %v554 = vunpack.c.l.b16 %v262
      %v555 = vunpack.c.h.b16 %v262
      %v556 = vunpack.c.l.b16 %v263
      %v557 = vunpack.c.h.b16 %v263
      %v558 = vunpack.c.l.b16 %v264
      %v559 = vunpack.c.h.b16 %v264
      %v560 = vunpack.c.l.b16 %v265
      %v561 = vunpack.c.h.b16 %v265
      %v562 = vunpack.c.l.b16 %v266
      %v563 = vunpack.c.h.b16 %v266
      %v564 = vunpack.c.l.b16 %v267
      %v565 = vunpack.c.h.b16 %v267
      %v566 = vunpack.c.l.b16 %v268
      %v567 = vunpack.c.h.b16 %v268
      %v568 = vunpack.c.l.b16 %v269
      %v569 = vunpack.c.h.b16 %v269
      %v570 = vunpack.c.l.b16 %v270
      %v571 = vunpack.c.h.b16 %v270
      %v572 = vunpack.c.l.b16 %v271
      %v573 = vunpack.c.h.b16 %v271
      %v574 = vunpack.c.l.b16 %v272
      %v575 = vunpack.c.h.b16 %v272
      %v576 = vunpack.c.l.b16 %v273
      %v577 = vunpack.c.h.b16 %v273
      %v578 = vunpack.c.l.b16 %v274
      %v579 = vunpack.c.h.b16 %v274
      %v580 = vunpack.c.l.b16 %v275
      %v581 = vunpack.c.h.b16 %v275
      %v582 = vunpack.c.l.b16 %v276
      %v583 = vunpack.c.h.b16 %v276
      %v584 = vunpack.c.l.b16 %v277
      %v585 = vunpack.c.h.b16 %v277
      %v586 = vunpack.c.l.b16 %v278
      %v587 = vunpack.c.h.b16 %v278
      %v588 = vunpack.c.l.b16 %v279
      %v589 = vunpack.c.h.b16 %v279
      %v590 = vunpack.c.l.b16 %v280
      %v591 = vunpack.c.h.b16 %v280
      %v592 = vunpack.c.l.b16 %v281
      %v593 = vunpack.c.h.b16 %v281
      %v594 = vunpack.c.l.b16 %v282
      %v595 = vunpack.c.h.b16 %v282
      %v596 = vunpack.c.l.b16 %v283
      %v597 = vunpack.c.h.b16 %v283
      %v598 = vunpack.c.l.b16 %v284
      %v599 = vunpack.c.h.b16 %v284
      %v600 = vunpack.c.l.b16 %v285
      %v601 = vunpack.c.h.b16 %v285
      %v602 = vunpack.c.l.b16 %v286
      %v603 = vunpack.c.h.b16 %v286
      %v604 = vunpack.c.l.b16 %v287
      %v605 = vunpack.c.h.b16 %v287
      %v606 = vunpack.c.l.b16 %v288
      %v607 = vunpack.c.h.b16 %v288
      %v608 = vunpack.c.l.b16 %v289
      %v609 = vunpack.c.h.b16 %v289
      %v610 = vunpack.c.l.b16 %v290
      %v611 = vunpack.c.h.b16 %v290
      %v612 = vunpack.c.l.b16 %v291
      %v613 = vunpack.c.h.b16 %v291
      %v614 = vunpack.c.l.b16 %v292
      %v615 = vunpack.c.h.b16 %v292
      %v616 = vunpack.c.l.b16 %v293
      %v617 = vunpack.c.h.b16 %v293
      %v618 = vunpack.c.l.b16 %v294
      %v619 = vunpack.c.h.b16 %v294
      %v620 = vunpack.c.l.b16 %v295
      %v621 = vunpack.c.h.b16 %v295
      %v622 = vunpack.c.l.b16 %v296
      %v623 = vunpack.c.h.b16 %v296
      %v624 = vunpack.c.l.b16 %v297
      %v625 = vunpack.c.h.b16 %v297
      %v626 = vunpack.c.l.b16 %v298
      %v627 = vunpack.c.h.b16 %v298
      %v628 = vunpack.c.l.b16 %v299
      %v629 = vunpack.c.h.b16 %v299
      %v630 = vunpack.c.l.b16 %v300
      %v631 = vunpack.c.h.b16 %v300
      %v632 = vunpack.c.l.b16 %v301
      %v633 = vunpack.c.h.b16 %v301
      %v634 = vunpack.c.l.b16 %v302
      %v635 = vunpack.c.h.b16 %v302
      %v636 = vunpack.c.l.b16 %v303
      %v637 = vunpack.c.h.b16 %v303
      %v638 = vunpack.c.l.b16 %v304
      %v639 = vunpack.c.h.b16 %v304
      %v640 = vunpack.c.l.b16 %v305
      %v641 = vunpack.c.h.b16 %v305
      %v642 = vunpack.c.l.b16 %v306
      %v643 = vunpack.c.h.b16 %v306
      %v644 = vunpack.c.l.b16 %v307
      %v645 = vunpack.c.h.b16 %v307
      %v646 = vunpack.c.l.b16 %v308
      %v647 = vunpack.c.h.b16 %v308
      %v648 = vunpack.c.l.b16 %v309
      %v649 = vunpack.c.h.b16 %v309
      %v650 = vunpack.c.l.b16 %v310
      %v651 = vunpack.c.h.b16 %v310
      %v652 = vunpack.c.l.b16 %v311
      %v653 = vunpack.c.h.b16 %v311
      %v654 = vunpack.c.l.b16 %v312
      %v655 = vunpack.c.h.b16 %v312
      %v656 = vunpack.c.l.b16 %v313
      %v657 = vunpack.c.h.b16 %v313
      %v658 = vunpack.c.l.b16 %v314
      %v659 = vunpack.c.h.b16 %v314
      %v660 = vunpack.c.l.b16 %v315
      %v661 = vunpack.c.h.b16 %v315
      %v662 = vunpack.c.l.b16 %v316
      %v663 = vunpack.c.h.b16 %v316
      %v664 = vunpack.c.l.b16 %v317
      %v665 = vunpack.c.h.b16 %v317
      %v666 = vunpack.c.l.b16 %v318
      %v667 = vunpack.c.h.b16 %v318
      %v668 = vunpack.c.l.b16 %v319
      %v669 = vunpack.c.h.b16 %v319
      %v670 = vunpack.c.l.b16 %v320
      %v671 = vunpack.c.h.b16 %v320
      %v672 = vunpack.c.l.b16 %v321
      %v673 = vunpack.c.h.b16 %v321
      %v674 = vunpack.c.l.b16 %v322
      %v675 = vunpack.c.h.b16 %v322
      %v676 = vunpack.c.l.b16 %v323
      %v677 = vunpack.c.h.b16 %v323
      %v678 = vunpack.c.l.b16 %v324
      %v679 = vunpack.c.h.b16 %v324
      %v680 = vunpack.c.l.b16 %v325
      %v681 = vunpack.c.h.b16 %v325
      %v682 = vunpack.c.l.b16 %v326
      %v683 = vunpack.c.h.b16 %v326
      %v684 = vunpack.c.l.b16 %v327
      %v685 = vunpack.c.h.b16 %v327
      %v686 = vunpack.c.l.b16 %v328
      %v687 = vunpack.c.h.b16 %v328
      %v688 = vunpack.c.l.b16 %v329
      %v689 = vunpack.c.h.b16 %v329
      %v690 = vunpack.c.l.b16 %v330
      %v691 = vunpack.c.h.b16 %v330
      %v692 = vunpack.c.l.b16 %v331
      %v693 = vunpack.c.h.b16 %v331
      %v694 = vunpack.c.l.b16 %v332
      %v695 = vunpack.c.h.b16 %v332
      %v696 = vunpack.c.l.b16 %v333
      %v697 = vunpack.c.h.b16 %v333
      %v698 = vunpack.c.l.b16 %v334
      %v699 = vunpack.c.h.b16 %v334
      %v700 = vunpack.c.l.b16 %v335
      %v701 = vunpack.c.h.b16 %v335
      %v702 = vunpack.c.l.b16 %v336
      %v703 = vunpack.c.h.b16 %v336
      %v704 = vunpack.c.l.b16 %v337
      %v705 = vunpack.c.h.b16 %v337
      %v706 = vunpack.c.l.b16 %v338
      %v707 = vunpack.c.h.b16 %v338
      %v708 = vunpack.c.l.b16 %v339
      %v709 = vunpack.c.h.b16 %v339
      %v710 = vunpack.c.l.b16 %v340
      %v711 = vunpack.c.h.b16 %v340
      %v712 = vunpack.c.l.b16 %v341
      %v713 = vunpack.c.h.b16 %v341
      %v714 = vunpack.c.l.b16 %v342
      %v715 = vunpack.c.h.b16 %v342
      %v716 = vunpack.c.l.b16 %v343
      %v717 = vunpack.c.h.b16 %v343
      %v718 = vunpack.c.l.b16 %v344
      %v719 = vunpack.c.h.b16 %v344
      %v720 = vunpack.c.l.b16 %v345
      %v721 = vunpack.c.h.b16 %v345
      %v722 = vunpack.c.l.b16 %v346
      %v723 = vunpack.c.h.b16 %v346
      %v724 = vunpack.c.l.b16 %v347
      %v725 = vunpack.c.h.b16 %v347
      %v726 = vunpack.c.l.b16 %v348
      %v727 = vunpack.c.h.b16 %v348
      %v728 = vunpack.c.l.b16 %v349
      %v729 = vunpack.c.h.b16 %v349
      %v730 = vunpack.c.l.b16 %v350
      %v731 = vunpack.c.h.b16 %v350
      %v732 = vunpack.c.l.b16 %v351
      %v733 = vunpack.c.h.b16 %v351
      %v734 = vunpack.c.l.b16 %v352
      %v735 = vunpack.c.h.b16 %v352
      %v736 = vunpack.c.l.b16 %v353
      %v737 = vunpack.c.h.b16 %v353
      %v738 = vunpack.c.l.b16 %v354
      %v739 = vunpack.c.h.b16 %v354
      %v740 = vunpack.c.l.b16 %v355
      %v741 = vunpack.c.h.b16 %v355
      %v742 = vunpack.c.l.b16 %v356
      %v743 = vunpack.c.h.b16 %v356
      %v744 = vunpack.c.l.b16 %v357
      %v745 = vunpack.c.h.b16 %v357
      %v746 = vunpack.c.l.b16 %v358
      %v747 = vunpack.c.h.b16 %v358
      %v748 = vunpack.c.l.b16 %v359
      %v749 = vunpack.c.h.b16 %v359
      %v750 = vunpack.c.l.b16 %v360
      %v751 = vunpack.c.h.b16 %v360
      %v752 = vunpack.c.l.b16 %v361
      %v753 = vunpack.c.h.b16 %v361
      %v754 = vpack.c.b16 %v542, %v538
      %v755 = vpack.c.b16 %v543, %v539
      %v756 = vpack.c.b16 %v544, %v540
      %v757 = vpack.c.b16 %v545, %v541
      %v758 = vpack.c.b16 %v550, %v546
      %v759 = vpack.c.b16 %v551, %v547
      %v760 = vpack.c.b16 %v552, %v548
      %v761 = vpack.c.b16 %v553, %v549
      %v762 = vpack.c.b16 %v558, %v554
      %v763 = vpack.c.b16 %v559, %v555
      %v764 = vpack.c.b16 %v560, %v556
      %v765 = vpack.c.b16 %v561, %v557
      %v766 = vpack.c.b16 %v566, %v562
      %v767 = vpack.c.b16 %v567, %v563
      %v768 = vpack.c.b16 %v568, %v564
      %v769 = vpack.c.b16 %v569, %v565
      %v770 = vpack.c.b16 %v574, %v570
      %v771 = vpack.c.b16 %v575, %v571
      %v772 = vpack.c.b16 %v576, %v572
      %v773 = vpack.c.b16 %v577, %v573
      %v774 = vpack.c.b16 %v582, %v578
      %v775 = vpack.c.b16 %v583, %v579
      %v776 = vpack.c.b16 %v584, %v580
      %v777 = vpack.c.b16 %v585, %v581
      %v778 = vpack.c.b16 %v590, %v586
      %v779 = vpack.c.b16 %v591, %v587
      %v780 = vpack.c.b16 %v592, %v588
      %v781 = vpack.c.b16 %v593, %v589
      %v782 = vpack.c.b16 %v598, %v594
      %v783 = vpack.c.b16 %v599, %v595
      %v784 = vpack.c.b16 %v600, %v596
      %v785 = vpack.c.b16 %v601, %v597
      %v786 = vpack.c.b16 %v606, %v602
      %v787 = vpack.c.b16 %v607, %v603
      %v788 = vpack.c.b16 %v608, %v604
      %v789 = vpack.c.b16 %v609, %v605
      %v790 = vpack.c.b16 %v614, %v610
      %v791 = vpack.c.b16 %v615, %v611
      %v792 = vpack.c.b16 %v616, %v612
      %v793 = vpack.c.b16 %v617, %v613
      %v794 = vpack.c.b16 %v622, %v618
      %v795 = vpack.c.b16 %v623, %v619
      %v796 = vpack.c.b16 %v624, %v620
      %v797 = vpack.c.b16 %v625, %v621
      %v798 = vpack.c.b16 %v630, %v626
      %v799 = vpack.c.b16 %v631, %v627
      %v800 = vpack.c.b16 %v632, %v628
      %v801 = vpack.c.b16 %v633, %v629
      %v802 = vpack.c.b16 %v638, %v634
      %v803 = vpack.c.b16 %v639, %v635
      %v804 = vpack.c.b16 %v640, %v636
      %v805 = vpack.c.b16 %v641, %v637
      %v806 = vpack.c.b16 %v646, %v642
      %v807 = vpack.c.b16 %v647, %v643
      %v808 = vpack.c.b16 %v648, %v644
      %v809 = vpack.c.b16 %v649, %v645
      %v810 = vpack.c.b16 %v654, %v650
      %v811 = vpack.c.b16 %v655, %v651
      %v812 = vpack.c.b16 %v656, %v652
      %v813 = vpack.c.b16 %v657, %v653
      %v814 = vpack.c.b16 %v662, %v658
      %v815 = vpack.c.b16 %v663, %v659
      %v816 = vpack.c.b16 %v664, %v660
      %v817 = vpack.c.b16 %v665, %v661
      %v818 = vpack.c.b16 %v670, %v666
      %v819 = vpack.c.b16 %v671, %v667
      %v820 = vpack.c.b16 %v672, %v668
      %v821 = vpack.c.b16 %v673, %v669
      %v822 = vpack.c.b16 %v678, %v674
      %v823 = vpack.c.b16 %v679, %v675
      %v824 = vpack.c.b16 %v680, %v676
      %v825 = vpack.c.b16 %v681, %v677
      %v826 = vpack.c.b16 %v686, %v682
      %v827 = vpack.c.b16 %v687, %v683
      %v828 = vpack.c.b16 %v688, %v684
      %v829 = vpack.c.b16 %v689, %v685
      %v830 = vpack.c.b16 %v694, %v690
      %v831 = vpack.c.b16 %v695, %v691
      %v832 = vpack.c.b16 %v696, %v692
      %v833 = vpack.c.b16 %v697, %v693
      %v834 = vpack.c.b16 %v702, %v698
      %v835 = vpack.c.b16 %v703, %v699
      %v836 = vpack.c.b16 %v704, %v700
      %v837 = vpack.c.b16 %v705, %v701
      %v838 = vpack.c.b16 %v710, %v706
      %v839 = vpack.c.b16 %v711, %v707
      %v840 = vpack.c.b16 %v712, %v708
      %v841 = vpack.c.b16 %v713, %v709
      %v842 = vpack.c.b16 %v718, %v714
      %v843 = vpack.c.b16 %v719, %v715
      %v844 = vpack.c.b16 %v720, %v716
      %v845 = vpack.c.b16 %v721, %v717
      %v846 = vpack.c.b16 %v726, %v722
      %v847 = vpack.c.b16 %v727, %v723
      %v848 = vpack.c.b16 %v728, %v724
      %v849 = vpack.c.b16 %v729, %v725
      %v850 = vpack.c.b16 %v734, %v730
      %v851 = vpack.c.b16 %v735, %v731
      %v852 = vpack.c.b16 %v736, %v732
      %v853 = vpack.c.b16 %v737, %v733
      %v854 = vpack.c.b16 %v742, %v738
      %v855 = vpack.c.b16 %v743, %v739
      %v856 = vpack.c.b16 %v744, %v740
      %v857 = vpack.c.b16 %v745, %v741
      %v858 = vpack.c.b16 %v750, %v746
      %v859 = vpack.c.b16 %v751, %v747
      %v860 = vpack.c.b16 %v752, %v748
      %v861 = vpack.c.b16 %v753, %v749
      %v1034 = vunpack.c.l.b16 %v362
      %v1035 = vunpack.c.l.b16 %v363
      %v1036 = vunpack.c.l.b16 %v364
      %v1037 = vunpack.c.l.b16 %v365
      %v1038 = vunpack.c.l.b16 %v366
      %v1039 = vunpack.c.l.b16 %v367
      %v1040 = vunpack.c.l.b16 %v368
      %v1041 = vunpack.c.l.b16 %v369
      %v1042 = vunpack.c.l.b16 %v370
      %v1043 = vunpack.c.l.b16 %v371
      %v1044 = vunpack.c.l.b16 %v372
      %v1045 = vunpack.c.l.b16 %v373
      %v1046 = vunpack.c.l.b16 %v374
      %v1047 = vunpack.c.l.b16 %v375
      %v1048 = vunpack.c.l.b16 %v376
      %v1049 = vunpack.c.l.b16 %v377
      %v1050 = vunpack.c.l.b16 %v378
      %v1051 = vunpack.c.l.b16 %v379
      %v1052 = vunpack.c.l.b16 %v380
      %v1053 = vunpack.c.l.b16 %v381
      %v1054 = vunpack.c.l.b16 %v382
      %v1055 = vunpack.c.l.b16 %v383
      %v1056 = vunpack.c.l.b16 %v384
      %v1057 = vunpack.c.l.b16 %v385
      %v1058 = vunpack.c.l.b16 %v386
      %v1059 = vunpack.c.l.b16 %v387
      %v1060 = vunpack.c.l.b16 %v388
      %v1061 = vunpack.c.l.b16 %v389
      %v1062 = vunpack.c.l.b16 %v390
      %v1063 = vunpack.c.l.b16 %v391
      %v1064 = vunpack.c.l.b16 %v392
      %v1065 = vunpack.c.l.b16 %v393
      %v1066 = vunpack.c.l.b16 %v394
      %v1067 = vunpack.c.l.b16 %v395
      %v1068 = vunpack.c.l.b16 %v396
      %v1069 = vunpack.c.l.b16 %v397
      %v1070 = vunpack.c.l.b16 %v398
      %v1071 = vunpack.c.l.b16 %v399
      %v1072 = vunpack.c.l.b16 %v400
      %v1073 = vunpack.c.l.b16 %v401
      %v1074 = vunpack.c.l.b16 %v402
      %v1075 = vunpack.c.l.b16 %v403
      %v1076 = vunpack.c.l.b16 %v404
      %v1077 = vunpack.c.l.b16 %v405
      %v1078 = vunpack.c.l.b16 %v406
      %v1079 = vunpack.c.l.b16 %v407
      %v1080 = vunpack.c.l.b16 %v408
      %v1081 = vunpack.c.l.b16 %v409
      %v1082 = vunpack.c.l.b16 %v410
      %v1083 = vunpack.c.l.b16 %v411
      %v1084 = vunpack.c.l.b16 %v412
      %v1085 = vunpack.c.l.b16 %v413
      %v1086 = vunpack.c.l.b16 %v414
      %v1087 = vunpack.c.l.b16 %v415
      %v1088 = vunpack.c.l.b16 %v416
      %v1089 = vunpack.c.l.b16 %v417
      %v1090 = vunpack.c.l.b16 %v418
      %v1091 = vunpack.c.l.b16 %v419
      %v1092 = vunpack.c.l.b16 %v420
      %v1093 = vunpack.c.l.b16 %v421
      %v1094 = vunpack.c.l.b16 %v422
      %v1095 = vunpack.c.l.b16 %v423
      %v1096 = vunpack.c.l.b16 %v424
      %v1097 = vunpack.c.l.b16 %v425
      %v1098 = vpack.c.b16 %v1035, %v1034
      %v1099 = vpack.c.b16 %v1037, %v1036
      %v1100 = vpack.c.b16 %v1039, %v1038
      %v1101 = vpack.c.b16 %v1041, %v1040
      %v1102 = vpack.c.b16 %v1043, %v1042
      %v1103 = vpack.c.b16 %v1045, %v1044
      %v1104 = vpack.c.b16 %v1047, %v1046
      %v1105 = vpack.c.b16 %v1049, %v1048
      %v1106 = vpack.c.b16 %v1051, %v1050
      %v1107 = vpack.c.b16 %v1053, %v1052
      %v1108 = vpack.c.b16 %v1055, %v1054
      %v1109 = vpack.c.b16 %v1057, %v1056
      %v1110 = vpack.c.b16 %v1059, %v1058
      %v1111 = vpack.c.b16 %v1061, %v1060
      %v1112 = vpack.c.b16 %v1063, %v1062
      %v1113 = vpack.c.b16 %v1065, %v1064
      %v1114 = vpack.c.b16 %v1067, %v1066
      %v1115 = vpack.c.b16 %v1069, %v1068
      %v1116 = vpack.c.b16 %v1071, %v1070
      %v1117 = vpack.c.b16 %v1073, %v1072
      %v1118 = vpack.c.b16 %v1075, %v1074
      %v1119 = vpack.c.b16 %v1077, %v1076
      %v1120 = vpack.c.b16 %v1079, %v1078
      %v1121 = vpack.c.b16 %v1081, %v1080
      %v1122 = vpack.c.b16 %v1083, %v1082
      %v1123 = vpack.c.b16 %v1085, %v1084
      %v1124 = vpack.c.b16 %v1087, %v1086
      %v1125 = vpack.c.b16 %v1089, %v1088
      %v1126 = vpack.c.b16 %v1091, %v1090
      %v1127 = vpack.c.b16 %v1093, %v1092
      %v1128 = vpack.c.b16 %v1095, %v1094
      %v1129 = vpack.c.b16 %v1097, %v1096
      %1162 = vmatpush.bf16.msra.mxu0 %v1105
      %1163 = vmatpush.bf16.msra.mxu0 %v1104
      %1164 = vmatpush.bf16.msra.mxu0 %v1103
      %1165 = vmatpush.bf16.msra.mxu0 %v1102
      %1166 = vmatpush.bf16.msra.mxu0 %v1101
      %1167 = vmatpush.bf16.msra.mxu0 %v1100
      %1168 = vmatpush.bf16.msra.mxu0 %v1099
      %1169 = vmatpush.bf16.msra.mxu0 %v1098
      %1170 = vmatmul.bf16.gmra.mxu0 %v754
      %v1171 = vpop.f32.mrf.mxu0
      %v1172 = vadd.f32 %v428, %v1171
      %v1173 = vpop.f32.mrf.mxu0
      %v1174 = vadd.f32 %v428, %v1173
      %1175 = vmatmul.bf16.gmra.mxu0 %v758
      %v1176 = vpop.f32.mrf.mxu0
      %v1177 = vadd.f32 %v428, %v1176
      %v1178 = vpop.f32.mrf.mxu0
      %v1179 = vadd.f32 %v428, %v1178
      %1180 = vmatmul.bf16.gmra.mxu0 %v762
      %v1181 = vpop.f32.mrf.mxu0
      %v1182 = vadd.f32 %v428, %v1181
      %v1183 = vpop.f32.mrf.mxu0
      %v1184 = vadd.f32 %v428, %v1183
      %1185 = vmatmul.bf16.gmra.mxu0 %v766
      %v1186 = vpop.f32.mrf.mxu0
      %v1187 = vadd.f32 %v428, %v1186
      %v1188 = vpop.f32.mrf.mxu0
      %v1189 = vadd.f32 %v428, %v1188
      %1190 = vmatmul.bf16.gmra.mxu0 %v770
      %v1191 = vpop.f32.mrf.mxu0
      %v1192 = vadd.f32 %v428, %v1191
      %v1193 = vpop.f32.mrf.mxu0
      %v1194 = vadd.f32 %v428, %v1193
      %1195 = vmatmul.bf16.gmra.mxu0 %v774
      %v1196 = vpop.f32.mrf.mxu0
      %v1197 = vadd.f32 %v428, %v1196
      %v1198 = vpop.f32.mrf.mxu0
      %v1199 = vadd.f32 %v428, %v1198
      %1200 = vmatmul.bf16.gmra.mxu0 %v778
      %v1201 = vpop.f32.mrf.mxu0
      %v1202 = vadd.f32 %v428, %v1201
      %v1203 = vpop.f32.mrf.mxu0
      %v1204 = vadd.f32 %v428, %v1203
      %1205 = vmatmul.bf16.gmra.mxu0 %v782
      %v1206 = vpop.f32.mrf.mxu0
      %v1207 = vadd.f32 %v428, %v1206
      %v1208 = vpop.f32.mrf.mxu0
      %v1209 = vadd.f32 %v428, %v1208
      %1210 = vmatmul.bf16.gmra.mxu0 %v786
      %v1211 = vpop.f32.mrf.mxu0
      %v1212 = vadd.f32 %v428, %v1211
      %v1213 = vpop.f32.mrf.mxu0
      %v1214 = vadd.f32 %v428, %v1213
      %1215 = vmatmul.bf16.gmra.mxu0 %v790
      %v1216 = vpop.f32.mrf.mxu0
      %v1217 = vadd.f32 %v428, %v1216
      %v1218 = vpop.f32.mrf.mxu0
      %v1219 = vadd.f32 %v428, %v1218
      %1220 = vmatmul.bf16.gmra.mxu0 %v794
      %v1221 = vpop.f32.mrf.mxu0
      %v1222 = vadd.f32 %v428, %v1221
      %v1223 = vpop.f32.mrf.mxu0
      %v1224 = vadd.f32 %v428, %v1223
      %1225 = vmatmul.bf16.gmra.mxu0 %v798
      %v1226 = vpop.f32.mrf.mxu0
      %v1227 = vadd.f32 %v428, %v1226
      %v1228 = vpop.f32.mrf.mxu0
      %v1229 = vadd.f32 %v428, %v1228
      %1230 = vmatmul.bf16.gmra.mxu0 %v802
      %v1231 = vpop.f32.mrf.mxu0
      %v1232 = vadd.f32 %v428, %v1231
      %v1233 = vpop.f32.mrf.mxu0
      %v1234 = vadd.f32 %v428, %v1233
      %1235 = vmatmul.bf16.gmra.mxu0 %v806
      %v1236 = vpop.f32.mrf.mxu0
      %v1237 = vadd.f32 %v428, %v1236
      %v1238 = vpop.f32.mrf.mxu0
      %v1239 = vadd.f32 %v428, %v1238
      %1240 = vmatmul.bf16.gmra.mxu0 %v810
      %v1241 = vpop.f32.mrf.mxu0
      %v1242 = vadd.f32 %v428, %v1241
      %v1243 = vpop.f32.mrf.mxu0
      %v1244 = vadd.f32 %v428, %v1243
      %1245 = vmatmul.bf16.gmra.mxu0 %v814
      %v1246 = vpop.f32.mrf.mxu0
      %v1247 = vadd.f32 %v428, %v1246
      %v1248 = vpop.f32.mrf.mxu0
      %v1249 = vadd.f32 %v428, %v1248
      %1250 = vmatmul.bf16.gmra.mxu0 %v818
      %v1251 = vpop.f32.mrf.mxu0
      %v1252 = vadd.f32 %v428, %v1251
      %v1253 = vpop.f32.mrf.mxu0
      %v1254 = vadd.f32 %v428, %v1253
      %1255 = vmatmul.bf16.gmra.mxu0 %v822
      %v1256 = vpop.f32.mrf.mxu0
      %v1257 = vadd.f32 %v428, %v1256
      %v1258 = vpop.f32.mrf.mxu0
      %v1259 = vadd.f32 %v428, %v1258
      %1260 = vmatmul.bf16.gmra.mxu0 %v826
      %v1261 = vpop.f32.mrf.mxu0
      %v1262 = vadd.f32 %v428, %v1261
      %v1263 = vpop.f32.mrf.mxu0
      %v1264 = vadd.f32 %v428, %v1263
      %1265 = vmatmul.bf16.gmra.mxu0 %v830
      %v1266 = vpop.f32.mrf.mxu0
      %v1267 = vadd.f32 %v428, %v1266
      %v1268 = vpop.f32.mrf.mxu0
      %v1269 = vadd.f32 %v428, %v1268
      %1270 = vmatmul.bf16.gmra.mxu0 %v834
      %v1271 = vpop.f32.mrf.mxu0
      %v1272 = vadd.f32 %v428, %v1271
      %v1273 = vpop.f32.mrf.mxu0
      %v1274 = vadd.f32 %v428, %v1273
      %1275 = vmatmul.bf16.gmra.mxu0 %v838
      %v1276 = vpop.f32.mrf.mxu0
      %v1277 = vadd.f32 %v428, %v1276
      %v1278 = vpop.f32.mrf.mxu0
      %v1279 = vadd.f32 %v428, %v1278
      %1280 = vmatmul.bf16.gmra.mxu0 %v842
      %v1281 = vpop.f32.mrf.mxu0
      %v1282 = vadd.f32 %v428, %v1281
      %v1283 = vpop.f32.mrf.mxu0
      %v1284 = vadd.f32 %v428, %v1283
      %1285 = vmatmul.bf16.gmra.mxu0 %v846
      %v1286 = vpop.f32.mrf.mxu0
      %v1287 = vadd.f32 %v428, %v1286
      %v1288 = vpop.f32.mrf.mxu0
      %v1289 = vadd.f32 %v428, %v1288
      %1290 = vmatmul.bf16.gmra.mxu0 %v850
      %v1291 = vpop.f32.mrf.mxu0
      %v1292 = vadd.f32 %v428, %v1291
      %v1293 = vpop.f32.mrf.mxu0
      %v1294 = vadd.f32 %v428, %v1293
      %1295 = vmatmul.bf16.gmra.mxu0 %v854
      %v1296 = vpop.f32.mrf.mxu0
      %v1297 = vadd.f32 %v428, %v1296
      %v1298 = vpop.f32.mrf.mxu0
      %v1299 = vadd.f32 %v428, %v1298
      %1300 = vmatmul.bf16.gmra.mxu0 %v858
      %v1301 = vpop.f32.mrf.mxu0
      %v1302 = vadd.f32 %v428, %v1301
      %v1303 = vpop.f32.mrf.mxu0
      %v1304 = vadd.f32 %v428, %v1303
      %1305 = vdwg.mxu0
      %1306 = vmatpush.bf16.msra.mxu0 %v1113
      %1307 = vmatpush.bf16.msra.mxu0 %v1112
      %1308 = vmatpush.bf16.msra.mxu0 %v1111
      %1309 = vmatpush.bf16.msra.mxu0 %v1110
      %1310 = vmatpush.bf16.msra.mxu0 %v1109
      %1311 = vmatpush.bf16.msra.mxu0 %v1108
      %1312 = vmatpush.bf16.msra.mxu0 %v1107
      %1313 = vmatpush.bf16.msra.mxu0 %v1106
      %1314 = vmatmul.bf16.gmra.mxu0 %v755
      %v1315 = vpop.f32.mrf.mxu0
      %v1316 = vadd.f32 %v1172, %v1315
      %v1317 = vpop.f32.mrf.mxu0
      %v1318 = vadd.f32 %v1174, %v1317
      %1319 = vmatmul.bf16.gmra.mxu0 %v759
      %v1320 = vpop.f32.mrf.mxu0
      %v1321 = vadd.f32 %v1177, %v1320
      %v1322 = vpop.f32.mrf.mxu0
      %v1323 = vadd.f32 %v1179, %v1322
      %1324 = vmatmul.bf16.gmra.mxu0 %v763
      %v1325 = vpop.f32.mrf.mxu0
      %v1326 = vadd.f32 %v1182, %v1325
      %v1327 = vpop.f32.mrf.mxu0
      %v1328 = vadd.f32 %v1184, %v1327
      %1329 = vmatmul.bf16.gmra.mxu0 %v767
      %v1330 = vpop.f32.mrf.mxu0
      %v1331 = vadd.f32 %v1187, %v1330
      %v1332 = vpop.f32.mrf.mxu0
      %v1333 = vadd.f32 %v1189, %v1332
      %1334 = vmatmul.bf16.gmra.mxu0 %v771
      %v1335 = vpop.f32.mrf.mxu0
      %v1336 = vadd.f32 %v1192, %v1335
      %v1337 = vpop.f32.mrf.mxu0
      %v1338 = vadd.f32 %v1194, %v1337
      %1339 = vmatmul.bf16.gmra.mxu0 %v775
      %v1340 = vpop.f32.mrf.mxu0
      %v1341 = vadd.f32 %v1197, %v1340
      %v1342 = vpop.f32.mrf.mxu0
      %v1343 = vadd.f32 %v1199, %v1342
      %1344 = vmatmul.bf16.gmra.mxu0 %v779
      %v1345 = vpop.f32.mrf.mxu0
      %v1346 = vadd.f32 %v1202, %v1345
      %v1347 = vpop.f32.mrf.mxu0
      %v1348 = vadd.f32 %v1204, %v1347
      %1349 = vmatmul.bf16.gmra.mxu0 %v783
      %v1350 = vpop.f32.mrf.mxu0
      %v1351 = vadd.f32 %v1207, %v1350
      %v1352 = vpop.f32.mrf.mxu0
      %v1353 = vadd.f32 %v1209, %v1352
      %1354 = vmatmul.bf16.gmra.mxu0 %v787
      %v1355 = vpop.f32.mrf.mxu0
      %v1356 = vadd.f32 %v1212, %v1355
      %v1357 = vpop.f32.mrf.mxu0
      %v1358 = vadd.f32 %v1214, %v1357
      %1359 = vmatmul.bf16.gmra.mxu0 %v791
      %v1360 = vpop.f32.mrf.mxu0
      %v1361 = vadd.f32 %v1217, %v1360
      %v1362 = vpop.f32.mrf.mxu0
      %v1363 = vadd.f32 %v1219, %v1362
      %1364 = vmatmul.bf16.gmra.mxu0 %v795
      %v1365 = vpop.f32.mrf.mxu0
      %v1366 = vadd.f32 %v1222, %v1365
      %v1367 = vpop.f32.mrf.mxu0
      %v1368 = vadd.f32 %v1224, %v1367
      %1369 = vmatmul.bf16.gmra.mxu0 %v799
      %v1370 = vpop.f32.mrf.mxu0
      %v1371 = vadd.f32 %v1227, %v1370
      %v1372 = vpop.f32.mrf.mxu0
      %v1373 = vadd.f32 %v1229, %v1372
      %1374 = vmatmul.bf16.gmra.mxu0 %v803
      %v1375 = vpop.f32.mrf.mxu0
      %v1376 = vadd.f32 %v1232, %v1375
      %v1377 = vpop.f32.mrf.mxu0
      %v1378 = vadd.f32 %v1234, %v1377
      %1379 = vmatmul.bf16.gmra.mxu0 %v807
      %v1380 = vpop.f32.mrf.mxu0
      %v1381 = vadd.f32 %v1237, %v1380
      %v1382 = vpop.f32.mrf.mxu0
      %v1383 = vadd.f32 %v1239, %v1382
      %1384 = vmatmul.bf16.gmra.mxu0 %v811
      %v1385 = vpop.f32.mrf.mxu0
      %v1386 = vadd.f32 %v1242, %v1385
      %v1387 = vpop.f32.mrf.mxu0
      %v1388 = vadd.f32 %v1244, %v1387
      %1389 = vmatmul.bf16.gmra.mxu0 %v815
      %v1390 = vpop.f32.mrf.mxu0
      %v1391 = vadd.f32 %v1247, %v1390
      %v1392 = vpop.f32.mrf.mxu0
      %v1393 = vadd.f32 %v1249, %v1392
      %1394 = vmatmul.bf16.gmra.mxu0 %v819
      %v1395 = vpop.f32.mrf.mxu0
      %v1396 = vadd.f32 %v1252, %v1395
      %v1397 = vpop.f32.mrf.mxu0
      %v1398 = vadd.f32 %v1254, %v1397
      %1399 = vmatmul.bf16.gmra.mxu0 %v823
      %v1400 = vpop.f32.mrf.mxu0
      %v1401 = vadd.f32 %v1257, %v1400
      %v1402 = vpop.f32.mrf.mxu0
      %v1403 = vadd.f32 %v1259, %v1402
      %1404 = vmatmul.bf16.gmra.mxu0 %v827
      %v1405 = vpop.f32.mrf.mxu0
      %v1406 = vadd.f32 %v1262, %v1405
      %v1407 = vpop.f32.mrf.mxu0
      %v1408 = vadd.f32 %v1264, %v1407
      %1409 = vmatmul.bf16.gmra.mxu0 %v831
      %v1410 = vpop.f32.mrf.mxu0
      %v1411 = vadd.f32 %v1267, %v1410
      %v1412 = vpop.f32.mrf.mxu0
      %v1413 = vadd.f32 %v1269, %v1412
      %1414 = vmatmul.bf16.gmra.mxu0 %v835
      %v1415 = vpop.f32.mrf.mxu0
      %v1416 = vadd.f32 %v1272, %v1415
      %v1417 = vpop.f32.mrf.mxu0
      %v1418 = vadd.f32 %v1274, %v1417
      %1419 = vmatmul.bf16.gmra.mxu0 %v839
      %v1420 = vpop.f32.mrf.mxu0
      %v1421 = vadd.f32 %v1277, %v1420
      %v1422 = vpop.f32.mrf.mxu0
      %v1423 = vadd.f32 %v1279, %v1422
      %1424 = vmatmul.bf16.gmra.mxu0 %v843
      %v1425 = vpop.f32.mrf.mxu0
      %v1426 = vadd.f32 %v1282, %v1425
      %v1427 = vpop.f32.mrf.mxu0
      %v1428 = vadd.f32 %v1284, %v1427
      %1429 = vmatmul.bf16.gmra.mxu0 %v847
      %v1430 = vpop.f32.mrf.mxu0
      %v1431 = vadd.f32 %v1287, %v1430
      %v1432 = vpop.f32.mrf.mxu0
      %v1433 = vadd.f32 %v1289, %v1432
      %1434 = vmatmul.bf16.gmra.mxu0 %v851
      %v1435 = vpop.f32.mrf.mxu0
      %v1436 = vadd.f32 %v1292, %v1435
      %v1437 = vpop.f32.mrf.mxu0
      %v1438 = vadd.f32 %v1294, %v1437
      %1439 = vmatmul.bf16.gmra.mxu0 %v855
      %v1440 = vpop.f32.mrf.mxu0
      %v1441 = vadd.f32 %v1297, %v1440
      %v1442 = vpop.f32.mrf.mxu0
      %v1443 = vadd.f32 %v1299, %v1442
      %1444 = vmatmul.bf16.gmra.mxu0 %v859
      %v1445 = vpop.f32.mrf.mxu0
      %v1446 = vadd.f32 %v1302, %v1445
      %v1447 = vpop.f32.mrf.mxu0
      %v1448 = vadd.f32 %v1304, %v1447
      %1449 = vdwg.mxu0
      %1450 = vmatpush.bf16.msra.mxu0 %v1121
      %1451 = vmatpush.bf16.msra.mxu0 %v1120
      %1452 = vmatpush.bf16.msra.mxu0 %v1119
      %1453 = vmatpush.bf16.msra.mxu0 %v1118
      %1454 = vmatpush.bf16.msra.mxu0 %v1117
      %1455 = vmatpush.bf16.msra.mxu0 %v1116
      %1456 = vmatpush.bf16.msra.mxu0 %v1115
      %1457 = vmatpush.bf16.msra.mxu0 %v1114
      %1458 = vmatmul.bf16.gmra.mxu0 %v756
      %v1459 = vpop.f32.mrf.mxu0
      %v1460 = vadd.f32 %v1316, %v1459
      %v1461 = vpop.f32.mrf.mxu0
      %v1462 = vadd.f32 %v1318, %v1461
      %1463 = vmatmul.bf16.gmra.mxu0 %v760
      %v1464 = vpop.f32.mrf.mxu0
      %v1465 = vadd.f32 %v1321, %v1464
      %v1466 = vpop.f32.mrf.mxu0
      %v1467 = vadd.f32 %v1323, %v1466
      %1468 = vmatmul.bf16.gmra.mxu0 %v764
      %v1469 = vpop.f32.mrf.mxu0
      %v1470 = vadd.f32 %v1326, %v1469
      %v1471 = vpop.f32.mrf.mxu0
      %v1472 = vadd.f32 %v1328, %v1471
      %1473 = vmatmul.bf16.gmra.mxu0 %v768
      %v1474 = vpop.f32.mrf.mxu0
      %v1475 = vadd.f32 %v1331, %v1474
      %v1476 = vpop.f32.mrf.mxu0
      %v1477 = vadd.f32 %v1333, %v1476
      %1478 = vmatmul.bf16.gmra.mxu0 %v772
      %v1479 = vpop.f32.mrf.mxu0
      %v1480 = vadd.f32 %v1336, %v1479
      %v1481 = vpop.f32.mrf.mxu0
      %v1482 = vadd.f32 %v1338, %v1481
      %1483 = vmatmul.bf16.gmra.mxu0 %v776
      %v1484 = vpop.f32.mrf.mxu0
      %v1485 = vadd.f32 %v1341, %v1484
      %v1486 = vpop.f32.mrf.mxu0
      %v1487 = vadd.f32 %v1343, %v1486
      %1488 = vmatmul.bf16.gmra.mxu0 %v780
      %v1489 = vpop.f32.mrf.mxu0
      %v1490 = vadd.f32 %v1346, %v1489
      %v1491 = vpop.f32.mrf.mxu0
      %v1492 = vadd.f32 %v1348, %v1491
      %1493 = vmatmul.bf16.gmra.mxu0 %v784
      %v1494 = vpop.f32.mrf.mxu0
      %v1495 = vadd.f32 %v1351, %v1494
      %v1496 = vpop.f32.mrf.mxu0
      %v1497 = vadd.f32 %v1353, %v1496
      %1498 = vmatmul.bf16.gmra.mxu0 %v788
      %v1499 = vpop.f32.mrf.mxu0
      %v1500 = vadd.f32 %v1356, %v1499
      %v1501 = vpop.f32.mrf.mxu0
      %v1502 = vadd.f32 %v1358, %v1501
      %1503 = vmatmul.bf16.gmra.mxu0 %v792
      %v1504 = vpop.f32.mrf.mxu0
      %v1505 = vadd.f32 %v1361, %v1504
      %v1506 = vpop.f32.mrf.mxu0
      %v1507 = vadd.f32 %v1363, %v1506
      %1508 = vmatmul.bf16.gmra.mxu0 %v796
      %v1509 = vpop.f32.mrf.mxu0
      %v1510 = vadd.f32 %v1366, %v1509
      %v1511 = vpop.f32.mrf.mxu0
      %v1512 = vadd.f32 %v1368, %v1511
      %1513 = vmatmul.bf16.gmra.mxu0 %v800
      %v1514 = vpop.f32.mrf.mxu0
      %v1515 = vadd.f32 %v1371, %v1514
      %v1516 = vpop.f32.mrf.mxu0
      %v1517 = vadd.f32 %v1373, %v1516
      %1518 = vmatmul.bf16.gmra.mxu0 %v804
      %v1519 = vpop.f32.mrf.mxu0
      %v1520 = vadd.f32 %v1376, %v1519
      %v1521 = vpop.f32.mrf.mxu0
      %v1522 = vadd.f32 %v1378, %v1521
      %1523 = vmatmul.bf16.gmra.mxu0 %v808
      %v1524 = vpop.f32.mrf.mxu0
      %v1525 = vadd.f32 %v1381, %v1524
      %v1526 = vpop.f32.mrf.mxu0
      %v1527 = vadd.f32 %v1383, %v1526
      %1528 = vmatmul.bf16.gmra.mxu0 %v812
      %v1529 = vpop.f32.mrf.mxu0
      %v1530 = vadd.f32 %v1386, %v1529
      %v1531 = vpop.f32.mrf.mxu0
      %v1532 = vadd.f32 %v1388, %v1531
      %1533 = vmatmul.bf16.gmra.mxu0 %v816
      %v1534 = vpop.f32.mrf.mxu0
      %v1535 = vadd.f32 %v1391, %v1534
      %v1536 = vpop.f32.mrf.mxu0
      %v1537 = vadd.f32 %v1393, %v1536
      %1538 = vmatmul.bf16.gmra.mxu0 %v820
      %v1539 = vpop.f32.mrf.mxu0
      %v1540 = vadd.f32 %v1396, %v1539
      %v1541 = vpop.f32.mrf.mxu0
      %v1542 = vadd.f32 %v1398, %v1541
      %1543 = vmatmul.bf16.gmra.mxu0 %v824
      %v1544 = vpop.f32.mrf.mxu0
      %v1545 = vadd.f32 %v1401, %v1544
      %v1546 = vpop.f32.mrf.mxu0
      %v1547 = vadd.f32 %v1403, %v1546
      %1548 = vmatmul.bf16.gmra.mxu0 %v828
      %v1549 = vpop.f32.mrf.mxu0
      %v1550 = vadd.f32 %v1406, %v1549
      %v1551 = vpop.f32.mrf.mxu0
      %v1552 = vadd.f32 %v1408, %v1551
      %1553 = vmatmul.bf16.gmra.mxu0 %v832
      %v1554 = vpop.f32.mrf.mxu0
      %v1555 = vadd.f32 %v1411, %v1554
      %v1556 = vpop.f32.mrf.mxu0
      %v1557 = vadd.f32 %v1413, %v1556
      %1558 = vmatmul.bf16.gmra.mxu0 %v836
      %v1559 = vpop.f32.mrf.mxu0
      %v1560 = vadd.f32 %v1416, %v1559
      %v1561 = vpop.f32.mrf.mxu0
      %v1562 = vadd.f32 %v1418, %v1561
      %1563 = vmatmul.bf16.gmra.mxu0 %v840
      %v1564 = vpop.f32.mrf.mxu0
      %v1565 = vadd.f32 %v1421, %v1564
      %v1566 = vpop.f32.mrf.mxu0
      %v1567 = vadd.f32 %v1423, %v1566
      %1568 = vmatmul.bf16.gmra.mxu0 %v844
      %v1569 = vpop.f32.mrf.mxu0
      %v1570 = vadd.f32 %v1426, %v1569
      %v1571 = vpop.f32.mrf.mxu0
      %v1572 = vadd.f32 %v1428, %v1571
      %1573 = vmatmul.bf16.gmra.mxu0 %v848
      %v1574 = vpop.f32.mrf.mxu0
      %v1575 = vadd.f32 %v1431, %v1574
      %v1576 = vpop.f32.mrf.mxu0
      %v1577 = vadd.f32 %v1433, %v1576
      %1578 = vmatmul.bf16.gmra.mxu0 %v852
      %v1579 = vpop.f32.mrf.mxu0
      %v1580 = vadd.f32 %v1436, %v1579
      %v1581 = vpop.f32.mrf.mxu0
      %v1582 = vadd.f32 %v1438, %v1581
      %1583 = vmatmul.bf16.gmra.mxu0 %v856
      %v1584 = vpop.f32.mrf.mxu0
      %v1585 = vadd.f32 %v1441, %v1584
      %v1586 = vpop.f32.mrf.mxu0
      %v1587 = vadd.f32 %v1443, %v1586
      %1588 = vmatmul.bf16.gmra.mxu0 %v860
      %v1589 = vpop.f32.mrf.mxu0
      %v1590 = vadd.f32 %v1446, %v1589
      %v1591 = vpop.f32.mrf.mxu0
      %v1592 = vadd.f32 %v1448, %v1591
      %1593 = vdwg.mxu0
      %1594 = vmatpush.bf16.msra.mxu0 %v1129
      %1595 = vmatpush.bf16.msra.mxu0 %v1128
      %1596 = vmatpush.bf16.msra.mxu0 %v1127
      %1597 = vmatpush.bf16.msra.mxu0 %v1126
      %1598 = vmatpush.bf16.msra.mxu0 %v1125
      %1599 = vmatpush.bf16.msra.mxu0 %v1124
      %1600 = vmatpush.bf16.msra.mxu0 %v1123
      %1601 = vmatpush.bf16.msra.mxu0 %v1122
      %1602 = vmatmul.bf16.gmra.mxu0 %v757
      %v1603 = vpop.f32.mrf.mxu0
      %v1604 = vadd.f32 %v1460, %v1603
      %v1605 = vpop.f32.mrf.mxu0
      %v1606 = vadd.f32 %v1462, %v1605
      %1607 = vmatmul.bf16.gmra.mxu0 %v761
      %v1608 = vpop.f32.mrf.mxu0
      %v1609 = vadd.f32 %v1465, %v1608
      %v1610 = vpop.f32.mrf.mxu0
      %v1611 = vadd.f32 %v1467, %v1610
      %1612 = vmatmul.bf16.gmra.mxu0 %v765
      %v1613 = vpop.f32.mrf.mxu0
      %v1614 = vadd.f32 %v1470, %v1613
      %v1615 = vpop.f32.mrf.mxu0
      %v1616 = vadd.f32 %v1472, %v1615
      %1617 = vmatmul.bf16.gmra.mxu0 %v769
      %v1618 = vpop.f32.mrf.mxu0
      %v1619 = vadd.f32 %v1475, %v1618
      %v1620 = vpop.f32.mrf.mxu0
      %v1621 = vadd.f32 %v1477, %v1620
      %1622 = vmatmul.bf16.gmra.mxu0 %v773
      %v1623 = vpop.f32.mrf.mxu0
      %v1624 = vadd.f32 %v1480, %v1623
      %v1625 = vpop.f32.mrf.mxu0
      %v1626 = vadd.f32 %v1482, %v1625
      %1627 = vmatmul.bf16.gmra.mxu0 %v777
      %v1628 = vpop.f32.mrf.mxu0
      %v1629 = vadd.f32 %v1485, %v1628
      %v1630 = vpop.f32.mrf.mxu0
      %v1631 = vadd.f32 %v1487, %v1630
      %1632 = vmatmul.bf16.gmra.mxu0 %v781
      %v1633 = vpop.f32.mrf.mxu0
      %v1634 = vadd.f32 %v1490, %v1633
      %v1635 = vpop.f32.mrf.mxu0
      %v1636 = vadd.f32 %v1492, %v1635
      %1637 = vmatmul.bf16.gmra.mxu0 %v785
      %v1638 = vpop.f32.mrf.mxu0
      %v1639 = vadd.f32 %v1495, %v1638
      %v1640 = vpop.f32.mrf.mxu0
      %v1641 = vadd.f32 %v1497, %v1640
      %1642 = vmatmul.bf16.gmra.mxu0 %v789
      %v1643 = vpop.f32.mrf.mxu0
      %v1644 = vadd.f32 %v1500, %v1643
      %v1645 = vpop.f32.mrf.mxu0
      %v1646 = vadd.f32 %v1502, %v1645
      %1647 = vmatmul.bf16.gmra.mxu0 %v793
      %v1648 = vpop.f32.mrf.mxu0
      %v1649 = vadd.f32 %v1505, %v1648
      %v1650 = vpop.f32.mrf.mxu0
      %v1651 = vadd.f32 %v1507, %v1650
      %1652 = vmatmul.bf16.gmra.mxu0 %v797
      %v1653 = vpop.f32.mrf.mxu0
      %v1654 = vadd.f32 %v1510, %v1653
      %v1655 = vpop.f32.mrf.mxu0
      %v1656 = vadd.f32 %v1512, %v1655
      %1657 = vmatmul.bf16.gmra.mxu0 %v801
      %v1658 = vpop.f32.mrf.mxu0
      %v1659 = vadd.f32 %v1515, %v1658
      %v1660 = vpop.f32.mrf.mxu0
      %v1661 = vadd.f32 %v1517, %v1660
      %1662 = vmatmul.bf16.gmra.mxu0 %v805
      %v1663 = vpop.f32.mrf.mxu0
      %v1664 = vadd.f32 %v1520, %v1663
      %v1665 = vpop.f32.mrf.mxu0
      %v1666 = vadd.f32 %v1522, %v1665
      %1667 = vmatmul.bf16.gmra.mxu0 %v809
      %v1668 = vpop.f32.mrf.mxu0
      %v1669 = vadd.f32 %v1525, %v1668
      %v1670 = vpop.f32.mrf.mxu0
      %v1671 = vadd.f32 %v1527, %v1670
      %1672 = vmatmul.bf16.gmra.mxu0 %v813
      %v1673 = vpop.f32.mrf.mxu0
      %v1674 = vadd.f32 %v1530, %v1673
      %v1675 = vpop.f32.mrf.mxu0
      %v1676 = vadd.f32 %v1532, %v1675
      %1677 = vmatmul.bf16.gmra.mxu0 %v817
      %v1678 = vpop.f32.mrf.mxu0
      %v1679 = vadd.f32 %v1535, %v1678
      %v1680 = vpop.f32.mrf.mxu0
      %v1681 = vadd.f32 %v1537, %v1680
      %1682 = vmatmul.bf16.gmra.mxu0 %v821
      %v1683 = vpop.f32.mrf.mxu0
      %v1684 = vadd.f32 %v1540, %v1683
      %v1685 = vpop.f32.mrf.mxu0
      %v1686 = vadd.f32 %v1542, %v1685
      %1687 = vmatmul.bf16.gmra.mxu0 %v825
      %v1688 = vpop.f32.mrf.mxu0
      %v1689 = vadd.f32 %v1545, %v1688
      %v1690 = vpop.f32.mrf.mxu0
      %v1691 = vadd.f32 %v1547, %v1690
      %1692 = vmatmul.bf16.gmra.mxu0 %v829
      %v1693 = vpop.f32.mrf.mxu0
      %v1694 = vadd.f32 %v1550, %v1693
      %v1695 = vpop.f32.mrf.mxu0
      %v1696 = vadd.f32 %v1552, %v1695
      %1697 = vmatmul.bf16.gmra.mxu0 %v833
      %v1698 = vpop.f32.mrf.mxu0
      %v1699 = vadd.f32 %v1555, %v1698
      %v1700 = vpop.f32.mrf.mxu0
      %v1701 = vadd.f32 %v1557, %v1700
      %1702 = vmatmul.bf16.gmra.mxu0 %v837
      %v1703 = vpop.f32.mrf.mxu0
      %v1704 = vadd.f32 %v1560, %v1703
      %v1705 = vpop.f32.mrf.mxu0
      %v1706 = vadd.f32 %v1562, %v1705
      %1707 = vmatmul.bf16.gmra.mxu0 %v841
      %v1708 = vpop.f32.mrf.mxu0
      %v1709 = vadd.f32 %v1565, %v1708
      %v1710 = vpop.f32.mrf.mxu0
      %v1711 = vadd.f32 %v1567, %v1710
      %1712 = vmatmul.bf16.gmra.mxu0 %v845
      %v1713 = vpop.f32.mrf.mxu0
      %v1714 = vadd.f32 %v1570, %v1713
      %v1715 = vpop.f32.mrf.mxu0
      %v1716 = vadd.f32 %v1572, %v1715
      %1717 = vmatmul.bf16.gmra.mxu0 %v849
      %v1718 = vpop.f32.mrf.mxu0
      %v1719 = vadd.f32 %v1575, %v1718
      %v1720 = vpop.f32.mrf.mxu0
      %v1721 = vadd.f32 %v1577, %v1720
      %1722 = vmatmul.bf16.gmra.mxu0 %v853
      %v1723 = vpop.f32.mrf.mxu0
      %v1724 = vadd.f32 %v1580, %v1723
      %v1725 = vpop.f32.mrf.mxu0
      %v1726 = vadd.f32 %v1582, %v1725
      %1727 = vmatmul.bf16.gmra.mxu0 %v857
      %v1728 = vpop.f32.mrf.mxu0
      %v1729 = vadd.f32 %v1585, %v1728
      %v1730 = vpop.f32.mrf.mxu0
      %v1731 = vadd.f32 %v1587, %v1730
      %1732 = vmatmul.bf16.gmra.mxu0 %v861
      %v1733 = vpop.f32.mrf.mxu0
      %v1734 = vadd.f32 %v1590, %v1733
      %v1735 = vpop.f32.mrf.mxu0
      %v1736 = vadd.f32 %v1592, %v1735
      %1737 = vdwg.mxu0
      %v1738 = vmax.f32 %v1604, 0.0
      %v1739 = vmax.f32 %v1606, 0.0
      %v1740 = vmax.f32 %v1609, 0.0
      %v1741 = vmax.f32 %v1611, 0.0
      %v1742 = vmax.f32 %v1614, 0.0
      %v1743 = vmax.f32 %v1616, 0.0
      %v1744 = vmax.f32 %v1619, 0.0
      %v1745 = vmax.f32 %v1621, 0.0
      %v1746 = vmax.f32 %v1624, 0.0
      %v1747 = vmax.f32 %v1626, 0.0
      %v1748 = vmax.f32 %v1629, 0.0
      %v1749 = vmax.f32 %v1631, 0.0
      %v1750 = vmax.f32 %v1634, 0.0
      %v1751 = vmax.f32 %v1636, 0.0
      %v1752 = vmax.f32 %v1639, 0.0
      %v1753 = vmax.f32 %v1641, 0.0
      %v1754 = vmax.f32 %v1644, 0.0
      %v1755 = vmax.f32 %v1646, 0.0
      %v1756 = vmax.f32 %v1649, 0.0
      %v1757 = vmax.f32 %v1651, 0.0
      %v1758 = vmax.f32 %v1654, 0.0
      %v1759 = vmax.f32 %v1656, 0.0
      %v1760 = vmax.f32 %v1659, 0.0
      %v1761 = vmax.f32 %v1661, 0.0
      %v1762 = vmax.f32 %v1664, 0.0
      %v1763 = vmax.f32 %v1666, 0.0
      %v1764 = vmax.f32 %v1669, 0.0
      %v1765 = vmax.f32 %v1671, 0.0
      %v1766 = vmax.f32 %v1674, 0.0
      %v1767 = vmax.f32 %v1676, 0.0
      %v1768 = vmax.f32 %v1679, 0.0
      %v1769 = vmax.f32 %v1681, 0.0
      %v1770 = vmax.f32 %v1684, 0.0
      %v1771 = vmax.f32 %v1686, 0.0
      %v1772 = vmax.f32 %v1689, 0.0
      %v1773 = vmax.f32 %v1691, 0.0
      %v1774 = vmax.f32 %v1694, 0.0
      %v1775 = vmax.f32 %v1696, 0.0
      %v1776 = vmax.f32 %v1699, 0.0
      %v1777 = vmax.f32 %v1701, 0.0
      %v1778 = vmax.f32 %v1704, 0.0
      %v1779 = vmax.f32 %v1706, 0.0
      %v1780 = vmax.f32 %v1709, 0.0
      %v1781 = vmax.f32 %v1711, 0.0
      %v1782 = vmax.f32 %v1714, 0.0
      %v1783 = vmax.f32 %v1716, 0.0
      %v1784 = vmax.f32 %v1719, 0.0
      %v1785 = vmax.f32 %v1721, 0.0
      %v1786 = vmax.f32 %v1724, 0.0
      %v1787 = vmax.f32 %v1726, 0.0
      %v1788 = vmax.f32 %v1729, 0.0
      %v1789 = vmax.f32 %v1731, 0.0
      %v1790 = vmax.f32 %v1734, 0.0
      %v1791 = vmax.f32 %v1736, 0.0
      %v1792 = vld [vmem:[%s243] sm:$0x1]
      %v1794 = vperm.slane %v1792, 0
      %v1796 = vadd.f32 %v1738, %v1794
      %v1797 = vadd.f32 %v1739, %v1794
      %v1798 = vadd.f32 %v1740, %v1794
      %v1799 = vadd.f32 %v1741, %v1794
      %v1800 = vadd.f32 %v1742, %v1794
      %v1801 = vadd.f32 %v1743, %v1794
      %v1802 = vadd.f32 %v1744, %v1794
      %v1803 = vadd.f32 %v1745, %v1794
      %v1804 = vadd.f32 %v1746, %v1794
      %v1805 = vadd.f32 %v1747, %v1794
      %v1806 = vadd.f32 %v1748, %v1794
      %v1807 = vadd.f32 %v1749, %v1794
      %v1808 = vadd.f32 %v1750, %v1794
      %v1809 = vadd.f32 %v1751, %v1794
      %v1810 = vadd.f32 %v1752, %v1794
      %v1811 = vadd.f32 %v1753, %v1794
      %v1812 = vadd.f32 %v1754, %v1794
      %v1813 = vadd.f32 %v1755, %v1794
      %v1814 = vadd.f32 %v1756, %v1794
      %v1815 = vadd.f32 %v1757, %v1794
      %v1816 = vadd.f32 %v1758, %v1794
      %v1817 = vadd.f32 %v1759, %v1794
      %v1818 = vadd.f32 %v1760, %v1794
      %v1819 = vadd.f32 %v1761, %v1794
      %v1820 = vadd.f32 %v1762, %v1794
      %v1821 = vadd.f32 %v1763, %v1794
      %v1822 = vadd.f32 %v1764, %v1794
      %v1823 = vadd.f32 %v1765, %v1794
      %v1824 = vadd.f32 %v1766, %v1794
      %v1825 = vadd.f32 %v1767, %v1794
      %v1826 = vadd.f32 %v1768, %v1794
      %v1827 = vadd.f32 %v1769, %v1794
      %v1828 = vadd.f32 %v1770, %v1794
      %v1829 = vadd.f32 %v1771, %v1794
      %v1830 = vadd.f32 %v1772, %v1794
      %v1831 = vadd.f32 %v1773, %v1794
      %v1832 = vadd.f32 %v1774, %v1794
      %v1833 = vadd.f32 %v1775, %v1794
      %v1834 = vadd.f32 %v1776, %v1794
      %v1835 = vadd.f32 %v1777, %v1794
      %v1836 = vadd.f32 %v1778, %v1794
      %v1837 = vadd.f32 %v1779, %v1794
      %v1838 = vadd.f32 %v1780, %v1794
      %v1839 = vadd.f32 %v1781, %v1794
      %v1840 = vadd.f32 %v1782, %v1794
      %v1841 = vadd.f32 %v1783, %v1794
      %v1842 = vadd.f32 %v1784, %v1794
      %v1843 = vadd.f32 %v1785, %v1794
      %v1844 = vadd.f32 %v1786, %v1794
      %v1845 = vadd.f32 %v1787, %v1794
      %v1846 = vadd.f32 %v1788, %v1794
      %v1847 = vadd.f32 %v1789, %v1794
      %v1848 = vadd.f32 %v1790, %v1794
      %v1849 = vadd.f32 %v1791, %v1794
      %1850 = vst [vmem:[%s252] sm:$0xff] %v1796
      %1851 = vst [vmem:[%s252 + $0x8] sm:$0xff] %v1797
      %1852 = vst [vmem:[%s252 + $0x10] sm:$0xff] %v1798
      %1853 = vst [vmem:[%s252 + $0x18] sm:$0xff] %v1799
      %1854 = vst [vmem:[%s252 + $0x20] sm:$0xff] %v1800
      %1855 = vst [vmem:[%s252 + $0x28] sm:$0xff] %v1801
      %1856 = vst [vmem:[%s252 + $0x30] sm:$0xff] %v1802
      %1857 = vst [vmem:[%s252 + $0x38] sm:$0xff] %v1803
      %1858 = vst [vmem:[%s252 + $0x40] sm:$0xff] %v1804
      %1859 = vst [vmem:[%s252 + $0x48] sm:$0xff] %v1805
      %1860 = vst [vmem:[%s252 + $0x50] sm:$0xff] %v1806
      %1861 = vst [vmem:[%s252 + $0x58] sm:$0xff] %v1807
      %1862 = vst [vmem:[%s252 + $0x60] sm:$0xff] %v1808
      %1863 = vst [vmem:[%s252 + $0x68] sm:$0xff] %v1809
      %1864 = vst [vmem:[%s252 + $0x70] sm:$0xff] %v1810
      %1865 = vst [vmem:[%s252 + $0x78] sm:$0xff] %v1811
      %1866 = vst [vmem:[%s252 + $0x80] sm:$0xff] %v1812
      %1867 = vst [vmem:[%s252 + $0x88] sm:$0xff] %v1813
      %1868 = vst [vmem:[%s252 + $0x90] sm:$0xff] %v1814
      %1869 = vst [vmem:[%s252 + $0x98] sm:$0xff] %v1815
      %1870 = vst [vmem:[%s252 + $0xa0] sm:$0xff] %v1816
      %1871 = vst [vmem:[%s252 + $0xa8] sm:$0xff] %v1817
      %1872 = vst [vmem:[%s252 + $0xb0] sm:$0xff] %v1818
      %1873 = vst [vmem:[%s252 + $0xb8] sm:$0xff] %v1819
      %1874 = vst [vmem:[%s252 + $0xc0] sm:$0xff] %v1820
      %1875 = vst [vmem:[%s252 + $0xc8] sm:$0xff] %v1821
      %1876 = vst [vmem:[%s252 + $0xd0] sm:$0xff] %v1822
      %1877 = vst [vmem:[%s252 + $0xd8] sm:$0xff] %v1823
      %1878 = vst [vmem:[%s252 + $0xe0] sm:$0xff] %v1824
      %1879 = vst [vmem:[%s252 + $0xe8] sm:$0xff] %v1825
      %1880 = vst [vmem:[%s252 + $0xf0] sm:$0xff] %v1826
      %1881 = vst [vmem:[%s252 + $0xf8] sm:$0xff] %v1827
      %1882 = vst [vmem:[%s252 + $0x100] sm:$0xff] %v1828
      %1883 = vst [vmem:[%s252 + $0x108] sm:$0xff] %v1829
      %1884 = vst [vmem:[%s252 + $0x110] sm:$0xff] %v1830
      %1885 = vst [vmem:[%s252 + $0x118] sm:$0xff] %v1831
      %1886 = vst [vmem:[%s252 + $0x120] sm:$0xff] %v1832
      %1887 = vst [vmem:[%s252 + $0x128] sm:$0xff] %v1833
      %1888 = vst [vmem:[%s252 + $0x130] sm:$0xff] %v1834
      %1889 = vst [vmem:[%s252 + $0x138] sm:$0xff] %v1835
      %1890 = vst [vmem:[%s252 + $0x140] sm:$0xff] %v1836
      %1891 = vst [vmem:[%s252 + $0x148] sm:$0xff] %v1837
      %1892 = vst [vmem:[%s252 + $0x150] sm:$0xff] %v1838
      %1893 = vst [vmem:[%s252 + $0x158] sm:$0xff] %v1839
      %1894 = vst [vmem:[%s252 + $0x160] sm:$0xff] %v1840
      %1895 = vst [vmem:[%s252 + $0x168] sm:$0xff] %v1841
      %1896 = vst [vmem:[%s252 + $0x170] sm:$0xff] %v1842
      %1897 = vst [vmem:[%s252 + $0x178] sm:$0xff] %v1843
      %1898 = vst [vmem:[%s252 + $0x180] sm:$0xff] %v1844
      %1899 = vst [vmem:[%s252 + $0x188] sm:$0xff] %v1845
      %1900 = vst [vmem:[%s252 + $0x190] sm:$0xff] %v1846
      %1901 = vst [vmem:[%s252 + $0x198] sm:$0xff] %v1847
      %1902 = vst [vmem:[%s252 + $0x1a0] sm:$0xff] %v1848
      %1903 = vst [vmem:[%s252 + $0x1a8] sm:$0xff] %v1849
      %s1904 = smul.u32 54, %s20
      %p1905 = scmp.lt.s32.totalorder %s19, 1
      %s1906 = scalar_select %p1905, %s19, 1
      %p1907 = scmp.lt.s32.totalorder %s1904, 53
      %s1908 = scalar_select %p1907, %s1904, 53
      %s1909 = smul.addr %s1906, 54
      %s1910 = sadd.s32 %s1908, %s1909
      %s1911 = smul.addr %s1910, 8
      %s1912 = scalar_lea.vmem %s4, %s1911
      // Predicated region
      $region37: #{nature_cnn_d_forward.6} parent=35 // pred_check
        %p1913 = pneg %p143
      $region38: #{nature_cnn_d_forward.6} parent=35 // pred_check_branch
        %1915 = sbr.rel (%p1913) target = $region40
      $region39: #{nature_cnn_d_forward.6} parent=35 // pred_region
        %s1916 = smul.u32 54, %s20
      $region40: #{nature_cnn_d_forward.6} parent=35 // pred_fallthru
        _
    $region36: #{nature_cnn_d_forward.6} parent=5 // pred_fallthru
      _
    %p1917 = scmp.le.s32.totalorder 2, %s10
    // Predicated region
    $region41: #{nature_cnn_d_forward.6} parent=5 // pred_check
      %p1918 = pneg %p1917
    $region42: #{nature_cnn_d_forward.6} parent=5 // pred_check_branch
      %1920 = sbr.rel (%p1918) target = $region44
    $region43: #{nature_cnn_d_forward.6} parent=5 // pred_region
      %s1921 = ssub.s32 %s10, 2
      // Predicated region
      $region45: #{nature_cnn_d_forward.6} parent=43 // pred_check
        %p1922 = pneg %p149
      $region46: #{nature_cnn_d_forward.6} parent=43 // pred_check_branch
        %1924 = sbr.rel (%p1922) target = $region48
      $region47: #{nature_cnn_d_forward.6} parent=43 // pred_region
        %s1925 = smul.u32 54, %s22
        %p1926 = scmp.lt.s32.totalorder %s21, 1
        %s1927 = scalar_select %p1926, %s21, 1
        %p1928 = scmp.lt.s32.totalorder %s1925, 53
        %s1929 = scalar_select %p1928, %s1925, 53
        %s1930 = smul.addr %s1927, 54
        %s1931 = sadd.s32 %s1929, %s1930
        %s1932 = smul.addr %s1931, 8
        %s1933 = scalar_lea.vmem %s4, %s1932
      $region48: #{nature_cnn_d_forward.6} parent=43 // pred_fallthru
        _
    $region44: #{nature_cnn_d_forward.6} parent=5 // pred_fallthru
      _
  $region6: #{nature_cnn_d_forward.6} parent=0 // loop_footer
    %s14 = sadd.s32 1, %s10
  $region7: #{nature_cnn_d_forward.6} parent=0 // loop_footer_branch
    %9 = sbr.rel target = $region3
  $region8: #{nature_cnn_d_forward.6} parent=0 // loop_exit
    _

// kernel: nature_cnn_d_forward.7
$region0: #{nature_cnn_d_forward.7}
  #allocation0 [shape = 'u32[]', space=smem, size = 0x4, offset = 0x4, fixed_abs, tag = 'smem constant byte address 0x4 - core index']
  #allocation1 [shape = 'u32[72,128]{1,0:T(1,128)}', space=vmem, size = 0x9000, scoped, tag = 'internal scratch']
  %s0 = inlined_call_operand.vmem [shape: bf16[2,88,1024], index: 0, kind: input, shape index: {}]
  %s1 = inlined_call_operand.vmem [shape: bf16[1024,128], index: 1, kind: input, shape index: {}]
  %s2 = inlined_call_operand.vmem [shape: f32[1,128], index: 2, kind: input, shape index: {}]
  %s3 = inlined_call_operand.vmem [shape: f32[2,1,128], index: 3, kind: input, shape index: {}]
  %s4 = inlined_call_operand.vmem [shape: f32[2,88,128], index: 4, kind: output, shape index: {}]
  %s5 = sld [smem:[#allocation0]]
  $region49: #{nature_cnn_d_forward.7} parent=0
    _
  %s7 = ssub.s32 1, %s5
  %s8 = scalar_select 0, %s7, %s5
  loop: start=0, step=1, limit=4
  $region2: #{nature_cnn_d_forward.7} parent=0 // loop_pre_header
    _
  $region3: #{nature_cnn_d_forward.7} parent=0 // loop_header
    %s10 = sphi 0, %s14
    %p11 = scmp.ge.s32.totalorder %s10, 4
    %s17 = sphi 0, %s29
    %s18 = sphi 0, %s25
    %s19 = sphi 0, %s17
    %s20 = sphi 0, %s18
    %s21 = sphi 0, %s19
    %s22 = sphi 0, %s20
    %s34 = sphi 0, %s36
    %s37 = sphi 0, %s34
    %s38 = sphi 0, %s37
    %s54 = sphi 0, %s38
    %s58 = sphi 0, %s58
    %s60 = sphi 0, %s58
    %s61 = sphi 0, %s60
    %s75 = sphi 0, %s61
    %s79 = sphi 0, %s79
    %s81 = sphi 0, %s79
    %s82 = sphi 0, %s81
    %s96 = sphi 0, %s82
    %s102 = sphi 0, %s104
    %s105 = sphi 0, %s102
    %s106 = sphi 0, %s105
    %s122 = sphi 0, %s106
    %s130 = sphi 0, %s132
    %s133 = sphi 0, %s130
    %s134 = sphi 0, %s133
    %s150 = sphi 0, %s134
  $region4: #{nature_cnn_d_forward.7} parent=0 // loop_header_branch
    %13 = sbr.rel (%p11) target = $region8
  $region5: #{nature_cnn_d_forward.7} parent=0 // loop_body
    %s15 = ssub.s32 %s10, 1
    %s16 = ssub.s32 %s10, 2
    %s23 = sadd.s32 1, %s18
    %p24 = scmp.ge.s32.totalorder %s23, 1
    %s25 = scalar_select %p24, 0, %s23
    %s26 = sadd.s32 1, %s17
    %s27 = scalar_select %p24, %s26, %s17
    %p28 = scmp.ge.s32.totalorder %s27, 2
    %s29 = scalar_select %p28, 0, %s27
    %s30 = ssub.s32 %s17, %s29
    %s31 = ssub.s32 %s18, %s25
    %s32 = sor.u32 %s30, %s31
    %p33 = scmp.eq.s32.totalorder %s32, 0
    %s35 = sadd.s32 %s34, 1
    %s36 = scalar_select %p33, %s34, %s35
    %p39 = pneg %p33
    %p40 = scmp.eq.s32.totalorder %s10, 1
    %p41 = por %p39, %p40
    %p42 = scmp.ne.s32.totalorder %s34, %s37
    %p43 = scmp.eq.s32.totalorder %s10, 0
    %p44 = por %p42, %p43
    %p45 = scmp.ne.s32.totalorder %s34, %s37
    %p46 = scmp.eq.s32.totalorder %s15, 1
    %p47 = por %p45, %p46
    %p48 = scmp.ne.s32.totalorder %s37, %s38
    %p49 = scmp.eq.s32.totalorder %s15, 0
    %p50 = por %p48, %p49
    %p51 = scmp.ne.s32.totalorder %s37, %s38
    %p52 = scmp.eq.s32.totalorder %s16, 1
    %p53 = por %p51, %p52
    %p55 = scmp.ne.s32.totalorder %s38, %s54
    %p56 = scmp.eq.s32.totalorder %s16, 0
    %p57 = por %p55, %p56
    %s59 = sadd.s32 %s58, 1
    %p62 = scmp.eq.s32.totalorder %s10, 1
    %p63 = scmp.ne.s32.totalorder %s58, %s60
    %p64 = scmp.eq.s32.totalorder %s10, 0
    %p65 = por %p63, %p64
    %p66 = scmp.ne.s32.totalorder %s58, %s60
    %p67 = scmp.eq.s32.totalorder %s15, 1
    %p68 = por %p66, %p67
    %p69 = scmp.ne.s32.totalorder %s60, %s61
    %p70 = scmp.eq.s32.totalorder %s15, 0
    %p71 = por %p69, %p70
    %p72 = scmp.ne.s32.totalorder %s60, %s61
    %p73 = scmp.eq.s32.totalorder %s16, 1
    %p74 = por %p72, %p73
    %p76 = scmp.ne.s32.totalorder %s61, %s75
    %p77 = scmp.eq.s32.totalorder %s16, 0
    %p78 = por %p76, %p77
    %s80 = sadd.s32 %s79, 1
    %p83 = scmp.eq.s32.totalorder %s10, 1
    %p84 = scmp.ne.s32.totalorder %s79, %s81
    %p85 = scmp.eq.s32.totalorder %s10, 0
    %p86 = por %p84, %p85
    %p87 = scmp.ne.s32.totalorder %s79, %s81
    %p88 = scmp.eq.s32.totalorder %s15, 1
    %p89 = por %p87, %p88
    %p90 = scmp.ne.s32.totalorder %s81, %s82
    %p91 = scmp.eq.s32.totalorder %s15, 0
    %p92 = por %p90, %p91
    %p93 = scmp.ne.s32.totalorder %s81, %s82
    %p94 = scmp.eq.s32.totalorder %s16, 1
    %p95 = por %p93, %p94
    %p97 = scmp.ne.s32.totalorder %s82, %s96
    %p98 = scmp.eq.s32.totalorder %s16, 0
    %p99 = por %p97, %p98
    %s100 = ssub.s32 %s17, %s29
    %p101 = scmp.eq.s32.totalorder %s100, 0
    %s103 = sadd.s32 %s102, 1
    %s104 = scalar_select %p101, %s102, %s103
    %p107 = pneg %p101
    %p108 = scmp.eq.s32.totalorder %s10, 1
    %p109 = por %p107, %p108
    %p110 = scmp.ne.s32.totalorder %s102, %s105
    %p111 = scmp.eq.s32.totalorder %s10, 0
    %p112 = por %p110, %p111
    %p113 = scmp.ne.s32.totalorder %s102, %s105
    %p114 = scmp.eq.s32.totalorder %s15, 1
    %p115 = por %p113, %p114
    %p116 = scmp.ne.s32.totalorder %s105, %s106
    %p117 = scmp.eq.s32.totalorder %s15, 0
    %p118 = por %p116, %p117
    %p119 = scmp.ne.s32.totalorder %s105, %s106
    %p120 = scmp.eq.s32.totalorder %s16, 1
    %p121 = por %p119, %p120
    %p123 = scmp.ne.s32.totalorder %s106, %s122
    %p124 = scmp.eq.s32.totalorder %s16, 0
    %p125 = por %p123, %p124
    %s126 = ssub.s32 %s17, %s29
    %s127 = ssub.s32 %s18, %s25
    %s128 = sor.u32 %s126, %s127
    %p129 = scmp.eq.s32.totalorder %s128, 0
    %s131 = sadd.s32 %s130, 1
    %s132 = scalar_select %p129, %s130, %s131
    %p135 = pneg %p129
    %p136 = scmp.eq.s32.totalorder %s10, 1
    %p137 = por %p135, %p136
    %p138 = scmp.ne.s32.totalorder %s130, %s133
    %p139 = scmp.eq.s32.totalorder %s10, 0
    %p140 = por %p138, %p139
    %p141 = scmp.ne.s32.totalorder %s130, %s133
    %p142 = scmp.eq.s32.totalorder %s15, 1
    %p143 = por %p141, %p142
    %p144 = scmp.ne.s32.totalorder %s133, %s134
    %p145 = scmp.eq.s32.totalorder %s15, 0
    %p146 = por %p144, %p145
    %p147 = scmp.ne.s32.totalorder %s133, %s134
    %p148 = scmp.eq.s32.totalorder %s16, 1
    %p149 = por %p147, %p148
    %p151 = scmp.ne.s32.totalorder %s134, %s150
    %p152 = scmp.eq.s32.totalorder %s16, 0
    %p153 = por %p151, %p152
    %p154 = scmp.le.s32.totalorder 1, %s10
    %p155 = scmp.lt.s32.totalorder %s10, 3
    %p156 = pnand %p154, %p155
    %p157 = pneg %p156
    // Predicated region
    $region9: #{nature_cnn_d_forward.7} parent=5 // pred_check
      _
    $region10: #{nature_cnn_d_forward.7} parent=5 // pred_check_branch
      %159 = sbr.rel (%p156) target = $region12
    $region11: #{nature_cnn_d_forward.7} parent=5 // pred_region
      %s160 = ssub.s32 %s10, 1
      // Predicated region
      $region13: #{nature_cnn_d_forward.7} parent=11 // pred_check
        %p161 = pneg %p71
      $region14: #{nature_cnn_d_forward.7} parent=11 // pred_check_branch
        %163 = sbr.rel (%p161) target = $region16
      $region15: #{nature_cnn_d_forward.7} parent=11 // pred_region
        _
      $region16: #{nature_cnn_d_forward.7} parent=11 // pred_fallthru
        _
      // Predicated region
      $region17: #{nature_cnn_d_forward.7} parent=11 // pred_check
        %p164 = pneg %p92
      $region18: #{nature_cnn_d_forward.7} parent=11 // pred_check_branch
        %166 = sbr.rel (%p164) target = $region20
      $region19: #{nature_cnn_d_forward.7} parent=11 // pred_region
        _
      $region20: #{nature_cnn_d_forward.7} parent=11 // pred_fallthru
        _
    $region12: #{nature_cnn_d_forward.7} parent=5 // pred_fallthru
      _
    %p167 = scmp.lt.s32.totalorder %s10, 2
    // Predicated region
    $region21: #{nature_cnn_d_forward.7} parent=5 // pred_check
      %p168 = pneg %p167
    $region22: #{nature_cnn_d_forward.7} parent=5 // pred_check_branch
      %170 = sbr.rel (%p168) target = $region24
    $region23: #{nature_cnn_d_forward.7} parent=5 // pred_region
      // Predicated region
      $region25: #{nature_cnn_d_forward.7} parent=23 // pred_check
        %p171 = pneg %p44
      $region26: #{nature_cnn_d_forward.7} parent=23 // pred_check_branch
        %173 = sbr.rel (%p171) target = $region28
      $region27: #{nature_cnn_d_forward.7} parent=23 // pred_region
        %s174 = smul.u32 11, %s18
        %p175 = scmp.lt.s32.totalorder %s17, 1
        %s176 = scalar_select %p175, %s17, 1
        %p177 = scmp.lt.s32.totalorder %s174, 10
        %s178 = scalar_select %p177, %s174, 10
        %s179 = smul.addr %s178, 8
        %s180 = smul.addr %s176, 88
        %s181 = sadd.s32 %s179, %s180
        %s182 = smul.addr %s181, 4
        %s183 = scalar_lea.vmem %s0, %s182
        %s184 = smul.u32 11, %s18
      $region28: #{nature_cnn_d_forward.7} parent=23 // pred_fallthru
        _
      // Predicated region
      $region29: #{nature_cnn_d_forward.7} parent=23 // pred_check
        %p185 = pneg %p112
      $region30: #{nature_cnn_d_forward.7} parent=23 // pred_check_branch
        %187 = sbr.rel (%p185) target = $region32
      $region31: #{nature_cnn_d_forward.7} parent=23 // pred_region
        %p188 = scmp.lt.s32.totalorder %s17, 1
        %s189 = scalar_select %p188, %s17, 1
        %s190 = scalar_lea.vmem %s3, %s189
      $region32: #{nature_cnn_d_forward.7} parent=23 // pred_fallthru
        _
    $region24: #{nature_cnn_d_forward.7} parent=5 // pred_fallthru
      _
    %p191 = scmp.le.s32.totalorder 1, %s10
    %p192 = scmp.lt.s32.totalorder %s10, 3
    %p193 = pnand %p191, %p192
    %p194 = pneg %p193
    // Predicated region
    $region33: #{nature_cnn_d_forward.7} parent=5 // pred_check
      _
    $region34: #{nature_cnn_d_forward.7} parent=5 // pred_check_branch
      %196 = sbr.rel (%p193) target = $region36
    $region35: #{nature_cnn_d_forward.7} parent=5 // pred_region
      %s197 = ssub.s32 %s10, 1
      %s198 = smul.u32 11, %s20
      %p199 = scmp.lt.s32.totalorder %s19, 1
      %s200 = scalar_select %p199, %s19, 1
      %p201 = scmp.lt.s32.totalorder %s198, 10
      %s202 = scalar_select %p201, %s198, 10
      %s203 = smul.addr %s202, 8
      %s204 = smul.addr %s200, 88
      %s205 = sadd.s32 %s203, %s204
      %s206 = smul.addr %s205, 4
      %s207 = scalar_lea.vmem %s0, %s206
      %p208 = pneg %p50
      %p209 = pneg %p47
      %p210 = pneg %p71
      %p211 = pneg %p68
      %p212 = pneg %p92
      %p213 = pneg %p89
      %p214 = scmp.lt.s32.totalorder %s19, 1
      %s215 = scalar_select %p214, %s19, 1
      %s216 = scalar_lea.vmem %s3, %s215
      %p217 = pneg %p118
      %p218 = pneg %p115
      %p219 = pneg %p146
      %p220 = pneg %p143
      %s221 = smul.u32 11, %s20
      %p222 = scmp.lt.s32.totalorder %s19, 1
      %s223 = scalar_select %p222, %s19, 1
      %p224 = scmp.lt.s32.totalorder %s221, 10
      %s225 = scalar_select %p224, %s221, 10
      %s226 = smul.addr %s223, 11
      %s227 = sadd.s32 %s225, %s226
      %s228 = smul.addr %s227, 8
      %s229 = scalar_lea.vmem %s4, %s228
      %s230 = smul.u32 11, %s20
      %p231 = scmp.lt.s32.totalorder %s19, 1
      %s232 = scalar_select %p231, %s19, 1
      %p233 = scmp.lt.s32.totalorder %s230, 10
      %s234 = scalar_select %p233, %s230, 10
      %s235 = smul.addr %s234, 8
      %s236 = smul.addr %s232, 88
      %s237 = sadd.s32 %s235, %s236
      %s238 = smul.addr %s237, 4
      %s239 = scalar_lea.vmem %s0, %s238
      %s240 = smul.u32 11, %s20
      %p241 = scmp.lt.s32.totalorder %s19, 1
      %s242 = scalar_select %p241, %s19, 1
      %s243 = scalar_lea.vmem %s3, %s242
      %s244 = smul.u32 11, %s20
      %p245 = scmp.lt.s32.totalorder %s19, 1
      %s246 = scalar_select %p245, %s19, 1
      %p247 = scmp.lt.s32.totalorder %s244, 10
      %s248 = scalar_select %p247, %s244, 10
      %s249 = smul.addr %s246, 11
      %s250 = sadd.s32 %s248, %s249
      %s251 = smul.addr %s250, 8
      %s252 = scalar_lea.vmem %s4, %s251
      %s253 = smul.u32 11, %s20
      %v254 = vld [vmem:[%s239] sm:$0xff]
      %v255 = vld [vmem:[%s239 + $0x8] sm:$0xff]
      %v256 = vld [vmem:[%s239 + $0x10] sm:$0xff]
      %v257 = vld [vmem:[%s239 + $0x18] sm:$0xff]
      %v258 = vld [vmem:[%s239 + $0x20] sm:$0xff]
      %v259 = vld [vmem:[%s239 + $0x28] sm:$0xff]
      %v260 = vld [vmem:[%s239 + $0x30] sm:$0xff]
      %v261 = vld [vmem:[%s239 + $0x38] sm:$0xff]
      %v262 = vld [vmem:[%s239 + $0x40] sm:$0xff]
      %v263 = vld [vmem:[%s239 + $0x48] sm:$0xff]
      %v264 = vld [vmem:[%s239 + $0x50] sm:$0xff]
      %v265 = vld [vmem:[%s239 + $0x58] sm:$0xff]
      %v266 = vld [vmem:[%s239 + $0x60] sm:$0xff]
      %v267 = vld [vmem:[%s239 + $0x68] sm:$0xff]
      %v268 = vld [vmem:[%s239 + $0x70] sm:$0xff]
      %v269 = vld [vmem:[%s239 + $0x78] sm:$0xff]
      %v270 = vld [vmem:[%s239 + $0x80] sm:$0xff]
      %v271 = vld [vmem:[%s239 + $0x88] sm:$0xff]
      %v272 = vld [vmem:[%s239 + $0x90] sm:$0xff]
      %v273 = vld [vmem:[%s239 + $0x98] sm:$0xff]
      %v274 = vld [vmem:[%s239 + $0xa0] sm:$0xff]
      %v275 = vld [vmem:[%s239 + $0xa8] sm:$0xff]
      %v276 = vld [vmem:[%s239 + $0xb0] sm:$0xff]
      %v277 = vld [vmem:[%s239 + $0xb8] sm:$0xff]
      %v278 = vld [vmem:[%s239 + $0xc0] sm:$0xff]
      %v279 = vld [vmem:[%s239 + $0xc8] sm:$0xff]
      %v280 = vld [vmem:[%s239 + $0xd0] sm:$0xff]
      %v281 = vld [vmem:[%s239 + $0xd8] sm:$0xff]
      %v282 = vld [vmem:[%s239 + $0xe0] sm:$0xff]
      %v283 = vld [vmem:[%s239 + $0xe8] sm:$0xff]
      %v284 = vld [vmem:[%s239 + $0xf0] sm:$0xff]
      %v285 = vld [vmem:[%s239 + $0xf8] sm:$0xff]
      %v286 = vld [vmem:[%s239 + $0x100] sm:$0xff]
      %v287 = vld [vmem:[%s239 + $0x108] sm:$0xff]
      %v288 = vld [vmem:[%s239 + $0x110] sm:$0xff]
      %v289 = vld [vmem:[%s239 + $0x118] sm:$0xff]
      %v290 = vld [vmem:[%s239 + $0x120] sm:$0xff]
      %v291 = vld [vmem:[%s239 + $0x128] sm:$0xff]
      %v292 = vld [vmem:[%s239 + $0x130] sm:$0xff]
      %v293 = vld [vmem:[%s239 + $0x138] sm:$0xff]
      %v294 = vld [vmem:[%s239 + $0x140] sm:$0xff]
      %v295 = vld [vmem:[%s239 + $0x148] sm:$0xff]
      %v296 = vld [vmem:[%s239 + $0x150] sm:$0xff]
      %v297 = vld [vmem:[%s239 + $0x158] sm:$0xff]
      %v298 = vld [vmem:[%s1] sm:$0xf]
      %v299 = vld [vmem:[%s1 + $0x4] sm:$0xf]
      %v300 = vld [vmem:[%s1 + $0x8] sm:$0xf]
      %v301 = vld [vmem:[%s1 + $0xc] sm:$0xf]
      %v302 = vld [vmem:[%s1 + $0x10] sm:$0xf]
      %v303 = vld [vmem:[%s1 + $0x14] sm:$0xf]
      %v304 = vld [vmem:[%s1 + $0x18] sm:$0xf]
      %v305 = vld [vmem:[%s1 + $0x1c] sm:$0xf]
      %v306 = vld [vmem:[%s1 + $0x20] sm:$0xf]
      %v307 = vld [vmem:[%s1 + $0x24] sm:$0xf]
      %v308 = vld [vmem:[%s1 + $0x28] sm:$0xf]
      %v309 = vld [vmem:[%s1 + $0x2c] sm:$0xf]
      %v310 = vld [vmem:[%s1 + $0x30] sm:$0xf]
      %v311 = vld [vmem:[%s1 + $0x34] sm:$0xf]
      %v312 = vld [vmem:[%s1 + $0x38] sm:$0xf]
      %v313 = vld [vmem:[%s1 + $0x3c] sm:$0xf]
      %v314 = vld [vmem:[%s1 + $0x40] sm:$0xf]
      %v315 = vld [vmem:[%s1 + $0x44] sm:$0xf]
      %v316 = vld [vmem:[%s1 + $0x48] sm:$0xf]
      %v317 = vld [vmem:[%s1 + $0x4c] sm:$0xf]
      %v318 = vld [vmem:[%s1 + $0x50] sm:$0xf]
      %v319 = vld [vmem:[%s1 + $0x54] sm:$0xf]
      %v320 = vld [vmem:[%s1 + $0x58] sm:$0xf]
      %v321 = vld [vmem:[%s1 + $0x5c] sm:$0xf]
      %v322 = vld [vmem:[%s1 + $0x60] sm:$0xf]
      %v323 = vld [vmem:[%s1 + $0x64] sm:$0xf]
      %v324 = vld [vmem:[%s1 + $0x68] sm:$0xf]
      %v325 = vld [vmem:[%s1 + $0x6c] sm:$0xf]
      %v326 = vld [vmem:[%s1 + $0x70] sm:$0xf]
      %v327 = vld [vmem:[%s1 + $0x74] sm:$0xf]
      %v328 = vld [vmem:[%s1 + $0x78] sm:$0xf]
      %v329 = vld [vmem:[%s1 + $0x7c] sm:$0xf]
      %v330 = vld [vmem:[%s1 + $0x80] sm:$0xf]
      %v331 = vld [vmem:[%s1 + $0x84] sm:$0xf]
      %v332 = vld [vmem:[%s1 + $0x88] sm:$0xf]
      %v333 = vld [vmem:[%s1 + $0x8c] sm:$0xf]
      %v334 = vld [vmem:[%s1 + $0x90] sm:$0xf]
      %v335 = vld [vmem:[%s1 + $0x94] sm:$0xf]
      %v336 = vld [vmem:[%s1 + $0x98] sm:$0xf]
      %v337 = vld [vmem:[%s1 + $0x9c] sm:$0xf]
      %v338 = vld [vmem:[%s1 + $0xa0] sm:$0xf]
      %v339 = vld [vmem:[%s1 + $0xa4] sm:$0xf]
      %v340 = vld [vmem:[%s1 + $0xa8] sm:$0xf]
      %v341 = vld [vmem:[%s1 + $0xac] sm:$0xf]
      %v342 = vld [vmem:[%s1 + $0xb0] sm:$0xf]
      %v343 = vld [vmem:[%s1 + $0xb4] sm:$0xf]
      %v344 = vld [vmem:[%s1 + $0xb8] sm:$0xf]
      %v345 = vld [vmem:[%s1 + $0xbc] sm:$0xf]
      %v346 = vld [vmem:[%s1 + $0xc0] sm:$0xf]
      %v347 = vld [vmem:[%s1 + $0xc4] sm:$0xf]
      %v348 = vld [vmem:[%s1 + $0xc8] sm:$0xf]
      %v349 = vld [vmem:[%s1 + $0xcc] sm:$0xf]
      %v350 = vld [vmem:[%s1 + $0xd0] sm:$0xf]
      %v351 = vld [vmem:[%s1 + $0xd4] sm:$0xf]
      %v352 = vld [vmem:[%s1 + $0xd8] sm:$0xf]
      %v353 = vld [vmem:[%s1 + $0xdc] sm:$0xf]
      %v354 = vld [vmem:[%s1 + $0xe0] sm:$0xf]
      %v355 = vld [vmem:[%s1 + $0xe4] sm:$0xf]
      %v356 = vld [vmem:[%s1 + $0xe8] sm:$0xf]
      %v357 = vld [vmem:[%s1 + $0xec] sm:$0xf]
      %v358 = vld [vmem:[%s1 + $0xf0] sm:$0xf]
      %v359 = vld [vmem:[%s1 + $0xf4] sm:$0xf]
      %v360 = vld [vmem:[%s1 + $0xf8] sm:$0xf]
      %v361 = vld [vmem:[%s1 + $0xfc] sm:$0xf]
      %v362 = vld [vmem:[%s1 + $0x100] sm:$0xf]
      %v363 = vld [vmem:[%s1 + $0x104] sm:$0xf]
      %v364 = vld [vmem:[%s1 + $0x108] sm:$0xf]
      %v365 = vld [vmem:[%s1 + $0x10c] sm:$0xf]
      %v366 = vld [vmem:[%s1 + $0x110] sm:$0xf]
      %v367 = vld [vmem:[%s1 + $0x114] sm:$0xf]
      %v368 = vld [vmem:[%s1 + $0x118] sm:$0xf]
      %v369 = vld [vmem:[%s1 + $0x11c] sm:$0xf]
      %v370 = vld [vmem:[%s1 + $0x120] sm:$0xf]
      %v371 = vld [vmem:[%s1 + $0x124] sm:$0xf]
      %v372 = vld [vmem:[%s1 + $0x128] sm:$0xf]
      %v373 = vld [vmem:[%s1 + $0x12c] sm:$0xf]
      %v374 = vld [vmem:[%s1 + $0x130] sm:$0xf]
      %v375 = vld [vmem:[%s1 + $0x134] sm:$0xf]
      %v376 = vld [vmem:[%s1 + $0x138] sm:$0xf]
      %v377 = vld [vmem:[%s1 + $0x13c] sm:$0xf]
      %v378 = vld [vmem:[%s1 + $0x140] sm:$0xf]
      %v379 = vld [vmem:[%s1 + $0x144] sm:$0xf]
      %v380 = vld [vmem:[%s1 + $0x148] sm:$0xf]
      %v381 = vld [vmem:[%s1 + $0x14c] sm:$0xf]
      %v382 = vld [vmem:[%s1 + $0x150] sm:$0xf]
      %v383 = vld [vmem:[%s1 + $0x154] sm:$0xf]
      %v384 = vld [vmem:[%s1 + $0x158] sm:$0xf]
      %v385 = vld [vmem:[%s1 + $0x15c] sm:$0xf]
      %v386 = vld [vmem:[%s1 + $0x160] sm:$0xf]
      %v387 = vld [vmem:[%s1 + $0x164] sm:$0xf]
      %v388 = vld [vmem:[%s1 + $0x168] sm:$0xf]
      %v389 = vld [vmem:[%s1 + $0x16c] sm:$0xf]
      %v390 = vld [vmem:[%s1 + $0x170] sm:$0xf]
      %v391 = vld [vmem:[%s1 + $0x174] sm:$0xf]
      %v392 = vld [vmem:[%s1 + $0x178] sm:$0xf]
      %v393 = vld [vmem:[%s1 + $0x17c] sm:$0xf]
      %v394 = vld [vmem:[%s1 + $0x180] sm:$0xf]
      %v395 = vld [vmem:[%s1 + $0x184] sm:$0xf]
      %v396 = vld [vmem:[%s1 + $0x188] sm:$0xf]
      %v397 = vld [vmem:[%s1 + $0x18c] sm:$0xf]
      %v398 = vld [vmem:[%s1 + $0x190] sm:$0xf]
      %v399 = vld [vmem:[%s1 + $0x194] sm:$0xf]
      %v400 = vld [vmem:[%s1 + $0x198] sm:$0xf]
      %v401 = vld [vmem:[%s1 + $0x19c] sm:$0xf]
      %v402 = vld [vmem:[%s1 + $0x1a0] sm:$0xf]
      %v403 = vld [vmem:[%s1 + $0x1a4] sm:$0xf]
      %v404 = vld [vmem:[%s1 + $0x1a8] sm:$0xf]
      %v405 = vld [vmem:[%s1 + $0x1ac] sm:$0xf]
      %v406 = vld [vmem:[%s1 + $0x1b0] sm:$0xf]
      %v407 = vld [vmem:[%s1 + $0x1b4] sm:$0xf]
      %v408 = vld [vmem:[%s1 + $0x1b8] sm:$0xf]
      %v409 = vld [vmem:[%s1 + $0x1bc] sm:$0xf]
      %v410 = vld [vmem:[%s1 + $0x1c0] sm:$0xf]
      %v411 = vld [vmem:[%s1 + $0x1c4] sm:$0xf]
      %v412 = vld [vmem:[%s1 + $0x1c8] sm:$0xf]
      %v413 = vld [vmem:[%s1 + $0x1cc] sm:$0xf]
      %v414 = vld [vmem:[%s1 + $0x1d0] sm:$0xf]
      %v415 = vld [vmem:[%s1 + $0x1d4] sm:$0xf]
      %v416 = vld [vmem:[%s1 + $0x1d8] sm:$0xf]
      %v417 = vld [vmem:[%s1 + $0x1dc] sm:$0xf]
      %v418 = vld [vmem:[%s1 + $0x1e0] sm:$0xf]
      %v419 = vld [vmem:[%s1 + $0x1e4] sm:$0xf]
      %v420 = vld [vmem:[%s1 + $0x1e8] sm:$0xf]
      %v421 = vld [vmem:[%s1 + $0x1ec] sm:$0xf]
      %v422 = vld [vmem:[%s1 + $0x1f0] sm:$0xf]
      %v423 = vld [vmem:[%s1 + $0x1f4] sm:$0xf]
      %v424 = vld [vmem:[%s1 + $0x1f8] sm:$0xf]
      %v425 = vld [vmem:[%s1 + $0x1fc] sm:$0xf]
      %v426 = vld [vmem:[%s2] sm:$0x1]
      %v428 = vperm.slane %v426, 0
      %v474 = vunpack.c.l.b16 %v254
      %v475 = vunpack.c.h.b16 %v254
      %v476 = vunpack.c.l.b16 %v255
      %v477 = vunpack.c.h.b16 %v255
      %v478 = vunpack.c.l.b16 %v256
      %v479 = vunpack.c.h.b16 %v256
      %v480 = vunpack.c.l.b16 %v257
      %v481 = vunpack.c.h.b16 %v257
      %v482 = vunpack.c.l.b16 %v258
      %v483 = vunpack.c.h.b16 %v258
      %v484 = vunpack.c.l.b16 %v259
      %v485 = vunpack.c.h.b16 %v259
      %v486 = vunpack.c.l.b16 %v260
      %v487 = vunpack.c.h.b16 %v260
      %v488 = vunpack.c.l.b16 %v261
      %v489 = vunpack.c.h.b16 %v261
      %v490 = vunpack.c.l.b16 %v262
      %v491 = vunpack.c.h.b16 %v262
      %v492 = vunpack.c.l.b16 %v263
      %v493 = vunpack.c.h.b16 %v263
      %v494 = vunpack.c.l.b16 %v264
      %v495 = vunpack.c.h.b16 %v264
      %v496 = vunpack.c.l.b16 %v265
      %v497 = vunpack.c.h.b16 %v265
      %v498 = vunpack.c.l.b16 %v266
      %v499 = vunpack.c.h.b16 %v266
      %v500 = vunpack.c.l.b16 %v267
      %v501 = vunpack.c.h.b16 %v267
      %v502 = vunpack.c.l.b16 %v268
      %v503 = vunpack.c.h.b16 %v268
      %v504 = vunpack.c.l.b16 %v269
      %v505 = vunpack.c.h.b16 %v269
      %v506 = vunpack.c.l.b16 %v270
      %v507 = vunpack.c.h.b16 %v270
      %v508 = vunpack.c.l.b16 %v271
      %v509 = vunpack.c.h.b16 %v271
      %v510 = vunpack.c.l.b16 %v272
      %v511 = vunpack.c.h.b16 %v272
      %v512 = vunpack.c.l.b16 %v273
      %v513 = vunpack.c.h.b16 %v273
      %v514 = vunpack.c.l.b16 %v274
      %v515 = vunpack.c.h.b16 %v274
      %v516 = vunpack.c.l.b16 %v275
      %v517 = vunpack.c.h.b16 %v275
      %v518 = vunpack.c.l.b16 %v276
      %v519 = vunpack.c.h.b16 %v276
      %v520 = vunpack.c.l.b16 %v277
      %v521 = vunpack.c.h.b16 %v277
      %v522 = vunpack.c.l.b16 %v278
      %v523 = vunpack.c.h.b16 %v278
      %v524 = vunpack.c.l.b16 %v279
      %v525 = vunpack.c.h.b16 %v279
      %v526 = vunpack.c.l.b16 %v280
      %v527 = vunpack.c.h.b16 %v280
      %v528 = vunpack.c.l.b16 %v281
      %v529 = vunpack.c.h.b16 %v281
      %v530 = vunpack.c.l.b16 %v282
      %v531 = vunpack.c.h.b16 %v282
      %v532 = vunpack.c.l.b16 %v283
      %v533 = vunpack.c.h.b16 %v283
      %v534 = vunpack.c.l.b16 %v284
      %v535 = vunpack.c.h.b16 %v284
      %v536 = vunpack.c.l.b16 %v285
      %v537 = vunpack.c.h.b16 %v285
      %v538 = vunpack.c.l.b16 %v286
      %v539 = vunpack.c.h.b16 %v286
      %v540 = vunpack.c.l.b16 %v287
      %v541 = vunpack.c.h.b16 %v287
      %v542 = vunpack.c.l.b16 %v288
      %v543 = vunpack.c.h.b16 %v288
      %v544 = vunpack.c.l.b16 %v289
      %v545 = vunpack.c.h.b16 %v289
      %v546 = vunpack.c.l.b16 %v290
      %v547 = vunpack.c.h.b16 %v290
      %v548 = vunpack.c.l.b16 %v291
      %v549 = vunpack.c.h.b16 %v291
      %v550 = vunpack.c.l.b16 %v292
      %v551 = vunpack.c.h.b16 %v292
      %v552 = vunpack.c.l.b16 %v293
      %v553 = vunpack.c.h.b16 %v293
      %v554 = vunpack.c.l.b16 %v294
      %v555 = vunpack.c.h.b16 %v294
      %v556 = vunpack.c.l.b16 %v295
      %v557 = vunpack.c.h.b16 %v295
      %v558 = vunpack.c.l.b16 %v296
      %v559 = vunpack.c.h.b16 %v296
      %v560 = vunpack.c.l.b16 %v297
      %v561 = vunpack.c.h.b16 %v297
      %v562 = vpack.c.b16 %v482, %v474
      %v563 = vpack.c.b16 %v483, %v475
      %v564 = vpack.c.b16 %v484, %v476
      %v565 = vpack.c.b16 %v485, %v477
      %v566 = vpack.c.b16 %v486, %v478
      %v567 = vpack.c.b16 %v487, %v479
      %v568 = vpack.c.b16 %v488, %v480
      %v569 = vpack.c.b16 %v489, %v481
      %v570 = vpack.c.b16 %v498, %v490
      %v571 = vpack.c.b16 %v499, %v491
      %v572 = vpack.c.b16 %v500, %v492
      %v573 = vpack.c.b16 %v501, %v493
      %v574 = vpack.c.b16 %v502, %v494
      %v575 = vpack.c.b16 %v503, %v495
      %v576 = vpack.c.b16 %v504, %v496
      %v577 = vpack.c.b16 %v505, %v497
      %v578 = vpack.c.b16 %v514, %v506
      %v579 = vpack.c.b16 %v515, %v507
      %v580 = vpack.c.b16 %v516, %v508
      %v581 = vpack.c.b16 %v517, %v509
      %v582 = vpack.c.b16 %v518, %v510
      %v583 = vpack.c.b16 %v519, %v511
      %v584 = vpack.c.b16 %v520, %v512
      %v585 = vpack.c.b16 %v521, %v513
      %v586 = vpack.c.b16 %v530, %v522
      %v587 = vpack.c.b16 %v531, %v523
      %v588 = vpack.c.b16 %v532, %v524
      %v589 = vpack.c.b16 %v533, %v525
      %v590 = vpack.c.b16 %v534, %v526
      %v591 = vpack.c.b16 %v535, %v527
      %v592 = vpack.c.b16 %v536, %v528
      %v593 = vpack.c.b16 %v537, %v529
      %v594 = vpack.c.b16 %v546, %v538
      %v595 = vpack.c.b16 %v547, %v539
      %v596 = vpack.c.b16 %v548, %v540
      %v597 = vpack.c.b16 %v549, %v541
      %v598 = vpack.c.b16 %v550, %v542
      %v599 = vpack.c.b16 %v551, %v543
      %v600 = vpack.c.b16 %v552, %v544
      %v601 = vpack.c.b16 %v553, %v545
      %v602 = vpack.c.b16 %v554, %v554
      %v603 = vpack.c.b16 %v555, %v555
      %v604 = vpack.c.b16 %v556, %v556
      %v605 = vpack.c.b16 %v557, %v557
      %v606 = vpack.c.b16 %v558, %v558
      %v607 = vpack.c.b16 %v559, %v559
      %v608 = vpack.c.b16 %v560, %v560
      %v609 = vpack.c.b16 %v561, %v561
      %v786 = vunpack.c.l.b16 %v298
      %v787 = vunpack.c.l.b16 %v299
      %v788 = vunpack.c.l.b16 %v300
      %v789 = vunpack.c.l.b16 %v301
      %v790 = vunpack.c.l.b16 %v302
      %v791 = vunpack.c.l.b16 %v303
      %v792 = vunpack.c.l.b16 %v304
      %v793 = vunpack.c.l.b16 %v305
      %v794 = vunpack.c.l.b16 %v306
      %v795 = vunpack.c.l.b16 %v307
      %v796 = vunpack.c.l.b16 %v308
      %v797 = vunpack.c.l.b16 %v309
      %v798 = vunpack.c.l.b16 %v310
      %v799 = vunpack.c.l.b16 %v311
      %v800 = vunpack.c.l.b16 %v312
      %v801 = vunpack.c.l.b16 %v313
      %v802 = vunpack.c.l.b16 %v314
      %v803 = vunpack.c.l.b16 %v315
      %v804 = vunpack.c.l.b16 %v316
      %v805 = vunpack.c.l.b16 %v317
      %v806 = vunpack.c.l.b16 %v318
      %v807 = vunpack.c.l.b16 %v319
      %v808 = vunpack.c.l.b16 %v320
      %v809 = vunpack.c.l.b16 %v321
      %v810 = vunpack.c.l.b16 %v322
      %v811 = vunpack.c.l.b16 %v323
      %v812 = vunpack.c.l.b16 %v324
      %v813 = vunpack.c.l.b16 %v325
      %v814 = vunpack.c.l.b16 %v326
      %v815 = vunpack.c.l.b16 %v327
      %v816 = vunpack.c.l.b16 %v328
      %v817 = vunpack.c.l.b16 %v329
      %v818 = vunpack.c.l.b16 %v330
      %v819 = vunpack.c.l.b16 %v331
      %v820 = vunpack.c.l.b16 %v332
      %v821 = vunpack.c.l.b16 %v333
      %v822 = vunpack.c.l.b16 %v334
      %v823 = vunpack.c.l.b16 %v335
      %v824 = vunpack.c.l.b16 %v336
      %v825 = vunpack.c.l.b16 %v337
      %v826 = vunpack.c.l.b16 %v338
      %v827 = vunpack.c.l.b16 %v339
      %v828 = vunpack.c.l.b16 %v340
      %v829 = vunpack.c.l.b16 %v341
      %v830 = vunpack.c.l.b16 %v342
      %v831 = vunpack.c.l.b16 %v343
      %v832 = vunpack.c.l.b16 %v344
      %v833 = vunpack.c.l.b16 %v345
      %v834 = vunpack.c.l.b16 %v346
      %v835 = vunpack.c.l.b16 %v347
      %v836 = vunpack.c.l.b16 %v348
      %v837 = vunpack.c.l.b16 %v349
      %v838 = vunpack.c.l.b16 %v350
      %v839 = vunpack.c.l.b16 %v351
      %v840 = vunpack.c.l.b16 %v352
      %v841 = vunpack.c.l.b16 %v353
      %v842 = vunpack.c.l.b16 %v354
      %v843 = vunpack.c.l.b16 %v355
      %v844 = vunpack.c.l.b16 %v356
      %v845 = vunpack.c.l.b16 %v357
      %v846 = vunpack.c.l.b16 %v358
      %v847 = vunpack.c.l.b16 %v359
      %v848 = vunpack.c.l.b16 %v360
      %v849 = vunpack.c.l.b16 %v361
      %v850 = vunpack.c.l.b16 %v362
      %v851 = vunpack.c.l.b16 %v363
      %v852 = vunpack.c.l.b16 %v364
      %v853 = vunpack.c.l.b16 %v365
      %v854 = vunpack.c.l.b16 %v366
      %v855 = vunpack.c.l.b16 %v367
      %v856 = vunpack.c.l.b16 %v368
      %v857 = vunpack.c.l.b16 %v369
      %v858 = vunpack.c.l.b16 %v370
      %v859 = vunpack.c.l.b16 %v371
      %v860 = vunpack.c.l.b16 %v372
      %v861 = vunpack.c.l.b16 %v373
      %v862 = vunpack.c.l.b16 %v374
      %v863 = vunpack.c.l.b16 %v375
      %v864 = vunpack.c.l.b16 %v376
      %v865 = vunpack.c.l.b16 %v377
      %v866 = vunpack.c.l.b16 %v378
      %v867 = vunpack.c.l.b16 %v379
      %v868 = vunpack.c.l.b16 %v380
      %v869 = vunpack.c.l.b16 %v381
      %v870 = vunpack.c.l.b16 %v382
      %v871 = vunpack.c.l.b16 %v383
      %v872 = vunpack.c.l.b16 %v384
      %v873 = vunpack.c.l.b16 %v385
      %v874 = vunpack.c.l.b16 %v386
      %v875 = vunpack.c.l.b16 %v387
      %v876 = vunpack.c.l.b16 %v388
      %v877 = vunpack.c.l.b16 %v389
      %v878 = vunpack.c.l.b16 %v390
      %v879 = vunpack.c.l.b16 %v391
      %v880 = vunpack.c.l.b16 %v392
      %v881 = vunpack.c.l.b16 %v393
      %v882 = vunpack.c.l.b16 %v394
      %v883 = vunpack.c.l.b16 %v395
      %v884 = vunpack.c.l.b16 %v396
      %v885 = vunpack.c.l.b16 %v397
      %v886 = vunpack.c.l.b16 %v398
      %v887 = vunpack.c.l.b16 %v399
      %v888 = vunpack.c.l.b16 %v400
      %v889 = vunpack.c.l.b16 %v401
      %v890 = vunpack.c.l.b16 %v402
      %v891 = vunpack.c.l.b16 %v403
      %v892 = vunpack.c.l.b16 %v404
      %v893 = vunpack.c.l.b16 %v405
      %v894 = vunpack.c.l.b16 %v406
      %v895 = vunpack.c.l.b16 %v407
      %v896 = vunpack.c.l.b16 %v408
      %v897 = vunpack.c.l.b16 %v409
      %v898 = vunpack.c.l.b16 %v410
      %v899 = vunpack.c.l.b16 %v411
      %v900 = vunpack.c.l.b16 %v412
      %v901 = vunpack.c.l.b16 %v413
      %v902 = vunpack.c.l.b16 %v414
      %v903 = vunpack.c.l.b16 %v415
      %v904 = vunpack.c.l.b16 %v416
      %v905 = vunpack.c.l.b16 %v417
      %v906 = vunpack.c.l.b16 %v418
      %v907 = vunpack.c.l.b16 %v419
      %v908 = vunpack.c.l.b16 %v420
      %v909 = vunpack.c.l.b16 %v421
      %v910 = vunpack.c.l.b16 %v422
      %v911 = vunpack.c.l.b16 %v423
      %v912 = vunpack.c.l.b16 %v424
      %v913 = vunpack.c.l.b16 %v425
      %v914 = vpack.c.b16 %v787, %v786
      %v915 = vpack.c.b16 %v789, %v788
      %v916 = vpack.c.b16 %v791, %v790
      %v917 = vpack.c.b16 %v793, %v792
      %v918 = vpack.c.b16 %v795, %v794
      %v919 = vpack.c.b16 %v797, %v796
      %v920 = vpack.c.b16 %v799, %v798
      %v921 = vpack.c.b16 %v801, %v800
      %v922 = vpack.c.b16 %v803, %v802
      %v923 = vpack.c.b16 %v805, %v804
      %v924 = vpack.c.b16 %v807, %v806
      %v925 = vpack.c.b16 %v809, %v808
      %v926 = vpack.c.b16 %v811, %v810
      %v927 = vpack.c.b16 %v813, %v812
      %v928 = vpack.c.b16 %v815, %v814
      %v929 = vpack.c.b16 %v817, %v816
      %v930 = vpack.c.b16 %v819, %v818
      %v931 = vpack.c.b16 %v821, %v820
      %v932 = vpack.c.b16 %v823, %v822
      %v933 = vpack.c.b16 %v825, %v824
      %v934 = vpack.c.b16 %v827, %v826
      %v935 = vpack.c.b16 %v829, %v828
      %v936 = vpack.c.b16 %v831, %v830
      %v937 = vpack.c.b16 %v833, %v832
      %v938 = vpack.c.b16 %v835, %v834
      %v939 = vpack.c.b16 %v837, %v836
      %v940 = vpack.c.b16 %v839, %v838
      %v941 = vpack.c.b16 %v841, %v840
      %v942 = vpack.c.b16 %v843, %v842
      %v943 = vpack.c.b16 %v845, %v844
      %v944 = vpack.c.b16 %v847, %v846
      %v945 = vpack.c.b16 %v849, %v848
      %v946 = vpack.c.b16 %v851, %v850
      %v947 = vpack.c.b16 %v853, %v852
      %v948 = vpack.c.b16 %v855, %v854
      %v949 = vpack.c.b16 %v857, %v856
      %v950 = vpack.c.b16 %v859, %v858
      %v951 = vpack.c.b16 %v861, %v860
      %v952 = vpack.c.b16 %v863, %v862
      %v953 = vpack.c.b16 %v865, %v864
      %v954 = vpack.c.b16 %v867, %v866
      %v955 = vpack.c.b16 %v869, %v868
      %v956 = vpack.c.b16 %v871, %v870
      %v957 = vpack.c.b16 %v873, %v872
      %v958 = vpack.c.b16 %v875, %v874
      %v959 = vpack.c.b16 %v877, %v876
      %v960 = vpack.c.b16 %v879, %v878
      %v961 = vpack.c.b16 %v881, %v880
      %v962 = vpack.c.b16 %v883, %v882
      %v963 = vpack.c.b16 %v885, %v884
      %v964 = vpack.c.b16 %v887, %v886
      %v965 = vpack.c.b16 %v889, %v888
      %v966 = vpack.c.b16 %v891, %v890
      %v967 = vpack.c.b16 %v893, %v892
      %v968 = vpack.c.b16 %v895, %v894
      %v969 = vpack.c.b16 %v897, %v896
      %v970 = vpack.c.b16 %v899, %v898
      %v971 = vpack.c.b16 %v901, %v900
      %v972 = vpack.c.b16 %v903, %v902
      %v973 = vpack.c.b16 %v905, %v904
      %v974 = vpack.c.b16 %v907, %v906
      %v975 = vpack.c.b16 %v909, %v908
      %v976 = vpack.c.b16 %v911, %v910
      %v977 = vpack.c.b16 %v913, %v912
      %1042 = vmatpush.bf16.msra.mxu0 %v921
      %1043 = vmatpush.bf16.msra.mxu0 %v920
      %1044 = vmatpush.bf16.msra.mxu0 %v919
      %1045 = vmatpush.bf16.msra.mxu0 %v918
      %1046 = vmatpush.bf16.msra.mxu0 %v917
      %1047 = vmatpush.bf16.msra.mxu0 %v916
      %1048 = vmatpush.bf16.msra.mxu0 %v915
      %1049 = vmatpush.bf16.msra.mxu0 %v914
      %1050 = vmatmul.bf16.gmra.mxu0 %v562
      %v1051 = vpop.f32.mrf.mxu0
      %v1052 = vadd.f32 %v428, %v1051
      %v1053 = vpop.f32.mrf.mxu0
      %v1054 = vadd.f32 %v428, %v1053
      %1055 = vmatmul.bf16.gmra.mxu0 %v570
      %v1056 = vpop.f32.mrf.mxu0
      %v1057 = vadd.f32 %v428, %v1056
      %v1058 = vpop.f32.mrf.mxu0
      %v1059 = vadd.f32 %v428, %v1058
      %1060 = vmatmul.bf16.gmra.mxu0 %v578
      %v1061 = vpop.f32.mrf.mxu0
      %v1062 = vadd.f32 %v428, %v1061
      %v1063 = vpop.f32.mrf.mxu0
      %v1064 = vadd.f32 %v428, %v1063
      %1065 = vmatmul.bf16.gmra.mxu0 %v586
      %v1066 = vpop.f32.mrf.mxu0
      %v1067 = vadd.f32 %v428, %v1066
      %v1068 = vpop.f32.mrf.mxu0
      %v1069 = vadd.f32 %v428, %v1068
      %1070 = vmatmul.bf16.gmra.mxu0 %v594
      %v1071 = vpop.f32.mrf.mxu0
      %v1072 = vadd.f32 %v428, %v1071
      %v1073 = vpop.f32.mrf.mxu0
      %v1074 = vadd.f32 %v428, %v1073
      %1075 = vmatmul.bf16.gmra.mxu0 %v602
      %v1076 = vpop.f32.mrf.mxu0
      %v1077 = vadd.f32 %v428, %v1076
      %v1078 = vpop.f32.mrf.mxu0
      %1079 = vdwg.mxu0
      %1080 = vmatpush.bf16.msra.mxu0 %v929
      %1081 = vmatpush.bf16.msra.mxu0 %v928
      %1082 = vmatpush.bf16.msra.mxu0 %v927
      %1083 = vmatpush.bf16.msra.mxu0 %v926
      %1084 = vmatpush.bf16.msra.mxu0 %v925
      %1085 = vmatpush.bf16.msra.mxu0 %v924
      %1086 = vmatpush.bf16.msra.mxu0 %v923
      %1087 = vmatpush.bf16.msra.mxu0 %v922
      %1088 = vmatmul.bf16.gmra.mxu0 %v563
      %v1089 = vpop.f32.mrf.mxu0
      %v1090 = vadd.f32 %v1052, %v1089
      %v1091 = vpop.f32.mrf.mxu0
      %v1092 = vadd.f32 %v1054, %v1091
      %1093 = vmatmul.bf16.gmra.mxu0 %v571
      %v1094 = vpop.f32.mrf.mxu0
      %v1095 = vadd.f32 %v1057, %v1094
      %v1096 = vpop.f32.mrf.mxu0
      %v1097 = vadd.f32 %v1059, %v1096
      %1098 = vmatmul.bf16.gmra.mxu0 %v579
      %v1099 = vpop.f32.mrf.mxu0
      %v1100 = vadd.f32 %v1062, %v1099
      %v1101 = vpop.f32.mrf.mxu0
      %v1102 = vadd.f32 %v1064, %v1101
      %1103 = vmatmul.bf16.gmra.mxu0 %v587
      %v1104 = vpop.f32.mrf.mxu0
      %v1105 = vadd.f32 %v1067, %v1104
      %v1106 = vpop.f32.mrf.mxu0
      %v1107 = vadd.f32 %v1069, %v1106
      %1108 = vmatmul.bf16.gmra.mxu0 %v595
      %v1109 = vpop.f32.mrf.mxu0
      %v1110 = vadd.f32 %v1072, %v1109
      %v1111 = vpop.f32.mrf.mxu0
      %v1112 = vadd.f32 %v1074, %v1111
      %1113 = vmatmul.bf16.gmra.mxu0 %v603
      %v1114 = vpop.f32.mrf.mxu0
      %v1115 = vadd.f32 %v1077, %v1114
      %v1116 = vpop.f32.mrf.mxu0
      %1117 = vdwg.mxu0
      %1118 = vmatpush.bf16.msra.mxu0 %v937
      %1119 = vmatpush.bf16.msra.mxu0 %v936
      %1120 = vmatpush.bf16.msra.mxu0 %v935
      %1121 = vmatpush.bf16.msra.mxu0 %v934
      %1122 = vmatpush.bf16.msra.mxu0 %v933
      %1123 = vmatpush.bf16.msra.mxu0 %v932
      %1124 = vmatpush.bf16.msra.mxu0 %v931
      %1125 = vmatpush.bf16.msra.mxu0 %v930
      %1126 = vmatmul.bf16.gmra.mxu0 %v564
      %v1127 = vpop.f32.mrf.mxu0
      %v1128 = vadd.f32 %v1090, %v1127
      %v1129 = vpop.f32.mrf.mxu0
      %v1130 = vadd.f32 %v1092, %v1129
      %1131 = vmatmul.bf16.gmra.mxu0 %v572
      %v1132 = vpop.f32.mrf.mxu0
      %v1133 = vadd.f32 %v1095, %v1132
      %v1134 = vpop.f32.mrf.mxu0
      %v1135 = vadd.f32 %v1097, %v1134
      %1136 = vmatmul.bf16.gmra.mxu0 %v580
      %v1137 = vpop.f32.mrf.mxu0
      %v1138 = vadd.f32 %v1100, %v1137
      %v1139 = vpop.f32.mrf.mxu0
      %v1140 = vadd.f32 %v1102, %v1139
      %1141 = vmatmul.bf16.gmra.mxu0 %v588
      %v1142 = vpop.f32.mrf.mxu0
      %v1143 = vadd.f32 %v1105, %v1142
      %v1144 = vpop.f32.mrf.mxu0
      %v1145 = vadd.f32 %v1107, %v1144
      %1146 = vmatmul.bf16.gmra.mxu0 %v596
      %v1147 = vpop.f32.mrf.mxu0
      %v1148 = vadd.f32 %v1110, %v1147
      %v1149 = vpop.f32.mrf.mxu0
      %v1150 = vadd.f32 %v1112, %v1149
      %1151 = vmatmul.bf16.gmra.mxu0 %v604
      %v1152 = vpop.f32.mrf.mxu0
      %v1153 = vadd.f32 %v1115, %v1152
      %v1154 = vpop.f32.mrf.mxu0
      %1155 = vdwg.mxu0
      %1156 = vmatpush.bf16.msra.mxu0 %v945
      %1157 = vmatpush.bf16.msra.mxu0 %v944
      %1158 = vmatpush.bf16.msra.mxu0 %v943
      %1159 = vmatpush.bf16.msra.mxu0 %v942
      %1160 = vmatpush.bf16.msra.mxu0 %v941
      %1161 = vmatpush.bf16.msra.mxu0 %v940
      %1162 = vmatpush.bf16.msra.mxu0 %v939
      %1163 = vmatpush.bf16.msra.mxu0 %v938
      %1164 = vmatmul.bf16.gmra.mxu0 %v565
      %v1165 = vpop.f32.mrf.mxu0
      %v1166 = vadd.f32 %v1128, %v1165
      %v1167 = vpop.f32.mrf.mxu0
      %v1168 = vadd.f32 %v1130, %v1167
      %1169 = vmatmul.bf16.gmra.mxu0 %v573
      %v1170 = vpop.f32.mrf.mxu0
      %v1171 = vadd.f32 %v1133, %v1170
      %v1172 = vpop.f32.mrf.mxu0
      %v1173 = vadd.f32 %v1135, %v1172
      %1174 = vmatmul.bf16.gmra.mxu0 %v581
      %v1175 = vpop.f32.mrf.mxu0
      %v1176 = vadd.f32 %v1138, %v1175
      %v1177 = vpop.f32.mrf.mxu0
      %v1178 = vadd.f32 %v1140, %v1177
      %1179 = vmatmul.bf16.gmra.mxu0 %v589
      %v1180 = vpop.f32.mrf.mxu0
      %v1181 = vadd.f32 %v1143, %v1180
      %v1182 = vpop.f32.mrf.mxu0
      %v1183 = vadd.f32 %v1145, %v1182
      %1184 = vmatmul.bf16.gmra.mxu0 %v597
      %v1185 = vpop.f32.mrf.mxu0
      %v1186 = vadd.f32 %v1148, %v1185
      %v1187 = vpop.f32.mrf.mxu0
      %v1188 = vadd.f32 %v1150, %v1187
      %1189 = vmatmul.bf16.gmra.mxu0 %v605
      %v1190 = vpop.f32.mrf.mxu0
      %v1191 = vadd.f32 %v1153, %v1190
      %v1192 = vpop.f32.mrf.mxu0
      %1193 = vdwg.mxu0
      %1194 = vmatpush.bf16.msra.mxu0 %v953
      %1195 = vmatpush.bf16.msra.mxu0 %v952
      %1196 = vmatpush.bf16.msra.mxu0 %v951
      %1197 = vmatpush.bf16.msra.mxu0 %v950
      %1198 = vmatpush.bf16.msra.mxu0 %v949
      %1199 = vmatpush.bf16.msra.mxu0 %v948
      %1200 = vmatpush.bf16.msra.mxu0 %v947
      %1201 = vmatpush.bf16.msra.mxu0 %v946
      %1202 = vmatmul.bf16.gmra.mxu0 %v566
      %v1203 = vpop.f32.mrf.mxu0
      %v1204 = vadd.f32 %v1166, %v1203
      %v1205 = vpop.f32.mrf.mxu0
      %v1206 = vadd.f32 %v1168, %v1205
      %1207 = vmatmul.bf16.gmra.mxu0 %v574
      %v1208 = vpop.f32.mrf.mxu0
      %v1209 = vadd.f32 %v1171, %v1208
      %v1210 = vpop.f32.mrf.mxu0
      %v1211 = vadd.f32 %v1173, %v1210
      %1212 = vmatmul.bf16.gmra.mxu0 %v582
      %v1213 = vpop.f32.mrf.mxu0
      %v1214 = vadd.f32 %v1176, %v1213
      %v1215 = vpop.f32.mrf.mxu0
      %v1216 = vadd.f32 %v1178, %v1215
      %1217 = vmatmul.bf16.gmra.mxu0 %v590
      %v1218 = vpop.f32.mrf.mxu0
      %v1219 = vadd.f32 %v1181, %v1218
      %v1220 = vpop.f32.mrf.mxu0
      %v1221 = vadd.f32 %v1183, %v1220
      %1222 = vmatmul.bf16.gmra.mxu0 %v598
      %v1223 = vpop.f32.mrf.mxu0
      %v1224 = vadd.f32 %v1186, %v1223
      %v1225 = vpop.f32.mrf.mxu0
      %v1226 = vadd.f32 %v1188, %v1225
      %1227 = vmatmul.bf16.gmra.mxu0 %v606
      %v1228 = vpop.f32.mrf.mxu0
      %v1229 = vadd.f32 %v1191, %v1228
      %v1230 = vpop.f32.mrf.mxu0
      %1231 = vdwg.mxu0
      %1232 = vmatpush.bf16.msra.mxu0 %v961
      %1233 = vmatpush.bf16.msra.mxu0 %v960
      %1234 = vmatpush.bf16.msra.mxu0 %v959
      %1235 = vmatpush.bf16.msra.mxu0 %v958
      %1236 = vmatpush.bf16.msra.mxu0 %v957
      %1237 = vmatpush.bf16.msra.mxu0 %v956
      %1238 = vmatpush.bf16.msra.mxu0 %v955
      %1239 = vmatpush.bf16.msra.mxu0 %v954
      %1240 = vmatmul.bf16.gmra.mxu0 %v567
      %v1241 = vpop.f32.mrf.mxu0
      %v1242 = vadd.f32 %v1204, %v1241
      %v1243 = vpop.f32.mrf.mxu0
      %v1244 = vadd.f32 %v1206, %v1243
      %1245 = vmatmul.bf16.gmra.mxu0 %v575
      %v1246 = vpop.f32.mrf.mxu0
      %v1247 = vadd.f32 %v1209, %v1246
      %v1248 = vpop.f32.mrf.mxu0
      %v1249 = vadd.f32 %v1211, %v1248
      %1250 = vmatmul.bf16.gmra.mxu0 %v583
      %v1251 = vpop.f32.mrf.mxu0
      %v1252 = vadd.f32 %v1214, %v1251
      %v1253 = vpop.f32.mrf.mxu0
      %v1254 = vadd.f32 %v1216, %v1253
      %1255 = vmatmul.bf16.gmra.mxu0 %v591
      %v1256 = vpop.f32.mrf.mxu0
      %v1257 = vadd.f32 %v1219, %v1256
      %v1258 = vpop.f32.mrf.mxu0
      %v1259 = vadd.f32 %v1221, %v1258
      %1260 = vmatmul.bf16.gmra.mxu0 %v599
      %v1261 = vpop.f32.mrf.mxu0
      %v1262 = vadd.f32 %v1224, %v1261
      %v1263 = vpop.f32.mrf.mxu0
      %v1264 = vadd.f32 %v1226, %v1263
      %1265 = vmatmul.bf16.gmra.mxu0 %v607
      %v1266 = vpop.f32.mrf.mxu0
      %v1267 = vadd.f32 %v1229, %v1266
      %v1268 = vpop.f32.mrf.mxu0
      %1269 = vdwg.mxu0
      %1270 = vmatpush.bf16.msra.mxu0 %v969
      %1271 = vmatpush.bf16.msra.mxu0 %v968
      %1272 = vmatpush.bf16.msra.mxu0 %v967
      %1273 = vmatpush.bf16.msra.mxu0 %v966
      %1274 = vmatpush.bf16.msra.mxu0 %v965
      %1275 = vmatpush.bf16.msra.mxu0 %v964
      %1276 = vmatpush.bf16.msra.mxu0 %v963
      %1277 = vmatpush.bf16.msra.mxu0 %v962
      %1278 = vmatmul.bf16.gmra.mxu0 %v568
      %v1279 = vpop.f32.mrf.mxu0
      %v1280 = vadd.f32 %v1242, %v1279
      %v1281 = vpop.f32.mrf.mxu0
      %v1282 = vadd.f32 %v1244, %v1281
      %1283 = vmatmul.bf16.gmra.mxu0 %v576
      %v1284 = vpop.f32.mrf.mxu0
      %v1285 = vadd.f32 %v1247, %v1284
      %v1286 = vpop.f32.mrf.mxu0
      %v1287 = vadd.f32 %v1249, %v1286
      %1288 = vmatmul.bf16.gmra.mxu0 %v584
      %v1289 = vpop.f32.mrf.mxu0
      %v1290 = vadd.f32 %v1252, %v1289
      %v1291 = vpop.f32.mrf.mxu0
      %v1292 = vadd.f32 %v1254, %v1291
      %1293 = vmatmul.bf16.gmra.mxu0 %v592
      %v1294 = vpop.f32.mrf.mxu0
      %v1295 = vadd.f32 %v1257, %v1294
      %v1296 = vpop.f32.mrf.mxu0
      %v1297 = vadd.f32 %v1259, %v1296
      %1298 = vmatmul.bf16.gmra.mxu0 %v600
      %v1299 = vpop.f32.mrf.mxu0
      %v1300 = vadd.f32 %v1262, %v1299
      %v1301 = vpop.f32.mrf.mxu0
      %v1302 = vadd.f32 %v1264, %v1301
      %1303 = vmatmul.bf16.gmra.mxu0 %v608
      %v1304 = vpop.f32.mrf.mxu0
      %v1305 = vadd.f32 %v1267, %v1304
      %v1306 = vpop.f32.mrf.mxu0
      %1307 = vdwg.mxu0
      %1308 = vmatpush.bf16.msra.mxu0 %v977
      %1309 = vmatpush.bf16.msra.mxu0 %v976
      %1310 = vmatpush.bf16.msra.mxu0 %v975
      %1311 = vmatpush.bf16.msra.mxu0 %v974
      %1312 = vmatpush.bf16.msra.mxu0 %v973
      %1313 = vmatpush.bf16.msra.mxu0 %v972
      %1314 = vmatpush.bf16.msra.mxu0 %v971
      %1315 = vmatpush.bf16.msra.mxu0 %v970
      %1316 = vmatmul.bf16.gmra.mxu0 %v569
      %v1317 = vpop.f32.mrf.mxu0
      %v1318 = vadd.f32 %v1280, %v1317
      %v1319 = vpop.f32.mrf.mxu0
      %v1320 = vadd.f32 %v1282, %v1319
      %1321 = vmatmul.bf16.gmra.mxu0 %v577
      %v1322 = vpop.f32.mrf.mxu0
      %v1323 = vadd.f32 %v1285, %v1322
      %v1324 = vpop.f32.mrf.mxu0
      %v1325 = vadd.f32 %v1287, %v1324
      %1326 = vmatmul.bf16.gmra.mxu0 %v585
      %v1327 = vpop.f32.mrf.mxu0
      %v1328 = vadd.f32 %v1290, %v1327
      %v1329 = vpop.f32.mrf.mxu0
      %v1330 = vadd.f32 %v1292, %v1329
      %1331 = vmatmul.bf16.gmra.mxu0 %v593
      %v1332 = vpop.f32.mrf.mxu0
      %v1333 = vadd.f32 %v1295, %v1332
      %v1334 = vpop.f32.mrf.mxu0
      %v1335 = vadd.f32 %v1297, %v1334
      %1336 = vmatmul.bf16.gmra.mxu0 %v601
      %v1337 = vpop.f32.mrf.mxu0
      %v1338 = vadd.f32 %v1300, %v1337
      %v1339 = vpop.f32.mrf.mxu0
      %v1340 = vadd.f32 %v1302, %v1339
      %1341 = vmatmul.bf16.gmra.mxu0 %v609
      %v1342 = vpop.f32.mrf.mxu0
      %v1343 = vadd.f32 %v1305, %v1342
      %v1344 = vpop.f32.mrf.mxu0
      %1345 = vdwg.mxu0
      %v1346 = vmax.f32 %v1318, 0.0
      %v1347 = vmax.f32 %v1320, 0.0
      %v1348 = vmax.f32 %v1323, 0.0
      %v1349 = vmax.f32 %v1325, 0.0
      %v1350 = vmax.f32 %v1328, 0.0
      %v1351 = vmax.f32 %v1330, 0.0
      %v1352 = vmax.f32 %v1333, 0.0
      %v1353 = vmax.f32 %v1335, 0.0
      %v1354 = vmax.f32 %v1338, 0.0
      %v1355 = vmax.f32 %v1340, 0.0
      %v1356 = vmax.f32 %v1343, 0.0
      %v1357 = vld [vmem:[%s243] sm:$0x1]
      %v1359 = vperm.slane %v1357, 0
      %v1361 = vadd.f32 %v1346, %v1359
      %v1362 = vadd.f32 %v1347, %v1359
      %v1363 = vadd.f32 %v1348, %v1359
      %v1364 = vadd.f32 %v1349, %v1359
      %v1365 = vadd.f32 %v1350, %v1359
      %v1366 = vadd.f32 %v1351, %v1359
      %v1367 = vadd.f32 %v1352, %v1359
      %v1368 = vadd.f32 %v1353, %v1359
      %v1369 = vadd.f32 %v1354, %v1359
      %v1370 = vadd.f32 %v1355, %v1359
      %v1371 = vadd.f32 %v1356, %v1359
      %1372 = vst [vmem:[%s252] sm:$0xff] %v1361
      %1373 = vst [vmem:[%s252 + $0x8] sm:$0xff] %v1362
      %1374 = vst [vmem:[%s252 + $0x10] sm:$0xff] %v1363
      %1375 = vst [vmem:[%s252 + $0x18] sm:$0xff] %v1364
      %1376 = vst [vmem:[%s252 + $0x20] sm:$0xff] %v1365
      %1377 = vst [vmem:[%s252 + $0x28] sm:$0xff] %v1366
      %1378 = vst [vmem:[%s252 + $0x30] sm:$0xff] %v1367
      %1379 = vst [vmem:[%s252 + $0x38] sm:$0xff] %v1368
      %1380 = vst [vmem:[%s252 + $0x40] sm:$0xff] %v1369
      %1381 = vst [vmem:[%s252 + $0x48] sm:$0xff] %v1370
      %1382 = vst [vmem:[%s252 + $0x50] sm:$0xff] %v1371
      %s1383 = smul.u32 11, %s20
      %p1384 = scmp.lt.s32.totalorder %s19, 1
      %s1385 = scalar_select %p1384, %s19, 1
      %p1386 = scmp.lt.s32.totalorder %s1383, 10
      %s1387 = scalar_select %p1386, %s1383, 10
      %s1388 = smul.addr %s1385, 11
      %s1389 = sadd.s32 %s1387, %s1388
      %s1390 = smul.addr %s1389, 8
      %s1391 = scalar_lea.vmem %s4, %s1390
      // Predicated region
      $region37: #{nature_cnn_d_forward.7} parent=35 // pred_check
        %p1392 = pneg %p143
      $region38: #{nature_cnn_d_forward.7} parent=35 // pred_check_branch
        %1394 = sbr.rel (%p1392) target = $region40
      $region39: #{nature_cnn_d_forward.7} parent=35 // pred_region
        %s1395 = smul.u32 11, %s20
      $region40: #{nature_cnn_d_forward.7} parent=35 // pred_fallthru
        _
    $region36: #{nature_cnn_d_forward.7} parent=5 // pred_fallthru
      _
    %p1396 = scmp.le.s32.totalorder 2, %s10
    // Predicated region
    $region41: #{nature_cnn_d_forward.7} parent=5 // pred_check
      %p1397 = pneg %p1396
    $region42: #{nature_cnn_d_forward.7} parent=5 // pred_check_branch
      %1399 = sbr.rel (%p1397) target = $region44
    $region43: #{nature_cnn_d_forward.7} parent=5 // pred_region
      %s1400 = ssub.s32 %s10, 2
      // Predicated region
      $region45: #{nature_cnn_d_forward.7} parent=43 // pred_check
        %p1401 = pneg %p149
      $region46: #{nature_cnn_d_forward.7} parent=43 // pred_check_branch
        %1403 = sbr.rel (%p1401) target = $region48
      $region47: #{nature_cnn_d_forward.7} parent=43 // pred_region
        %s1404 = smul.u32 11, %s22
        %p1405 = scmp.lt.s32.totalorder %s21, 1
        %s1406 = scalar_select %p1405, %s21, 1
        %p1407 = scmp.lt.s32.totalorder %s1404, 10
        %s1408 = scalar_select %p1407, %s1404, 10
        %s1409 = smul.addr %s1406, 11
        %s1410 = sadd.s32 %s1408, %s1409
        %s1411 = smul.addr %s1410, 8
        %s1412 = scalar_lea.vmem %s4, %s1411
      $region48: #{nature_cnn_d_forward.7} parent=43 // pred_fallthru
        _
    $region44: #{nature_cnn_d_forward.7} parent=5 // pred_fallthru
      _
  $region6: #{nature_cnn_d_forward.7} parent=0 // loop_footer
    %s14 = sadd.s32 1, %s10
  $region7: #{nature_cnn_d_forward.7} parent=0 // loop_footer_branch
    %9 = sbr.rel target = $region3
  $region8: #{nature_cnn_d_forward.7} parent=0 // loop_exit
    _

// kernel: nature_cnn_d_forward.8
$region0: #{nature_cnn_d_forward.8}
  #allocation0 [shape = 'u32[]', space=smem, size = 0x4, offset = 0x4, fixed_abs, tag = 'smem constant byte address 0x4 - core index']
  #allocation1 [shape = 'u32[72,128]{1,0:T(1,128)}', space=vmem, size = 0x9000, scoped, tag = 'internal scratch']
  %s0 = inlined_call_operand.vmem [shape: bf16[2,56,1152], index: 0, kind: input, shape index: {}]
  %s1 = inlined_call_operand.vmem [shape: bf16[1152,128], index: 1, kind: input, shape index: {}]
  %s2 = inlined_call_operand.vmem [shape: f32[1,128], index: 2, kind: input, shape index: {}]
  %s3 = inlined_call_operand.vmem [shape: f32[2,1,128], index: 3, kind: input, shape index: {}]
  %s4 = inlined_call_operand.vmem [shape: f32[2,56,128], index: 4, kind: output, shape index: {}]
  %s5 = sld [smem:[#allocation0]]
  $region49: #{nature_cnn_d_forward.8} parent=0
    _
  %s7 = ssub.s32 1, %s5
  %s8 = scalar_select 0, %s7, %s5
  loop: start=0, step=1, limit=4
  $region2: #{nature_cnn_d_forward.8} parent=0 // loop_pre_header
    _
  $region3: #{nature_cnn_d_forward.8} parent=0 // loop_header
    %s10 = sphi 0, %s14
    %p11 = scmp.ge.s32.totalorder %s10, 4
    %s17 = sphi 0, %s29
    %s18 = sphi 0, %s25
    %s19 = sphi 0, %s17
    %s20 = sphi 0, %s18
    %s21 = sphi 0, %s19
    %s22 = sphi 0, %s20
    %s34 = sphi 0, %s36
    %s37 = sphi 0, %s34
    %s38 = sphi 0, %s37
    %s54 = sphi 0, %s38
    %s58 = sphi 0, %s58
    %s60 = sphi 0, %s58
    %s61 = sphi 0, %s60
    %s75 = sphi 0, %s61
    %s79 = sphi 0, %s79
    %s81 = sphi 0, %s79
    %s82 = sphi 0, %s81
    %s96 = sphi 0, %s82
    %s102 = sphi 0, %s104
    %s105 = sphi 0, %s102
    %s106 = sphi 0, %s105
    %s122 = sphi 0, %s106
    %s130 = sphi 0, %s132
    %s133 = sphi 0, %s130
    %s134 = sphi 0, %s133
    %s150 = sphi 0, %s134
  $region4: #{nature_cnn_d_forward.8} parent=0 // loop_header_branch
    %13 = sbr.rel (%p11) target = $region8
  $region5: #{nature_cnn_d_forward.8} parent=0 // loop_body
    %s15 = ssub.s32 %s10, 1
    %s16 = ssub.s32 %s10, 2
    %s23 = sadd.s32 1, %s18
    %p24 = scmp.ge.s32.totalorder %s23, 1
    %s25 = scalar_select %p24, 0, %s23
    %s26 = sadd.s32 1, %s17
    %s27 = scalar_select %p24, %s26, %s17
    %p28 = scmp.ge.s32.totalorder %s27, 2
    %s29 = scalar_select %p28, 0, %s27
    %s30 = ssub.s32 %s17, %s29
    %s31 = ssub.s32 %s18, %s25
    %s32 = sor.u32 %s30, %s31
    %p33 = scmp.eq.s32.totalorder %s32, 0
    %s35 = sadd.s32 %s34, 1
    %s36 = scalar_select %p33, %s34, %s35
    %p39 = pneg %p33
    %p40 = scmp.eq.s32.totalorder %s10, 1
    %p41 = por %p39, %p40
    %p42 = scmp.ne.s32.totalorder %s34, %s37
    %p43 = scmp.eq.s32.totalorder %s10, 0
    %p44 = por %p42, %p43
    %p45 = scmp.ne.s32.totalorder %s34, %s37
    %p46 = scmp.eq.s32.totalorder %s15, 1
    %p47 = por %p45, %p46
    %p48 = scmp.ne.s32.totalorder %s37, %s38
    %p49 = scmp.eq.s32.totalorder %s15, 0
    %p50 = por %p48, %p49
    %p51 = scmp.ne.s32.totalorder %s37, %s38
    %p52 = scmp.eq.s32.totalorder %s16, 1
    %p53 = por %p51, %p52
    %p55 = scmp.ne.s32.totalorder %s38, %s54
    %p56 = scmp.eq.s32.totalorder %s16, 0
    %p57 = por %p55, %p56
    %s59 = sadd.s32 %s58, 1
    %p62 = scmp.eq.s32.totalorder %s10, 1
    %p63 = scmp.ne.s32.totalorder %s58, %s60
    %p64 = scmp.eq.s32.totalorder %s10, 0
    %p65 = por %p63, %p64
    %p66 = scmp.ne.s32.totalorder %s58, %s60
    %p67 = scmp.eq.s32.totalorder %s15, 1
    %p68 = por %p66, %p67
    %p69 = scmp.ne.s32.totalorder %s60, %s61
    %p70 = scmp.eq.s32.totalorder %s15, 0
    %p71 = por %p69, %p70
    %p72 = scmp.ne.s32.totalorder %s60, %s61
    %p73 = scmp.eq.s32.totalorder %s16, 1
    %p74 = por %p72, %p73
    %p76 = scmp.ne.s32.totalorder %s61, %s75
    %p77 = scmp.eq.s32.totalorder %s16, 0
    %p78 = por %p76, %p77
    %s80 = sadd.s32 %s79, 1
    %p83 = scmp.eq.s32.totalorder %s10, 1
    %p84 = scmp.ne.s32.totalorder %s79, %s81
    %p85 = scmp.eq.s32.totalorder %s10, 0
    %p86 = por %p84, %p85
    %p87 = scmp.ne.s32.totalorder %s79, %s81
    %p88 = scmp.eq.s32.totalorder %s15, 1
    %p89 = por %p87, %p88
    %p90 = scmp.ne.s32.totalorder %s81, %s82
    %p91 = scmp.eq.s32.totalorder %s15, 0
    %p92 = por %p90, %p91
    %p93 = scmp.ne.s32.totalorder %s81, %s82
    %p94 = scmp.eq.s32.totalorder %s16, 1
    %p95 = por %p93, %p94
    %p97 = scmp.ne.s32.totalorder %s82, %s96
    %p98 = scmp.eq.s32.totalorder %s16, 0
    %p99 = por %p97, %p98
    %s100 = ssub.s32 %s17, %s29
    %p101 = scmp.eq.s32.totalorder %s100, 0
    %s103 = sadd.s32 %s102, 1
    %s104 = scalar_select %p101, %s102, %s103
    %p107 = pneg %p101
    %p108 = scmp.eq.s32.totalorder %s10, 1
    %p109 = por %p107, %p108
    %p110 = scmp.ne.s32.totalorder %s102, %s105
    %p111 = scmp.eq.s32.totalorder %s10, 0
    %p112 = por %p110, %p111
    %p113 = scmp.ne.s32.totalorder %s102, %s105
    %p114 = scmp.eq.s32.totalorder %s15, 1
    %p115 = por %p113, %p114
    %p116 = scmp.ne.s32.totalorder %s105, %s106
    %p117 = scmp.eq.s32.totalorder %s15, 0
    %p118 = por %p116, %p117
    %p119 = scmp.ne.s32.totalorder %s105, %s106
    %p120 = scmp.eq.s32.totalorder %s16, 1
    %p121 = por %p119, %p120
    %p123 = scmp.ne.s32.totalorder %s106, %s122
    %p124 = scmp.eq.s32.totalorder %s16, 0
    %p125 = por %p123, %p124
    %s126 = ssub.s32 %s17, %s29
    %s127 = ssub.s32 %s18, %s25
    %s128 = sor.u32 %s126, %s127
    %p129 = scmp.eq.s32.totalorder %s128, 0
    %s131 = sadd.s32 %s130, 1
    %s132 = scalar_select %p129, %s130, %s131
    %p135 = pneg %p129
    %p136 = scmp.eq.s32.totalorder %s10, 1
    %p137 = por %p135, %p136
    %p138 = scmp.ne.s32.totalorder %s130, %s133
    %p139 = scmp.eq.s32.totalorder %s10, 0
    %p140 = por %p138, %p139
    %p141 = scmp.ne.s32.totalorder %s130, %s133
    %p142 = scmp.eq.s32.totalorder %s15, 1
    %p143 = por %p141, %p142
    %p144 = scmp.ne.s32.totalorder %s133, %s134
    %p145 = scmp.eq.s32.totalorder %s15, 0
    %p146 = por %p144, %p145
    %p147 = scmp.ne.s32.totalorder %s133, %s134
    %p148 = scmp.eq.s32.totalorder %s16, 1
    %p149 = por %p147, %p148
    %p151 = scmp.ne.s32.totalorder %s134, %s150
    %p152 = scmp.eq.s32.totalorder %s16, 0
    %p153 = por %p151, %p152
    %p154 = scmp.le.s32.totalorder 1, %s10
    %p155 = scmp.lt.s32.totalorder %s10, 3
    %p156 = pnand %p154, %p155
    %p157 = pneg %p156
    // Predicated region
    $region9: #{nature_cnn_d_forward.8} parent=5 // pred_check
      _
    $region10: #{nature_cnn_d_forward.8} parent=5 // pred_check_branch
      %159 = sbr.rel (%p156) target = $region12
    $region11: #{nature_cnn_d_forward.8} parent=5 // pred_region
      %s160 = ssub.s32 %s10, 1
      // Predicated region
      $region13: #{nature_cnn_d_forward.8} parent=11 // pred_check
        %p161 = pneg %p71
      $region14: #{nature_cnn_d_forward.8} parent=11 // pred_check_branch
        %163 = sbr.rel (%p161) target = $region16
      $region15: #{nature_cnn_d_forward.8} parent=11 // pred_region
        _
      $region16: #{nature_cnn_d_forward.8} parent=11 // pred_fallthru
        _
      // Predicated region
      $region17: #{nature_cnn_d_forward.8} parent=11 // pred_check
        %p164 = pneg %p92
      $region18: #{nature_cnn_d_forward.8} parent=11 // pred_check_branch
        %166 = sbr.rel (%p164) target = $region20
      $region19: #{nature_cnn_d_forward.8} parent=11 // pred_region
        _
      $region20: #{nature_cnn_d_forward.8} parent=11 // pred_fallthru
        _
    $region12: #{nature_cnn_d_forward.8} parent=5 // pred_fallthru
      _
    %p167 = scmp.lt.s32.totalorder %s10, 2
    // Predicated region
    $region21: #{nature_cnn_d_forward.8} parent=5 // pred_check
      %p168 = pneg %p167
    $region22: #{nature_cnn_d_forward.8} parent=5 // pred_check_branch
      %170 = sbr.rel (%p168) target = $region24
    $region23: #{nature_cnn_d_forward.8} parent=5 // pred_region
      // Predicated region
      $region25: #{nature_cnn_d_forward.8} parent=23 // pred_check
        %p171 = pneg %p44
      $region26: #{nature_cnn_d_forward.8} parent=23 // pred_check_branch
        %173 = sbr.rel (%p171) target = $region28
      $region27: #{nature_cnn_d_forward.8} parent=23 // pred_region
        %s174 = smul.u32 7, %s18
        %p175 = scmp.lt.s32.totalorder %s17, 1
        %s176 = scalar_select %p175, %s17, 1
        %p177 = scmp.lt.s32.totalorder %s174, 6
        %s178 = scalar_select %p177, %s174, 6
        %s179 = smul.addr %s178, 9
        %s180 = smul.addr %s176, 63
        %s181 = sadd.s32 %s179, %s180
        %s182 = smul.addr %s181, 4
        %s183 = scalar_lea.vmem %s0, %s182
        %s184 = smul.u32 7, %s18
      $region28: #{nature_cnn_d_forward.8} parent=23 // pred_fallthru
        _
      // Predicated region
      $region29: #{nature_cnn_d_forward.8} parent=23 // pred_check
        %p185 = pneg %p112
      $region30: #{nature_cnn_d_forward.8} parent=23 // pred_check_branch
        %187 = sbr.rel (%p185) target = $region32
      $region31: #{nature_cnn_d_forward.8} parent=23 // pred_region
        %p188 = scmp.lt.s32.totalorder %s17, 1
        %s189 = scalar_select %p188, %s17, 1
        %s190 = scalar_lea.vmem %s3, %s189
      $region32: #{nature_cnn_d_forward.8} parent=23 // pred_fallthru
        _
    $region24: #{nature_cnn_d_forward.8} parent=5 // pred_fallthru
      _
    %p191 = scmp.le.s32.totalorder 1, %s10
    %p192 = scmp.lt.s32.totalorder %s10, 3
    %p193 = pnand %p191, %p192
    %p194 = pneg %p193
    // Predicated region
    $region33: #{nature_cnn_d_forward.8} parent=5 // pred_check
      _
    $region34: #{nature_cnn_d_forward.8} parent=5 // pred_check_branch
      %196 = sbr.rel (%p193) target = $region36
    $region35: #{nature_cnn_d_forward.8} parent=5 // pred_region
      %s197 = ssub.s32 %s10, 1
      %s198 = smul.u32 7, %s20
      %p199 = scmp.lt.s32.totalorder %s19, 1
      %s200 = scalar_select %p199, %s19, 1
      %p201 = scmp.lt.s32.totalorder %s198, 6
      %s202 = scalar_select %p201, %s198, 6
      %s203 = smul.addr %s202, 9
      %s204 = smul.addr %s200, 63
      %s205 = sadd.s32 %s203, %s204
      %s206 = smul.addr %s205, 4
      %s207 = scalar_lea.vmem %s0, %s206
      %p208 = pneg %p50
      %p209 = pneg %p47
      %p210 = pneg %p71
      %p211 = pneg %p68
      %p212 = pneg %p92
      %p213 = pneg %p89
      %p214 = scmp.lt.s32.totalorder %s19, 1
      %s215 = scalar_select %p214, %s19, 1
      %s216 = scalar_lea.vmem %s3, %s215
      %p217 = pneg %p118
      %p218 = pneg %p115
      %p219 = pneg %p146
      %p220 = pneg %p143
      %s221 = smul.u32 7, %s20
      %p222 = scmp.lt.s32.totalorder %s19, 1
      %s223 = scalar_select %p222, %s19, 1
      %p224 = scmp.lt.s32.totalorder %s221, 6
      %s225 = scalar_select %p224, %s221, 6
      %s226 = smul.addr %s223, 7
      %s227 = sadd.s32 %s225, %s226
      %s228 = smul.addr %s227, 8
      %s229 = scalar_lea.vmem %s4, %s228
      %s230 = smul.u32 7, %s20
      %p231 = scmp.lt.s32.totalorder %s19, 1
      %s232 = scalar_select %p231, %s19, 1
      %p233 = scmp.lt.s32.totalorder %s230, 6
      %s234 = scalar_select %p233, %s230, 6
      %s235 = smul.addr %s234, 9
      %s236 = smul.addr %s232, 63
      %s237 = sadd.s32 %s235, %s236
      %s238 = smul.addr %s237, 4
      %s239 = scalar_lea.vmem %s0, %s238
      %s240 = smul.u32 7, %s20
      %p241 = scmp.lt.s32.totalorder %s19, 1
      %s242 = scalar_select %p241, %s19, 1
      %s243 = scalar_lea.vmem %s3, %s242
      %s244 = smul.u32 7, %s20
      %p245 = scmp.lt.s32.totalorder %s19, 1
      %s246 = scalar_select %p245, %s19, 1
      %p247 = scmp.lt.s32.totalorder %s244, 6
      %s248 = scalar_select %p247, %s244, 6
      %s249 = smul.addr %s246, 7
      %s250 = sadd.s32 %s248, %s249
      %s251 = smul.addr %s250, 8
      %s252 = scalar_lea.vmem %s4, %s251
      %s253 = smul.u32 7, %s20
      %v254 = vld [vmem:[%s239] sm:$0xff]
      %v255 = vld [vmem:[%s239 + $0x8] sm:$0xff]
      %v256 = vld [vmem:[%s239 + $0x10] sm:$0xff]
      %v257 = vld [vmem:[%s239 + $0x18] sm:$0xff]
      %v258 = vld [vmem:[%s239 + $0x20] sm:$0xf]
      %v259 = vld [vmem:[%s239 + $0x24] sm:$0xff]
      %v260 = vld [vmem:[%s239 + $0x2c] sm:$0xff]
      %v261 = vld [vmem:[%s239 + $0x34] sm:$0xff]
      %v262 = vld [vmem:[%s239 + $0x3c] sm:$0xff]
      %v263 = vld [vmem:[%s239 + $0x44] sm:$0xf]
      %v264 = vld [vmem:[%s239 + $0x48] sm:$0xff]
      %v265 = vld [vmem:[%s239 + $0x50] sm:$0xff]
      %v266 = vld [vmem:[%s239 + $0x58] sm:$0xff]
      %v267 = vld [vmem:[%s239 + $0x60] sm:$0xff]
      %v268 = vld [vmem:[%s239 + $0x68] sm:$0xf]
      %v269 = vld [vmem:[%s239 + $0x6c] sm:$0xff]
      %v270 = vld [vmem:[%s239 + $0x74] sm:$0xff]
      %v271 = vld [vmem:[%s239 + $0x7c] sm:$0xff]
      %v272 = vld [vmem:[%s239 + $0x84] sm:$0xff]
      %v273 = vld [vmem:[%s239 + $0x8c] sm:$0xf]
      %v274 = vld [vmem:[%s239 + $0x90] sm:$0xff]
      %v275 = vld [vmem:[%s239 + $0x98] sm:$0xff]
      %v276 = vld [vmem:[%s239 + $0xa0] sm:$0xff]
      %v277 = vld [vmem:[%s239 + $0xa8] sm:$0xff]
      %v278 = vld [vmem:[%s239 + $0xb0] sm:$0xf]
      %v279 = vld [vmem:[%s239 + $0xb4] sm:$0xff]
      %v280 = vld [vmem:[%s239 + $0xbc] sm:$0xff]
      %v281 = vld [vmem:[%s239 + $0xc4] sm:$0xff]
      %v282 = vld [vmem:[%s239 + $0xcc] sm:$0xff]
      %v283 = vld [vmem:[%s239 + $0xd4] sm:$0xf]
      %v284 = vld [vmem:[%s239 + $0xd8] sm:$0xff]
      %v285 = vld [vmem:[%s239 + $0xe0] sm:$0xff]
      %v286 = vld [vmem:[%s239 + $0xe8] sm:$0xff]
      %v287 = vld [vmem:[%s239 + $0xf0] sm:$0xff]
      %v288 = vld [vmem:[%s239 + $0xf8] sm:$0xf]
      %v289 = vld [vmem:[%s1] sm:$0xf]
      %v290 = vld [vmem:[%s1 + $0x4] sm:$0xf]
      %v291 = vld [vmem:[%s1 + $0x8] sm:$0xf]
      %v292 = vld [vmem:[%s1 + $0xc] sm:$0xf]
      %v293 = vld [vmem:[%s1 + $0x10] sm:$0xf]
      %v294 = vld [vmem:[%s1 + $0x14] sm:$0xf]
      %v295 = vld [vmem:[%s1 + $0x18] sm:$0xf]
      %v296 = vld [vmem:[%s1 + $0x1c] sm:$0xf]
      %v297 = vld [vmem:[%s1 + $0x20] sm:$0xf]
      %v298 = vld [vmem:[%s1 + $0x24] sm:$0xf]
      %v299 = vld [vmem:[%s1 + $0x28] sm:$0xf]
      %v300 = vld [vmem:[%s1 + $0x2c] sm:$0xf]
      %v301 = vld [vmem:[%s1 + $0x30] sm:$0xf]
      %v302 = vld [vmem:[%s1 + $0x34] sm:$0xf]
      %v303 = vld [vmem:[%s1 + $0x38] sm:$0xf]
      %v304 = vld [vmem:[%s1 + $0x3c] sm:$0xf]
      %v305 = vld [vmem:[%s1 + $0x40] sm:$0xf]
      %v306 = vld [vmem:[%s1 + $0x44] sm:$0xf]
      %v307 = vld [vmem:[%s1 + $0x48] sm:$0xf]
      %v308 = vld [vmem:[%s1 + $0x4c] sm:$0xf]
      %v309 = vld [vmem:[%s1 + $0x50] sm:$0xf]
      %v310 = vld [vmem:[%s1 + $0x54] sm:$0xf]
      %v311 = vld [vmem:[%s1 + $0x58] sm:$0xf]
      %v312 = vld [vmem:[%s1 + $0x5c] sm:$0xf]
      %v313 = vld [vmem:[%s1 + $0x60] sm:$0xf]
      %v314 = vld [vmem:[%s1 + $0x64] sm:$0xf]
      %v315 = vld [vmem:[%s1 + $0x68] sm:$0xf]
      %v316 = vld [vmem:[%s1 + $0x6c] sm:$0xf]
      %v317 = vld [vmem:[%s1 + $0x70] sm:$0xf]
      %v318 = vld [vmem:[%s1 + $0x74] sm:$0xf]
      %v319 = vld [vmem:[%s1 + $0x78] sm:$0xf]
      %v320 = vld [vmem:[%s1 + $0x7c] sm:$0xf]
      %v321 = vld [vmem:[%s1 + $0x80] sm:$0xf]
      %v322 = vld [vmem:[%s1 + $0x84] sm:$0xf]
      %v323 = vld [vmem:[%s1 + $0x88] sm:$0xf]
      %v324 = vld [vmem:[%s1 + $0x8c] sm:$0xf]
      %v325 = vld [vmem:[%s1 + $0x90] sm:$0xf]
      %v326 = vld [vmem:[%s1 + $0x94] sm:$0xf]
      %v327 = vld [vmem:[%s1 + $0x98] sm:$0xf]
      %v328 = vld [vmem:[%s1 + $0x9c] sm:$0xf]
      %v329 = vld [vmem:[%s1 + $0xa0] sm:$0xf]
      %v330 = vld [vmem:[%s1 + $0xa4] sm:$0xf]
      %v331 = vld [vmem:[%s1 + $0xa8] sm:$0xf]
      %v332 = vld [vmem:[%s1 + $0xac] sm:$0xf]
      %v333 = vld [vmem:[%s1 + $0xb0] sm:$0xf]
      %v334 = vld [vmem:[%s1 + $0xb4] sm:$0xf]
      %v335 = vld [vmem:[%s1 + $0xb8] sm:$0xf]
      %v336 = vld [vmem:[%s1 + $0xbc] sm:$0xf]
      %v337 = vld [vmem:[%s1 + $0xc0] sm:$0xf]
      %v338 = vld [vmem:[%s1 + $0xc4] sm:$0xf]
      %v339 = vld [vmem:[%s1 + $0xc8] sm:$0xf]
      %v340 = vld [vmem:[%s1 + $0xcc] sm:$0xf]
      %v341 = vld [vmem:[%s1 + $0xd0] sm:$0xf]
      %v342 = vld [vmem:[%s1 + $0xd4] sm:$0xf]
      %v343 = vld [vmem:[%s1 + $0xd8] sm:$0xf]
      %v344 = vld [vmem:[%s1 + $0xdc] sm:$0xf]
      %v345 = vld [vmem:[%s1 + $0xe0] sm:$0xf]
      %v346 = vld [vmem:[%s1 + $0xe4] sm:$0xf]
      %v347 = vld [vmem:[%s1 + $0xe8] sm:$0xf]
      %v348 = vld [vmem:[%s1 + $0xec] sm:$0xf]
      %v349 = vld [vmem:[%s1 + $0xf0] sm:$0xf]
      %v350 = vld [vmem:[%s1 + $0xf4] sm:$0xf]
      %v351 = vld [vmem:[%s1 + $0xf8] sm:$0xf]
      %v352 = vld [vmem:[%s1 + $0xfc] sm:$0xf]
      %v353 = vld [vmem:[%s1 + $0x100] sm:$0xf]
      %v354 = vld [vmem:[%s1 + $0x104] sm:$0xf]
      %v355 = vld [vmem:[%s1 + $0x108] sm:$0xf]
      %v356 = vld [vmem:[%s1 + $0x10c] sm:$0xf]
      %v357 = vld [vmem:[%s1 + $0x110] sm:$0xf]
      %v358 = vld [vmem:[%s1 + $0x114] sm:$0xf]
      %v359 = vld [vmem:[%s1 + $0x118] sm:$0xf]
      %v360 = vld [vmem:[%s1 + $0x11c] sm:$0xf]
      %v361 = vld [vmem:[%s1 + $0x120] sm:$0xf]
      %v362 = vld [vmem:[%s1 + $0x124] sm:$0xf]
      %v363 = vld [vmem:[%s1 + $0x128] sm:$0xf]
      %v364 = vld [vmem:[%s1 + $0x12c] sm:$0xf]
      %v365 = vld [vmem:[%s1 + $0x130] sm:$0xf]
      %v366 = vld [vmem:[%s1 + $0x134] sm:$0xf]
      %v367 = vld [vmem:[%s1 + $0x138] sm:$0xf]
      %v368 = vld [vmem:[%s1 + $0x13c] sm:$0xf]
      %v369 = vld [vmem:[%s1 + $0x140] sm:$0xf]
      %v370 = vld [vmem:[%s1 + $0x144] sm:$0xf]
      %v371 = vld [vmem:[%s1 + $0x148] sm:$0xf]
      %v372 = vld [vmem:[%s1 + $0x14c] sm:$0xf]
      %v373 = vld [vmem:[%s1 + $0x150] sm:$0xf]
      %v374 = vld [vmem:[%s1 + $0x154] sm:$0xf]
      %v375 = vld [vmem:[%s1 + $0x158] sm:$0xf]
      %v376 = vld [vmem:[%s1 + $0x15c] sm:$0xf]
      %v377 = vld [vmem:[%s1 + $0x160] sm:$0xf]
      %v378 = vld [vmem:[%s1 + $0x164] sm:$0xf]
      %v379 = vld [vmem:[%s1 + $0x168] sm:$0xf]
      %v380 = vld [vmem:[%s1 + $0x16c] sm:$0xf]
      %v381 = vld [vmem:[%s1 + $0x170] sm:$0xf]
      %v382 = vld [vmem:[%s1 + $0x174] sm:$0xf]
      %v383 = vld [vmem:[%s1 + $0x178] sm:$0xf]
      %v384 = vld [vmem:[%s1 + $0x17c] sm:$0xf]
      %v385 = vld [vmem:[%s1 + $0x180] sm:$0xf]
      %v386 = vld [vmem:[%s1 + $0x184] sm:$0xf]
      %v387 = vld [vmem:[%s1 + $0x188] sm:$0xf]
      %v388 = vld [vmem:[%s1 + $0x18c] sm:$0xf]
      %v389 = vld [vmem:[%s1 + $0x190] sm:$0xf]
      %v390 = vld [vmem:[%s1 + $0x194] sm:$0xf]
      %v391 = vld [vmem:[%s1 + $0x198] sm:$0xf]
      %v392 = vld [vmem:[%s1 + $0x19c] sm:$0xf]
      %v393 = vld [vmem:[%s1 + $0x1a0] sm:$0xf]
      %v394 = vld [vmem:[%s1 + $0x1a4] sm:$0xf]
      %v395 = vld [vmem:[%s1 + $0x1a8] sm:$0xf]
      %v396 = vld [vmem:[%s1 + $0x1ac] sm:$0xf]
      %v397 = vld [vmem:[%s1 + $0x1b0] sm:$0xf]
      %v398 = vld [vmem:[%s1 + $0x1b4] sm:$0xf]
      %v399 = vld [vmem:[%s1 + $0x1b8] sm:$0xf]
      %v400 = vld [vmem:[%s1 + $0x1bc] sm:$0xf]
      %v401 = vld [vmem:[%s1 + $0x1c0] sm:$0xf]
      %v402 = vld [vmem:[%s1 + $0x1c4] sm:$0xf]
      %v403 = vld [vmem:[%s1 + $0x1c8] sm:$0xf]
      %v404 = vld [vmem:[%s1 + $0x1cc] sm:$0xf]
      %v405 = vld [vmem:[%s1 + $0x1d0] sm:$0xf]
      %v406 = vld [vmem:[%s1 + $0x1d4] sm:$0xf]
      %v407 = vld [vmem:[%s1 + $0x1d8] sm:$0xf]
      %v408 = vld [vmem:[%s1 + $0x1dc] sm:$0xf]
      %v409 = vld [vmem:[%s1 + $0x1e0] sm:$0xf]
      %v410 = vld [vmem:[%s1 + $0x1e4] sm:$0xf]
      %v411 = vld [vmem:[%s1 + $0x1e8] sm:$0xf]
      %v412 = vld [vmem:[%s1 + $0x1ec] sm:$0xf]
      %v413 = vld [vmem:[%s1 + $0x1f0] sm:$0xf]
      %v414 = vld [vmem:[%s1 + $0x1f4] sm:$0xf]
      %v415 = vld [vmem:[%s1 + $0x1f8] sm:$0xf]
      %v416 = vld [vmem:[%s1 + $0x1fc] sm:$0xf]
      %v417 = vld [vmem:[%s1 + $0x200] sm:$0xf]
      %v418 = vld [vmem:[%s1 + $0x204] sm:$0xf]
      %v419 = vld [vmem:[%s1 + $0x208] sm:$0xf]
      %v420 = vld [vmem:[%s1 + $0x20c] sm:$0xf]
      %v421 = vld [vmem:[%s1 + $0x210] sm:$0xf]
      %v422 = vld [vmem:[%s1 + $0x214] sm:$0xf]
      %v423 = vld [vmem:[%s1 + $0x218] sm:$0xf]
      %v424 = vld [vmem:[%s1 + $0x21c] sm:$0xf]
      %v425 = vld [vmem:[%s1 + $0x220] sm:$0xf]
      %v426 = vld [vmem:[%s1 + $0x224] sm:$0xf]
      %v427 = vld [vmem:[%s1 + $0x228] sm:$0xf]
      %v428 = vld [vmem:[%s1 + $0x22c] sm:$0xf]
      %v429 = vld [vmem:[%s1 + $0x230] sm:$0xf]
      %v430 = vld [vmem:[%s1 + $0x234] sm:$0xf]
      %v431 = vld [vmem:[%s1 + $0x238] sm:$0xf]
      %v432 = vld [vmem:[%s1 + $0x23c] sm:$0xf]
      %v433 = vld [vmem:[%s2] sm:$0x1]
      %v435 = vperm.slane %v433, 0
      %v472 = vunpack.c.l.b16 %v254
      %v473 = vunpack.c.h.b16 %v254
      %v474 = vunpack.c.l.b16 %v255
      %v475 = vunpack.c.h.b16 %v255
      %v476 = vunpack.c.l.b16 %v256
      %v477 = vunpack.c.h.b16 %v256
      %v478 = vunpack.c.l.b16 %v257
      %v479 = vunpack.c.h.b16 %v257
      %v480 = vunpack.c.l.b16 %v258
      %v481 = vunpack.c.l.b16 %v259
      %v482 = vunpack.c.h.b16 %v259
      %v483 = vunpack.c.l.b16 %v260
      %v484 = vunpack.c.h.b16 %v260
      %v485 = vunpack.c.l.b16 %v261
      %v486 = vunpack.c.h.b16 %v261
      %v487 = vunpack.c.l.b16 %v262
      %v488 = vunpack.c.h.b16 %v262
      %v489 = vunpack.c.l.b16 %v263
      %v490 = vunpack.c.l.b16 %v264
      %v491 = vunpack.c.h.b16 %v264
      %v492 = vunpack.c.l.b16 %v265
      %v493 = vunpack.c.h.b16 %v265
      %v494 = vunpack.c.l.b16 %v266
      %v495 = vunpack.c.h.b16 %v266
      %v496 = vunpack.c.l.b16 %v267
      %v497 = vunpack.c.h.b16 %v267
      %v498 = vunpack.c.l.b16 %v268
      %v499 = vunpack.c.l.b16 %v269
      %v500 = vunpack.c.h.b16 %v269
      %v501 = vunpack.c.l.b16 %v270
      %v502 = vunpack.c.h.b16 %v270
      %v503 = vunpack.c.l.b16 %v271
      %v504 = vunpack.c.h.b16 %v271
      %v505 = vunpack.c.l.b16 %v272
      %v506 = vunpack.c.h.b16 %v272
      %v507 = vunpack.c.l.b16 %v273
      %v508 = vunpack.c.l.b16 %v274
      %v509 = vunpack.c.h.b16 %v274
      %v510 = vunpack.c.l.b16 %v275
      %v511 = vunpack.c.h.b16 %v275
      %v512 = vunpack.c.l.b16 %v276
      %v513 = vunpack.c.h.b16 %v276
      %v514 = vunpack.c.l.b16 %v277
      %v515 = vunpack.c.h.b16 %v277
      %v516 = vunpack.c.l.b16 %v278
      %v517 = vunpack.c.l.b16 %v279
      %v518 = vunpack.c.h.b16 %v279
      %v519 = vunpack.c.l.b16 %v280
      %v520 = vunpack.c.h.b16 %v280
      %v521 = vunpack.c.l.b16 %v281
      %v522 = vunpack.c.h.b16 %v281
      %v523 = vunpack.c.l.b16 %v282
      %v524 = vunpack.c.h.b16 %v282
      %v525 = vunpack.c.l.b16 %v283
      %v526 = vunpack.c.l.b16 %v284
      %v527 = vunpack.c.h.b16 %v284
      %v528 = vunpack.c.l.b16 %v285
      %v529 = vunpack.c.h.b16 %v285
      %v530 = vunpack.c.l.b16 %v286
      %v531 = vunpack.c.h.b16 %v286
      %v532 = vunpack.c.l.b16 %v287
      %v533 = vunpack.c.h.b16 %v287
      %v534 = vunpack.c.l.b16 %v288
      %v535 = vpack.c.b16 %v481, %v472
      %v536 = vpack.c.b16 %v482, %v473
      %v537 = vpack.c.b16 %v483, %v474
      %v538 = vpack.c.b16 %v484, %v475
      %v539 = vpack.c.b16 %v485, %v476
      %v540 = vpack.c.b16 %v486, %v477
      %v541 = vpack.c.b16 %v487, %v478
      %v542 = vpack.c.b16 %v488, %v479
      %v543 = vpack.c.b16 %v489, %v480
      %v544 = vpack.c.b16 %v499, %v490
      %v545 = vpack.c.b16 %v500, %v491
      %v546 = vpack.c.b16 %v501, %v492
      %v547 = vpack.c.b16 %v502, %v493
      %v548 = vpack.c.b16 %v503, %v494
      %v549 = vpack.c.b16 %v504, %v495
      %v550 = vpack.c.b16 %v505, %v496
      %v551 = vpack.c.b16 %v506, %v497
      %v552 = vpack.c.b16 %v507, %v498
      %v553 = vpack.c.b16 %v517, %v508
      %v554 = vpack.c.b16 %v518, %v509
      %v555 = vpack.c.b16 %v519, %v510
      %v556 = vpack.c.b16 %v520, %v511
      %v557 = vpack.c.b16 %v521, %v512
      %v558 = vpack.c.b16 %v522, %v513
      %v559 = vpack.c.b16 %v523, %v514
      %v560 = vpack.c.b16 %v524, %v515
      %v561 = vpack.c.b16 %v525, %v516
      %v562 = vpack.c.b16 %v526, %v526
      %v563 = vpack.c.b16 %v527, %v527
      %v564 = vpack.c.b16 %v528, %v528
      %v565 = vpack.c.b16 %v529, %v529
      %v566 = vpack.c.b16 %v530, %v530
      %v567 = vpack.c.b16 %v531, %v531
      %v568 = vpack.c.b16 %v532, %v532
      %v569 = vpack.c.b16 %v533, %v533
      %v570 = vpack.c.b16 %v534, %v534
      %v751 = vunpack.c.l.b16 %v289
      %v752 = vunpack.c.l.b16 %v290
      %v753 = vunpack.c.l.b16 %v291
      %v754 = vunpack.c.l.b16 %v292
      %v755 = vunpack.c.l.b16 %v293
      %v756 = vunpack.c.l.b16 %v294
      %v757 = vunpack.c.l.b16 %v295
      %v758 = vunpack.c.l.b16 %v296
      %v759 = vunpack.c.l.b16 %v297
      %v760 = vunpack.c.l.b16 %v298
      %v761 = vunpack.c.l.b16 %v299
      %v762 = vunpack.c.l.b16 %v300
      %v763 = vunpack.c.l.b16 %v301
      %v764 = vunpack.c.l.b16 %v302
      %v765 = vunpack.c.l.b16 %v303
      %v766 = vunpack.c.l.b16 %v304
      %v767 = vunpack.c.l.b16 %v305
      %v768 = vunpack.c.l.b16 %v306
      %v769 = vunpack.c.l.b16 %v307
      %v770 = vunpack.c.l.b16 %v308
      %v771 = vunpack.c.l.b16 %v309
      %v772 = vunpack.c.l.b16 %v310
      %v773 = vunpack.c.l.b16 %v311
      %v774 = vunpack.c.l.b16 %v312
      %v775 = vunpack.c.l.b16 %v313
      %v776 = vunpack.c.l.b16 %v314
      %v777 = vunpack.c.l.b16 %v315
      %v778 = vunpack.c.l.b16 %v316
      %v779 = vunpack.c.l.b16 %v317
      %v780 = vunpack.c.l.b16 %v318
      %v781 = vunpack.c.l.b16 %v319
      %v782 = vunpack.c.l.b16 %v320
      %v783 = vunpack.c.l.b16 %v321
      %v784 = vunpack.c.l.b16 %v322
      %v785 = vunpack.c.l.b16 %v323
      %v786 = vunpack.c.l.b16 %v324
      %v787 = vunpack.c.l.b16 %v325
      %v788 = vunpack.c.l.b16 %v326
      %v789 = vunpack.c.l.b16 %v327
      %v790 = vunpack.c.l.b16 %v328
      %v791 = vunpack.c.l.b16 %v329
      %v792 = vunpack.c.l.b16 %v330
      %v793 = vunpack.c.l.b16 %v331
      %v794 = vunpack.c.l.b16 %v332
      %v795 = vunpack.c.l.b16 %v333
      %v796 = vunpack.c.l.b16 %v334
      %v797 = vunpack.c.l.b16 %v335
      %v798 = vunpack.c.l.b16 %v336
      %v799 = vunpack.c.l.b16 %v337
      %v800 = vunpack.c.l.b16 %v338
      %v801 = vunpack.c.l.b16 %v339
      %v802 = vunpack.c.l.b16 %v340
      %v803 = vunpack.c.l.b16 %v341
      %v804 = vunpack.c.l.b16 %v342
      %v805 = vunpack.c.l.b16 %v343
      %v806 = vunpack.c.l.b16 %v344
      %v807 = vunpack.c.l.b16 %v345
      %v808 = vunpack.c.l.b16 %v346
      %v809 = vunpack.c.l.b16 %v347
      %v810 = vunpack.c.l.b16 %v348
      %v811 = vunpack.c.l.b16 %v349
      %v812 = vunpack.c.l.b16 %v350
      %v813 = vunpack.c.l.b16 %v351
      %v814 = vunpack.c.l.b16 %v352
      %v815 = vunpack.c.l.b16 %v353
      %v816 = vunpack.c.l.b16 %v354
      %v817 = vunpack.c.l.b16 %v355
      %v818 = vunpack.c.l.b16 %v356
      %v819 = vunpack.c.l.b16 %v357
      %v820 = vunpack.c.l.b16 %v358
      %v821 = vunpack.c.l.b16 %v359
      %v822 = vunpack.c.l.b16 %v360
      %v823 = vunpack.c.l.b16 %v361
      %v824 = vunpack.c.l.b16 %v362
      %v825 = vunpack.c.l.b16 %v363
      %v826 = vunpack.c.l.b16 %v364
      %v827 = vunpack.c.l.b16 %v365
      %v828 = vunpack.c.l.b16 %v366
      %v829 = vunpack.c.l.b16 %v367
      %v830 = vunpack.c.l.b16 %v368
      %v831 = vunpack.c.l.b16 %v369
      %v832 = vunpack.c.l.b16 %v370
      %v833 = vunpack.c.l.b16 %v371
      %v834 = vunpack.c.l.b16 %v372
      %v835 = vunpack.c.l.b16 %v373
      %v836 = vunpack.c.l.b16 %v374
      %v837 = vunpack.c.l.b16 %v375
      %v838 = vunpack.c.l.b16 %v376
      %v839 = vunpack.c.l.b16 %v377
      %v840 = vunpack.c.l.b16 %v378
      %v841 = vunpack.c.l.b16 %v379
      %v842 = vunpack.c.l.b16 %v380
      %v843 = vunpack.c.l.b16 %v381
      %v844 = vunpack.c.l.b16 %v382
      %v845 = vunpack.c.l.b16 %v383
      %v846 = vunpack.c.l.b16 %v384
      %v847 = vunpack.c.l.b16 %v385
      %v848 = vunpack.c.l.b16 %v386
      %v849 = vunpack.c.l.b16 %v387
      %v850 = vunpack.c.l.b16 %v388
      %v851 = vunpack.c.l.b16 %v389
      %v852 = vunpack.c.l.b16 %v390
      %v853 = vunpack.c.l.b16 %v391
      %v854 = vunpack.c.l.b16 %v392
      %v855 = vunpack.c.l.b16 %v393
      %v856 = vunpack.c.l.b16 %v394
      %v857 = vunpack.c.l.b16 %v395
      %v858 = vunpack.c.l.b16 %v396
      %v859 = vunpack.c.l.b16 %v397
      %v860 = vunpack.c.l.b16 %v398
      %v861 = vunpack.c.l.b16 %v399
      %v862 = vunpack.c.l.b16 %v400
      %v863 = vunpack.c.l.b16 %v401
      %v864 = vunpack.c.l.b16 %v402
      %v865 = vunpack.c.l.b16 %v403
      %v866 = vunpack.c.l.b16 %v404
      %v867 = vunpack.c.l.b16 %v405
      %v868 = vunpack.c.l.b16 %v406
      %v869 = vunpack.c.l.b16 %v407
      %v870 = vunpack.c.l.b16 %v408
      %v871 = vunpack.c.l.b16 %v409
      %v872 = vunpack.c.l.b16 %v410
      %v873 = vunpack.c.l.b16 %v411
      %v874 = vunpack.c.l.b16 %v412
      %v875 = vunpack.c.l.b16 %v413
      %v876 = vunpack.c.l.b16 %v414
      %v877 = vunpack.c.l.b16 %v415
      %v878 = vunpack.c.l.b16 %v416
      %v879 = vunpack.c.l.b16 %v417
      %v880 = vunpack.c.l.b16 %v418
      %v881 = vunpack.c.l.b16 %v419
      %v882 = vunpack.c.l.b16 %v420
      %v883 = vunpack.c.l.b16 %v421
      %v884 = vunpack.c.l.b16 %v422
      %v885 = vunpack.c.l.b16 %v423
      %v886 = vunpack.c.l.b16 %v424
      %v887 = vunpack.c.l.b16 %v425
      %v888 = vunpack.c.l.b16 %v426
      %v889 = vunpack.c.l.b16 %v427
      %v890 = vunpack.c.l.b16 %v428
      %v891 = vunpack.c.l.b16 %v429
      %v892 = vunpack.c.l.b16 %v430
      %v893 = vunpack.c.l.b16 %v431
      %v894 = vunpack.c.l.b16 %v432
      %v895 = vpack.c.b16 %v752, %v751
      %v896 = vpack.c.b16 %v754, %v753
      %v897 = vpack.c.b16 %v756, %v755
      %v898 = vpack.c.b16 %v758, %v757
      %v899 = vpack.c.b16 %v760, %v759
      %v900 = vpack.c.b16 %v762, %v761
      %v901 = vpack.c.b16 %v764, %v763
      %v902 = vpack.c.b16 %v766, %v765
      %v903 = vpack.c.b16 %v768, %v767
      %v904 = vpack.c.b16 %v770, %v769
      %v905 = vpack.c.b16 %v772, %v771
      %v906 = vpack.c.b16 %v774, %v773
      %v907 = vpack.c.b16 %v776, %v775
      %v908 = vpack.c.b16 %v778, %v777
      %v909 = vpack.c.b16 %v780, %v779
      %v910 = vpack.c.b16 %v782, %v781
      %v911 = vpack.c.b16 %v784, %v783
      %v912 = vpack.c.b16 %v786, %v785
      %v913 = vpack.c.b16 %v788, %v787
      %v914 = vpack.c.b16 %v790, %v789
      %v915 = vpack.c.b16 %v792, %v791
      %v916 = vpack.c.b16 %v794, %v793
      %v917 = vpack.c.b16 %v796, %v795
      %v918 = vpack.c.b16 %v798, %v797
      %v919 = vpack.c.b16 %v800, %v799
      %v920 = vpack.c.b16 %v802, %v801
      %v921 = vpack.c.b16 %v804, %v803
      %v922 = vpack.c.b16 %v806, %v805
      %v923 = vpack.c.b16 %v808, %v807
      %v924 = vpack.c.b16 %v810, %v809
      %v925 = vpack.c.b16 %v812, %v811
      %v926 = vpack.c.b16 %v814, %v813
      %v927 = vpack.c.b16 %v816, %v815
      %v928 = vpack.c.b16 %v818, %v817
      %v929 = vpack.c.b16 %v820, %v819
      %v930 = vpack.c.b16 %v822, %v821
      %v931 = vpack.c.b16 %v824, %v823
      %v932 = vpack.c.b16 %v826, %v825
      %v933 = vpack.c.b16 %v828, %v827
      %v934 = vpack.c.b16 %v830, %v829
      %v935 = vpack.c.b16 %v832, %v831
      %v936 = vpack.c.b16 %v834, %v833
      %v937 = vpack.c.b16 %v836, %v835
      %v938 = vpack.c.b16 %v838, %v837
      %v939 = vpack.c.b16 %v840, %v839
      %v940 = vpack.c.b16 %v842, %v841
      %v941 = vpack.c.b16 %v844, %v843
      %v942 = vpack.c.b16 %v846, %v845
      %v943 = vpack.c.b16 %v848, %v847
      %v944 = vpack.c.b16 %v850, %v849
      %v945 = vpack.c.b16 %v852, %v851
      %v946 = vpack.c.b16 %v854, %v853
      %v947 = vpack.c.b16 %v856, %v855
      %v948 = vpack.c.b16 %v858, %v857
      %v949 = vpack.c.b16 %v860, %v859
      %v950 = vpack.c.b16 %v862, %v861
      %v951 = vpack.c.b16 %v864, %v863
      %v952 = vpack.c.b16 %v866, %v865
      %v953 = vpack.c.b16 %v868, %v867
      %v954 = vpack.c.b16 %v870, %v869
      %v955 = vpack.c.b16 %v872, %v871
      %v956 = vpack.c.b16 %v874, %v873
      %v957 = vpack.c.b16 %v876, %v875
      %v958 = vpack.c.b16 %v878, %v877
      %v959 = vpack.c.b16 %v880, %v879
      %v960 = vpack.c.b16 %v882, %v881
      %v961 = vpack.c.b16 %v884, %v883
      %v962 = vpack.c.b16 %v886, %v885
      %v963 = vpack.c.b16 %v888, %v887
      %v964 = vpack.c.b16 %v890, %v889
      %v965 = vpack.c.b16 %v892, %v891
      %v966 = vpack.c.b16 %v894, %v893
      %1039 = vmatpush.bf16.msra.mxu0 %v902
      %1040 = vmatpush.bf16.msra.mxu0 %v901
      %1041 = vmatpush.bf16.msra.mxu0 %v900
      %1042 = vmatpush.bf16.msra.mxu0 %v899
      %1043 = vmatpush.bf16.msra.mxu0 %v898
      %1044 = vmatpush.bf16.msra.mxu0 %v897
      %1045 = vmatpush.bf16.msra.mxu0 %v896
      %1046 = vmatpush.bf16.msra.mxu0 %v895
      %1047 = vmatmul.bf16.gmra.mxu0 %v535
      %v1048 = vpop.f32.mrf.mxu0
      %v1049 = vadd.f32 %v435, %v1048
      %v1050 = vpop.f32.mrf.mxu0
      %v1051 = vadd.f32 %v435, %v1050
      %1052 = vmatmul.bf16.gmra.mxu0 %v544
      %v1053 = vpop.f32.mrf.mxu0
      %v1054 = vadd.f32 %v435, %v1053
      %v1055 = vpop.f32.mrf.mxu0
      %v1056 = vadd.f32 %v435, %v1055
      %1057 = vmatmul.bf16.gmra.mxu0 %v553
      %v1058 = vpop.f32.mrf.mxu0
      %v1059 = vadd.f32 %v435, %v1058
      %v1060 = vpop.f32.mrf.mxu0
      %v1061 = vadd.f32 %v435, %v1060
      %1062 = vmatmul.bf16.gmra.mxu0 %v562
      %v1063 = vpop.f32.mrf.mxu0
      %v1064 = vadd.f32 %v435, %v1063
      %v1065 = vpop.f32.mrf.mxu0
      %1066 = vdwg.mxu0
      %1067 = vmatpush.bf16.msra.mxu0 %v910
      %1068 = vmatpush.bf16.msra.mxu0 %v909
      %1069 = vmatpush.bf16.msra.mxu0 %v908
      %1070 = vmatpush.bf16.msra.mxu0 %v907
      %1071 = vmatpush.bf16.msra.mxu0 %v906
      %1072 = vmatpush.bf16.msra.mxu0 %v905
      %1073 = vmatpush.bf16.msra.mxu0 %v904
      %1074 = vmatpush.bf16.msra.mxu0 %v903
      %1075 = vmatmul.bf16.gmra.mxu0 %v536
      %v1076 = vpop.f32.mrf.mxu0
      %v1077 = vadd.f32 %v1049, %v1076
      %v1078 = vpop.f32.mrf.mxu0
      %v1079 = vadd.f32 %v1051, %v1078
      %1080 = vmatmul.bf16.gmra.mxu0 %v545
      %v1081 = vpop.f32.mrf.mxu0
      %v1082 = vadd.f32 %v1054, %v1081
      %v1083 = vpop.f32.mrf.mxu0
      %v1084 = vadd.f32 %v1056, %v1083
      %1085 = vmatmul.bf16.gmra.mxu0 %v554
      %v1086 = vpop.f32.mrf.mxu0
      %v1087 = vadd.f32 %v1059, %v1086
      %v1088 = vpop.f32.mrf.mxu0
      %v1089 = vadd.f32 %v1061, %v1088
      %1090 = vmatmul.bf16.gmra.mxu0 %v563
      %v1091 = vpop.f32.mrf.mxu0
      %v1092 = vadd.f32 %v1064, %v1091
      %v1093 = vpop.f32.mrf.mxu0
      %1094 = vdwg.mxu0
      %1095 = vmatpush.bf16.msra.mxu0 %v918
      %1096 = vmatpush.bf16.msra.mxu0 %v917
      %1097 = vmatpush.bf16.msra.mxu0 %v916
      %1098 = vmatpush.bf16.msra.mxu0 %v915
      %1099 = vmatpush.bf16.msra.mxu0 %v914
      %1100 = vmatpush.bf16.msra.mxu0 %v913
      %1101 = vmatpush.bf16.msra.mxu0 %v912
      %1102 = vmatpush.bf16.msra.mxu0 %v911
      %1103 = vmatmul.bf16.gmra.mxu0 %v537
      %v1104 = vpop.f32.mrf.mxu0
      %v1105 = vadd.f32 %v1077, %v1104
      %v1106 = vpop.f32.mrf.mxu0
      %v1107 = vadd.f32 %v1079, %v1106
      %1108 = vmatmul.bf16.gmra.mxu0 %v546
      %v1109 = vpop.f32.mrf.mxu0
      %v1110 = vadd.f32 %v1082, %v1109
      %v1111 = vpop.f32.mrf.mxu0
      %v1112 = vadd.f32 %v1084, %v1111
      %1113 = vmatmul.bf16.gmra.mxu0 %v555
      %v1114 = vpop.f32.mrf.mxu0
      %v1115 = vadd.f32 %v1087, %v1114
      %v1116 = vpop.f32.mrf.mxu0
      %v1117 = vadd.f32 %v1089, %v1116
      %1118 = vmatmul.bf16.gmra.mxu0 %v564
      %v1119 = vpop.f32.mrf.mxu0
      %v1120 = vadd.f32 %v1092, %v1119
      %v1121 = vpop.f32.mrf.mxu0
      %1122 = vdwg.mxu0
      %1123 = vmatpush.bf16.msra.mxu0 %v926
      %1124 = vmatpush.bf16.msra.mxu0 %v925
      %1125 = vmatpush.bf16.msra.mxu0 %v924
      %1126 = vmatpush.bf16.msra.mxu0 %v923
      %1127 = vmatpush.bf16.msra.mxu0 %v922
      %1128 = vmatpush.bf16.msra.mxu0 %v921
      %1129 = vmatpush.bf16.msra.mxu0 %v920
      %1130 = vmatpush.bf16.msra.mxu0 %v919
      %1131 = vmatmul.bf16.gmra.mxu0 %v538
      %v1132 = vpop.f32.mrf.mxu0
      %v1133 = vadd.f32 %v1105, %v1132
      %v1134 = vpop.f32.mrf.mxu0
      %v1135 = vadd.f32 %v1107, %v1134
      %1136 = vmatmul.bf16.gmra.mxu0 %v547
      %v1137 = vpop.f32.mrf.mxu0
      %v1138 = vadd.f32 %v1110, %v1137
      %v1139 = vpop.f32.mrf.mxu0
      %v1140 = vadd.f32 %v1112, %v1139
      %1141 = vmatmul.bf16.gmra.mxu0 %v556
      %v1142 = vpop.f32.mrf.mxu0
      %v1143 = vadd.f32 %v1115, %v1142
      %v1144 = vpop.f32.mrf.mxu0
      %v1145 = vadd.f32 %v1117, %v1144
      %1146 = vmatmul.bf16.gmra.mxu0 %v565
      %v1147 = vpop.f32.mrf.mxu0
      %v1148 = vadd.f32 %v1120, %v1147
      %v1149 = vpop.f32.mrf.mxu0
      %1150 = vdwg.mxu0
      %1151 = vmatpush.bf16.msra.mxu0 %v934
      %1152 = vmatpush.bf16.msra.mxu0 %v933
      %1153 = vmatpush.bf16.msra.mxu0 %v932
      %1154 = vmatpush.bf16.msra.mxu0 %v931
      %1155 = vmatpush.bf16.msra.mxu0 %v930
      %1156 = vmatpush.bf16.msra.mxu0 %v929
      %1157 = vmatpush.bf16.msra.mxu0 %v928
      %1158 = vmatpush.bf16.msra.mxu0 %v927
      %1159 = vmatmul.bf16.gmra.mxu0 %v539
      %v1160 = vpop.f32.mrf.mxu0
      %v1161 = vadd.f32 %v1133, %v1160
      %v1162 = vpop.f32.mrf.mxu0
      %v1163 = vadd.f32 %v1135, %v1162
      %1164 = vmatmul.bf16.gmra.mxu0 %v548
      %v1165 = vpop.f32.mrf.mxu0
      %v1166 = vadd.f32 %v1138, %v1165
      %v1167 = vpop.f32.mrf.mxu0
      %v1168 = vadd.f32 %v1140, %v1167
      %1169 = vmatmul.bf16.gmra.mxu0 %v557
      %v1170 = vpop.f32.mrf.mxu0
      %v1171 = vadd.f32 %v1143, %v1170
      %v1172 = vpop.f32.mrf.mxu0
      %v1173 = vadd.f32 %v1145, %v1172
      %1174 = vmatmul.bf16.gmra.mxu0 %v566
      %v1175 = vpop.f32.mrf.mxu0
      %v1176 = vadd.f32 %v1148, %v1175
      %v1177 = vpop.f32.mrf.mxu0
      %1178 = vdwg.mxu0
      %1179 = vmatpush.bf16.msra.mxu0 %v942
      %1180 = vmatpush.bf16.msra.mxu0 %v941
      %1181 = vmatpush.bf16.msra.mxu0 %v940
      %1182 = vmatpush.bf16.msra.mxu0 %v939
      %1183 = vmatpush.bf16.msra.mxu0 %v938
      %1184 = vmatpush.bf16.msra.mxu0 %v937
      %1185 = vmatpush.bf16.msra.mxu0 %v936
      %1186 = vmatpush.bf16.msra.mxu0 %v935
      %1187 = vmatmul.bf16.gmra.mxu0 %v540
      %v1188 = vpop.f32.mrf.mxu0
      %v1189 = vadd.f32 %v1161, %v1188
      %v1190 = vpop.f32.mrf.mxu0
      %v1191 = vadd.f32 %v1163, %v1190
      %1192 = vmatmul.bf16.gmra.mxu0 %v549
      %v1193 = vpop.f32.mrf.mxu0
      %v1194 = vadd.f32 %v1166, %v1193
      %v1195 = vpop.f32.mrf.mxu0
      %v1196 = vadd.f32 %v1168, %v1195
      %1197 = vmatmul.bf16.gmra.mxu0 %v558
      %v1198 = vpop.f32.mrf.mxu0
      %v1199 = vadd.f32 %v1171, %v1198
      %v1200 = vpop.f32.mrf.mxu0
      %v1201 = vadd.f32 %v1173, %v1200
      %1202 = vmatmul.bf16.gmra.mxu0 %v567
      %v1203 = vpop.f32.mrf.mxu0
      %v1204 = vadd.f32 %v1176, %v1203
      %v1205 = vpop.f32.mrf.mxu0
      %1206 = vdwg.mxu0
      %1207 = vmatpush.bf16.msra.mxu0 %v950
      %1208 = vmatpush.bf16.msra.mxu0 %v949
      %1209 = vmatpush.bf16.msra.mxu0 %v948
      %1210 = vmatpush.bf16.msra.mxu0 %v947
      %1211 = vmatpush.bf16.msra.mxu0 %v946
      %1212 = vmatpush.bf16.msra.mxu0 %v945
      %1213 = vmatpush.bf16.msra.mxu0 %v944
      %1214 = vmatpush.bf16.msra.mxu0 %v943
      %1215 = vmatmul.bf16.gmra.mxu0 %v541
      %v1216 = vpop.f32.mrf.mxu0
      %v1217 = vadd.f32 %v1189, %v1216
      %v1218 = vpop.f32.mrf.mxu0
      %v1219 = vadd.f32 %v1191, %v1218
      %1220 = vmatmul.bf16.gmra.mxu0 %v550
      %v1221 = vpop.f32.mrf.mxu0
      %v1222 = vadd.f32 %v1194, %v1221
      %v1223 = vpop.f32.mrf.mxu0
      %v1224 = vadd.f32 %v1196, %v1223
      %1225 = vmatmul.bf16.gmra.mxu0 %v559
      %v1226 = vpop.f32.mrf.mxu0
      %v1227 = vadd.f32 %v1199, %v1226
      %v1228 = vpop.f32.mrf.mxu0
      %v1229 = vadd.f32 %v1201, %v1228
      %1230 = vmatmul.bf16.gmra.mxu0 %v568
      %v1231 = vpop.f32.mrf.mxu0
      %v1232 = vadd.f32 %v1204, %v1231
      %v1233 = vpop.f32.mrf.mxu0
      %1234 = vdwg.mxu0
      %1235 = vmatpush.bf16.msra.mxu0 %v958
      %1236 = vmatpush.bf16.msra.mxu0 %v957
      %1237 = vmatpush.bf16.msra.mxu0 %v956
      %1238 = vmatpush.bf16.msra.mxu0 %v955
      %1239 = vmatpush.bf16.msra.mxu0 %v954
      %1240 = vmatpush.bf16.msra.mxu0 %v953
      %1241 = vmatpush.bf16.msra.mxu0 %v952
      %1242 = vmatpush.bf16.msra.mxu0 %v951
      %1243 = vmatmul.bf16.gmra.mxu0 %v542
      %v1244 = vpop.f32.mrf.mxu0
      %v1245 = vadd.f32 %v1217, %v1244
      %v1246 = vpop.f32.mrf.mxu0
      %v1247 = vadd.f32 %v1219, %v1246
      %1248 = vmatmul.bf16.gmra.mxu0 %v551
      %v1249 = vpop.f32.mrf.mxu0
      %v1250 = vadd.f32 %v1222, %v1249
      %v1251 = vpop.f32.mrf.mxu0
      %v1252 = vadd.f32 %v1224, %v1251
      %1253 = vmatmul.bf16.gmra.mxu0 %v560
      %v1254 = vpop.f32.mrf.mxu0
      %v1255 = vadd.f32 %v1227, %v1254
      %v1256 = vpop.f32.mrf.mxu0
      %v1257 = vadd.f32 %v1229, %v1256
      %1258 = vmatmul.bf16.gmra.mxu0 %v569
      %v1259 = vpop.f32.mrf.mxu0
      %v1260 = vadd.f32 %v1232, %v1259
      %v1261 = vpop.f32.mrf.mxu0
      %1262 = vdwg.mxu0
      %1263 = vmatpush.bf16.msra.mxu0 %v966
      %1264 = vmatpush.bf16.msra.mxu0 %v965
      %1265 = vmatpush.bf16.msra.mxu0 %v964
      %1266 = vmatpush.bf16.msra.mxu0 %v963
      %1267 = vmatpush.bf16.msra.mxu0 %v962
      %1268 = vmatpush.bf16.msra.mxu0 %v961
      %1269 = vmatpush.bf16.msra.mxu0 %v960
      %1270 = vmatpush.bf16.msra.mxu0 %v959
      %1271 = vmatmul.bf16.gmra.mxu0 %v543
      %v1272 = vpop.f32.mrf.mxu0
      %v1273 = vadd.f32 %v1245, %v1272
      %v1274 = vpop.f32.mrf.mxu0
      %v1275 = vadd.f32 %v1247, %v1274
      %1276 = vmatmul.bf16.gmra.mxu0 %v552
      %v1277 = vpop.f32.mrf.mxu0
      %v1278 = vadd.f32 %v1250, %v1277
      %v1279 = vpop.f32.mrf.mxu0
      %v1280 = vadd.f32 %v1252, %v1279
      %1281 = vmatmul.bf16.gmra.mxu0 %v561
      %v1282 = vpop.f32.mrf.mxu0
      %v1283 = vadd.f32 %v1255, %v1282
      %v1284 = vpop.f32.mrf.mxu0
      %v1285 = vadd.f32 %v1257, %v1284
      %1286 = vmatmul.bf16.gmra.mxu0 %v570
      %v1287 = vpop.f32.mrf.mxu0
      %v1288 = vadd.f32 %v1260, %v1287
      %v1289 = vpop.f32.mrf.mxu0
      %1290 = vdwg.mxu0
      %v1291 = vmax.f32 %v1273, 0.0
      %v1292 = vmax.f32 %v1275, 0.0
      %v1293 = vmax.f32 %v1278, 0.0
      %v1294 = vmax.f32 %v1280, 0.0
      %v1295 = vmax.f32 %v1283, 0.0
      %v1296 = vmax.f32 %v1285, 0.0
      %v1297 = vmax.f32 %v1288, 0.0
      %v1298 = vld [vmem:[%s243] sm:$0x1]
      %v1300 = vperm.slane %v1298, 0
      %v1302 = vadd.f32 %v1291, %v1300
      %v1303 = vadd.f32 %v1292, %v1300
      %v1304 = vadd.f32 %v1293, %v1300
      %v1305 = vadd.f32 %v1294, %v1300
      %v1306 = vadd.f32 %v1295, %v1300
      %v1307 = vadd.f32 %v1296, %v1300
      %v1308 = vadd.f32 %v1297, %v1300
      %1309 = vst [vmem:[%s252] sm:$0xff] %v1302
      %1310 = vst [vmem:[%s252 + $0x8] sm:$0xff] %v1303
      %1311 = vst [vmem:[%s252 + $0x10] sm:$0xff] %v1304
      %1312 = vst [vmem:[%s252 + $0x18] sm:$0xff] %v1305
      %1313 = vst [vmem:[%s252 + $0x20] sm:$0xff] %v1306
      %1314 = vst [vmem:[%s252 + $0x28] sm:$0xff] %v1307
      %1315 = vst [vmem:[%s252 + $0x30] sm:$0xff] %v1308
      %s1316 = smul.u32 7, %s20
      %p1317 = scmp.lt.s32.totalorder %s19, 1
      %s1318 = scalar_select %p1317, %s19, 1
      %p1319 = scmp.lt.s32.totalorder %s1316, 6
      %s1320 = scalar_select %p1319, %s1316, 6
      %s1321 = smul.addr %s1318, 7
      %s1322 = sadd.s32 %s1320, %s1321
      %s1323 = smul.addr %s1322, 8
      %s1324 = scalar_lea.vmem %s4, %s1323
      // Predicated region
      $region37: #{nature_cnn_d_forward.8} parent=35 // pred_check
        %p1325 = pneg %p143
      $region38: #{nature_cnn_d_forward.8} parent=35 // pred_check_branch
        %1327 = sbr.rel (%p1325) target = $region40
      $region39: #{nature_cnn_d_forward.8} parent=35 // pred_region
        %s1328 = smul.u32 7, %s20
      $region40: #{nature_cnn_d_forward.8} parent=35 // pred_fallthru
        _
    $region36: #{nature_cnn_d_forward.8} parent=5 // pred_fallthru
      _
    %p1329 = scmp.le.s32.totalorder 2, %s10
    // Predicated region
    $region41: #{nature_cnn_d_forward.8} parent=5 // pred_check
      %p1330 = pneg %p1329
    $region42: #{nature_cnn_d_forward.8} parent=5 // pred_check_branch
      %1332 = sbr.rel (%p1330) target = $region44
    $region43: #{nature_cnn_d_forward.8} parent=5 // pred_region
      %s1333 = ssub.s32 %s10, 2
      // Predicated region
      $region45: #{nature_cnn_d_forward.8} parent=43 // pred_check
        %p1334 = pneg %p149
      $region46: #{nature_cnn_d_forward.8} parent=43 // pred_check_branch
        %1336 = sbr.rel (%p1334) target = $region48
      $region47: #{nature_cnn_d_forward.8} parent=43 // pred_region
        %s1337 = smul.u32 7, %s22
        %p1338 = scmp.lt.s32.totalorder %s21, 1
        %s1339 = scalar_select %p1338, %s21, 1
        %p1340 = scmp.lt.s32.totalorder %s1337, 6
        %s1341 = scalar_select %p1340, %s1337, 6
        %s1342 = smul.addr %s1339, 7
        %s1343 = sadd.s32 %s1341, %s1342
        %s1344 = smul.addr %s1343, 8
        %s1345 = scalar_lea.vmem %s4, %s1344
      $region48: #{nature_cnn_d_forward.8} parent=43 // pred_fallthru
        _
    $region44: #{nature_cnn_d_forward.8} parent=5 // pred_fallthru
      _
  $region6: #{nature_cnn_d_forward.8} parent=0 // loop_footer
    %s14 = sadd.s32 1, %s10
  $region7: #{nature_cnn_d_forward.8} parent=0 // loop_footer_branch
    %9 = sbr.rel target = $region3
  $region8: #{nature_cnn_d_forward.8} parent=0 // loop_exit
    _

// kernel: nature_cnn_d_forward.9
$region0: #{nature_cnn_d_forward.9}
  #allocation0 [shape = 'u32[]', space=smem, size = 0x4, offset = 0x4, fixed_abs, tag = 'smem constant byte address 0x4 - core index']
  #allocation1 [shape = 'u32[72,128]{1,0:T(1,128)}', space=vmem, size = 0x9000, scoped, tag = 'internal scratch']
  %s0 = inlined_call_operand.vmem [shape: bf16[1,8,3456], index: 0, kind: input, shape index: {}]
  %s1 = inlined_call_operand.vmem [shape: bf16[3456,128], index: 1, kind: input, shape index: {}]
  %s2 = inlined_call_operand.vmem [shape: f32[1,128], index: 2, kind: input, shape index: {}]
  %s3 = inlined_call_operand.vmem [shape: f32[1,8,128], index: 3, kind: output, shape index: {}]
  %s4 = sld [smem:[#allocation0]]
  $region22: #{nature_cnn_d_forward.9} parent=0
    _
  %s6 = ssub.s32 1, %s4
  %s7 = scalar_select 0, %s6, %s4
  // Predicated region
  $region2: #{nature_cnn_d_forward.9} parent=0 // pred_check
    _
  $region3: #{nature_cnn_d_forward.9} parent=0 // pred_check_branch
    %9 = sbr.rel (0) target = $region5
  $region4: #{nature_cnn_d_forward.9} parent=0 // pred_region
    _
  $region5: #{nature_cnn_d_forward.9} parent=0 // pred_fallthru
    _
  // Predicated region
  $region6: #{nature_cnn_d_forward.9} parent=0 // pred_check
    _
  $region7: #{nature_cnn_d_forward.9} parent=0 // pred_check_branch
    %11 = sbr.rel (0) target = $region9
  $region8: #{nature_cnn_d_forward.9} parent=0 // pred_region
    _
  $region9: #{nature_cnn_d_forward.9} parent=0 // pred_fallthru
    _
  // Predicated region
  $region10: #{nature_cnn_d_forward.9} parent=0 // pred_check
    _
  $region11: #{nature_cnn_d_forward.9} parent=0 // pred_check_branch
    %13 = sbr.rel (0) target = $region13
  $region12: #{nature_cnn_d_forward.9} parent=0 // pred_region
    _
  $region13: #{nature_cnn_d_forward.9} parent=0 // pred_fallthru
    _
  %v14 = vld [vmem:[%s0] sm:$0xff]
  %v15 = vld [vmem:[%s0 + $0x8] sm:$0xff]
  %v16 = vld [vmem:[%s0 + $0x10] sm:$0xff]
  %v17 = vld [vmem:[%s0 + $0x18] sm:$0xff]
  %v18 = vld [vmem:[%s0 + $0x20] sm:$0xff]
  %v19 = vld [vmem:[%s0 + $0x28] sm:$0xff]
  %v20 = vld [vmem:[%s0 + $0x30] sm:$0xff]
  %v21 = vld [vmem:[%s0 + $0x38] sm:$0xff]
  %v22 = vld [vmem:[%s0 + $0x40] sm:$0xff]
  %v23 = vld [vmem:[%s0 + $0x48] sm:$0xff]
  %v24 = vld [vmem:[%s0 + $0x50] sm:$0xff]
  %v25 = vld [vmem:[%s0 + $0x58] sm:$0xff]
  %v26 = vld [vmem:[%s0 + $0x60] sm:$0xff]
  %v27 = vld [vmem:[%s0 + $0x68] sm:$0xf]
  %v28 = vld [vmem:[%s1] sm:$0xf]
  %v29 = vld [vmem:[%s1 + $0x4] sm:$0xf]
  %v30 = vld [vmem:[%s1 + $0x8] sm:$0xf]
  %v31 = vld [vmem:[%s1 + $0xc] sm:$0xf]
  %v32 = vld [vmem:[%s1 + $0x10] sm:$0xf]
  %v33 = vld [vmem:[%s1 + $0x14] sm:$0xf]
  %v34 = vld [vmem:[%s1 + $0x18] sm:$0xf]
  %v35 = vld [vmem:[%s1 + $0x1c] sm:$0xf]
  %v36 = vld [vmem:[%s1 + $0x20] sm:$0xf]
  %v37 = vld [vmem:[%s1 + $0x24] sm:$0xf]
  %v38 = vld [vmem:[%s1 + $0x28] sm:$0xf]
  %v39 = vld [vmem:[%s1 + $0x2c] sm:$0xf]
  %v40 = vld [vmem:[%s1 + $0x30] sm:$0xf]
  %v41 = vld [vmem:[%s1 + $0x34] sm:$0xf]
  %v42 = vld [vmem:[%s1 + $0x38] sm:$0xf]
  %v43 = vld [vmem:[%s1 + $0x3c] sm:$0xf]
  %v44 = vld [vmem:[%s1 + $0x40] sm:$0xf]
  %v45 = vld [vmem:[%s1 + $0x44] sm:$0xf]
  %v46 = vld [vmem:[%s1 + $0x48] sm:$0xf]
  %v47 = vld [vmem:[%s1 + $0x4c] sm:$0xf]
  %v48 = vld [vmem:[%s1 + $0x50] sm:$0xf]
  %v49 = vld [vmem:[%s1 + $0x54] sm:$0xf]
  %v50 = vld [vmem:[%s1 + $0x58] sm:$0xf]
  %v51 = vld [vmem:[%s1 + $0x5c] sm:$0xf]
  %v52 = vld [vmem:[%s1 + $0x60] sm:$0xf]
  %v53 = vld [vmem:[%s1 + $0x64] sm:$0xf]
  %v54 = vld [vmem:[%s1 + $0x68] sm:$0xf]
  %v55 = vld [vmem:[%s1 + $0x6c] sm:$0xf]
  %v56 = vld [vmem:[%s1 + $0x70] sm:$0xf]
  %v57 = vld [vmem:[%s1 + $0x74] sm:$0xf]
  %v58 = vld [vmem:[%s1 + $0x78] sm:$0xf]
  %v59 = vld [vmem:[%s1 + $0x7c] sm:$0xf]
  %v60 = vld [vmem:[%s1 + $0x80] sm:$0xf]
  %v61 = vld [vmem:[%s1 + $0x84] sm:$0xf]
  %v62 = vld [vmem:[%s1 + $0x88] sm:$0xf]
  %v63 = vld [vmem:[%s1 + $0x8c] sm:$0xf]
  %v64 = vld [vmem:[%s1 + $0x90] sm:$0xf]
  %v65 = vld [vmem:[%s1 + $0x94] sm:$0xf]
  %v66 = vld [vmem:[%s1 + $0x98] sm:$0xf]
  %v67 = vld [vmem:[%s1 + $0x9c] sm:$0xf]
  %v68 = vld [vmem:[%s1 + $0xa0] sm:$0xf]
  %v69 = vld [vmem:[%s1 + $0xa4] sm:$0xf]
  %v70 = vld [vmem:[%s1 + $0xa8] sm:$0xf]
  %v71 = vld [vmem:[%s1 + $0xac] sm:$0xf]
  %v72 = vld [vmem:[%s1 + $0xb0] sm:$0xf]
  %v73 = vld [vmem:[%s1 + $0xb4] sm:$0xf]
  %v74 = vld [vmem:[%s1 + $0xb8] sm:$0xf]
  %v75 = vld [vmem:[%s1 + $0xbc] sm:$0xf]
  %v76 = vld [vmem:[%s1 + $0xc0] sm:$0xf]
  %v77 = vld [vmem:[%s1 + $0xc4] sm:$0xf]
  %v78 = vld [vmem:[%s1 + $0xc8] sm:$0xf]
  %v79 = vld [vmem:[%s1 + $0xcc] sm:$0xf]
  %v80 = vld [vmem:[%s1 + $0xd0] sm:$0xf]
  %v81 = vld [vmem:[%s1 + $0xd4] sm:$0xf]
  %v82 = vld [vmem:[%s1 + $0xd8] sm:$0xf]
  %v83 = vld [vmem:[%s1 + $0xdc] sm:$0xf]
  %v84 = vld [vmem:[%s1 + $0xe0] sm:$0xf]
  %v85 = vld [vmem:[%s1 + $0xe4] sm:$0xf]
  %v86 = vld [vmem:[%s1 + $0xe8] sm:$0xf]
  %v87 = vld [vmem:[%s1 + $0xec] sm:$0xf]
  %v88 = vld [vmem:[%s1 + $0xf0] sm:$0xf]
  %v89 = vld [vmem:[%s1 + $0xf4] sm:$0xf]
  %v90 = vld [vmem:[%s1 + $0xf8] sm:$0xf]
  %v91 = vld [vmem:[%s1 + $0xfc] sm:$0xf]
  %v92 = vld [vmem:[%s1 + $0x100] sm:$0xf]
  %v93 = vld [vmem:[%s1 + $0x104] sm:$0xf]
  %v94 = vld [vmem:[%s1 + $0x108] sm:$0xf]
  %v95 = vld [vmem:[%s1 + $0x10c] sm:$0xf]
  %v96 = vld [vmem:[%s1 + $0x110] sm:$0xf]
  %v97 = vld [vmem:[%s1 + $0x114] sm:$0xf]
  %v98 = vld [vmem:[%s1 + $0x118] sm:$0xf]
  %v99 = vld [vmem:[%s1 + $0x11c] sm:$0xf]
  %v100 = vld [vmem:[%s1 + $0x120] sm:$0xf]
  %v101 = vld [vmem:[%s1 + $0x124] sm:$0xf]
  %v102 = vld [vmem:[%s1 + $0x128] sm:$0xf]
  %v103 = vld [vmem:[%s1 + $0x12c] sm:$0xf]
  %v104 = vld [vmem:[%s1 + $0x130] sm:$0xf]
  %v105 = vld [vmem:[%s1 + $0x134] sm:$0xf]
  %v106 = vld [vmem:[%s1 + $0x138] sm:$0xf]
  %v107 = vld [vmem:[%s1 + $0x13c] sm:$0xf]
  %v108 = vld [vmem:[%s1 + $0x140] sm:$0xf]
  %v109 = vld [vmem:[%s1 + $0x144] sm:$0xf]
  %v110 = vld [vmem:[%s1 + $0x148] sm:$0xf]
  %v111 = vld [vmem:[%s1 + $0x14c] sm:$0xf]
  %v112 = vld [vmem:[%s1 + $0x150] sm:$0xf]
  %v113 = vld [vmem:[%s1 + $0x154] sm:$0xf]
  %v114 = vld [vmem:[%s1 + $0x158] sm:$0xf]
  %v115 = vld [vmem:[%s1 + $0x15c] sm:$0xf]
  %v116 = vld [vmem:[%s1 + $0x160] sm:$0xf]
  %v117 = vld [vmem:[%s1 + $0x164] sm:$0xf]
  %v118 = vld [vmem:[%s1 + $0x168] sm:$0xf]
  %v119 = vld [vmem:[%s1 + $0x16c] sm:$0xf]
  %v120 = vld [vmem:[%s1 + $0x170] sm:$0xf]
  %v121 = vld [vmem:[%s1 + $0x174] sm:$0xf]
  %v122 = vld [vmem:[%s1 + $0x178] sm:$0xf]
  %v123 = vld [vmem:[%s1 + $0x17c] sm:$0xf]
  %v124 = vld [vmem:[%s1 + $0x180] sm:$0xf]
  %v125 = vld [vmem:[%s1 + $0x184] sm:$0xf]
  %v126 = vld [vmem:[%s1 + $0x188] sm:$0xf]
  %v127 = vld [vmem:[%s1 + $0x18c] sm:$0xf]
  %v128 = vld [vmem:[%s1 + $0x190] sm:$0xf]
  %v129 = vld [vmem:[%s1 + $0x194] sm:$0xf]
  %v130 = vld [vmem:[%s1 + $0x198] sm:$0xf]
  %v131 = vld [vmem:[%s1 + $0x19c] sm:$0xf]
  %v132 = vld [vmem:[%s1 + $0x1a0] sm:$0xf]
  %v133 = vld [vmem:[%s1 + $0x1a4] sm:$0xf]
  %v134 = vld [vmem:[%s1 + $0x1a8] sm:$0xf]
  %v135 = vld [vmem:[%s1 + $0x1ac] sm:$0xf]
  %v136 = vld [vmem:[%s1 + $0x1b0] sm:$0xf]
  %v137 = vld [vmem:[%s1 + $0x1b4] sm:$0xf]
  %v138 = vld [vmem:[%s1 + $0x1b8] sm:$0xf]
  %v139 = vld [vmem:[%s1 + $0x1bc] sm:$0xf]
  %v140 = vld [vmem:[%s1 + $0x1c0] sm:$0xf]
  %v141 = vld [vmem:[%s1 + $0x1c4] sm:$0xf]
  %v142 = vld [vmem:[%s1 + $0x1c8] sm:$0xf]
  %v143 = vld [vmem:[%s1 + $0x1cc] sm:$0xf]
  %v144 = vld [vmem:[%s1 + $0x1d0] sm:$0xf]
  %v145 = vld [vmem:[%s1 + $0x1d4] sm:$0xf]
  %v146 = vld [vmem:[%s1 + $0x1d8] sm:$0xf]
  %v147 = vld [vmem:[%s1 + $0x1dc] sm:$0xf]
  %v148 = vld [vmem:[%s1 + $0x1e0] sm:$0xf]
  %v149 = vld [vmem:[%s1 + $0x1e4] sm:$0xf]
  %v150 = vld [vmem:[%s1 + $0x1e8] sm:$0xf]
  %v151 = vld [vmem:[%s1 + $0x1ec] sm:$0xf]
  %v152 = vld [vmem:[%s1 + $0x1f0] sm:$0xf]
  %v153 = vld [vmem:[%s1 + $0x1f4] sm:$0xf]
  %v154 = vld [vmem:[%s1 + $0x1f8] sm:$0xf]
  %v155 = vld [vmem:[%s1 + $0x1fc] sm:$0xf]
  %v156 = vld [vmem:[%s1 + $0x200] sm:$0xf]
  %v157 = vld [vmem:[%s1 + $0x204] sm:$0xf]
  %v158 = vld [vmem:[%s1 + $0x208] sm:$0xf]
  %v159 = vld [vmem:[%s1 + $0x20c] sm:$0xf]
  %v160 = vld [vmem:[%s1 + $0x210] sm:$0xf]
  %v161 = vld [vmem:[%s1 + $0x214] sm:$0xf]
  %v162 = vld [vmem:[%s1 + $0x218] sm:$0xf]
  %v163 = vld [vmem:[%s1 + $0x21c] sm:$0xf]
  %v164 = vld [vmem:[%s1 + $0x220] sm:$0xf]
  %v165 = vld [vmem:[%s1 + $0x224] sm:$0xf]
  %v166 = vld [vmem:[%s1 + $0x228] sm:$0xf]
  %v167 = vld [vmem:[%s1 + $0x22c] sm:$0xf]
  %v168 = vld [vmem:[%s1 + $0x230] sm:$0xf]
  %v169 = vld [vmem:[%s1 + $0x234] sm:$0xf]
  %v170 = vld [vmem:[%s1 + $0x238] sm:$0xf]
  %v171 = vld [vmem:[%s1 + $0x23c] sm:$0xf]
  %v172 = vld [vmem:[%s1 + $0x240] sm:$0xf]
  %v173 = vld [vmem:[%s1 + $0x244] sm:$0xf]
  %v174 = vld [vmem:[%s1 + $0x248] sm:$0xf]
  %v175 = vld [vmem:[%s1 + $0x24c] sm:$0xf]
  %v176 = vld [vmem:[%s1 + $0x250] sm:$0xf]
  %v177 = vld [vmem:[%s1 + $0x254] sm:$0xf]
  %v178 = vld [vmem:[%s1 + $0x258] sm:$0xf]
  %v179 = vld [vmem:[%s1 + $0x25c] sm:$0xf]
  %v180 = vld [vmem:[%s1 + $0x260] sm:$0xf]
  %v181 = vld [vmem:[%s1 + $0x264] sm:$0xf]
  %v182 = vld [vmem:[%s1 + $0x268] sm:$0xf]
  %v183 = vld [vmem:[%s1 + $0x26c] sm:$0xf]
  %v184 = vld [vmem:[%s1 + $0x270] sm:$0xf]
  %v185 = vld [vmem:[%s1 + $0x274] sm:$0xf]
  %v186 = vld [vmem:[%s1 + $0x278] sm:$0xf]
  %v187 = vld [vmem:[%s1 + $0x27c] sm:$0xf]
  %v188 = vld [vmem:[%s1 + $0x280] sm:$0xf]
  %v189 = vld [vmem:[%s1 + $0x284] sm:$0xf]
  %v190 = vld [vmem:[%s1 + $0x288] sm:$0xf]
  %v191 = vld [vmem:[%s1 + $0x28c] sm:$0xf]
  %v192 = vld [vmem:[%s1 + $0x290] sm:$0xf]
  %v193 = vld [vmem:[%s1 + $0x294] sm:$0xf]
  %v194 = vld [vmem:[%s1 + $0x298] sm:$0xf]
  %v195 = vld [vmem:[%s1 + $0x29c] sm:$0xf]
  %v196 = vld [vmem:[%s1 + $0x2a0] sm:$0xf]
  %v197 = vld [vmem:[%s1 + $0x2a4] sm:$0xf]
  %v198 = vld [vmem:[%s1 + $0x2a8] sm:$0xf]
  %v199 = vld [vmem:[%s1 + $0x2ac] sm:$0xf]
  %v200 = vld [vmem:[%s1 + $0x2b0] sm:$0xf]
  %v201 = vld [vmem:[%s1 + $0x2b4] sm:$0xf]
  %v202 = vld [vmem:[%s1 + $0x2b8] sm:$0xf]
  %v203 = vld [vmem:[%s1 + $0x2bc] sm:$0xf]
  %v204 = vld [vmem:[%s1 + $0x2c0] sm:$0xf]
  %v205 = vld [vmem:[%s1 + $0x2c4] sm:$0xf]
  %v206 = vld [vmem:[%s1 + $0x2c8] sm:$0xf]
  %v207 = vld [vmem:[%s1 + $0x2cc] sm:$0xf]
  %v208 = vld [vmem:[%s1 + $0x2d0] sm:$0xf]
  %v209 = vld [vmem:[%s1 + $0x2d4] sm:$0xf]
  %v210 = vld [vmem:[%s1 + $0x2d8] sm:$0xf]
  %v211 = vld [vmem:[%s1 + $0x2dc] sm:$0xf]
  %v212 = vld [vmem:[%s1 + $0x2e0] sm:$0xf]
  %v213 = vld [vmem:[%s1 + $0x2e4] sm:$0xf]
  %v214 = vld [vmem:[%s1 + $0x2e8] sm:$0xf]
  %v215 = vld [vmem:[%s1 + $0x2ec] sm:$0xf]
  %v216 = vld [vmem:[%s1 + $0x2f0] sm:$0xf]
  %v217 = vld [vmem:[%s1 + $0x2f4] sm:$0xf]
  %v218 = vld [vmem:[%s1 + $0x2f8] sm:$0xf]
  %v219 = vld [vmem:[%s1 + $0x2fc] sm:$0xf]
  %v220 = vld [vmem:[%s1 + $0x300] sm:$0xf]
  %v221 = vld [vmem:[%s1 + $0x304] sm:$0xf]
  %v222 = vld [vmem:[%s1 + $0x308] sm:$0xf]
  %v223 = vld [vmem:[%s1 + $0x30c] sm:$0xf]
  %v224 = vld [vmem:[%s1 + $0x310] sm:$0xf]
  %v225 = vld [vmem:[%s1 + $0x314] sm:$0xf]
  %v226 = vld [vmem:[%s1 + $0x318] sm:$0xf]
  %v227 = vld [vmem:[%s1 + $0x31c] sm:$0xf]
  %v228 = vld [vmem:[%s1 + $0x320] sm:$0xf]
  %v229 = vld [vmem:[%s1 + $0x324] sm:$0xf]
  %v230 = vld [vmem:[%s1 + $0x328] sm:$0xf]
  %v231 = vld [vmem:[%s1 + $0x32c] sm:$0xf]
  %v232 = vld [vmem:[%s1 + $0x330] sm:$0xf]
  %v233 = vld [vmem:[%s1 + $0x334] sm:$0xf]
  %v234 = vld [vmem:[%s1 + $0x338] sm:$0xf]
  %v235 = vld [vmem:[%s1 + $0x33c] sm:$0xf]
  %v236 = vld [vmem:[%s1 + $0x340] sm:$0xf]
  %v237 = vld [vmem:[%s1 + $0x344] sm:$0xf]
  %v238 = vld [vmem:[%s1 + $0x348] sm:$0xf]
  %v239 = vld [vmem:[%s1 + $0x34c] sm:$0xf]
  %v240 = vld [vmem:[%s1 + $0x350] sm:$0xf]
  %v241 = vld [vmem:[%s1 + $0x354] sm:$0xf]
  %v242 = vld [vmem:[%s1 + $0x358] sm:$0xf]
  %v243 = vld [vmem:[%s1 + $0x35c] sm:$0xf]
  %v244 = vld [vmem:[%s1 + $0x360] sm:$0xf]
  %v245 = vld [vmem:[%s1 + $0x364] sm:$0xf]
  %v246 = vld [vmem:[%s1 + $0x368] sm:$0xf]
  %v247 = vld [vmem:[%s1 + $0x36c] sm:$0xf]
  %v248 = vld [vmem:[%s1 + $0x370] sm:$0xf]
  %v249 = vld [vmem:[%s1 + $0x374] sm:$0xf]
  %v250 = vld [vmem:[%s1 + $0x378] sm:$0xf]
  %v251 = vld [vmem:[%s1 + $0x37c] sm:$0xf]
  %v252 = vld [vmem:[%s1 + $0x380] sm:$0xf]
  %v253 = vld [vmem:[%s1 + $0x384] sm:$0xf]
  %v254 = vld [vmem:[%s1 + $0x388] sm:$0xf]
  %v255 = vld [vmem:[%s1 + $0x38c] sm:$0xf]
  %v256 = vld [vmem:[%s1 + $0x390] sm:$0xf]
  %v257 = vld [vmem:[%s1 + $0x394] sm:$0xf]
  %v258 = vld [vmem:[%s1 + $0x398] sm:$0xf]
  %v259 = vld [vmem:[%s1 + $0x39c] sm:$0xf]
  %v260 = vld [vmem:[%s1 + $0x3a0] sm:$0xf]
  %v261 = vld [vmem:[%s1 + $0x3a4] sm:$0xf]
  %v262 = vld [vmem:[%s1 + $0x3a8] sm:$0xf]
  %v263 = vld [vmem:[%s1 + $0x3ac] sm:$0xf]
  %v264 = vld [vmem:[%s1 + $0x3b0] sm:$0xf]
  %v265 = vld [vmem:[%s1 + $0x3b4] sm:$0xf]
  %v266 = vld [vmem:[%s1 + $0x3b8] sm:$0xf]
  %v267 = vld [vmem:[%s1 + $0x3bc] sm:$0xf]
  %v268 = vld [vmem:[%s1 + $0x3c0] sm:$0xf]
  %v269 = vld [vmem:[%s1 + $0x3c4] sm:$0xf]
  %v270 = vld [vmem:[%s1 + $0x3c8] sm:$0xf]
  %v271 = vld [vmem:[%s1 + $0x3cc] sm:$0xf]
  %v272 = vld [vmem:[%s1 + $0x3d0] sm:$0xf]
  %v273 = vld [vmem:[%s1 + $0x3d4] sm:$0xf]
  %v274 = vld [vmem:[%s1 + $0x3d8] sm:$0xf]
  %v275 = vld [vmem:[%s1 + $0x3dc] sm:$0xf]
  %v276 = vld [vmem:[%s1 + $0x3e0] sm:$0xf]
  %v277 = vld [vmem:[%s1 + $0x3e4] sm:$0xf]
  %v278 = vld [vmem:[%s1 + $0x3e8] sm:$0xf]
  %v279 = vld [vmem:[%s1 + $0x3ec] sm:$0xf]
  %v280 = vld [vmem:[%s1 + $0x3f0] sm:$0xf]
  %v281 = vld [vmem:[%s1 + $0x3f4] sm:$0xf]
  %v282 = vld [vmem:[%s1 + $0x3f8] sm:$0xf]
  %v283 = vld [vmem:[%s1 + $0x3fc] sm:$0xf]
  %v284 = vld [vmem:[%s1 + $0x400] sm:$0xf]
  %v285 = vld [vmem:[%s1 + $0x404] sm:$0xf]
  %v286 = vld [vmem:[%s1 + $0x408] sm:$0xf]
  %v287 = vld [vmem:[%s1 + $0x40c] sm:$0xf]
  %v288 = vld [vmem:[%s1 + $0x410] sm:$0xf]
  %v289 = vld [vmem:[%s1 + $0x414] sm:$0xf]
  %v290 = vld [vmem:[%s1 + $0x418] sm:$0xf]
  %v291 = vld [vmem:[%s1 + $0x41c] sm:$0xf]
  %v292 = vld [vmem:[%s1 + $0x420] sm:$0xf]
  %v293 = vld [vmem:[%s1 + $0x424] sm:$0xf]
  %v294 = vld [vmem:[%s1 + $0x428] sm:$0xf]
  %v295 = vld [vmem:[%s1 + $0x42c] sm:$0xf]
  %v296 = vld [vmem:[%s1 + $0x430] sm:$0xf]
  %v297 = vld [vmem:[%s1 + $0x434] sm:$0xf]
  %v298 = vld [vmem:[%s1 + $0x438] sm:$0xf]
  %v299 = vld [vmem:[%s1 + $0x43c] sm:$0xf]
  %v300 = vld [vmem:[%s1 + $0x440] sm:$0xf]
  %v301 = vld [vmem:[%s1 + $0x444] sm:$0xf]
  %v302 = vld [vmem:[%s1 + $0x448] sm:$0xf]
  %v303 = vld [vmem:[%s1 + $0x44c] sm:$0xf]
  %v304 = vld [vmem:[%s1 + $0x450] sm:$0xf]
  %v305 = vld [vmem:[%s1 + $0x454] sm:$0xf]
  %v306 = vld [vmem:[%s1 + $0x458] sm:$0xf]
  %v307 = vld [vmem:[%s1 + $0x45c] sm:$0xf]
  %v308 = vld [vmem:[%s1 + $0x460] sm:$0xf]
  %v309 = vld [vmem:[%s1 + $0x464] sm:$0xf]
  %v310 = vld [vmem:[%s1 + $0x468] sm:$0xf]
  %v311 = vld [vmem:[%s1 + $0x46c] sm:$0xf]
  %v312 = vld [vmem:[%s1 + $0x470] sm:$0xf]
  %v313 = vld [vmem:[%s1 + $0x474] sm:$0xf]
  %v314 = vld [vmem:[%s1 + $0x478] sm:$0xf]
  %v315 = vld [vmem:[%s1 + $0x47c] sm:$0xf]
  %v316 = vld [vmem:[%s1 + $0x480] sm:$0xf]
  %v317 = vld [vmem:[%s1 + $0x484] sm:$0xf]
  %v318 = vld [vmem:[%s1 + $0x488] sm:$0xf]
  %v319 = vld [vmem:[%s1 + $0x48c] sm:$0xf]
  %v320 = vld [vmem:[%s1 + $0x490] sm:$0xf]
  %v321 = vld [vmem:[%s1 + $0x494] sm:$0xf]
  %v322 = vld [vmem:[%s1 + $0x498] sm:$0xf]
  %v323 = vld [vmem:[%s1 + $0x49c] sm:$0xf]
  %v324 = vld [vmem:[%s1 + $0x4a0] sm:$0xf]
  %v325 = vld [vmem:[%s1 + $0x4a4] sm:$0xf]
  %v326 = vld [vmem:[%s1 + $0x4a8] sm:$0xf]
  %v327 = vld [vmem:[%s1 + $0x4ac] sm:$0xf]
  %v328 = vld [vmem:[%s1 + $0x4b0] sm:$0xf]
  %v329 = vld [vmem:[%s1 + $0x4b4] sm:$0xf]
  %v330 = vld [vmem:[%s1 + $0x4b8] sm:$0xf]
  %v331 = vld [vmem:[%s1 + $0x4bc] sm:$0xf]
  %v332 = vld [vmem:[%s1 + $0x4c0] sm:$0xf]
  %v333 = vld [vmem:[%s1 + $0x4c4] sm:$0xf]
  %v334 = vld [vmem:[%s1 + $0x4c8] sm:$0xf]
  %v335 = vld [vmem:[%s1 + $0x4cc] sm:$0xf]
  %v336 = vld [vmem:[%s1 + $0x4d0] sm:$0xf]
  %v337 = vld [vmem:[%s1 + $0x4d4] sm:$0xf]
  %v338 = vld [vmem:[%s1 + $0x4d8] sm:$0xf]
  %v339 = vld [vmem:[%s1 + $0x4dc] sm:$0xf]
  %v340 = vld [vmem:[%s1 + $0x4e0] sm:$0xf]
  %v341 = vld [vmem:[%s1 + $0x4e4] sm:$0xf]
  %v342 = vld [vmem:[%s1 + $0x4e8] sm:$0xf]
  %v343 = vld [vmem:[%s1 + $0x4ec] sm:$0xf]
  %v344 = vld [vmem:[%s1 + $0x4f0] sm:$0xf]
  %v345 = vld [vmem:[%s1 + $0x4f4] sm:$0xf]
  %v346 = vld [vmem:[%s1 + $0x4f8] sm:$0xf]
  %v347 = vld [vmem:[%s1 + $0x4fc] sm:$0xf]
  %v348 = vld [vmem:[%s1 + $0x500] sm:$0xf]
  %v349 = vld [vmem:[%s1 + $0x504] sm:$0xf]
  %v350 = vld [vmem:[%s1 + $0x508] sm:$0xf]
  %v351 = vld [vmem:[%s1 + $0x50c] sm:$0xf]
  %v352 = vld [vmem:[%s1 + $0x510] sm:$0xf]
  %v353 = vld [vmem:[%s1 + $0x514] sm:$0xf]
  %v354 = vld [vmem:[%s1 + $0x518] sm:$0xf]
  %v355 = vld [vmem:[%s1 + $0x51c] sm:$0xf]
  %v356 = vld [vmem:[%s1 + $0x520] sm:$0xf]
  %v357 = vld [vmem:[%s1 + $0x524] sm:$0xf]
  %v358 = vld [vmem:[%s1 + $0x528] sm:$0xf]
  %v359 = vld [vmem:[%s1 + $0x52c] sm:$0xf]
  %v360 = vld [vmem:[%s1 + $0x530] sm:$0xf]
  %v361 = vld [vmem:[%s1 + $0x534] sm:$0xf]
  %v362 = vld [vmem:[%s1 + $0x538] sm:$0xf]
  %v363 = vld [vmem:[%s1 + $0x53c] sm:$0xf]
  %v364 = vld [vmem:[%s1 + $0x540] sm:$0xf]
  %v365 = vld [vmem:[%s1 + $0x544] sm:$0xf]
  %v366 = vld [vmem:[%s1 + $0x548] sm:$0xf]
  %v367 = vld [vmem:[%s1 + $0x54c] sm:$0xf]
  %v368 = vld [vmem:[%s1 + $0x550] sm:$0xf]
  %v369 = vld [vmem:[%s1 + $0x554] sm:$0xf]
  %v370 = vld [vmem:[%s1 + $0x558] sm:$0xf]
  %v371 = vld [vmem:[%s1 + $0x55c] sm:$0xf]
  %v372 = vld [vmem:[%s1 + $0x560] sm:$0xf]
  %v373 = vld [vmem:[%s1 + $0x564] sm:$0xf]
  %v374 = vld [vmem:[%s1 + $0x568] sm:$0xf]
  %v375 = vld [vmem:[%s1 + $0x56c] sm:$0xf]
  %v376 = vld [vmem:[%s1 + $0x570] sm:$0xf]
  %v377 = vld [vmem:[%s1 + $0x574] sm:$0xf]
  %v378 = vld [vmem:[%s1 + $0x578] sm:$0xf]
  %v379 = vld [vmem:[%s1 + $0x57c] sm:$0xf]
  %v380 = vld [vmem:[%s1 + $0x580] sm:$0xf]
  %v381 = vld [vmem:[%s1 + $0x584] sm:$0xf]
  %v382 = vld [vmem:[%s1 + $0x588] sm:$0xf]
  %v383 = vld [vmem:[%s1 + $0x58c] sm:$0xf]
  %v384 = vld [vmem:[%s1 + $0x590] sm:$0xf]
  %v385 = vld [vmem:[%s1 + $0x594] sm:$0xf]
  %v386 = vld [vmem:[%s1 + $0x598] sm:$0xf]
  %v387 = vld [vmem:[%s1 + $0x59c] sm:$0xf]
  %v388 = vld [vmem:[%s1 + $0x5a0] sm:$0xf]
  %v389 = vld [vmem:[%s1 + $0x5a4] sm:$0xf]
  %v390 = vld [vmem:[%s1 + $0x5a8] sm:$0xf]
  %v391 = vld [vmem:[%s1 + $0x5ac] sm:$0xf]
  %v392 = vld [vmem:[%s1 + $0x5b0] sm:$0xf]
  %v393 = vld [vmem:[%s1 + $0x5b4] sm:$0xf]
  %v394 = vld [vmem:[%s1 + $0x5b8] sm:$0xf]
  %v395 = vld [vmem:[%s1 + $0x5bc] sm:$0xf]
  %v396 = vld [vmem:[%s1 + $0x5c0] sm:$0xf]
  %v397 = vld [vmem:[%s1 + $0x5c4] sm:$0xf]
  %v398 = vld [vmem:[%s1 + $0x5c8] sm:$0xf]
  %v399 = vld [vmem:[%s1 + $0x5cc] sm:$0xf]
  %v400 = vld [vmem:[%s1 + $0x5d0] sm:$0xf]
  %v401 = vld [vmem:[%s1 + $0x5d4] sm:$0xf]
  %v402 = vld [vmem:[%s1 + $0x5d8] sm:$0xf]
  %v403 = vld [vmem:[%s1 + $0x5dc] sm:$0xf]
  %v404 = vld [vmem:[%s1 + $0x5e0] sm:$0xf]
  %v405 = vld [vmem:[%s1 + $0x5e4] sm:$0xf]
  %v406 = vld [vmem:[%s1 + $0x5e8] sm:$0xf]
  %v407 = vld [vmem:[%s1 + $0x5ec] sm:$0xf]
  %v408 = vld [vmem:[%s1 + $0x5f0] sm:$0xf]
  %v409 = vld [vmem:[%s1 + $0x5f4] sm:$0xf]
  %v410 = vld [vmem:[%s1 + $0x5f8] sm:$0xf]
  %v411 = vld [vmem:[%s1 + $0x5fc] sm:$0xf]
  %v412 = vld [vmem:[%s1 + $0x600] sm:$0xf]
  %v413 = vld [vmem:[%s1 + $0x604] sm:$0xf]
  %v414 = vld [vmem:[%s1 + $0x608] sm:$0xf]
  %v415 = vld [vmem:[%s1 + $0x60c] sm:$0xf]
  %v416 = vld [vmem:[%s1 + $0x610] sm:$0xf]
  %v417 = vld [vmem:[%s1 + $0x614] sm:$0xf]
  %v418 = vld [vmem:[%s1 + $0x618] sm:$0xf]
  %v419 = vld [vmem:[%s1 + $0x61c] sm:$0xf]
  %v420 = vld [vmem:[%s1 + $0x620] sm:$0xf]
  %v421 = vld [vmem:[%s1 + $0x624] sm:$0xf]
  %v422 = vld [vmem:[%s1 + $0x628] sm:$0xf]
  %v423 = vld [vmem:[%s1 + $0x62c] sm:$0xf]
  %v424 = vld [vmem:[%s1 + $0x630] sm:$0xf]
  %v425 = vld [vmem:[%s1 + $0x634] sm:$0xf]
  %v426 = vld [vmem:[%s1 + $0x638] sm:$0xf]
  %v427 = vld [vmem:[%s1 + $0x63c] sm:$0xf]
  %v428 = vld [vmem:[%s1 + $0x640] sm:$0xf]
  %v429 = vld [vmem:[%s1 + $0x644] sm:$0xf]
  %v430 = vld [vmem:[%s1 + $0x648] sm:$0xf]
  %v431 = vld [vmem:[%s1 + $0x64c] sm:$0xf]
  %v432 = vld [vmem:[%s1 + $0x650] sm:$0xf]
  %v433 = vld [vmem:[%s1 + $0x654] sm:$0xf]
  %v434 = vld [vmem:[%s1 + $0x658] sm:$0xf]
  %v435 = vld [vmem:[%s1 + $0x65c] sm:$0xf]
  %v436 = vld [vmem:[%s1 + $0x660] sm:$0xf]
  %v437 = vld [vmem:[%s1 + $0x664] sm:$0xf]
  %v438 = vld [vmem:[%s1 + $0x668] sm:$0xf]
  %v439 = vld [vmem:[%s1 + $0x66c] sm:$0xf]
  %v440 = vld [vmem:[%s1 + $0x670] sm:$0xf]
  %v441 = vld [vmem:[%s1 + $0x674] sm:$0xf]
  %v442 = vld [vmem:[%s1 + $0x678] sm:$0xf]
  %v443 = vld [vmem:[%s1 + $0x67c] sm:$0xf]
  %v444 = vld [vmem:[%s1 + $0x680] sm:$0xf]
  %v445 = vld [vmem:[%s1 + $0x684] sm:$0xf]
  %v446 = vld [vmem:[%s1 + $0x688] sm:$0xf]
  %v447 = vld [vmem:[%s1 + $0x68c] sm:$0xf]
  %v448 = vld [vmem:[%s1 + $0x690] sm:$0xf]
  %v449 = vld [vmem:[%s1 + $0x694] sm:$0xf]
  %v450 = vld [vmem:[%s1 + $0x698] sm:$0xf]
  %v451 = vld [vmem:[%s1 + $0x69c] sm:$0xf]
  %v452 = vld [vmem:[%s1 + $0x6a0] sm:$0xf]
  %v453 = vld [vmem:[%s1 + $0x6a4] sm:$0xf]
  %v454 = vld [vmem:[%s1 + $0x6a8] sm:$0xf]
  %v455 = vld [vmem:[%s1 + $0x6ac] sm:$0xf]
  %v456 = vld [vmem:[%s1 + $0x6b0] sm:$0xf]
  %v457 = vld [vmem:[%s1 + $0x6b4] sm:$0xf]
  %v458 = vld [vmem:[%s1 + $0x6b8] sm:$0xf]
  %v459 = vld [vmem:[%s1 + $0x6bc] sm:$0xf]
  %v460 = vld [vmem:[%s2] sm:$0x1]
  %v462 = vperm.slane %v460, 0
  %v478 = vunpack.c.l.b16 %v14
  %v479 = vunpack.c.h.b16 %v14
  %v480 = vunpack.c.l.b16 %v15
  %v481 = vunpack.c.h.b16 %v15
  %v482 = vunpack.c.l.b16 %v16
  %v483 = vunpack.c.h.b16 %v16
  %v484 = vunpack.c.l.b16 %v17
  %v485 = vunpack.c.h.b16 %v17
  %v486 = vunpack.c.l.b16 %v18
  %v487 = vunpack.c.h.b16 %v18
  %v488 = vunpack.c.l.b16 %v19
  %v489 = vunpack.c.h.b16 %v19
  %v490 = vunpack.c.l.b16 %v20
  %v491 = vunpack.c.h.b16 %v20
  %v492 = vunpack.c.l.b16 %v21
  %v493 = vunpack.c.h.b16 %v21
  %v494 = vunpack.c.l.b16 %v22
  %v495 = vunpack.c.h.b16 %v22
  %v496 = vunpack.c.l.b16 %v23
  %v497 = vunpack.c.h.b16 %v23
  %v498 = vunpack.c.l.b16 %v24
  %v499 = vunpack.c.h.b16 %v24
  %v500 = vunpack.c.l.b16 %v25
  %v501 = vunpack.c.h.b16 %v25
  %v502 = vunpack.c.l.b16 %v26
  %v503 = vunpack.c.h.b16 %v26
  %v504 = vunpack.c.l.b16 %v27
  %v505 = vpack.c.b16 %v478, %v478
  %v506 = vpack.c.b16 %v479, %v479
  %v507 = vpack.c.b16 %v480, %v480
  %v508 = vpack.c.b16 %v481, %v481
  %v509 = vpack.c.b16 %v482, %v482
  %v510 = vpack.c.b16 %v483, %v483
  %v511 = vpack.c.b16 %v484, %v484
  %v512 = vpack.c.b16 %v485, %v485
  %v513 = vpack.c.b16 %v486, %v486
  %v514 = vpack.c.b16 %v487, %v487
  %v515 = vpack.c.b16 %v488, %v488
  %v516 = vpack.c.b16 %v489, %v489
  %v517 = vpack.c.b16 %v490, %v490
  %v518 = vpack.c.b16 %v491, %v491
  %v519 = vpack.c.b16 %v492, %v492
  %v520 = vpack.c.b16 %v493, %v493
  %v521 = vpack.c.b16 %v494, %v494
  %v522 = vpack.c.b16 %v495, %v495
  %v523 = vpack.c.b16 %v496, %v496
  %v524 = vpack.c.b16 %v497, %v497
  %v525 = vpack.c.b16 %v498, %v498
  %v526 = vpack.c.b16 %v499, %v499
  %v527 = vpack.c.b16 %v500, %v500
  %v528 = vpack.c.b16 %v501, %v501
  %v529 = vpack.c.b16 %v502, %v502
  %v530 = vpack.c.b16 %v503, %v503
  %v531 = vpack.c.b16 %v504, %v504
  %v991 = vunpack.c.l.b16 %v28
  %v992 = vunpack.c.l.b16 %v29
  %v993 = vunpack.c.l.b16 %v30
  %v994 = vunpack.c.l.b16 %v31
  %v995 = vunpack.c.l.b16 %v32
  %v996 = vunpack.c.l.b16 %v33
  %v997 = vunpack.c.l.b16 %v34
  %v998 = vunpack.c.l.b16 %v35
  %v999 = vunpack.c.l.b16 %v36
  %v1000 = vunpack.c.l.b16 %v37
  %v1001 = vunpack.c.l.b16 %v38
  %v1002 = vunpack.c.l.b16 %v39
  %v1003 = vunpack.c.l.b16 %v40
  %v1004 = vunpack.c.l.b16 %v41
  %v1005 = vunpack.c.l.b16 %v42
  %v1006 = vunpack.c.l.b16 %v43
  %v1007 = vunpack.c.l.b16 %v44
  %v1008 = vunpack.c.l.b16 %v45
  %v1009 = vunpack.c.l.b16 %v46
  %v1010 = vunpack.c.l.b16 %v47
  %v1011 = vunpack.c.l.b16 %v48
  %v1012 = vunpack.c.l.b16 %v49
  %v1013 = vunpack.c.l.b16 %v50
  %v1014 = vunpack.c.l.b16 %v51
  %v1015 = vunpack.c.l.b16 %v52
  %v1016 = vunpack.c.l.b16 %v53
  %v1017 = vunpack.c.l.b16 %v54
  %v1018 = vunpack.c.l.b16 %v55
  %v1019 = vunpack.c.l.b16 %v56
  %v1020 = vunpack.c.l.b16 %v57
  %v1021 = vunpack.c.l.b16 %v58
  %v1022 = vunpack.c.l.b16 %v59
  %v1023 = vunpack.c.l.b16 %v60
  %v1024 = vunpack.c.l.b16 %v61
  %v1025 = vunpack.c.l.b16 %v62
  %v1026 = vunpack.c.l.b16 %v63
  %v1027 = vunpack.c.l.b16 %v64
  %v1028 = vunpack.c.l.b16 %v65
  %v1029 = vunpack.c.l.b16 %v66
  %v1030 = vunpack.c.l.b16 %v67
  %v1031 = vunpack.c.l.b16 %v68
  %v1032 = vunpack.c.l.b16 %v69
  %v1033 = vunpack.c.l.b16 %v70
  %v1034 = vunpack.c.l.b16 %v71
  %v1035 = vunpack.c.l.b16 %v72
  %v1036 = vunpack.c.l.b16 %v73
  %v1037 = vunpack.c.l.b16 %v74
  %v1038 = vunpack.c.l.b16 %v75
  %v1039 = vunpack.c.l.b16 %v76
  %v1040 = vunpack.c.l.b16 %v77
  %v1041 = vunpack.c.l.b16 %v78
  %v1042 = vunpack.c.l.b16 %v79
  %v1043 = vunpack.c.l.b16 %v80
  %v1044 = vunpack.c.l.b16 %v81
  %v1045 = vunpack.c.l.b16 %v82
  %v1046 = vunpack.c.l.b16 %v83
  %v1047 = vunpack.c.l.b16 %v84
  %v1048 = vunpack.c.l.b16 %v85
  %v1049 = vunpack.c.l.b16 %v86
  %v1050 = vunpack.c.l.b16 %v87
  %v1051 = vunpack.c.l.b16 %v88
  %v1052 = vunpack.c.l.b16 %v89
  %v1053 = vunpack.c.l.b16 %v90
  %v1054 = vunpack.c.l.b16 %v91
  %v1055 = vunpack.c.l.b16 %v92
  %v1056 = vunpack.c.l.b16 %v93
  %v1057 = vunpack.c.l.b16 %v94
  %v1058 = vunpack.c.l.b16 %v95
  %v1059 = vunpack.c.l.b16 %v96
  %v1060 = vunpack.c.l.b16 %v97
  %v1061 = vunpack.c.l.b16 %v98
  %v1062 = vunpack.c.l.b16 %v99
  %v1063 = vunpack.c.l.b16 %v100
  %v1064 = vunpack.c.l.b16 %v101
  %v1065 = vunpack.c.l.b16 %v102
  %v1066 = vunpack.c.l.b16 %v103
  %v1067 = vunpack.c.l.b16 %v104
  %v1068 = vunpack.c.l.b16 %v105
  %v1069 = vunpack.c.l.b16 %v106
  %v1070 = vunpack.c.l.b16 %v107
  %v1071 = vunpack.c.l.b16 %v108
  %v1072 = vunpack.c.l.b16 %v109
  %v1073 = vunpack.c.l.b16 %v110
  %v1074 = vunpack.c.l.b16 %v111
  %v1075 = vunpack.c.l.b16 %v112
  %v1076 = vunpack.c.l.b16 %v113
  %v1077 = vunpack.c.l.b16 %v114
  %v1078 = vunpack.c.l.b16 %v115
  %v1079 = vunpack.c.l.b16 %v116
  %v1080 = vunpack.c.l.b16 %v117
  %v1081 = vunpack.c.l.b16 %v118
  %v1082 = vunpack.c.l.b16 %v119
  %v1083 = vunpack.c.l.b16 %v120
  %v1084 = vunpack.c.l.b16 %v121
  %v1085 = vunpack.c.l.b16 %v122
  %v1086 = vunpack.c.l.b16 %v123
  %v1087 = vunpack.c.l.b16 %v124
  %v1088 = vunpack.c.l.b16 %v125
  %v1089 = vunpack.c.l.b16 %v126
  %v1090 = vunpack.c.l.b16 %v127
  %v1091 = vunpack.c.l.b16 %v128
  %v1092 = vunpack.c.l.b16 %v129
  %v1093 = vunpack.c.l.b16 %v130
  %v1094 = vunpack.c.l.b16 %v131
  %v1095 = vunpack.c.l.b16 %v132
  %v1096 = vunpack.c.l.b16 %v133
  %v1097 = vunpack.c.l.b16 %v134
  %v1098 = vunpack.c.l.b16 %v135
  %v1099 = vunpack.c.l.b16 %v136
  %v1100 = vunpack.c.l.b16 %v137
  %v1101 = vunpack.c.l.b16 %v138
  %v1102 = vunpack.c.l.b16 %v139
  %v1103 = vunpack.c.l.b16 %v140
  %v1104 = vunpack.c.l.b16 %v141
  %v1105 = vunpack.c.l.b16 %v142
  %v1106 = vunpack.c.l.b16 %v143
  %v1107 = vunpack.c.l.b16 %v144
  %v1108 = vunpack.c.l.b16 %v145
  %v1109 = vunpack.c.l.b16 %v146
  %v1110 = vunpack.c.l.b16 %v147
  %v1111 = vunpack.c.l.b16 %v148
  %v1112 = vunpack.c.l.b16 %v149
  %v1113 = vunpack.c.l.b16 %v150
  %v1114 = vunpack.c.l.b16 %v151
  %v1115 = vunpack.c.l.b16 %v152
  %v1116 = vunpack.c.l.b16 %v153
  %v1117 = vunpack.c.l.b16 %v154
  %v1118 = vunpack.c.l.b16 %v155
  %v1119 = vunpack.c.l.b16 %v156
  %v1120 = vunpack.c.l.b16 %v157
  %v1121 = vunpack.c.l.b16 %v158
  %v1122 = vunpack.c.l.b16 %v159
  %v1123 = vunpack.c.l.b16 %v160
  %v1124 = vunpack.c.l.b16 %v161
  %v1125 = vunpack.c.l.b16 %v162
  %v1126 = vunpack.c.l.b16 %v163
  %v1127 = vunpack.c.l.b16 %v164
  %v1128 = vunpack.c.l.b16 %v165
  %v1129 = vunpack.c.l.b16 %v166
  %v1130 = vunpack.c.l.b16 %v167
  %v1131 = vunpack.c.l.b16 %v168
  %v1132 = vunpack.c.l.b16 %v169
  %v1133 = vunpack.c.l.b16 %v170
  %v1134 = vunpack.c.l.b16 %v171
  %v1135 = vunpack.c.l.b16 %v172
  %v1136 = vunpack.c.l.b16 %v173
  %v1137 = vunpack.c.l.b16 %v174
  %v1138 = vunpack.c.l.b16 %v175
  %v1139 = vunpack.c.l.b16 %v176
  %v1140 = vunpack.c.l.b16 %v177
  %v1141 = vunpack.c.l.b16 %v178
  %v1142 = vunpack.c.l.b16 %v179
  %v1143 = vunpack.c.l.b16 %v180
  %v1144 = vunpack.c.l.b16 %v181
  %v1145 = vunpack.c.l.b16 %v182
  %v1146 = vunpack.c.l.b16 %v183
  %v1147 = vunpack.c.l.b16 %v184
  %v1148 = vunpack.c.l.b16 %v185
  %v1149 = vunpack.c.l.b16 %v186
  %v1150 = vunpack.c.l.b16 %v187
  %v1151 = vunpack.c.l.b16 %v188
  %v1152 = vunpack.c.l.b16 %v189
  %v1153 = vunpack.c.l.b16 %v190
  %v1154 = vunpack.c.l.b16 %v191
  %v1155 = vunpack.c.l.b16 %v192
  %v1156 = vunpack.c.l.b16 %v193
  %v1157 = vunpack.c.l.b16 %v194
  %v1158 = vunpack.c.l.b16 %v195
  %v1159 = vunpack.c.l.b16 %v196
  %v1160 = vunpack.c.l.b16 %v197
  %v1161 = vunpack.c.l.b16 %v198
  %v1162 = vunpack.c.l.b16 %v199
  %v1163 = vunpack.c.l.b16 %v200
  %v1164 = vunpack.c.l.b16 %v201
  %v1165 = vunpack.c.l.b16 %v202
  %v1166 = vunpack.c.l.b16 %v203
  %v1167 = vunpack.c.l.b16 %v204
  %v1168 = vunpack.c.l.b16 %v205
  %v1169 = vunpack.c.l.b16 %v206
  %v1170 = vunpack.c.l.b16 %v207
  %v1171 = vunpack.c.l.b16 %v208
  %v1172 = vunpack.c.l.b16 %v209
  %v1173 = vunpack.c.l.b16 %v210
  %v1174 = vunpack.c.l.b16 %v211
  %v1175 = vunpack.c.l.b16 %v212
  %v1176 = vunpack.c.l.b16 %v213
  %v1177 = vunpack.c.l.b16 %v214
  %v1178 = vunpack.c.l.b16 %v215
  %v1179 = vunpack.c.l.b16 %v216
  %v1180 = vunpack.c.l.b16 %v217
  %v1181 = vunpack.c.l.b16 %v218
  %v1182 = vunpack.c.l.b16 %v219
  %v1183 = vunpack.c.l.b16 %v220
  %v1184 = vunpack.c.l.b16 %v221
  %v1185 = vunpack.c.l.b16 %v222
  %v1186 = vunpack.c.l.b16 %v223
  %v1187 = vunpack.c.l.b16 %v224
  %v1188 = vunpack.c.l.b16 %v225
  %v1189 = vunpack.c.l.b16 %v226
  %v1190 = vunpack.c.l.b16 %v227
  %v1191 = vunpack.c.l.b16 %v228
  %v1192 = vunpack.c.l.b16 %v229
  %v1193 = vunpack.c.l.b16 %v230
  %v1194 = vunpack.c.l.b16 %v231
  %v1195 = vunpack.c.l.b16 %v232
  %v1196 = vunpack.c.l.b16 %v233
  %v1197 = vunpack.c.l.b16 %v234
  %v1198 = vunpack.c.l.b16 %v235
  %v1199 = vunpack.c.l.b16 %v236
  %v1200 = vunpack.c.l.b16 %v237
  %v1201 = vunpack.c.l.b16 %v238
  %v1202 = vunpack.c.l.b16 %v239
  %v1203 = vunpack.c.l.b16 %v240
  %v1204 = vunpack.c.l.b16 %v241
  %v1205 = vunpack.c.l.b16 %v242
  %v1206 = vunpack.c.l.b16 %v243
  %v1207 = vunpack.c.l.b16 %v244
  %v1208 = vunpack.c.l.b16 %v245
  %v1209 = vunpack.c.l.b16 %v246
  %v1210 = vunpack.c.l.b16 %v247
  %v1211 = vunpack.c.l.b16 %v248
  %v1212 = vunpack.c.l.b16 %v249
  %v1213 = vunpack.c.l.b16 %v250
  %v1214 = vunpack.c.l.b16 %v251
  %v1215 = vunpack.c.l.b16 %v252
  %v1216 = vunpack.c.l.b16 %v253
  %v1217 = vunpack.c.l.b16 %v254
  %v1218 = vunpack.c.l.b16 %v255
  %v1219 = vunpack.c.l.b16 %v256
  %v1220 = vunpack.c.l.b16 %v257
  %v1221 = vunpack.c.l.b16 %v258
  %v1222 = vunpack.c.l.b16 %v259
  %v1223 = vunpack.c.l.b16 %v260
  %v1224 = vunpack.c.l.b16 %v261
  %v1225 = vunpack.c.l.b16 %v262
  %v1226 = vunpack.c.l.b16 %v263
  %v1227 = vunpack.c.l.b16 %v264
  %v1228 = vunpack.c.l.b16 %v265
  %v1229 = vunpack.c.l.b16 %v266
  %v1230 = vunpack.c.l.b16 %v267
  %v1231 = vunpack.c.l.b16 %v268
  %v1232 = vunpack.c.l.b16 %v269
  %v1233 = vunpack.c.l.b16 %v270
  %v1234 = vunpack.c.l.b16 %v271
  %v1235 = vunpack.c.l.b16 %v272
  %v1236 = vunpack.c.l.b16 %v273
  %v1237 = vunpack.c.l.b16 %v274
  %v1238 = vunpack.c.l.b16 %v275
  %v1239 = vunpack.c.l.b16 %v276
  %v1240 = vunpack.c.l.b16 %v277
  %v1241 = vunpack.c.l.b16 %v278
  %v1242 = vunpack.c.l.b16 %v279
  %v1243 = vunpack.c.l.b16 %v280
  %v1244 = vunpack.c.l.b16 %v281
  %v1245 = vunpack.c.l.b16 %v282
  %v1246 = vunpack.c.l.b16 %v283
  %v1247 = vunpack.c.l.b16 %v284
  %v1248 = vunpack.c.l.b16 %v285
  %v1249 = vunpack.c.l.b16 %v286
  %v1250 = vunpack.c.l.b16 %v287
  %v1251 = vunpack.c.l.b16 %v288
  %v1252 = vunpack.c.l.b16 %v289
  %v1253 = vunpack.c.l.b16 %v290
  %v1254 = vunpack.c.l.b16 %v291
  %v1255 = vunpack.c.l.b16 %v292
  %v1256 = vunpack.c.l.b16 %v293
  %v1257 = vunpack.c.l.b16 %v294
  %v1258 = vunpack.c.l.b16 %v295
  %v1259 = vunpack.c.l.b16 %v296
  %v1260 = vunpack.c.l.b16 %v297
  %v1261 = vunpack.c.l.b16 %v298
  %v1262 = vunpack.c.l.b16 %v299
  %v1263 = vunpack.c.l.b16 %v300
  %v1264 = vunpack.c.l.b16 %v301
  %v1265 = vunpack.c.l.b16 %v302
  %v1266 = vunpack.c.l.b16 %v303
  %v1267 = vunpack.c.l.b16 %v304
  %v1268 = vunpack.c.l.b16 %v305
  %v1269 = vunpack.c.l.b16 %v306
  %v1270 = vunpack.c.l.b16 %v307
  %v1271 = vunpack.c.l.b16 %v308
  %v1272 = vunpack.c.l.b16 %v309
  %v1273 = vunpack.c.l.b16 %v310
  %v1274 = vunpack.c.l.b16 %v311
  %v1275 = vunpack.c.l.b16 %v312
  %v1276 = vunpack.c.l.b16 %v313
  %v1277 = vunpack.c.l.b16 %v314
  %v1278 = vunpack.c.l.b16 %v315
  %v1279 = vunpack.c.l.b16 %v316
  %v1280 = vunpack.c.l.b16 %v317
  %v1281 = vunpack.c.l.b16 %v318
  %v1282 = vunpack.c.l.b16 %v319
  %v1283 = vunpack.c.l.b16 %v320
  %v1284 = vunpack.c.l.b16 %v321
  %v1285 = vunpack.c.l.b16 %v322
  %v1286 = vunpack.c.l.b16 %v323
  %v1287 = vunpack.c.l.b16 %v324
  %v1288 = vunpack.c.l.b16 %v325
  %v1289 = vunpack.c.l.b16 %v326
  %v1290 = vunpack.c.l.b16 %v327
  %v1291 = vunpack.c.l.b16 %v328
  %v1292 = vunpack.c.l.b16 %v329
  %v1293 = vunpack.c.l.b16 %v330
  %v1294 = vunpack.c.l.b16 %v331
  %v1295 = vunpack.c.l.b16 %v332
  %v1296 = vunpack.c.l.b16 %v333
  %v1297 = vunpack.c.l.b16 %v334
  %v1298 = vunpack.c.l.b16 %v335
  %v1299 = vunpack.c.l.b16 %v336
  %v1300 = vunpack.c.l.b16 %v337
  %v1301 = vunpack.c.l.b16 %v338
  %v1302 = vunpack.c.l.b16 %v339
  %v1303 = vunpack.c.l.b16 %v340
  %v1304 = vunpack.c.l.b16 %v341
  %v1305 = vunpack.c.l.b16 %v342
  %v1306 = vunpack.c.l.b16 %v343
  %v1307 = vunpack.c.l.b16 %v344
  %v1308 = vunpack.c.l.b16 %v345
  %v1309 = vunpack.c.l.b16 %v346
  %v1310 = vunpack.c.l.b16 %v347
  %v1311 = vunpack.c.l.b16 %v348
  %v1312 = vunpack.c.l.b16 %v349
  %v1313 = vunpack.c.l.b16 %v350
  %v1314 = vunpack.c.l.b16 %v351
  %v1315 = vunpack.c.l.b16 %v352
  %v1316 = vunpack.c.l.b16 %v353
  %v1317 = vunpack.c.l.b16 %v354
  %v1318 = vunpack.c.l.b16 %v355
  %v1319 = vunpack.c.l.b16 %v356
  %v1320 = vunpack.c.l.b16 %v357
  %v1321 = vunpack.c.l.b16 %v358
  %v1322 = vunpack.c.l.b16 %v359
  %v1323 = vunpack.c.l.b16 %v360
  %v1324 = vunpack.c.l.b16 %v361
  %v1325 = vunpack.c.l.b16 %v362
  %v1326 = vunpack.c.l.b16 %v363
  %v1327 = vunpack.c.l.b16 %v364
  %v1328 = vunpack.c.l.b16 %v365
  %v1329 = vunpack.c.l.b16 %v366
  %v1330 = vunpack.c.l.b16 %v367
  %v1331 = vunpack.c.l.b16 %v368
  %v1332 = vunpack.c.l.b16 %v369
  %v1333 = vunpack.c.l.b16 %v370
  %v1334 = vunpack.c.l.b16 %v371
  %v1335 = vunpack.c.l.b16 %v372
  %v1336 = vunpack.c.l.b16 %v373
  %v1337 = vunpack.c.l.b16 %v374
  %v1338 = vunpack.c.l.b16 %v375
  %v1339 = vunpack.c.l.b16 %v376
  %v1340 = vunpack.c.l.b16 %v377
  %v1341 = vunpack.c.l.b16 %v378
  %v1342 = vunpack.c.l.b16 %v379
  %v1343 = vunpack.c.l.b16 %v380
  %v1344 = vunpack.c.l.b16 %v381
  %v1345 = vunpack.c.l.b16 %v382
  %v1346 = vunpack.c.l.b16 %v383
  %v1347 = vunpack.c.l.b16 %v384
  %v1348 = vunpack.c.l.b16 %v385
  %v1349 = vunpack.c.l.b16 %v386
  %v1350 = vunpack.c.l.b16 %v387
  %v1351 = vunpack.c.l.b16 %v388
  %v1352 = vunpack.c.l.b16 %v389
  %v1353 = vunpack.c.l.b16 %v390
  %v1354 = vunpack.c.l.b16 %v391
  %v1355 = vunpack.c.l.b16 %v392
  %v1356 = vunpack.c.l.b16 %v393
  %v1357 = vunpack.c.l.b16 %v394
  %v1358 = vunpack.c.l.b16 %v395
  %v1359 = vunpack.c.l.b16 %v396
  %v1360 = vunpack.c.l.b16 %v397
  %v1361 = vunpack.c.l.b16 %v398
  %v1362 = vunpack.c.l.b16 %v399
  %v1363 = vunpack.c.l.b16 %v400
  %v1364 = vunpack.c.l.b16 %v401
  %v1365 = vunpack.c.l.b16 %v402
  %v1366 = vunpack.c.l.b16 %v403
  %v1367 = vunpack.c.l.b16 %v404
  %v1368 = vunpack.c.l.b16 %v405
  %v1369 = vunpack.c.l.b16 %v406
  %v1370 = vunpack.c.l.b16 %v407
  %v1371 = vunpack.c.l.b16 %v408
  %v1372 = vunpack.c.l.b16 %v409
  %v1373 = vunpack.c.l.b16 %v410
  %v1374 = vunpack.c.l.b16 %v411
  %v1375 = vunpack.c.l.b16 %v412
  %v1376 = vunpack.c.l.b16 %v413
  %v1377 = vunpack.c.l.b16 %v414
  %v1378 = vunpack.c.l.b16 %v415
  %v1379 = vunpack.c.l.b16 %v416
  %v1380 = vunpack.c.l.b16 %v417
  %v1381 = vunpack.c.l.b16 %v418
  %v1382 = vunpack.c.l.b16 %v419
  %v1383 = vunpack.c.l.b16 %v420
  %v1384 = vunpack.c.l.b16 %v421
  %v1385 = vunpack.c.l.b16 %v422
  %v1386 = vunpack.c.l.b16 %v423
  %v1387 = vunpack.c.l.b16 %v424
  %v1388 = vunpack.c.l.b16 %v425
  %v1389 = vunpack.c.l.b16 %v426
  %v1390 = vunpack.c.l.b16 %v427
  %v1391 = vunpack.c.l.b16 %v428
  %v1392 = vunpack.c.l.b16 %v429
  %v1393 = vunpack.c.l.b16 %v430
  %v1394 = vunpack.c.l.b16 %v431
  %v1395 = vunpack.c.l.b16 %v432
  %v1396 = vunpack.c.l.b16 %v433
  %v1397 = vunpack.c.l.b16 %v434
  %v1398 = vunpack.c.l.b16 %v435
  %v1399 = vunpack.c.l.b16 %v436
  %v1400 = vunpack.c.l.b16 %v437
  %v1401 = vunpack.c.l.b16 %v438
  %v1402 = vunpack.c.l.b16 %v439
  %v1403 = vunpack.c.l.b16 %v440
  %v1404 = vunpack.c.l.b16 %v441
  %v1405 = vunpack.c.l.b16 %v442
  %v1406 = vunpack.c.l.b16 %v443
  %v1407 = vunpack.c.l.b16 %v444
  %v1408 = vunpack.c.l.b16 %v445
  %v1409 = vunpack.c.l.b16 %v446
  %v1410 = vunpack.c.l.b16 %v447
  %v1411 = vunpack.c.l.b16 %v448
  %v1412 = vunpack.c.l.b16 %v449
  %v1413 = vunpack.c.l.b16 %v450
  %v1414 = vunpack.c.l.b16 %v451
  %v1415 = vunpack.c.l.b16 %v452
  %v1416 = vunpack.c.l.b16 %v453
  %v1417 = vunpack.c.l.b16 %v454
  %v1418 = vunpack.c.l.b16 %v455
  %v1419 = vunpack.c.l.b16 %v456
  %v1420 = vunpack.c.l.b16 %v457
  %v1421 = vunpack.c.l.b16 %v458
  %v1422 = vunpack.c.l.b16 %v459
  %v1423 = vpack.c.b16 %v992, %v991
  %v1424 = vpack.c.b16 %v994, %v993
  %v1425 = vpack.c.b16 %v996, %v995
  %v1426 = vpack.c.b16 %v998, %v997
  %v1427 = vpack.c.b16 %v1000, %v999
  %v1428 = vpack.c.b16 %v1002, %v1001
  %v1429 = vpack.c.b16 %v1004, %v1003
  %v1430 = vpack.c.b16 %v1006, %v1005
  %v1431 = vpack.c.b16 %v1008, %v1007
  %v1432 = vpack.c.b16 %v1010, %v1009
  %v1433 = vpack.c.b16 %v1012, %v1011
  %v1434 = vpack.c.b16 %v1014, %v1013
  %v1435 = vpack.c.b16 %v1016, %v1015
  %v1436 = vpack.c.b16 %v1018, %v1017
  %v1437 = vpack.c.b16 %v1020, %v1019
  %v1438 = vpack.c.b16 %v1022, %v1021
  %v1439 = vpack.c.b16 %v1024, %v1023
  %v1440 = vpack.c.b16 %v1026, %v1025
  %v1441 = vpack.c.b16 %v1028, %v1027
  %v1442 = vpack.c.b16 %v1030, %v1029
  %v1443 = vpack.c.b16 %v1032, %v1031
  %v1444 = vpack.c.b16 %v1034, %v1033
  %v1445 = vpack.c.b16 %v1036, %v1035
  %v1446 = vpack.c.b16 %v1038, %v1037
  %v1447 = vpack.c.b16 %v1040, %v1039
  %v1448 = vpack.c.b16 %v1042, %v1041
  %v1449 = vpack.c.b16 %v1044, %v1043
  %v1450 = vpack.c.b16 %v1046, %v1045
  %v1451 = vpack.c.b16 %v1048, %v1047
  %v1452 = vpack.c.b16 %v1050, %v1049
  %v1453 = vpack.c.b16 %v1052, %v1051
  %v1454 = vpack.c.b16 %v1054, %v1053
  %v1455 = vpack.c.b16 %v1056, %v1055
  %v1456 = vpack.c.b16 %v1058, %v1057
  %v1457 = vpack.c.b16 %v1060, %v1059
  %v1458 = vpack.c.b16 %v1062, %v1061
  %v1459 = vpack.c.b16 %v1064, %v1063
  %v1460 = vpack.c.b16 %v1066, %v1065
  %v1461 = vpack.c.b16 %v1068, %v1067
  %v1462 = vpack.c.b16 %v1070, %v1069
  %v1463 = vpack.c.b16 %v1072, %v1071
  %v1464 = vpack.c.b16 %v1074, %v1073
  %v1465 = vpack.c.b16 %v1076, %v1075
  %v1466 = vpack.c.b16 %v1078, %v1077
  %v1467 = vpack.c.b16 %v1080, %v1079
  %v1468 = vpack.c.b16 %v1082, %v1081
  %v1469 = vpack.c.b16 %v1084, %v1083
  %v1470 = vpack.c.b16 %v1086, %v1085
  %v1471 = vpack.c.b16 %v1088, %v1087
  %v1472 = vpack.c.b16 %v1090, %v1089
  %v1473 = vpack.c.b16 %v1092, %v1091
  %v1474 = vpack.c.b16 %v1094, %v1093
  %v1475 = vpack.c.b16 %v1096, %v1095
  %v1476 = vpack.c.b16 %v1098, %v1097
  %v1477 = vpack.c.b16 %v1100, %v1099
  %v1478 = vpack.c.b16 %v1102, %v1101
  %v1479 = vpack.c.b16 %v1104, %v1103
  %v1480 = vpack.c.b16 %v1106, %v1105
  %v1481 = vpack.c.b16 %v1108, %v1107
  %v1482 = vpack.c.b16 %v1110, %v1109
  %v1483 = vpack.c.b16 %v1112, %v1111
  %v1484 = vpack.c.b16 %v1114, %v1113
  %v1485 = vpack.c.b16 %v1116, %v1115
  %v1486 = vpack.c.b16 %v1118, %v1117
  %v1487 = vpack.c.b16 %v1120, %v1119
  %v1488 = vpack.c.b16 %v1122, %v1121
  %v1489 = vpack.c.b16 %v1124, %v1123
  %v1490 = vpack.c.b16 %v1126, %v1125
  %v1491 = vpack.c.b16 %v1128, %v1127
  %v1492 = vpack.c.b16 %v1130, %v1129
  %v1493 = vpack.c.b16 %v1132, %v1131
  %v1494 = vpack.c.b16 %v1134, %v1133
  %v1495 = vpack.c.b16 %v1136, %v1135
  %v1496 = vpack.c.b16 %v1138, %v1137
  %v1497 = vpack.c.b16 %v1140, %v1139
  %v1498 = vpack.c.b16 %v1142, %v1141
  %v1499 = vpack.c.b16 %v1144, %v1143
  %v1500 = vpack.c.b16 %v1146, %v1145
  %v1501 = vpack.c.b16 %v1148, %v1147
  %v1502 = vpack.c.b16 %v1150, %v1149
  %v1503 = vpack.c.b16 %v1152, %v1151
  %v1504 = vpack.c.b16 %v1154, %v1153
  %v1505 = vpack.c.b16 %v1156, %v1155
  %v1506 = vpack.c.b16 %v1158, %v1157
  %v1507 = vpack.c.b16 %v1160, %v1159
  %v1508 = vpack.c.b16 %v1162, %v1161
  %v1509 = vpack.c.b16 %v1164, %v1163
  %v1510 = vpack.c.b16 %v1166, %v1165
  %v1511 = vpack.c.b16 %v1168, %v1167
  %v1512 = vpack.c.b16 %v1170, %v1169
  %v1513 = vpack.c.b16 %v1172, %v1171
  %v1514 = vpack.c.b16 %v1174, %v1173
  %v1515 = vpack.c.b16 %v1176, %v1175
  %v1516 = vpack.c.b16 %v1178, %v1177
  %v1517 = vpack.c.b16 %v1180, %v1179
  %v1518 = vpack.c.b16 %v1182, %v1181
  %v1519 = vpack.c.b16 %v1184, %v1183
  %v1520 = vpack.c.b16 %v1186, %v1185
  %v1521 = vpack.c.b16 %v1188, %v1187
  %v1522 = vpack.c.b16 %v1190, %v1189
  %v1523 = vpack.c.b16 %v1192, %v1191
  %v1524 = vpack.c.b16 %v1194, %v1193
  %v1525 = vpack.c.b16 %v1196, %v1195
  %v1526 = vpack.c.b16 %v1198, %v1197
  %v1527 = vpack.c.b16 %v1200, %v1199
  %v1528 = vpack.c.b16 %v1202, %v1201
  %v1529 = vpack.c.b16 %v1204, %v1203
  %v1530 = vpack.c.b16 %v1206, %v1205
  %v1531 = vpack.c.b16 %v1208, %v1207
  %v1532 = vpack.c.b16 %v1210, %v1209
  %v1533 = vpack.c.b16 %v1212, %v1211
  %v1534 = vpack.c.b16 %v1214, %v1213
  %v1535 = vpack.c.b16 %v1216, %v1215
  %v1536 = vpack.c.b16 %v1218, %v1217
  %v1537 = vpack.c.b16 %v1220, %v1219
  %v1538 = vpack.c.b16 %v1222, %v1221
  %v1539 = vpack.c.b16 %v1224, %v1223
  %v1540 = vpack.c.b16 %v1226, %v1225
  %v1541 = vpack.c.b16 %v1228, %v1227
  %v1542 = vpack.c.b16 %v1230, %v1229
  %v1543 = vpack.c.b16 %v1232, %v1231
  %v1544 = vpack.c.b16 %v1234, %v1233
  %v1545 = vpack.c.b16 %v1236, %v1235
  %v1546 = vpack.c.b16 %v1238, %v1237
  %v1547 = vpack.c.b16 %v1240, %v1239
  %v1548 = vpack.c.b16 %v1242, %v1241
  %v1549 = vpack.c.b16 %v1244, %v1243
  %v1550 = vpack.c.b16 %v1246, %v1245
  %v1551 = vpack.c.b16 %v1248, %v1247
  %v1552 = vpack.c.b16 %v1250, %v1249
  %v1553 = vpack.c.b16 %v1252, %v1251
  %v1554 = vpack.c.b16 %v1254, %v1253
  %v1555 = vpack.c.b16 %v1256, %v1255
  %v1556 = vpack.c.b16 %v1258, %v1257
  %v1557 = vpack.c.b16 %v1260, %v1259
  %v1558 = vpack.c.b16 %v1262, %v1261
  %v1559 = vpack.c.b16 %v1264, %v1263
  %v1560 = vpack.c.b16 %v1266, %v1265
  %v1561 = vpack.c.b16 %v1268, %v1267
  %v1562 = vpack.c.b16 %v1270, %v1269
  %v1563 = vpack.c.b16 %v1272, %v1271
  %v1564 = vpack.c.b16 %v1274, %v1273
  %v1565 = vpack.c.b16 %v1276, %v1275
  %v1566 = vpack.c.b16 %v1278, %v1277
  %v1567 = vpack.c.b16 %v1280, %v1279
  %v1568 = vpack.c.b16 %v1282, %v1281
  %v1569 = vpack.c.b16 %v1284, %v1283
  %v1570 = vpack.c.b16 %v1286, %v1285
  %v1571 = vpack.c.b16 %v1288, %v1287
  %v1572 = vpack.c.b16 %v1290, %v1289
  %v1573 = vpack.c.b16 %v1292, %v1291
  %v1574 = vpack.c.b16 %v1294, %v1293
  %v1575 = vpack.c.b16 %v1296, %v1295
  %v1576 = vpack.c.b16 %v1298, %v1297
  %v1577 = vpack.c.b16 %v1300, %v1299
  %v1578 = vpack.c.b16 %v1302, %v1301
  %v1579 = vpack.c.b16 %v1304, %v1303
  %v1580 = vpack.c.b16 %v1306, %v1305
  %v1581 = vpack.c.b16 %v1308, %v1307
  %v1582 = vpack.c.b16 %v1310, %v1309
  %v1583 = vpack.c.b16 %v1312, %v1311
  %v1584 = vpack.c.b16 %v1314, %v1313
  %v1585 = vpack.c.b16 %v1316, %v1315
  %v1586 = vpack.c.b16 %v1318, %v1317
  %v1587 = vpack.c.b16 %v1320, %v1319
  %v1588 = vpack.c.b16 %v1322, %v1321
  %v1589 = vpack.c.b16 %v1324, %v1323
  %v1590 = vpack.c.b16 %v1326, %v1325
  %v1591 = vpack.c.b16 %v1328, %v1327
  %v1592 = vpack.c.b16 %v1330, %v1329
  %v1593 = vpack.c.b16 %v1332, %v1331
  %v1594 = vpack.c.b16 %v1334, %v1333
  %v1595 = vpack.c.b16 %v1336, %v1335
  %v1596 = vpack.c.b16 %v1338, %v1337
  %v1597 = vpack.c.b16 %v1340, %v1339
  %v1598 = vpack.c.b16 %v1342, %v1341
  %v1599 = vpack.c.b16 %v1344, %v1343
  %v1600 = vpack.c.b16 %v1346, %v1345
  %v1601 = vpack.c.b16 %v1348, %v1347
  %v1602 = vpack.c.b16 %v1350, %v1349
  %v1603 = vpack.c.b16 %v1352, %v1351
  %v1604 = vpack.c.b16 %v1354, %v1353
  %v1605 = vpack.c.b16 %v1356, %v1355
  %v1606 = vpack.c.b16 %v1358, %v1357
  %v1607 = vpack.c.b16 %v1360, %v1359
  %v1608 = vpack.c.b16 %v1362, %v1361
  %v1609 = vpack.c.b16 %v1364, %v1363
  %v1610 = vpack.c.b16 %v1366, %v1365
  %v1611 = vpack.c.b16 %v1368, %v1367
  %v1612 = vpack.c.b16 %v1370, %v1369
  %v1613 = vpack.c.b16 %v1372, %v1371
  %v1614 = vpack.c.b16 %v1374, %v1373
  %v1615 = vpack.c.b16 %v1376, %v1375
  %v1616 = vpack.c.b16 %v1378, %v1377
  %v1617 = vpack.c.b16 %v1380, %v1379
  %v1618 = vpack.c.b16 %v1382, %v1381
  %v1619 = vpack.c.b16 %v1384, %v1383
  %v1620 = vpack.c.b16 %v1386, %v1385
  %v1621 = vpack.c.b16 %v1388, %v1387
  %v1622 = vpack.c.b16 %v1390, %v1389
  %v1623 = vpack.c.b16 %v1392, %v1391
  %v1624 = vpack.c.b16 %v1394, %v1393
  %v1625 = vpack.c.b16 %v1396, %v1395
  %v1626 = vpack.c.b16 %v1398, %v1397
  %v1627 = vpack.c.b16 %v1400, %v1399
  %v1628 = vpack.c.b16 %v1402, %v1401
  %v1629 = vpack.c.b16 %v1404, %v1403
  %v1630 = vpack.c.b16 %v1406, %v1405
  %v1631 = vpack.c.b16 %v1408, %v1407
  %v1632 = vpack.c.b16 %v1410, %v1409
  %v1633 = vpack.c.b16 %v1412, %v1411
  %v1634 = vpack.c.b16 %v1414, %v1413
  %v1635 = vpack.c.b16 %v1416, %v1415
  %v1636 = vpack.c.b16 %v1418, %v1417
  %v1637 = vpack.c.b16 %v1420, %v1419
  %v1638 = vpack.c.b16 %v1422, %v1421
  %1855 = vmatpush.bf16.msra.mxu0 %v1430
  %1856 = vmatpush.bf16.msra.mxu0 %v1429
  %1857 = vmatpush.bf16.msra.mxu0 %v1428
  %1858 = vmatpush.bf16.msra.mxu0 %v1427
  %1859 = vmatpush.bf16.msra.mxu0 %v1426
  %1860 = vmatpush.bf16.msra.mxu0 %v1425
  %1861 = vmatpush.bf16.msra.mxu0 %v1424
  %1862 = vmatpush.bf16.msra.mxu0 %v1423
  %1863 = vmatmul.bf16.gmra.mxu0 %v505
  %v1864 = vpop.f32.mrf.mxu0
  %v1865 = vadd.f32 %v462, %v1864
  %v1866 = vpop.f32.mrf.mxu0
  %1867 = vdwg.mxu0
  %1868 = vmatpush.bf16.msra.mxu0 %v1438
  %1869 = vmatpush.bf16.msra.mxu0 %v1437
  %1870 = vmatpush.bf16.msra.mxu0 %v1436
  %1871 = vmatpush.bf16.msra.mxu0 %v1435
  %1872 = vmatpush.bf16.msra.mxu0 %v1434
  %1873 = vmatpush.bf16.msra.mxu0 %v1433
  %1874 = vmatpush.bf16.msra.mxu0 %v1432
  %1875 = vmatpush.bf16.msra.mxu0 %v1431
  %1876 = vmatmul.bf16.gmra.mxu0 %v506
  %v1877 = vpop.f32.mrf.mxu0
  %v1878 = vadd.f32 %v1865, %v1877
  %v1879 = vpop.f32.mrf.mxu0
  %1880 = vdwg.mxu0
  %1881 = vmatpush.bf16.msra.mxu0 %v1446
  %1882 = vmatpush.bf16.msra.mxu0 %v1445
  %1883 = vmatpush.bf16.msra.mxu0 %v1444
  %1884 = vmatpush.bf16.msra.mxu0 %v1443
  %1885 = vmatpush.bf16.msra.mxu0 %v1442
  %1886 = vmatpush.bf16.msra.mxu0 %v1441
  %1887 = vmatpush.bf16.msra.mxu0 %v1440
  %1888 = vmatpush.bf16.msra.mxu0 %v1439
  %1889 = vmatmul.bf16.gmra.mxu0 %v507
  %v1890 = vpop.f32.mrf.mxu0
  %v1891 = vadd.f32 %v1878, %v1890
  %v1892 = vpop.f32.mrf.mxu0
  %1893 = vdwg.mxu0
  %1894 = vmatpush.bf16.msra.mxu0 %v1454
  %1895 = vmatpush.bf16.msra.mxu0 %v1453
  %1896 = vmatpush.bf16.msra.mxu0 %v1452
  %1897 = vmatpush.bf16.msra.mxu0 %v1451
  %1898 = vmatpush.bf16.msra.mxu0 %v1450
  %1899 = vmatpush.bf16.msra.mxu0 %v1449
  %1900 = vmatpush.bf16.msra.mxu0 %v1448
  %1901 = vmatpush.bf16.msra.mxu0 %v1447
  %1902 = vmatmul.bf16.gmra.mxu0 %v508
  %v1903 = vpop.f32.mrf.mxu0
  %v1904 = vadd.f32 %v1891, %v1903
  %v1905 = vpop.f32.mrf.mxu0
  %1906 = vdwg.mxu0
  %1907 = vmatpush.bf16.msra.mxu0 %v1462
  %1908 = vmatpush.bf16.msra.mxu0 %v1461
  %1909 = vmatpush.bf16.msra.mxu0 %v1460
  %1910 = vmatpush.bf16.msra.mxu0 %v1459
  %1911 = vmatpush.bf16.msra.mxu0 %v1458
  %1912 = vmatpush.bf16.msra.mxu0 %v1457
  %1913 = vmatpush.bf16.msra.mxu0 %v1456
  %1914 = vmatpush.bf16.msra.mxu0 %v1455
  %1915 = vmatmul.bf16.gmra.mxu0 %v509
  %v1916 = vpop.f32.mrf.mxu0
  %v1917 = vadd.f32 %v1904, %v1916
  %v1918 = vpop.f32.mrf.mxu0
  %1919 = vdwg.mxu0
  %1920 = vmatpush.bf16.msra.mxu0 %v1470
  %1921 = vmatpush.bf16.msra.mxu0 %v1469
  %1922 = vmatpush.bf16.msra.mxu0 %v1468
  %1923 = vmatpush.bf16.msra.mxu0 %v1467
  %1924 = vmatpush.bf16.msra.mxu0 %v1466
  %1925 = vmatpush.bf16.msra.mxu0 %v1465
  %1926 = vmatpush.bf16.msra.mxu0 %v1464
  %1927 = vmatpush.bf16.msra.mxu0 %v1463
  %1928 = vmatmul.bf16.gmra.mxu0 %v510
  %v1929 = vpop.f32.mrf.mxu0
  %v1930 = vadd.f32 %v1917, %v1929
  %v1931 = vpop.f32.mrf.mxu0
  %1932 = vdwg.mxu0
  %1933 = vmatpush.bf16.msra.mxu0 %v1478
  %1934 = vmatpush.bf16.msra.mxu0 %v1477
  %1935 = vmatpush.bf16.msra.mxu0 %v1476
  %1936 = vmatpush.bf16.msra.mxu0 %v1475
  %1937 = vmatpush.bf16.msra.mxu0 %v1474
  %1938 = vmatpush.bf16.msra.mxu0 %v1473
  %1939 = vmatpush.bf16.msra.mxu0 %v1472
  %1940 = vmatpush.bf16.msra.mxu0 %v1471
  %1941 = vmatmul.bf16.gmra.mxu0 %v511
  %v1942 = vpop.f32.mrf.mxu0
  %v1943 = vadd.f32 %v1930, %v1942
  %v1944 = vpop.f32.mrf.mxu0
  %1945 = vdwg.mxu0
  %1946 = vmatpush.bf16.msra.mxu0 %v1486
  %1947 = vmatpush.bf16.msra.mxu0 %v1485
  %1948 = vmatpush.bf16.msra.mxu0 %v1484
  %1949 = vmatpush.bf16.msra.mxu0 %v1483
  %1950 = vmatpush.bf16.msra.mxu0 %v1482
  %1951 = vmatpush.bf16.msra.mxu0 %v1481
  %1952 = vmatpush.bf16.msra.mxu0 %v1480
  %1953 = vmatpush.bf16.msra.mxu0 %v1479
  %1954 = vmatmul.bf16.gmra.mxu0 %v512
  %v1955 = vpop.f32.mrf.mxu0
  %v1956 = vadd.f32 %v1943, %v1955
  %v1957 = vpop.f32.mrf.mxu0
  %1958 = vdwg.mxu0
  %1959 = vmatpush.bf16.msra.mxu0 %v1494
  %1960 = vmatpush.bf16.msra.mxu0 %v1493
  %1961 = vmatpush.bf16.msra.mxu0 %v1492
  %1962 = vmatpush.bf16.msra.mxu0 %v1491
  %1963 = vmatpush.bf16.msra.mxu0 %v1490
  %1964 = vmatpush.bf16.msra.mxu0 %v1489
  %1965 = vmatpush.bf16.msra.mxu0 %v1488
  %1966 = vmatpush.bf16.msra.mxu0 %v1487
  %1967 = vmatmul.bf16.gmra.mxu0 %v513
  %v1968 = vpop.f32.mrf.mxu0
  %v1969 = vadd.f32 %v1956, %v1968
  %v1970 = vpop.f32.mrf.mxu0
  %1971 = vdwg.mxu0
  %1972 = vmatpush.bf16.msra.mxu0 %v1502
  %1973 = vmatpush.bf16.msra.mxu0 %v1501
  %1974 = vmatpush.bf16.msra.mxu0 %v1500
  %1975 = vmatpush.bf16.msra.mxu0 %v1499
  %1976 = vmatpush.bf16.msra.mxu0 %v1498
  %1977 = vmatpush.bf16.msra.mxu0 %v1497
  %1978 = vmatpush.bf16.msra.mxu0 %v1496
  %1979 = vmatpush.bf16.msra.mxu0 %v1495
  %1980 = vmatmul.bf16.gmra.mxu0 %v514
  %v1981 = vpop.f32.mrf.mxu0
  %v1982 = vadd.f32 %v1969, %v1981
  %v1983 = vpop.f32.mrf.mxu0
  %1984 = vdwg.mxu0
  %1985 = vmatpush.bf16.msra.mxu0 %v1510
  %1986 = vmatpush.bf16.msra.mxu0 %v1509
  %1987 = vmatpush.bf16.msra.mxu0 %v1508
  %1988 = vmatpush.bf16.msra.mxu0 %v1507
  %1989 = vmatpush.bf16.msra.mxu0 %v1506
  %1990 = vmatpush.bf16.msra.mxu0 %v1505
  %1991 = vmatpush.bf16.msra.mxu0 %v1504
  %1992 = vmatpush.bf16.msra.mxu0 %v1503
  %1993 = vmatmul.bf16.gmra.mxu0 %v515
  %v1994 = vpop.f32.mrf.mxu0
  %v1995 = vadd.f32 %v1982, %v1994
  %v1996 = vpop.f32.mrf.mxu0
  %1997 = vdwg.mxu0
  %1998 = vmatpush.bf16.msra.mxu0 %v1518
  %1999 = vmatpush.bf16.msra.mxu0 %v1517
  %2000 = vmatpush.bf16.msra.mxu0 %v1516
  %2001 = vmatpush.bf16.msra.mxu0 %v1515
  %2002 = vmatpush.bf16.msra.mxu0 %v1514
  %2003 = vmatpush.bf16.msra.mxu0 %v1513
  %2004 = vmatpush.bf16.msra.mxu0 %v1512
  %2005 = vmatpush.bf16.msra.mxu0 %v1511
  %2006 = vmatmul.bf16.gmra.mxu0 %v516
  %v2007 = vpop.f32.mrf.mxu0
  %v2008 = vadd.f32 %v1995, %v2007
  %v2009 = vpop.f32.mrf.mxu0
  %2010 = vdwg.mxu0
  %2011 = vmatpush.bf16.msra.mxu0 %v1526
  %2012 = vmatpush.bf16.msra.mxu0 %v1525
  %2013 = vmatpush.bf16.msra.mxu0 %v1524
  %2014 = vmatpush.bf16.msra.mxu0 %v1523
  %2015 = vmatpush.bf16.msra.mxu0 %v1522
  %2016 = vmatpush.bf16.msra.mxu0 %v1521
  %2017 = vmatpush.bf16.msra.mxu0 %v1520
  %2018 = vmatpush.bf16.msra.mxu0 %v1519
  %2019 = vmatmul.bf16.gmra.mxu0 %v517
  %v2020 = vpop.f32.mrf.mxu0
  %v2021 = vadd.f32 %v2008, %v2020
  %v2022 = vpop.f32.mrf.mxu0
  %2023 = vdwg.mxu0
  %2024 = vmatpush.bf16.msra.mxu0 %v1534
  %2025 = vmatpush.bf16.msra.mxu0 %v1533
  %2026 = vmatpush.bf16.msra.mxu0 %v1532
  %2027 = vmatpush.bf16.msra.mxu0 %v1531
  %2028 = vmatpush.bf16.msra.mxu0 %v1530
  %2029 = vmatpush.bf16.msra.mxu0 %v1529
  %2030 = vmatpush.bf16.msra.mxu0 %v1528
  %2031 = vmatpush.bf16.msra.mxu0 %v1527
  %2032 = vmatmul.bf16.gmra.mxu0 %v518
  %v2033 = vpop.f32.mrf.mxu0
  %v2034 = vadd.f32 %v2021, %v2033
  %v2035 = vpop.f32.mrf.mxu0
  %2036 = vdwg.mxu0
  %2037 = vmatpush.bf16.msra.mxu0 %v1542
  %2038 = vmatpush.bf16.msra.mxu0 %v1541
  %2039 = vmatpush.bf16.msra.mxu0 %v1540
  %2040 = vmatpush.bf16.msra.mxu0 %v1539
  %2041 = vmatpush.bf16.msra.mxu0 %v1538
  %2042 = vmatpush.bf16.msra.mxu0 %v1537
  %2043 = vmatpush.bf16.msra.mxu0 %v1536
  %2044 = vmatpush.bf16.msra.mxu0 %v1535
  %2045 = vmatmul.bf16.gmra.mxu0 %v519
  %v2046 = vpop.f32.mrf.mxu0
  %v2047 = vadd.f32 %v2034, %v2046
  %v2048 = vpop.f32.mrf.mxu0
  %2049 = vdwg.mxu0
  %2050 = vmatpush.bf16.msra.mxu0 %v1550
  %2051 = vmatpush.bf16.msra.mxu0 %v1549
  %2052 = vmatpush.bf16.msra.mxu0 %v1548
  %2053 = vmatpush.bf16.msra.mxu0 %v1547
  %2054 = vmatpush.bf16.msra.mxu0 %v1546
  %2055 = vmatpush.bf16.msra.mxu0 %v1545
  %2056 = vmatpush.bf16.msra.mxu0 %v1544
  %2057 = vmatpush.bf16.msra.mxu0 %v1543
  %2058 = vmatmul.bf16.gmra.mxu0 %v520
  %v2059 = vpop.f32.mrf.mxu0
  %v2060 = vadd.f32 %v2047, %v2059
  %v2061 = vpop.f32.mrf.mxu0
  %2062 = vdwg.mxu0
  %2063 = vmatpush.bf16.msra.mxu0 %v1558
  %2064 = vmatpush.bf16.msra.mxu0 %v1557
  %2065 = vmatpush.bf16.msra.mxu0 %v1556
  %2066 = vmatpush.bf16.msra.mxu0 %v1555
  %2067 = vmatpush.bf16.msra.mxu0 %v1554
  %2068 = vmatpush.bf16.msra.mxu0 %v1553
  %2069 = vmatpush.bf16.msra.mxu0 %v1552
  %2070 = vmatpush.bf16.msra.mxu0 %v1551
  %2071 = vmatmul.bf16.gmra.mxu0 %v521
  %v2072 = vpop.f32.mrf.mxu0
  %v2073 = vadd.f32 %v2060, %v2072
  %v2074 = vpop.f32.mrf.mxu0
  %2075 = vdwg.mxu0
  %2076 = vmatpush.bf16.msra.mxu0 %v1566
  %2077 = vmatpush.bf16.msra.mxu0 %v1565
  %2078 = vmatpush.bf16.msra.mxu0 %v1564
  %2079 = vmatpush.bf16.msra.mxu0 %v1563
  %2080 = vmatpush.bf16.msra.mxu0 %v1562
  %2081 = vmatpush.bf16.msra.mxu0 %v1561
  %2082 = vmatpush.bf16.msra.mxu0 %v1560
  %2083 = vmatpush.bf16.msra.mxu0 %v1559
  %2084 = vmatmul.bf16.gmra.mxu0 %v522
  %v2085 = vpop.f32.mrf.mxu0
  %v2086 = vadd.f32 %v2073, %v2085
  %v2087 = vpop.f32.mrf.mxu0
  %2088 = vdwg.mxu0
  %2089 = vmatpush.bf16.msra.mxu0 %v1574
  %2090 = vmatpush.bf16.msra.mxu0 %v1573
  %2091 = vmatpush.bf16.msra.mxu0 %v1572
  %2092 = vmatpush.bf16.msra.mxu0 %v1571
  %2093 = vmatpush.bf16.msra.mxu0 %v1570
  %2094 = vmatpush.bf16.msra.mxu0 %v1569
  %2095 = vmatpush.bf16.msra.mxu0 %v1568
  %2096 = vmatpush.bf16.msra.mxu0 %v1567
  %2097 = vmatmul.bf16.gmra.mxu0 %v523
  %v2098 = vpop.f32.mrf.mxu0
  %v2099 = vadd.f32 %v2086, %v2098
  %v2100 = vpop.f32.mrf.mxu0
  %2101 = vdwg.mxu0
  %2102 = vmatpush.bf16.msra.mxu0 %v1582
  %2103 = vmatpush.bf16.msra.mxu0 %v1581
  %2104 = vmatpush.bf16.msra.mxu0 %v1580
  %2105 = vmatpush.bf16.msra.mxu0 %v1579
  %2106 = vmatpush.bf16.msra.mxu0 %v1578
  %2107 = vmatpush.bf16.msra.mxu0 %v1577
  %2108 = vmatpush.bf16.msra.mxu0 %v1576
  %2109 = vmatpush.bf16.msra.mxu0 %v1575
  %2110 = vmatmul.bf16.gmra.mxu0 %v524
  %v2111 = vpop.f32.mrf.mxu0
  %v2112 = vadd.f32 %v2099, %v2111
  %v2113 = vpop.f32.mrf.mxu0
  %2114 = vdwg.mxu0
  %2115 = vmatpush.bf16.msra.mxu0 %v1590
  %2116 = vmatpush.bf16.msra.mxu0 %v1589
  %2117 = vmatpush.bf16.msra.mxu0 %v1588
  %2118 = vmatpush.bf16.msra.mxu0 %v1587
  %2119 = vmatpush.bf16.msra.mxu0 %v1586
  %2120 = vmatpush.bf16.msra.mxu0 %v1585
  %2121 = vmatpush.bf16.msra.mxu0 %v1584
  %2122 = vmatpush.bf16.msra.mxu0 %v1583
  %2123 = vmatmul.bf16.gmra.mxu0 %v525
  %v2124 = vpop.f32.mrf.mxu0
  %v2125 = vadd.f32 %v2112, %v2124
  %v2126 = vpop.f32.mrf.mxu0
  %2127 = vdwg.mxu0
  %2128 = vmatpush.bf16.msra.mxu0 %v1598
  %2129 = vmatpush.bf16.msra.mxu0 %v1597
  %2130 = vmatpush.bf16.msra.mxu0 %v1596
  %2131 = vmatpush.bf16.msra.mxu0 %v1595
  %2132 = vmatpush.bf16.msra.mxu0 %v1594
  %2133 = vmatpush.bf16.msra.mxu0 %v1593
  %2134 = vmatpush.bf16.msra.mxu0 %v1592
  %2135 = vmatpush.bf16.msra.mxu0 %v1591
  %2136 = vmatmul.bf16.gmra.mxu0 %v526
  %v2137 = vpop.f32.mrf.mxu0
  %v2138 = vadd.f32 %v2125, %v2137
  %v2139 = vpop.f32.mrf.mxu0
  %2140 = vdwg.mxu0
  %2141 = vmatpush.bf16.msra.mxu0 %v1606
  %2142 = vmatpush.bf16.msra.mxu0 %v1605
  %2143 = vmatpush.bf16.msra.mxu0 %v1604
  %2144 = vmatpush.bf16.msra.mxu0 %v1603
  %2145 = vmatpush.bf16.msra.mxu0 %v1602
  %2146 = vmatpush.bf16.msra.mxu0 %v1601
  %2147 = vmatpush.bf16.msra.mxu0 %v1600
  %2148 = vmatpush.bf16.msra.mxu0 %v1599
  %2149 = vmatmul.bf16.gmra.mxu0 %v527
  %v2150 = vpop.f32.mrf.mxu0
  %v2151 = vadd.f32 %v2138, %v2150
  %v2152 = vpop.f32.mrf.mxu0
  %2153 = vdwg.mxu0
  %2154 = vmatpush.bf16.msra.mxu0 %v1614
  %2155 = vmatpush.bf16.msra.mxu0 %v1613
  %2156 = vmatpush.bf16.msra.mxu0 %v1612
  %2157 = vmatpush.bf16.msra.mxu0 %v1611
  %2158 = vmatpush.bf16.msra.mxu0 %v1610
  %2159 = vmatpush.bf16.msra.mxu0 %v1609
  %2160 = vmatpush.bf16.msra.mxu0 %v1608
  %2161 = vmatpush.bf16.msra.mxu0 %v1607
  %2162 = vmatmul.bf16.gmra.mxu0 %v528
  %v2163 = vpop.f32.mrf.mxu0
  %v2164 = vadd.f32 %v2151, %v2163
  %v2165 = vpop.f32.mrf.mxu0
  %2166 = vdwg.mxu0
  %2167 = vmatpush.bf16.msra.mxu0 %v1622
  %2168 = vmatpush.bf16.msra.mxu0 %v1621
  %2169 = vmatpush.bf16.msra.mxu0 %v1620
  %2170 = vmatpush.bf16.msra.mxu0 %v1619
  %2171 = vmatpush.bf16.msra.mxu0 %v1618
  %2172 = vmatpush.bf16.msra.mxu0 %v1617
  %2173 = vmatpush.bf16.msra.mxu0 %v1616
  %2174 = vmatpush.bf16.msra.mxu0 %v1615
  %2175 = vmatmul.bf16.gmra.mxu0 %v529
  %v2176 = vpop.f32.mrf.mxu0
  %v2177 = vadd.f32 %v2164, %v2176
  %v2178 = vpop.f32.mrf.mxu0
  %2179 = vdwg.mxu0
  %2180 = vmatpush.bf16.msra.mxu0 %v1630
  %2181 = vmatpush.bf16.msra.mxu0 %v1629
  %2182 = vmatpush.bf16.msra.mxu0 %v1628
  %2183 = vmatpush.bf16.msra.mxu0 %v1627
  %2184 = vmatpush.bf16.msra.mxu0 %v1626
  %2185 = vmatpush.bf16.msra.mxu0 %v1625
  %2186 = vmatpush.bf16.msra.mxu0 %v1624
  %2187 = vmatpush.bf16.msra.mxu0 %v1623
  %2188 = vmatmul.bf16.gmra.mxu0 %v530
  %v2189 = vpop.f32.mrf.mxu0
  %v2190 = vadd.f32 %v2177, %v2189
  %v2191 = vpop.f32.mrf.mxu0
  %2192 = vdwg.mxu0
  %2193 = vmatpush.bf16.msra.mxu0 %v1638
  %2194 = vmatpush.bf16.msra.mxu0 %v1637
  %2195 = vmatpush.bf16.msra.mxu0 %v1636
  %2196 = vmatpush.bf16.msra.mxu0 %v1635
  %2197 = vmatpush.bf16.msra.mxu0 %v1634
  %2198 = vmatpush.bf16.msra.mxu0 %v1633
  %2199 = vmatpush.bf16.msra.mxu0 %v1632
  %2200 = vmatpush.bf16.msra.mxu0 %v1631
  %2201 = vmatmul.bf16.gmra.mxu0 %v531
  %v2202 = vpop.f32.mrf.mxu0
  %v2203 = vadd.f32 %v2190, %v2202
  %v2204 = vpop.f32.mrf.mxu0
  %2205 = vdwg.mxu0
  %2206 = vst [vmem:[%s3] sm:$0xff] %v2203
  // Predicated region
  $region14: #{nature_cnn_d_forward.9} parent=0 // pred_check
    _
  $region15: #{nature_cnn_d_forward.9} parent=0 // pred_check_branch
    %2208 = sbr.rel (0) target = $region17
  $region16: #{nature_cnn_d_forward.9} parent=0 // pred_region
    _
  $region17: #{nature_cnn_d_forward.9} parent=0 // pred_fallthru
    _
  // Predicated region
  $region18: #{nature_cnn_d_forward.9} parent=0 // pred_check
    _
  $region19: #{nature_cnn_d_forward.9} parent=0 // pred_check_branch
    %2210 = sbr.rel (0) target = $region21
  $region20: #{nature_cnn_d_forward.9} parent=0 // pred_region
    _
  $region21: #{nature_cnn_d_forward.9} parent=0 // pred_fallthru
    _

</llo_original>
